<compile_context>
chip_gen: v5e
topology: v5e:2x2
jax: 0.10.0
libtpu: 0.0.40
codegen_flags: <defaults>
</compile_context>

<pallas_src>
import functools

import jax
import jax.numpy as jnp
from jax.experimental import pallas as pl
from jax.experimental.pallas import tpu as pltpu


# ----------------------------------------------------------------------------
# Pallas kernel 1: fused matmul + bias (+ReLU), single K step, bf16 out.
# Used for the ConvTranspose2d(k=2, s=2) "upconv" (a pure channel matmul).
# ----------------------------------------------------------------------------
def _matmul_bias_kernel(a_ref, b_ref, bias_ref, o_ref, *, relu):
    acc = jnp.dot(a_ref[...], b_ref[...], preferred_element_type=jnp.float32)
    acc = acc + bias_ref[...]                 # f32 epilogue, (1, tn) broadcasts
    if relu:
        acc = jnp.maximum(acc, 0.0)
    o_ref[...] = acc.astype(o_ref.dtype)      # bf16 store


def _round_up(x, m):
    return (x + m - 1) // m * m


def _choose_tile(dim, cap, align):
    """Largest tile <= cap that divides `dim` (and is `align`-aligned), so no
    padding pass over the operand is needed.  Pads only as a last resort."""
    if dim <= cap:
        return dim, dim
    t = cap - cap % align
    while t >= align:
        if dim % t == 0:
            return t, dim
        t -= align
    return cap, _round_up(dim, cap)


def matmul_bias_act(a, b, bias, relu=False):
    """bf16 out = act(a @ b + bias); f32 MXU accumulation + f32 bias/ReLU.

    Single-K-step matmul (K is just the channel count here) with the whole
    weight resident (tn = N) and M tiles chosen to divide M, so no operand
    padding copies are made.
    """
    M, K = a.shape
    K2, N = b.shape
    assert K == K2 and bias.shape == (N,)

    a = a.astype(jnp.bfloat16)
    b = b.astype(jnp.bfloat16)
    bias2d = bias.astype(jnp.float32).reshape(1, N)

    tm, Mp = _choose_tile(M, 512, 8)             # 512-row tiles ~85% HBM roofline
    if K * N * 2 <= (8 << 20):                   # keep the weight fully resident
        tn, Np = N, N
    else:
        tn, Np = _choose_tile(N, 512, 128)
    if Mp != M:                                  # fallback only; never hit here
        a = jnp.pad(a, ((0, Mp - M), (0, 0)))
    if Np != N:
        b = jnp.pad(b, ((0, 0), (0, Np - N)))
        bias2d = jnp.pad(bias2d, ((0, 0), (0, Np - N)))

    grid = (Mp // tm, Np // tn)
    flops = 2 * Mp * K * Np
    # B is re-fetched grid[0] times when tn < N; advisory only.
    bytes_accessed = Mp * K * 2 + grid[0] * K * Np * 2 + Np * 4 + Mp * Np * 2

    out = pl.pallas_call(
        functools.partial(_matmul_bias_kernel, relu=relu),
        out_shape=jax.ShapeDtypeStruct((Mp, Np), jnp.bfloat16),
        grid=grid,
        in_specs=[
            pl.BlockSpec((tm, K), lambda i, j: (i, 0)),
            pl.BlockSpec((K, tn), lambda i, j: (0, j)),
            pl.BlockSpec((1, tn), lambda i, j: (0, j)),
        ],
        out_specs=pl.BlockSpec((tm, tn), lambda i, j: (i, j)),
        compiler_params=pltpu.CompilerParams(
            dimension_semantics=("parallel", "parallel"),
            vmem_limit_bytes=32 * 1024 * 1024,   # v7x-safe (64 MiB VMEM per TC)
        ),
        cost_estimate=pl.CostEstimate(flops=flops, transcendentals=0,
                                      bytes_accessed=bytes_accessed),
    )(a, b, bias2d)

    if (Mp, Np) != (M, N):
        out = out[:M, :N]
    return out


# ----------------------------------------------------------------------------
# Pallas kernel 2: 3x3 "valid" conv (+bias, +ReLU) with in-kernel im2col.
# ----------------------------------------------------------------------------
def _conv3x3_kernel(*refs, n_in, W, Ho, Wo, relu):
    """refs = (x_0..x_{n-1}, w_0..w_{n-1}, bias, out).

    x_i : (1, H*W, C_i)  bf16   NHWC activation with H,W flattened.
    w_i : (9*C_i, Cout)  bf16   rows ordered (di, dj, c_i).
    bias: (1, Cout)      f32
    out : (1, Ho*W, Cout) bf16  flat rows p = ho*W + wo; columns wo >= Wo are
                                junk (cropped by the wrapper); the last W-Wo
                                rows of the block are left unwritten.

    For tap (di, dj) the im2col row of flat output position p is
    x_flat[p + di*W + dj], i.e. a contiguous static slice -- so the per-tap
    matmuls need no in-kernel reshape and no HBM patches tensor.
    """
    x_refs = refs[:n_in]
    w_refs = refs[n_in:2 * n_in]
    b_ref = refs[2 * n_in]
    o_ref = refs[2 * n_in + 1]
    cout = o_ref.shape[-1]
    m_valid = (Ho - 1) * W + Wo           # last tap slice ends exactly at H*W

    acc = jnp.zeros((m_valid, cout), jnp.float32)
    for x_ref, w_ref in zip(x_refs, w_refs):   # K-split: [skip, up] w/o concat
        c = x_ref.shape[-1]
        for di in range(3):
            for dj in range(3):
                tap = di * 3 + dj
                start = di * W + dj                            # static offset
                patch = x_ref[0, start:start + m_valid, :]     # (m_valid, C)
                w_tap = w_ref[tap * c:(tap + 1) * c, :]        # (C, Cout)
                acc = acc + jnp.dot(patch, w_tap,
                                    preferred_element_type=jnp.float32)
    acc = acc + b_ref[...]                     # f32 bias epilogue
    if relu:
        acc = jnp.maximum(acc, 0.0)
    o_ref[0, :m_valid, :] = acc.astype(o_ref.dtype)


def conv3x3_valid_relu_nhwc(xs, ws, bias, relu=True):
    """3x3 valid conv (+ReLU) over the channel-concat of `xs` (list of NHWC
    bf16 activations) without materializing the concat or an im2col patches
    tensor in HBM.  `ws` are the matching (9*C_i, Cout) weight slabs."""
    N, H, W, _ = xs[0].shape
    Ho, Wo = H - 2, W - 2
    Cout = int(ws[0].shape[1])
    m_valid = (Ho - 1) * W + Wo
    x_flats = [x.reshape(N, H * W, x.shape[-1]).astype(jnp.bfloat16) for x in xs]
    ws = [w.astype(jnp.bfloat16) for w in ws]
    bias2d = bias.astype(jnp.float32).reshape(1, Cout)

    kernel = functools.partial(_conv3x3_kernel, n_in=len(xs), W=W, Ho=Ho, Wo=Wo,
                               relu=relu)
    # TODO(synk): tile H*W (output-row blocks with a 2-row halo via manual DMA)
    # once feature maps no longer fit one VMEM block per batch element, and
    # chain convs stride-aware so the output crop below disappears too.
    in_specs = (
        [pl.BlockSpec((1, H * W, int(x.shape[-1])), lambda n: (n, 0, 0))
         for x in x_flats]
        + [pl.BlockSpec((int(w.shape[0]), Cout), lambda n: (0, 0)) for w in ws]
        + [pl.BlockSpec((1, Cout), lambda n: (0, 0))]
    )
    flops = 2 * N * m_valid * sum(int(w.shape[0]) for w in ws) * Cout
    bytes_accessed = (sum(int(x.size) for x in x_flats) * 2
                      + sum(int(w.size) for w in ws) * 2
                      + Cout * 4 + N * Ho * W * Cout * 2)
    out = pl.pallas_call(
        kernel,
        out_shape=jax.ShapeDtypeStruct((N, Ho * W, Cout), jnp.bfloat16),
        grid=(N,),
        in_specs=in_specs,
        out_specs=pl.BlockSpec((1, Ho * W, Cout), lambda n: (n, 0, 0)),
        compiler_params=pltpu.CompilerParams(
            dimension_semantics=("parallel",),
            vmem_limit_bytes=32 * 1024 * 1024,
        ),
        cost_estimate=pl.CostEstimate(flops=flops, transcendentals=0,
                                      bytes_accessed=bytes_accessed),
    )(*x_flats, *ws, bias2d)
    # Drop the junk right-edge columns (flat positions wo >= Wo per output row).
    return out.reshape(N, Ho, W, Cout)[:, :, :Wo, :]


# ----------------------------------------------------------------------------
# NHWC glue (plain JAX); all compute goes through the two Pallas kernels.
# ----------------------------------------------------------------------------
def conv_transpose2x2_s2_nhwc(x, w_mat, bias4):
    """ConvTranspose2d(k=2, s=2). x:(N,H,W,Cin) bf16, w_mat:(Cin,4*Cout)."""
    N, H, W, Cin = x.shape
    Cout = w_mat.shape[1] // 4
    y = matmul_bias_act(x.reshape(N * H * W, Cin), w_mat, bias4, relu=False)
    y = y.reshape(N, H, W, 2, 2, Cout)
    # TODO(synk): fold this 2x2 pixel-shuffle into the conv1 tap index math so
    # the upsampled tensor is never re-laid-out in HBM (bf16 already halves it).
    return jnp.transpose(y, (0, 1, 3, 2, 4, 5)).reshape(N, 2 * H, 2 * W, Cout)


def center_crop_nhwc(skip, H, W):
    _, Hs, Ws, _ = skip.shape
    dh, dw = (Hs - H) // 2, (Ws - W) // 2
    return skip[:, dh:dh + H, dw:dw + W, :]


def expansion_forward_nhwc(x, skip, p):
    up = conv_transpose2x2_s2_nhwc(x, p["up_w"], p["up_b"])
    H, W = up.shape[1], up.shape[2]
    skip_c = center_crop_nhwc(skip, H, W)
    # conv1 over concat([skip, up], channel) -- the concat never hits HBM:
    # the weight is row-partitioned offline and both K-splits share the f32
    # accumulator inside the conv kernel.
    h = conv3x3_valid_relu_nhwc([skip_c, up], [p["c1_w_skip"], p["c1_w_up"]],
                                p["c1_b"])
    h = conv3x3_valid_relu_nhwc([h], [p["c2_w"]], p["c2_b"])
    return h


def expanding_path_forward(x_nchw, from_contractions_nchw, params_mm):
    """Matches ExpandingPath.forward (NCHW in / NCHW out).  NCHW<->NHWC and
    f32<->bf16 conversion happens exactly once at the module boundary."""
    x = jnp.transpose(x_nchw, (0, 2, 3, 1)).astype(jnp.bfloat16)
    for skip_nchw, p in zip(from_contractions_nchw, params_mm):
        skip = jnp.transpose(skip_nchw, (0, 2, 3, 1)).astype(jnp.bfloat16)
        x = expansion_forward_nhwc(x, skip, p)
    return jnp.transpose(x, (0, 3, 1, 2)).astype(jnp.float32)


# ----------------------------------------------------------------------------
# Deterministic parameter / input construction + offline weight packing.
# ----------------------------------------------------------------------------
def make_params(key, n_expansions):
    params = []
    for path_index in range(n_expansions):
        cin = 2 ** (n_expansions + 6 - path_index)
        cout = cin // 2
        key, k1, k2, k3, k4, k5, k6 = jax.random.split(key, 7)
        params.append({
            "up_w": 0.05 * jax.random.normal(k1, (cin, cout, 2, 2), jnp.float32),
            "up_b": 0.05 * jax.random.normal(k2, (cout,), jnp.float32),
            "c1_w": 0.05 * jax.random.normal(k3, (cout, cin, 3, 3), jnp.float32),
            "c1_b": 0.05 * jax.random.normal(k4, (cout,), jnp.float32),
            "c2_w": 0.05 * jax.random.normal(k5, (cout, cout, 3, 3), jnp.float32),
            "c2_b": 0.05 * jax.random.normal(k6, (cout,), jnp.float32),
        })
    return params


def _conv_w_to_mm(w, dtype):
    """PyTorch Conv2d weight (Cout, C, 3, 3) -> (9*C, Cout), rows (di, dj, c)."""
    return jnp.transpose(w, (2, 3, 1, 0)).reshape(-1, w.shape[0]).astype(dtype)


def prepare_params(params, w_dtype=jnp.bfloat16):
    """PyTorch-layout weights -> matmul-form weights (once, off the hot path)."""
    prepped = []
    for p in params:
        cin, cout = p["up_w"].shape[0], p["up_w"].shape[1]
        prepped.append({
            # ConvTranspose2d(k=2,s=2): columns (a, b, cout) so the 2x2 spatial
            # scatter keeps channels last.
            "up_w": jnp.transpose(p["up_w"], (0, 2, 3, 1)).reshape(
                cin, 4 * cout).astype(w_dtype),
            "up_b": jnp.tile(p["up_b"], 4).astype(jnp.float32),
            # conv1 weight split along its input channels into the [skip, up]
            # halves so the kernel can consume skip/up separately (no concat).
            "c1_w_skip": _conv_w_to_mm(p["c1_w"][:, :cout], w_dtype),
            "c1_w_up": _conv_w_to_mm(p["c1_w"][:, cout:], w_dtype),
            "c1_b": p["c1_b"].astype(jnp.float32),
            "c2_w": _conv_w_to_mm(p["c2_w"], w_dtype),
            "c2_b": p["c2_b"].astype(jnp.float32),
        })
    return prepped


# ----------------------------------------------------------------------------
# Pure-jnp references.  dtype=bfloat16 matches the kernel lowering (bf16
# operands/intermediates, f32 accumulation); dtype=float32 is the semantic ref.
# ----------------------------------------------------------------------------
def _ref_forward(x_nchw, skips_nchw, params, dtype):
    def mm(a, b, bias, relu):
        acc = jnp.dot(a.astype(dtype), b.astype(dtype),
                      preferred_element_type=jnp.float32)
        acc = acc + bias.astype(jnp.float32)[None, :]
        if relu:
            acc = jnp.maximum(acc, 0.0)
        return acc.astype(dtype)

    x = jnp.transpose(x_nchw, (0, 2, 3, 1)).astype(dtype)
    for skip_nchw, p in zip(skips_nchw, params):
        skip = jnp.transpose(skip_nchw, (0, 2, 3, 1)).astype(dtype)
        cin, cout = p["up_w"].shape[0], p["up_w"].shape[1]
        N, H, W, _ = x.shape
        w_up = jnp.transpose(p["up_w"], (0, 2, 3, 1)).reshape(cin, 4 * cout)
        y = mm(x.reshape(N * H * W, cin), w_up, jnp.tile(p["up_b"], 4), False)
        up = jnp.transpose(y.reshape(N, H, W, 2, 2, cout),
                           (0, 1, 3, 2, 4, 5)).reshape(N, 2 * H, 2 * W, cout)
        Hs, Ws = skip.shape[1], skip.shape[2]
        dh, dw = (Hs - 2 * H) // 2, (Ws - 2 * W) // 2
        h = jnp.concatenate(
            [skip[:, dh:dh + 2 * H, dw:dw + 2 * W, :], up], axis=-1)
        for w_conv, b_conv in ((p["c1_w"], p["c1_b"]), (p["c2_w"], p["c2_b"])):
            Nn, Hh, Ww, Cc = h.shape
            Ho, Wo = Hh - 2, Ww - 2
            patches = jnp.concatenate(
                [h[:, di:di + Ho, dj:dj + Wo, :]
                 for di in range(3) for dj in range(3)],
                axis=-1).reshape(Nn * Ho * Wo, 9 * Cc)
            w_mm = jnp.transpose(w_conv, (2, 3, 1, 0)).reshape(9 * Cc, -1)
            h = mm(patches, w_mm, b_conv, True).reshape(Nn, Ho, Wo, -1)
        x = h
    return jnp.transpose(x, (0, 3, 1, 2)).astype(jnp.float32)


if __name__ == "__main__":
    n_expansions = 2
    in_channel_size = 4          # spatial size of the bottleneck feature map
    batch = 2

    key = jax.random.PRNGKey(0)
    key, kx = jax.random.split(key)
    params = make_params(key, n_expansions)

    in_channels = 2 ** (n_expansions + 6)                    # 256
    x = jax.random.normal(
        kx, (batch, in_channels, in_channel_size, in_channel_size), jnp.float32)

    # Skip connections from the contracting path (channels mirror the decoder).
    skips = []
    s = in_channel_size
    for path_index in range(n_expansions):
        cin = 2 ** (n_expansions + 6 - path_index)
        key, ks = jax.random.split(key)
        skips.append(jax.random.normal(ks, (batch, cin // 2, 2 * s, 2 * s),
                                       jnp.float32))
        s = 2 * s - 4                                        # out_channel_size

    params_mm = prepare_params(params, jnp.bfloat16)

    fwd = jax.jit(expanding_path_forward)
    out = jax.block_until_ready(fwd(x, skips, params_mm))

    out_bf16 = _ref_forward(x, skips, params, jnp.bfloat16)  # kernel-matched ref
    out_f32 = _ref_forward(x, skips, params, jnp.float32)    # semantic reference

    assert out.shape == (batch, 2 ** 6, s, s), out.shape
    # Kernel check: same bf16 operands / f32 accumulation -> tight match.
    assert jnp.allclose(out, out_bf16, atol=3e-2, rtol=3e-2), \
        float(jnp.max(jnp.abs(out - out_bf16)))
    # Semantic check vs. full-f32 path (loose: covers bf16 rounding).
    assert jnp.allclose(out, out_f32, atol=5e-1, rtol=1e-1), \
        float(jnp.max(jnp.abs(out - out_f32)))
    print("KERNEL_OK")
</pallas_src>

<mosaic_0001>
module attributes {stable_mosaic.version = 11 : i64} {
  func.func @_matmul_bias_kernel(%arg0: i32, %arg1: i32, %arg2: memref<32x256xbf16, #tpu.memory_space<vmem>>, %arg3: memref<256x512xbf16, #tpu.memory_space<vmem>>, %arg4: memref<1x512xf32, #tpu.memory_space<vmem>>, %arg5: memref<32x512xbf16, #tpu.memory_space<vmem>>) attributes {dimension_semantics = [#tpu.dimension_semantics<parallel>, #tpu.dimension_semantics<parallel>], iteration_bounds = array<i64: 1, 1>, scalar_prefetch = 0 : i64, scratch_operands = 0 : i64, tpu.core_type = #tpu.core_type<tc>, window_params = [{transform_indices = @transform_0, window_bounds = array<i64: 32, 256>}, {transform_indices = @transform_1, window_bounds = array<i64: 256, 512>}, {transform_indices = @transform_2, window_bounds = array<i64: 1, 512>}, {transform_indices = @transform_3, window_bounds = array<i64: 32, 512>}]} {
    %c0 = arith.constant 0 : index
    %c0_0 = arith.constant 0 : index
    %0 = vector.load %arg2[%c0, %c0_0] : memref<32x256xbf16, #tpu.memory_space<vmem>>, vector<32x256xbf16>
    %c0_1 = arith.constant 0 : index
    %c0_2 = arith.constant 0 : index
    %1 = vector.load %arg3[%c0_1, %c0_2] : memref<256x512xbf16, #tpu.memory_space<vmem>>, vector<256x512xbf16>
    %cst = arith.constant dense<0.000000e+00> : vector<32x512xf32>
    %2 = tpu.matmul %0, %1, %cst {dimension_numbers = #tpu.dot_dimension_numbers<[1], [0], [0], [1], [0, 0, 1, 1], [], []>} : vector<32x256xbf16>, vector<256x512xbf16>, vector<32x512xf32> -> vector<32x512xf32>
    %c0_3 = arith.constant 0 : index
    %c0_4 = arith.constant 0 : index
    %3 = vector.load %arg4[%c0_3, %c0_4] : memref<1x512xf32, #tpu.memory_space<vmem>>, vector<1x512xf32>
    %4 = vector.broadcast %3 : vector<1x512xf32> to vector<32x512xf32>
    %5 = arith.addf %2, %4 : vector<32x512xf32>
    %6 = arith.truncf %5 : vector<32x512xf32> to vector<32x512xbf16>
    %c0_5 = arith.constant 0 : index
    %c0_6 = arith.constant 0 : index
    %7 = vector.load %arg5[%c0_5, %c0_6] : memref<32x512xbf16, #tpu.memory_space<vmem>>, vector<32x512xbf16>
    tpu.vector_store %arg5[%c0_5, %c0_6], %6 {strides = array<i32>} : memref<32x512xbf16, #tpu.memory_space<vmem>>, vector<32x512xbf16>,
    return
  }
  func.func @transform_0(%arg0: i32, %arg1: i32) -> (i32, i32) {
    %c0_i32 = arith.constant 0 : i32
    %c0_i32_0 = arith.constant 0 : i32
    return %arg0, %c0_i32 : i32, i32
  }
  func.func @transform_1(%arg0: i32, %arg1: i32) -> (i32, i32) {
    %c0_i32 = arith.constant 0 : i32
    %c0_i32_0 = arith.constant 0 : i32
    return %c0_i32, %arg1 : i32, i32
  }
  func.func @transform_2(%arg0: i32, %arg1: i32) -> (i32, i32) {
    %c0_i32 = arith.constant 0 : i32
    %c0_i32_0 = arith.constant 0 : i32
    return %c0_i32, %arg1 : i32, i32
  }
  func.func @transform_3(%arg0: i32, %arg1: i32) -> (i32, i32) {
    %c0_i32 = arith.constant 0 : i32
    return %arg0, %arg1 : i32, i32
  }
}

module attributes {stable_mosaic.version = 11 : i64} {
  func.func @_conv3x3_kernel(%arg0: i32, %arg1: memref<1x36x128xbf16, #tpu.memory_space<vmem>>, %arg2: memref<1152x128xbf16, #tpu.memory_space<vmem>>, %arg3: memref<1x128xf32, #tpu.memory_space<vmem>>, %arg4: memref<1x24x128xbf16, #tpu.memory_space<vmem>>) attributes {dimension_semantics = [#tpu.dimension_semantics<parallel>], iteration_bounds = array<i64: 2>, scalar_prefetch = 0 : i64, scratch_operands = 0 : i64, tpu.core_type = #tpu.core_type<tc>, window_params = [{transform_indices = @transform_0, window_bounds = array<i64: 1, 36, 128>}, {pipeline_mode = #tpu.pipeline_mode<synchronous>, transform_indices = @transform_1, window_bounds = array<i64: 1152, 128>}, {pipeline_mode = #tpu.pipeline_mode<synchronous>, transform_indices = @transform_2, window_bounds = array<i64: 1, 128>}, {transform_indices = @transform_3, window_bounds = array<i64: 1, 24, 128>}]} {
    %cst = arith.constant 0.000000e+00 : f32
    %0 = vector.broadcast %cst : f32 to vector<22x128xf32>
    %c0 = arith.constant 0 : index
    %c0_0 = arith.constant 0 : index
    %c0_1 = arith.constant 0 : index
    %1 = vector.load %arg1[%c0, %c0_0, %c0_1] : memref<1x36x128xbf16, #tpu.memory_space<vmem>>, vector<1x22x128xbf16>
    %2 = vector.shape_cast %1 : vector<1x22x128xbf16> to vector<22x128xbf16>
    %c0_2 = arith.constant 0 : index
    %c0_3 = arith.constant 0 : index
    %3 = vector.load %arg2[%c0_2, %c0_3] : memref<1152x128xbf16, #tpu.memory_space<vmem>>, vector<128x128xbf16>
    %cst_4 = arith.constant dense<0.000000e+00> : vector<22x128xf32>
    %4 = tpu.matmul %2, %3, %cst_4 {dimension_numbers = #tpu.dot_dimension_numbers<[1], [0], [0], [1], [0, 0, 1, 1], [], []>} : vector<22x128xbf16>, vector<128x128xbf16>, vector<22x128xf32> -> vector<22x128xf32>
    %5 = arith.addf %0, %4 : vector<22x128xf32>
    %c0_5 = arith.constant 0 : index
    %c1 = arith.constant 1 : index
    %c0_6 = arith.constant 0 : index
    %6 = vector.load %arg1[%c0_5, %c1, %c0_6] : memref<1x36x128xbf16, #tpu.memory_space<vmem>>, vector<1x22x128xbf16>
    %7 = vector.shape_cast %6 : vector<1x22x128xbf16> to vector<22x128xbf16>
    %c128 = arith.constant 128 : index
    %c0_7 = arith.constant 0 : index
    %8 = vector.load %arg2[%c128, %c0_7] : memref<1152x128xbf16, #tpu.memory_space<vmem>>, vector<128x128xbf16>
    %cst_8 = arith.constant dense<0.000000e+00> : vector<22x128xf32>
    %9 = tpu.matmul %7, %8, %cst_8 {dimension_numbers = #tpu.dot_dimension_numbers<[1], [0], [0], [1], [0, 0, 1, 1], [], []>} : vector<22x128xbf16>, vector<128x128xbf16>, vector<22x128xf32> -> vector<22x128xf32>
    %10 = arith.addf %5, %9 : vector<22x128xf32>
    %c0_9 = arith.constant 0 : index
    %c2 = arith.constant 2 : index
    %c0_10 = arith.constant 0 : index
    %11 = vector.load %arg1[%c0_9, %c2, %c0_10] : memref<1x36x128xbf16, #tpu.memory_space<vmem>>, vector<1x22x128xbf16>
    %12 = vector.shape_cast %11 : vector<1x22x128xbf16> to vector<22x128xbf16>
    %c256 = arith.constant 256 : index
    %c0_11 = arith.constant 0 : index
    %13 = vector.load %arg2[%c256, %c0_11] : memref<1152x128xbf16, #tpu.memory_space<vmem>>, vector<128x128xbf16>
    %cst_12 = arith.constant dense<0.000000e+00> : vector<22x128xf32>
    %14 = tpu.matmul %12, %13, %cst_12 {dimension_numbers = #tpu.dot_dimension_numbers<[1], [0], [0], [1], [0, 0, 1, 1], [], []>} : vector<22x128xbf16>, vector<128x128xbf16>, vector<22x128xf32> -> vector<22x128xf32>
    %15 = arith.addf %10, %14 : vector<22x128xf32>
    %c0_13 = arith.constant 0 : index
    %c6 = arith.constant 6 : index
    %c0_14 = arith.constant 0 : index
    %16 = vector.load %arg1[%c0_13, %c6, %c0_14] : memref<1x36x128xbf16, #tpu.memory_space<vmem>>, vector<1x22x128xbf16>
    %17 = vector.shape_cast %16 : vector<1x22x128xbf16> to vector<22x128xbf16>
    %c384 = arith.constant 384 : index
    %c0_15 = arith.constant 0 : index
    %18 = vector.load %arg2[%c384, %c0_15] : memref<1152x128xbf16, #tpu.memory_space<vmem>>, vector<128x128xbf16>
    %cst_16 = arith.constant dense<0.000000e+00> : vector<22x128xf32>
    %19 = tpu.matmul %17, %18, %cst_16 {dimension_numbers = #tpu.dot_dimension_numbers<[1], [0], [0], [1], [0, 0, 1, 1], [], []>} : vector<22x128xbf16>, vector<128x128xbf16>, vector<22x128xf32> -> vector<22x128xf32>
    %20 = arith.addf %15, %19 : vector<22x128xf32>
    %c0_17 = arith.constant 0 : index
    %c7 = arith.constant 7 : index
    %c0_18 = arith.constant 0 : index
    %21 = vector.load %arg1[%c0_17, %c7, %c0_18] : memref<1x36x128xbf16, #tpu.memory_space<vmem>>, vector<1x22x128xbf16>
    %22 = vector.shape_cast %21 : vector<1x22x128xbf16> to vector<22x128xbf16>
    %c512 = arith.constant 512 : index
    %c0_19 = arith.constant 0 : index
    %23 = vector.load %arg2[%c512, %c0_19] : memref<1152x128xbf16, #tpu.memory_space<vmem>>, vector<128x128xbf16>
    %cst_20 = arith.constant dense<0.000000e+00> : vector<22x128xf32>
    %24 = tpu.matmul %22, %23, %cst_20 {dimension_numbers = #tpu.dot_dimension_numbers<[1], [0], [0], [1], [0, 0, 1, 1], [], []>} : vector<22x128xbf16>, vector<128x128xbf16>, vector<22x128xf32> -> vector<22x128xf32>
    %25 = arith.addf %20, %24 : vector<22x128xf32>
    %c0_21 = arith.constant 0 : index
    %c8 = arith.constant 8 : index
    %c0_22 = arith.constant 0 : index
    %26 = vector.load %arg1[%c0_21, %c8, %c0_22] : memref<1x36x128xbf16, #tpu.memory_space<vmem>>, vector<1x22x128xbf16>
    %27 = vector.shape_cast %26 : vector<1x22x128xbf16> to vector<22x128xbf16>
    %c640 = arith.constant 640 : index
    %c0_23 = arith.constant 0 : index
    %28 = vector.load %arg2[%c640, %c0_23] : memref<1152x128xbf16, #tpu.memory_space<vmem>>, vector<128x128xbf16>
    %cst_24 = arith.constant dense<0.000000e+00> : vector<22x128xf32>
    %29 = tpu.matmul %27, %28, %cst_24 {dimension_numbers = #tpu.dot_dimension_numbers<[1], [0], [0], [1], [0, 0, 1, 1], [], []>} : vector<22x128xbf16>, vector<128x128xbf16>, vector<22x128xf32> -> vector<22x128xf32>
    %30 = arith.addf %25, %29 : vector<22x128xf32>
    %c0_25 = arith.constant 0 : index
    %c12 = arith.constant 12 : index
    %c0_26 = arith.constant 0 : index
    %31 = vector.load %arg1[%c0_25, %c12, %c0_26] : memref<1x36x128xbf16, #tpu.memory_space<vmem>>, vector<1x22x128xbf16>
    %32 = vector.shape_cast %31 : vector<1x22x128xbf16> to vector<22x128xbf16>
    %c768 = arith.constant 768 : index
    %c0_27 = arith.constant 0 : index
    %33 = vector.load %arg2[%c768, %c0_27] : memref<1152x128xbf16, #tpu.memory_space<vmem>>, vector<128x128xbf16>
    %cst_28 = arith.constant dense<0.000000e+00> : vector<22x128xf32>
    %34 = tpu.matmul %32, %33, %cst_28 {dimension_numbers = #tpu.dot_dimension_numbers<[1], [0], [0], [1], [0, 0, 1, 1], [], []>} : vector<22x128xbf16>, vector<128x128xbf16>, vector<22x128xf32> -> vector<22x128xf32>
    %35 = arith.addf %30, %34 : vector<22x128xf32>
    %c0_29 = arith.constant 0 : index
    %c13 = arith.constant 13 : index
    %c0_30 = arith.constant 0 : index
    %36 = vector.load %arg1[%c0_29, %c13, %c0_30] : memref<1x36x128xbf16, #tpu.memory_space<vmem>>, vector<1x22x128xbf16>
    %37 = vector.shape_cast %36 : vector<1x22x128xbf16> to vector<22x128xbf16>
    %c896 = arith.constant 896 : index
    %c0_31 = arith.constant 0 : index
    %38 = vector.load %arg2[%c896, %c0_31] : memref<1152x128xbf16, #tpu.memory_space<vmem>>, vector<128x128xbf16>
    %cst_32 = arith.constant dense<0.000000e+00> : vector<22x128xf32>
    %39 = tpu.matmul %37, %38, %cst_32 {dimension_numbers = #tpu.dot_dimension_numbers<[1], [0], [0], [1], [0, 0, 1, 1], [], []>} : vector<22x128xbf16>, vector<128x128xbf16>, vector<22x128xf32> -> vector<22x128xf32>
    %40 = arith.addf %35, %39 : vector<22x128xf32>
    %c0_33 = arith.constant 0 : index
    %c14 = arith.constant 14 : index
    %c0_34 = arith.constant 0 : index
    %41 = vector.load %arg1[%c0_33, %c14, %c0_34] : memref<1x36x128xbf16, #tpu.memory_space<vmem>>, vector<1x22x128xbf16>
    %42 = vector.shape_cast %41 : vector<1x22x128xbf16> to vector<22x128xbf16>
    %c1024 = arith.constant 1024 : index
    %c0_35 = arith.constant 0 : index
    %43 = vector.load %arg2[%c1024, %c0_35] : memref<1152x128xbf16, #tpu.memory_space<vmem>>, vector<128x128xbf16>
    %cst_36 = arith.constant dense<0.000000e+00> : vector<22x128xf32>
    %44 = tpu.matmul %42, %43, %cst_36 {dimension_numbers = #tpu.dot_dimension_numbers<[1], [0], [0], [1], [0, 0, 1, 1], [], []>} : vector<22x128xbf16>, vector<128x128xbf16>, vector<22x128xf32> -> vector<22x128xf32>
    %45 = arith.addf %40, %44 : vector<22x128xf32>
    %c0_37 = arith.constant 0 : index
    %c0_38 = arith.constant 0 : index
    %46 = vector.load %arg3[%c0_37, %c0_38] : memref<1x128xf32, #tpu.memory_space<vmem>>, vector<1x128xf32>
    %47 = vector.broadcast %46 : vector<1x128xf32> to vector<22x128xf32>
    %48 = arith.addf %45, %47 : vector<22x128xf32>
    %cst_39 = arith.constant 0.000000e+00 : f32
    %49 = vector.broadcast %cst_39 : f32 to vector<22x128xf32>
    %50 = arith.maximumf %48, %49 : vector<22x128xf32>
    %51 = arith.truncf %50 : vector<22x128xf32> to vector<22x128xbf16>
    %c0_40 = arith.constant 0 : index
    %c0_41 = arith.constant 0 : index
    %c0_42 = arith.constant 0 : index
    %52 = vector.load %arg4[%c0_40, %c0_41, %c0_42] : memref<1x24x128xbf16, #tpu.memory_space<vmem>>, vector<1x22x128xbf16>
    %53 = vector.shape_cast %52 : vector<1x22x128xbf16> to vector<22x128xbf16>
    %54 = vector.shape_cast %51 : vector<22x128xbf16> to vector<1x22x128xbf16>
    tpu.vector_store %arg4[%c0_40, %c0_41, %c0_42], %54 {strides = array<i32>} : memref<1x24x128xbf16, #tpu.memory_space<vmem>>, vector<1x22x128xbf16>,
    return
  }
  func.func @transform_0(%arg0: i32) -> (i32, i32, i32) {
    %c0_i32 = arith.constant 0 : i32
    %c0_i32_0 = arith.constant 0 : i32
    %c0_i32_1 = arith.constant 0 : i32
    return %arg0, %c0_i32, %c0_i32_0 : i32, i32, i32
  }
  func.func @transform_1(%arg0: i32) -> (i32, i32) {
    %c0_i32 = arith.constant 0 : i32
    %c0_i32_0 = arith.constant 0 : i32
    %c0_i32_1 = arith.constant 0 : i32
    return %c0_i32, %c0_i32_0 : i32, i32
  }
  func.func @transform_2(%arg0: i32) -> (i32, i32) {
    %c0_i32 = arith.constant 0 : i32
    %c0_i32_0 = arith.constant 0 : i32
    %c0_i32_1 = arith.constant 0 : i32
    return %c0_i32, %c0_i32_0 : i32, i32
  }
  func.func @transform_3(%arg0: i32) -> (i32, i32, i32) {
    %c0_i32 = arith.constant 0 : i32
    %c0_i32_0 = arith.constant 0 : i32
    %c0_i32_1 = arith.constant 0 : i32
    return %arg0, %c0_i32, %c0_i32_0 : i32, i32, i32
  }
}

module attributes {stable_mosaic.version = 11 : i64} {
  func.func @_conv3x3_kernel(%arg0: i32, %arg1: memref<1x64x128xbf16, #tpu.memory_space<vmem>>, %arg2: memref<1x64x128xbf16, #tpu.memory_space<vmem>>, %arg3: memref<1152x128xbf16, #tpu.memory_space<vmem>>, %arg4: memref<1152x128xbf16, #tpu.memory_space<vmem>>, %arg5: memref<1x128xf32, #tpu.memory_space<vmem>>, %arg6: memref<1x48x128xbf16, #tpu.memory_space<vmem>>) attributes {dimension_semantics = [#tpu.dimension_semantics<parallel>], iteration_bounds = array<i64: 2>, scalar_prefetch = 0 : i64, scratch_operands = 0 : i64, tpu.core_type = #tpu.core_type<tc>, window_params = [{transform_indices = @transform_0, window_bounds = array<i64: 1, 64, 128>}, {transform_indices = @transform_1, window_bounds = array<i64: 1, 64, 128>}, {pipeline_mode = #tpu.pipeline_mode<synchronous>, transform_indices = @transform_2, window_bounds = array<i64: 1152, 128>}, {pipeline_mode = #tpu.pipeline_mode<synchronous>, transform_indices = @transform_3, window_bounds = array<i64: 1152, 128>}, {pipeline_mode = #tpu.pipeline_mode<synchronous>, transform_indices = @transform_4, window_bounds = array<i64: 1, 128>}, {transform_indices = @transform_5, window_bounds = array<i64: 1, 48, 128>}]} {
    %cst = arith.constant 0.000000e+00 : f32
    %0 = vector.broadcast %cst : f32 to vector<46x128xf32>
    %c0 = arith.constant 0 : index
    %c0_0 = arith.constant 0 : index
    %c0_1 = arith.constant 0 : index
    %1 = vector.load %arg1[%c0, %c0_0, %c0_1] : memref<1x64x128xbf16, #tpu.memory_space<vmem>>, vector<1x46x128xbf16>
    %2 = vector.shape_cast %1 : vector<1x46x128xbf16> to vector<46x128xbf16>
    %c0_2 = arith.constant 0 : index
    %c0_3 = arith.constant 0 : index
    %3 = vector.load %arg3[%c0_2, %c0_3] : memref<1152x128xbf16, #tpu.memory_space<vmem>>, vector<128x128xbf16>
    %cst_4 = arith.constant dense<0.000000e+00> : vector<46x128xf32>
    %4 = tpu.matmul %2, %3, %cst_4 {dimension_numbers = #tpu.dot_dimension_numbers<[1], [0], [0], [1], [0, 0, 1, 1], [], []>} : vector<46x128xbf16>, vector<128x128xbf16>, vector<46x128xf32> -> vector<46x128xf32>
    %5 = arith.addf %0, %4 : vector<46x128xf32>
    %c0_5 = arith.constant 0 : index
    %c1 = arith.constant 1 : index
    %c0_6 = arith.constant 0 : index
    %6 = vector.load %arg1[%c0_5, %c1, %c0_6] : memref<1x64x128xbf16, #tpu.memory_space<vmem>>, vector<1x46x128xbf16>
    %7 = vector.shape_cast %6 : vector<1x46x128xbf16> to vector<46x128xbf16>
    %c128 = arith.constant 128 : index
    %c0_7 = arith.constant 0 : index
    %8 = vector.load %arg3[%c128, %c0_7] : memref<1152x128xbf16, #tpu.memory_space<vmem>>, vector<128x128xbf16>
    %cst_8 = arith.constant dense<0.000000e+00> : vector<46x128xf32>
    %9 = tpu.matmul %7, %8, %cst_8 {dimension_numbers = #tpu.dot_dimension_numbers<[1], [0], [0], [1], [0, 0, 1, 1], [], []>} : vector<46x128xbf16>, vector<128x128xbf16>, vector<46x128xf32> -> vector<46x128xf32>
    %10 = arith.addf %5, %9 : vector<46x128xf32>
    %c0_9 = arith.constant 0 : index
    %c2 = arith.constant 2 : index
    %c0_10 = arith.constant 0 : index
    %11 = vector.load %arg1[%c0_9, %c2, %c0_10] : memref<1x64x128xbf16, #tpu.memory_space<vmem>>, vector<1x46x128xbf16>
    %12 = vector.shape_cast %11 : vector<1x46x128xbf16> to vector<46x128xbf16>
    %c256 = arith.constant 256 : index
    %c0_11 = arith.constant 0 : index
    %13 = vector.load %arg3[%c256, %c0_11] : memref<1152x128xbf16, #tpu.memory_space<vmem>>, vector<128x128xbf16>
    %cst_12 = arith.constant dense<0.000000e+00> : vector<46x128xf32>
    %14 = tpu.matmul %12, %13, %cst_12 {dimension_numbers = #tpu.dot_dimension_numbers<[1], [0], [0], [1], [0, 0, 1, 1], [], []>} : vector<46x128xbf16>, vector<128x128xbf16>, vector<46x128xf32> -> vector<46x128xf32>
    %15 = arith.addf %10, %14 : vector<46x128xf32>
    %c0_13 = arith.constant 0 : index
    %c8 = arith.constant 8 : index
    %c0_14 = arith.constant 0 : index
    %16 = vector.load %arg1[%c0_13, %c8, %c0_14] : memref<1x64x128xbf16, #tpu.memory_space<vmem>>, vector<1x46x128xbf16>
    %17 = vector.shape_cast %16 : vector<1x46x128xbf16> to vector<46x128xbf16>
    %c384 = arith.constant 384 : index
    %c0_15 = arith.constant 0 : index
    %18 = vector.load %arg3[%c384, %c0_15] : memref<1152x128xbf16, #tpu.memory_space<vmem>>, vector<128x128xbf16>
    %cst_16 = arith.constant dense<0.000000e+00> : vector<46x128xf32>
    %19 = tpu.matmul %17, %18, %cst_16 {dimension_numbers = #tpu.dot_dimension_numbers<[1], [0], [0], [1], [0, 0, 1, 1], [], []>} : vector<46x128xbf16>, vector<128x128xbf16>, vector<46x128xf32> -> vector<46x128xf32>
    %20 = arith.addf %15, %19 : vector<46x128xf32>
    %c0_17 = arith.constant 0 : index
    %c9 = arith.constant 9 : index
    %c0_18 = arith.constant 0 : index
    %21 = vector.load %arg1[%c0_17, %c9, %c0_18] : memref<1x64x128xbf16, #tpu.memory_space<vmem>>, vector<1x46x128xbf16>
    %22 = vector.shape_cast %21 : vector<1x46x128xbf16> to vector<46x128xbf16>
    %c512 = arith.constant 512 : index
    %c0_19 = arith.constant 0 : index
    %23 = vector.load %arg3[%c512, %c0_19] : memref<1152x128xbf16, #tpu.memory_space<vmem>>, vector<128x128xbf16>
    %cst_20 = arith.constant dense<0.000000e+00> : vector<46x128xf32>
    %24 = tpu.matmul %22, %23, %cst_20 {dimension_numbers = #tpu.dot_dimension_numbers<[1], [0], [0], [1], [0, 0, 1, 1], [], []>} : vector<46x128xbf16>, vector<128x128xbf16>, vector<46x128xf32> -> vector<46x128xf32>
    %25 = arith.addf %20, %24 : vector<46x128xf32>
    %c0_21 = arith.constant 0 : index
    %c10 = arith.constant 10 : index
    %c0_22 = arith.constant 0 : index
    %26 = vector.load %arg1[%c0_21, %c10, %c0_22] : memref<1x64x128xbf16, #tpu.memory_space<vmem>>, vector<1x46x128xbf16>
    %27 = vector.shape_cast %26 : vector<1x46x128xbf16> to vector<46x128xbf16>
    %c640 = arith.constant 640 : index
    %c0_23 = arith.constant 0 : index
    %28 = vector.load %arg3[%c640, %c0_23] : memref<1152x128xbf16, #tpu.memory_space<vmem>>, vector<128x128xbf16>
    %cst_24 = arith.constant dense<0.000000e+00> : vector<46x128xf32>
    %29 = tpu.matmul %27, %28, %cst_24 {dimension_numbers = #tpu.dot_dimension_numbers<[1], [0], [0], [1], [0, 0, 1, 1], [], []>} : vector<46x128xbf16>, vector<128x128xbf16>, vector<46x128xf32> -> vector<46x128xf32>
    %30 = arith.addf %25, %29 : vector<46x128xf32>
    %c0_25 = arith.constant 0 : index
    %c16 = arith.constant 16 : index
    %c0_26 = arith.constant 0 : index
    %31 = vector.load %arg1[%c0_25, %c16, %c0_26] : memref<1x64x128xbf16, #tpu.memory_space<vmem>>, vector<1x46x128xbf16>
    %32 = vector.shape_cast %31 : vector<1x46x128xbf16> to vector<46x128xbf16>
    %c768 = arith.constant 768 : index
    %c0_27 = arith.constant 0 : index
    %33 = vector.load %arg3[%c768, %c0_27] : memref<1152x128xbf16, #tpu.memory_space<vmem>>, vector<128x128xbf16>
    %cst_28 = arith.constant dense<0.000000e+00> : vector<46x128xf32>
    %34 = tpu.matmul %32, %33, %cst_28 {dimension_numbers = #tpu.dot_dimension_numbers<[1], [0], [0], [1], [0, 0, 1, 1], [], []>} : vector<46x128xbf16>, vector<128x128xbf16>, vector<46x128xf32> -> vector<46x128xf32>
    %35 = arith.addf %30, %34 : vector<46x128xf32>
    %c0_29 = arith.constant 0 : index
    %c17 = arith.constant 17 : index
    %c0_30 = arith.constant 0 : index
    %36 = vector.load %arg1[%c0_29, %c17, %c0_30] : memref<1x64x128xbf16, #tpu.memory_space<vmem>>, vector<1x46x128xbf16>
    %37 = vector.shape_cast %36 : vector<1x46x128xbf16> to vector<46x128xbf16>
    %c896 = arith.constant 896 : index
    %c0_31 = arith.constant 0 : index
    %38 = vector.load %arg3[%c896, %c0_31] : memref<1152x128xbf16, #tpu.memory_space<vmem>>, vector<128x128xbf16>
    %cst_32 = arith.constant dense<0.000000e+00> : vector<46x128xf32>
    %39 = tpu.matmul %37, %38, %cst_32 {dimension_numbers = #tpu.dot_dimension_numbers<[1], [0], [0], [1], [0, 0, 1, 1], [], []>} : vector<46x128xbf16>, vector<128x128xbf16>, vector<46x128xf32> -> vector<46x128xf32>
    %40 = arith.addf %35, %39 : vector<46x128xf32>
    %c0_33 = arith.constant 0 : index
    %c18 = arith.constant 18 : index
    %c0_34 = arith.constant 0 : index
    %41 = vector.load %arg1[%c0_33, %c18, %c0_34] : memref<1x64x128xbf16, #tpu.memory_space<vmem>>, vector<1x46x128xbf16>
    %42 = vector.shape_cast %41 : vector<1x46x128xbf16> to vector<46x128xbf16>
    %c1024 = arith.constant 1024 : index
    %c0_35 = arith.constant 0 : index
    %43 = vector.load %arg3[%c1024, %c0_35] : memref<1152x128xbf16, #tpu.memory_space<vmem>>, vector<128x128xbf16>
    %cst_36 = arith.constant dense<0.000000e+00> : vector<46x128xf32>
    %44 = tpu.matmul %42, %43, %cst_36 {dimension_numbers = #tpu.dot_dimension_numbers<[1], [0], [0], [1], [0, 0, 1, 1], [], []>} : vector<46x128xbf16>, vector<128x128xbf16>, vector<46x128xf32> -> vector<46x128xf32>
    %45 = arith.addf %40, %44 : vector<46x128xf32>
    %c0_37 = arith.constant 0 : index
    %c0_38 = arith.constant 0 : index
    %c0_39 = arith.constant 0 : index
    %46 = vector.load %arg2[%c0_37, %c0_38, %c0_39] : memref<1x64x128xbf16, #tpu.memory_space<vmem>>, vector<1x46x128xbf16>
    %47 = vector.shape_cast %46 : vector<1x46x128xbf16> to vector<46x128xbf16>
    %c0_40 = arith.constant 0 : index
    %c0_41 = arith.constant 0 : index
    %48 = vector.load %arg4[%c0_40, %c0_41] : memref<1152x128xbf16, #tpu.memory_space<vmem>>, vector<128x128xbf16>
    %cst_42 = arith.constant dense<0.000000e+00> : vector<46x128xf32>
    %49 = tpu.matmul %47, %48, %cst_42 {dimension_numbers = #tpu.dot_dimension_numbers<[1], [0], [0], [1], [0, 0, 1, 1], [], []>} : vector<46x128xbf16>, vector<128x128xbf16>, vector<46x128xf32> -> vector<46x128xf32>
    %50 = arith.addf %45, %49 : vector<46x128xf32>
    %c0_43 = arith.constant 0 : index
    %c1_44 = arith.constant 1 : index
    %c0_45 = arith.constant 0 : index
    %51 = vector.load %arg2[%c0_43, %c1_44, %c0_45] : memref<1x64x128xbf16, #tpu.memory_space<vmem>>, vector<1x46x128xbf16>
    %52 = vector.shape_cast %51 : vector<1x46x128xbf16> to vector<46x128xbf16>
    %c128_46 = arith.constant 128 : index
    %c0_47 = arith.constant 0 : index
    %53 = vector.load %arg4[%c128_46, %c0_47] : memref<1152x128xbf16, #tpu.memory_space<vmem>>, vector<128x128xbf16>
    %cst_48 = arith.constant dense<0.000000e+00> : vector<46x128xf32>
    %54 = tpu.matmul %52, %53, %cst_48 {dimension_numbers = #tpu.dot_dimension_numbers<[1], [0], [0], [1], [0, 0, 1, 1], [], []>} : vector<46x128xbf16>, vector<128x128xbf16>, vector<46x128xf32> -> vector<46x128xf32>
    %55 = arith.addf %50, %54 : vector<46x128xf32>
    %c0_49 = arith.constant 0 : index
    %c2_50 = arith.constant 2 : index
    %c0_51 = arith.constant 0 : index
    %56 = vector.load %arg2[%c0_49, %c2_50, %c0_51] : memref<1x64x128xbf16, #tpu.memory_space<vmem>>, vector<1x46x128xbf16>
    %57 = vector.shape_cast %56 : vector<1x46x128xbf16> to vector<46x128xbf16>
    %c256_52 = arith.constant 256 : index
    %c0_53 = arith.constant 0 : index
    %58 = vector.load %arg4[%c256_52, %c0_53] : memref<1152x128xbf16, #tpu.memory_space<vmem>>, vector<128x128xbf16>
    %cst_54 = arith.constant dense<0.000000e+00> : vector<46x128xf32>
    %59 = tpu.matmul %57, %58, %cst_54 {dimension_numbers = #tpu.dot_dimension_numbers<[1], [0], [0], [1], [0, 0, 1, 1], [], []>} : vector<46x128xbf16>, vector<128x128xbf16>, vector<46x128xf32> -> vector<46x128xf32>
    %60 = arith.addf %55, %59 : vector<46x128xf32>
    %c0_55 = arith.constant 0 : index
    %c8_56 = arith.constant 8 : index
    %c0_57 = arith.constant 0 : index
    %61 = vector.load %arg2[%c0_55, %c8_56, %c0_57] : memref<1x64x128xbf16, #tpu.memory_space<vmem>>, vector<1x46x128xbf16>
    %62 = vector.shape_cast %61 : vector<1x46x128xbf16> to vector<46x128xbf16>
    %c384_58 = arith.constant 384 : index
    %c0_59 = arith.constant 0 : index
    %63 = vector.load %arg4[%c384_58, %c0_59] : memref<1152x128xbf16, #tpu.memory_space<vmem>>, vector<128x128xbf16>
    %cst_60 = arith.constant dense<0.000000e+00> : vector<46x128xf32>
    %64 = tpu.matmul %62, %63, %cst_60 {dimension_numbers = #tpu.dot_dimension_numbers<[1], [0], [0], [1], [0, 0, 1, 1], [], []>} : vector<46x128xbf16>, vector<128x128xbf16>, vector<46x128xf32> -> vector<46x128xf32>
    %65 = arith.addf %60, %64 : vector<46x128xf32>
    %c0_61 = arith.constant 0 : index
    %c9_62 = arith.constant 9 : index
    %c0_63 = arith.constant 0 : index
    %66 = vector.load %arg2[%c0_61, %c9_62, %c0_63] : memref<1x64x128xbf16, #tpu.memory_space<vmem>>, vector<1x46x128xbf16>
    %67 = vector.shape_cast %66 : vector<1x46x128xbf16> to vector<46x128xbf16>
    %c512_64 = arith.constant 512 : index
    %c0_65 = arith.constant 0 : index
    %68 = vector.load %arg4[%c512_64, %c0_65] : memref<1152x128xbf16, #tpu.memory_space<vmem>>, vector<128x128xbf16>
    %cst_66 = arith.constant dense<0.000000e+00> : vector<46x128xf32>
    %69 = tpu.matmul %67, %68, %cst_66 {dimension_numbers = #tpu.dot_dimension_numbers<[1], [0], [0], [1], [0, 0, 1, 1], [], []>} : vector<46x128xbf16>, vector<128x128xbf16>, vector<46x128xf32> -> vector<46x128xf32>
    %70 = arith.addf %65, %69 : vector<46x128xf32>
    %c0_67 = arith.constant 0 : index
    %c10_68 = arith.constant 10 : index
    %c0_69 = arith.constant 0 : index
    %71 = vector.load %arg2[%c0_67, %c10_68, %c0_69] : memref<1x64x128xbf16, #tpu.memory_space<vmem>>, vector<1x46x128xbf16>
    %72 = vector.shape_cast %71 : vector<1x46x128xbf16> to vector<46x128xbf16>
    %c640_70 = arith.constant 640 : index
    %c0_71 = arith.constant 0 : index
    %73 = vector.load %arg4[%c640_70, %c0_71] : memref<1152x128xbf16, #tpu.memory_space<vmem>>, vector<128x128xbf16>
    %cst_72 = arith.constant dense<0.000000e+00> : vector<46x128xf32>
    %74 = tpu.matmul %72, %73, %cst_72 {dimension_numbers = #tpu.dot_dimension_numbers<[1], [0], [0], [1], [0, 0, 1, 1], [], []>} : vector<46x128xbf16>, vector<128x128xbf16>, vector<46x128xf32> -> vector<46x128xf32>
    %75 = arith.addf %70, %74 : vector<46x128xf32>
    %c0_73 = arith.constant 0 : index
    %c16_74 = arith.constant 16 : index
    %c0_75 = arith.constant 0 : index
    %76 = vector.load %arg2[%c0_73, %c16_74, %c0_75] : memref<1x64x128xbf16, #tpu.memory_space<vmem>>, vector<1x46x128xbf16>
    %77 = vector.shape_cast %76 : vector<1x46x128xbf16> to vector<46x128xbf16>
    %c768_76 = arith.constant 768 : index
    %c0_77 = arith.constant 0 : index
    %78 = vector.load %arg4[%c768_76, %c0_77] : memref<1152x128xbf16, #tpu.memory_space<vmem>>, vector<128x128xbf16>
    %cst_78 = arith.constant dense<0.000000e+00> : vector<46x128xf32>
    %79 = tpu.matmul %77, %78, %cst_78 {dimension_numbers = #tpu.dot_dimension_numbers<[1], [0], [0], [1], [0, 0, 1, 1], [], []>} : vector<46x128xbf16>, vector<128x128xbf16>, vector<46x128xf32> -> vector<46x128xf32>
    %80 = arith.addf %75, %79 : vector<46x128xf32>
    %c0_79 = arith.constant 0 : index
    %c17_80 = arith.constant 17 : index
    %c0_81 = arith.constant 0 : index
    %81 = vector.load %arg2[%c0_79, %c17_80, %c0_81] : memref<1x64x128xbf16, #tpu.memory_space<vmem>>, vector<1x46x128xbf16>
    %82 = vector.shape_cast %81 : vector<1x46x128xbf16> to vector<46x128xbf16>
    %c896_82 = arith.constant 896 : index
    %c0_83 = arith.constant 0 : index
    %83 = vector.load %arg4[%c896_82, %c0_83] : memref<1152x128xbf16, #tpu.memory_space<vmem>>, vector<128x128xbf16>
    %cst_84 = arith.constant dense<0.000000e+00> : vector<46x128xf32>
    %84 = tpu.matmul %82, %83, %cst_84 {dimension_numbers = #tpu.dot_dimension_numbers<[1], [0], [0], [1], [0, 0, 1, 1], [], []>} : vector<46x128xbf16>, vector<128x128xbf16>, vector<46x128xf32> -> vector<46x128xf32>
    %85 = arith.addf %80, %84 : vector<46x128xf32>
    %c0_85 = arith.constant 0 : index
    %c18_86 = arith.constant 18 : index
    %c0_87 = arith.constant 0 : index
    %86 = vector.load %arg2[%c0_85, %c18_86, %c0_87] : memref<1x64x128xbf16, #tpu.memory_space<vmem>>, vector<1x46x128xbf16>
    %87 = vector.shape_cast %86 : vector<1x46x128xbf16> to vector<46x128xbf16>
    %c1024_88 = arith.constant 1024 : index
    %c0_89 = arith.constant 0 : index
    %88 = vector.load %arg4[%c1024_88, %c0_89] : memref<1152x128xbf16, #tpu.memory_space<vmem>>, vector<128x128xbf16>
    %cst_90 = arith.constant dense<0.000000e+00> : vector<46x128xf32>
    %89 = tpu.matmul %87, %88, %cst_90 {dimension_numbers = #tpu.dot_dimension_numbers<[1], [0], [0], [1], [0, 0, 1, 1], [], []>} : vector<46x128xbf16>, vector<128x128xbf16>, vector<46x128xf32> -> vector<46x128xf32>
    %90 = arith.addf %85, %89 : vector<46x128xf32>
    %c0_91 = arith.constant 0 : index
    %c0_92 = arith.constant 0 : index
    %91 = vector.load %arg5[%c0_91, %c0_92] : memref<1x128xf32, #tpu.memory_space<vmem>>, vector<1x128xf32>
    %92 = vector.broadcast %91 : vector<1x128xf32> to vector<46x128xf32>
    %93 = arith.addf %90, %92 : vector<46x128xf32>
    %cst_93 = arith.constant 0.000000e+00 : f32
    %94 = vector.broadcast %cst_93 : f32 to vector<46x128xf32>
    %95 = arith.maximumf %93, %94 : vector<46x128xf32>
    %96 = arith.truncf %95 : vector<46x128xf32> to vector<46x128xbf16>
    %c0_94 = arith.constant 0 : index
    %c0_95 = arith.constant 0 : index
    %c0_96 = arith.constant 0 : index
    %97 = vector.load %arg6[%c0_94, %c0_95, %c0_96] : memref<1x48x128xbf16, #tpu.memory_space<vmem>>, vector<1x46x128xbf16>
    %98 = vector.shape_cast %97 : vector<1x46x128xbf16> to vector<46x128xbf16>
    %99 = vector.shape_cast %96 : vector<46x128xbf16> to vector<1x46x128xbf16>
    tpu.vector_store %arg6[%c0_94, %c0_95, %c0_96], %99 {strides = array<i32>} : memref<1x48x128xbf16, #tpu.memory_space<vmem>>, vector<1x46x128xbf16>,
    return
  }
  func.func @transform_0(%arg0: i32) -> (i32, i32, i32) {
    %c0_i32 = arith.constant 0 : i32
    %c0_i32_0 = arith.constant 0 : i32
    %c0_i32_1 = arith.constant 0 : i32
    return %arg0, %c0_i32, %c0_i32_0 : i32, i32, i32
  }
  func.func @transform_1(%arg0: i32) -> (i32, i32, i32) {
    %c0_i32 = arith.constant 0 : i32
    %c0_i32_0 = arith.constant 0 : i32
    %c0_i32_1 = arith.constant 0 : i32
    return %arg0, %c0_i32, %c0_i32_0 : i32, i32, i32
  }
  func.func @transform_2(%arg0: i32) -> (i32, i32) {
    %c0_i32 = arith.constant 0 : i32
    %c0_i32_0 = arith.constant 0 : i32
    %c0_i32_1 = arith.constant 0 : i32
    return %c0_i32, %c0_i32_0 : i32, i32
  }
  func.func @transform_3(%arg0: i32) -> (i32, i32) {
    %c0_i32 = arith.constant 0 : i32
    %c0_i32_0 = arith.constant 0 : i32
    %c0_i32_1 = arith.constant 0 : i32
    return %c0_i32, %c0_i32_0 : i32, i32
  }
  func.func @transform_4(%arg0: i32) -> (i32, i32) {
    %c0_i32 = arith.constant 0 : i32
    %c0_i32_0 = arith.constant 0 : i32
    %c0_i32_1 = arith.constant 0 : i32
    return %c0_i32, %c0_i32_0 : i32, i32
  }
  func.func @transform_5(%arg0: i32) -> (i32, i32, i32) {
    %c0_i32 = arith.constant 0 : i32
    %c0_i32_0 = arith.constant 0 : i32
    %c0_i32_1 = arith.constant 0 : i32
    return %arg0, %c0_i32, %c0_i32_0 : i32, i32, i32
  }
}

module attributes {stable_mosaic.version = 11 : i64} {
  func.func @_matmul_bias_kernel(%arg0: i32, %arg1: i32, %arg2: memref<32x128xbf16, #tpu.memory_space<vmem>>, %arg3: memref<128x256xbf16, #tpu.memory_space<vmem>>, %arg4: memref<1x256xf32, #tpu.memory_space<vmem>>, %arg5: memref<32x256xbf16, #tpu.memory_space<vmem>>) attributes {dimension_semantics = [#tpu.dimension_semantics<parallel>, #tpu.dimension_semantics<parallel>], iteration_bounds = array<i64: 1, 1>, scalar_prefetch = 0 : i64, scratch_operands = 0 : i64, tpu.core_type = #tpu.core_type<tc>, window_params = [{transform_indices = @transform_0, window_bounds = array<i64: 32, 128>}, {transform_indices = @transform_1, window_bounds = array<i64: 128, 256>}, {transform_indices = @transform_2, window_bounds = array<i64: 1, 256>}, {transform_indices = @transform_3, window_bounds = array<i64: 32, 256>}]} {
    %c0 = arith.constant 0 : index
    %c0_0 = arith.constant 0 : index
    %0 = vector.load %arg2[%c0, %c0_0] : memref<32x128xbf16, #tpu.memory_space<vmem>>, vector<32x128xbf16>
    %c0_1 = arith.constant 0 : index
    %c0_2 = arith.constant 0 : index
    %1 = vector.load %arg3[%c0_1, %c0_2] : memref<128x256xbf16, #tpu.memory_space<vmem>>, vector<128x256xbf16>
    %cst = arith.constant dense<0.000000e+00> : vector<32x256xf32>
    %2 = tpu.matmul %0, %1, %cst {dimension_numbers = #tpu.dot_dimension_numbers<[1], [0], [0], [1], [0, 0, 1, 1], [], []>} : vector<32x128xbf16>, vector<128x256xbf16>, vector<32x256xf32> -> vector<32x256xf32>
    %c0_3 = arith.constant 0 : index
    %c0_4 = arith.constant 0 : index
    %3 = vector.load %arg4[%c0_3, %c0_4] : memref<1x256xf32, #tpu.memory_space<vmem>>, vector<1x256xf32>
    %4 = vector.broadcast %3 : vector<1x256xf32> to vector<32x256xf32>
    %5 = arith.addf %2, %4 : vector<32x256xf32>
    %6 = arith.truncf %5 : vector<32x256xf32> to vector<32x256xbf16>
    %c0_5 = arith.constant 0 : index
    %c0_6 = arith.constant 0 : index
    %7 = vector.load %arg5[%c0_5, %c0_6] : memref<32x256xbf16, #tpu.memory_space<vmem>>, vector<32x256xbf16>
    tpu.vector_store %arg5[%c0_5, %c0_6], %6 {strides = array<i32>} : memref<32x256xbf16, #tpu.memory_space<vmem>>, vector<32x256xbf16>,
    return
  }
  func.func @transform_0(%arg0: i32, %arg1: i32) -> (i32, i32) {
    %c0_i32 = arith.constant 0 : i32
    %c0_i32_0 = arith.constant 0 : i32
    return %arg0, %c0_i32 : i32, i32
  }
  func.func @transform_1(%arg0: i32, %arg1: i32) -> (i32, i32) {
    %c0_i32 = arith.constant 0 : i32
    %c0_i32_0 = arith.constant 0 : i32
    return %c0_i32, %arg1 : i32, i32
  }
  func.func @transform_2(%arg0: i32, %arg1: i32) -> (i32, i32) {
    %c0_i32 = arith.constant 0 : i32
    %c0_i32_0 = arith.constant 0 : i32
    return %c0_i32, %arg1 : i32, i32
  }
  func.func @transform_3(%arg0: i32, %arg1: i32) -> (i32, i32) {
    %c0_i32 = arith.constant 0 : i32
    return %arg0, %arg1 : i32, i32
  }
}

module attributes {stable_mosaic.version = 11 : i64} {
  func.func @_conv3x3_kernel(%arg0: i32, %arg1: memref<1x64x64xbf16, #tpu.memory_space<vmem>>, %arg2: memref<1x64x64xbf16, #tpu.memory_space<vmem>>, %arg3: memref<576x64xbf16, #tpu.memory_space<vmem>>, %arg4: memref<576x64xbf16, #tpu.memory_space<vmem>>, %arg5: memref<1x64xf32, #tpu.memory_space<vmem>>, %arg6: memref<1x48x64xbf16, #tpu.memory_space<vmem>>) attributes {dimension_semantics = [#tpu.dimension_semantics<parallel>], iteration_bounds = array<i64: 2>, scalar_prefetch = 0 : i64, scratch_operands = 0 : i64, tpu.core_type = #tpu.core_type<tc>, window_params = [{transform_indices = @transform_0, window_bounds = array<i64: 1, 64, 64>}, {transform_indices = @transform_1, window_bounds = array<i64: 1, 64, 64>}, {pipeline_mode = #tpu.pipeline_mode<synchronous>, transform_indices = @transform_2, window_bounds = array<i64: 576, 64>}, {pipeline_mode = #tpu.pipeline_mode<synchronous>, transform_indices = @transform_3, window_bounds = array<i64: 576, 64>}, {pipeline_mode = #tpu.pipeline_mode<synchronous>, transform_indices = @transform_4, window_bounds = array<i64: 1, 64>}, {transform_indices = @transform_5, window_bounds = array<i64: 1, 48, 64>}]} {
    %cst = arith.constant 0.000000e+00 : f32
    %0 = vector.broadcast %cst : f32 to vector<46x64xf32>
    %c0 = arith.constant 0 : index
    %c0_0 = arith.constant 0 : index
    %c0_1 = arith.constant 0 : index
    %1 = vector.load %arg1[%c0, %c0_0, %c0_1] : memref<1x64x64xbf16, #tpu.memory_space<vmem>>, vector<1x46x64xbf16>
    %2 = vector.shape_cast %1 : vector<1x46x64xbf16> to vector<46x64xbf16>
    %c0_2 = arith.constant 0 : index
    %c0_3 = arith.constant 0 : index
    %3 = vector.load %arg3[%c0_2, %c0_3] : memref<576x64xbf16, #tpu.memory_space<vmem>>, vector<64x64xbf16>
    %cst_4 = arith.constant dense<0.000000e+00> : vector<46x64xf32>
    %4 = tpu.matmul %2, %3, %cst_4 {dimension_numbers = #tpu.dot_dimension_numbers<[1], [0], [0], [1], [0, 0, 1, 1], [], []>} : vector<46x64xbf16>, vector<64x64xbf16>, vector<46x64xf32> -> vector<46x64xf32>
    %5 = arith.addf %0, %4 : vector<46x64xf32>
    %c0_5 = arith.constant 0 : index
    %c1 = arith.constant 1 : index
    %c0_6 = arith.constant 0 : index
    %6 = vector.load %arg1[%c0_5, %c1, %c0_6] : memref<1x64x64xbf16, #tpu.memory_space<vmem>>, vector<1x46x64xbf16>
    %7 = vector.shape_cast %6 : vector<1x46x64xbf16> to vector<46x64xbf16>
    %c64 = arith.constant 64 : index
    %c0_7 = arith.constant 0 : index
    %8 = vector.load %arg3[%c64, %c0_7] : memref<576x64xbf16, #tpu.memory_space<vmem>>, vector<64x64xbf16>
    %cst_8 = arith.constant dense<0.000000e+00> : vector<46x64xf32>
    %9 = tpu.matmul %7, %8, %cst_8 {dimension_numbers = #tpu.dot_dimension_numbers<[1], [0], [0], [1], [0, 0, 1, 1], [], []>} : vector<46x64xbf16>, vector<64x64xbf16>, vector<46x64xf32> -> vector<46x64xf32>
    %10 = arith.addf %5, %9 : vector<46x64xf32>
    %c0_9 = arith.constant 0 : index
    %c2 = arith.constant 2 : index
    %c0_10 = arith.constant 0 : index
    %11 = vector.load %arg1[%c0_9, %c2, %c0_10] : memref<1x64x64xbf16, #tpu.memory_space<vmem>>, vector<1x46x64xbf16>
    %12 = vector.shape_cast %11 : vector<1x46x64xbf16> to vector<46x64xbf16>
    %c128 = arith.constant 128 : index
    %c0_11 = arith.constant 0 : index
    %13 = vector.load %arg3[%c128, %c0_11] : memref<576x64xbf16, #tpu.memory_space<vmem>>, vector<64x64xbf16>
    %cst_12 = arith.constant dense<0.000000e+00> : vector<46x64xf32>
    %14 = tpu.matmul %12, %13, %cst_12 {dimension_numbers = #tpu.dot_dimension_numbers<[1], [0], [0], [1], [0, 0, 1, 1], [], []>} : vector<46x64xbf16>, vector<64x64xbf16>, vector<46x64xf32> -> vector<46x64xf32>
    %15 = arith.addf %10, %14 : vector<46x64xf32>
    %c0_13 = arith.constant 0 : index
    %c8 = arith.constant 8 : index
    %c0_14 = arith.constant 0 : index
    %16 = vector.load %arg1[%c0_13, %c8, %c0_14] : memref<1x64x64xbf16, #tpu.memory_space<vmem>>, vector<1x46x64xbf16>
    %17 = vector.shape_cast %16 : vector<1x46x64xbf16> to vector<46x64xbf16>
    %c192 = arith.constant 192 : index
    %c0_15 = arith.constant 0 : index
    %18 = vector.load %arg3[%c192, %c0_15] : memref<576x64xbf16, #tpu.memory_space<vmem>>, vector<64x64xbf16>
    %cst_16 = arith.constant dense<0.000000e+00> : vector<46x64xf32>
    %19 = tpu.matmul %17, %18, %cst_16 {dimension_numbers = #tpu.dot_dimension_numbers<[1], [0], [0], [1], [0, 0, 1, 1], [], []>} : vector<46x64xbf16>, vector<64x64xbf16>, vector<46x64xf32> -> vector<46x64xf32>
    %20 = arith.addf %15, %19 : vector<46x64xf32>
    %c0_17 = arith.constant 0 : index
    %c9 = arith.constant 9 : index
    %c0_18 = arith.constant 0 : index
    %21 = vector.load %arg1[%c0_17, %c9, %c0_18] : memref<1x64x64xbf16, #tpu.memory_space<vmem>>, vector<1x46x64xbf16>
    %22 = vector.shape_cast %21 : vector<1x46x64xbf16> to vector<46x64xbf16>
    %c256 = arith.constant 256 : index
    %c0_19 = arith.constant 0 : index
    %23 = vector.load %arg3[%c256, %c0_19] : memref<576x64xbf16, #tpu.memory_space<vmem>>, vector<64x64xbf16>
    %cst_20 = arith.constant dense<0.000000e+00> : vector<46x64xf32>
    %24 = tpu.matmul %22, %23, %cst_20 {dimension_numbers = #tpu.dot_dimension_numbers<[1], [0], [0], [1], [0, 0, 1, 1], [], []>} : vector<46x64xbf16>, vector<64x64xbf16>, vector<46x64xf32> -> vector<46x64xf32>
    %25 = arith.addf %20, %24 : vector<46x64xf32>
    %c0_21 = arith.constant 0 : index
    %c10 = arith.constant 10 : index
    %c0_22 = arith.constant 0 : index
    %26 = vector.load %arg1[%c0_21, %c10, %c0_22] : memref<1x64x64xbf16, #tpu.memory_space<vmem>>, vector<1x46x64xbf16>
    %27 = vector.shape_cast %26 : vector<1x46x64xbf16> to vector<46x64xbf16>
    %c320 = arith.constant 320 : index
    %c0_23 = arith.constant 0 : index
    %28 = vector.load %arg3[%c320, %c0_23] : memref<576x64xbf16, #tpu.memory_space<vmem>>, vector<64x64xbf16>
    %cst_24 = arith.constant dense<0.000000e+00> : vector<46x64xf32>
    %29 = tpu.matmul %27, %28, %cst_24 {dimension_numbers = #tpu.dot_dimension_numbers<[1], [0], [0], [1], [0, 0, 1, 1], [], []>} : vector<46x64xbf16>, vector<64x64xbf16>, vector<46x64xf32> -> vector<46x64xf32>
    %30 = arith.addf %25, %29 : vector<46x64xf32>
    %c0_25 = arith.constant 0 : index
    %c16 = arith.constant 16 : index
    %c0_26 = arith.constant 0 : index
    %31 = vector.load %arg1[%c0_25, %c16, %c0_26] : memref<1x64x64xbf16, #tpu.memory_space<vmem>>, vector<1x46x64xbf16>
    %32 = vector.shape_cast %31 : vector<1x46x64xbf16> to vector<46x64xbf16>
    %c384 = arith.constant 384 : index
    %c0_27 = arith.constant 0 : index
    %33 = vector.load %arg3[%c384, %c0_27] : memref<576x64xbf16, #tpu.memory_space<vmem>>, vector<64x64xbf16>
    %cst_28 = arith.constant dense<0.000000e+00> : vector<46x64xf32>
    %34 = tpu.matmul %32, %33, %cst_28 {dimension_numbers = #tpu.dot_dimension_numbers<[1], [0], [0], [1], [0, 0, 1, 1], [], []>} : vector<46x64xbf16>, vector<64x64xbf16>, vector<46x64xf32> -> vector<46x64xf32>
    %35 = arith.addf %30, %34 : vector<46x64xf32>
    %c0_29 = arith.constant 0 : index
    %c17 = arith.constant 17 : index
    %c0_30 = arith.constant 0 : index
    %36 = vector.load %arg1[%c0_29, %c17, %c0_30] : memref<1x64x64xbf16, #tpu.memory_space<vmem>>, vector<1x46x64xbf16>
    %37 = vector.shape_cast %36 : vector<1x46x64xbf16> to vector<46x64xbf16>
    %c448 = arith.constant 448 : index
    %c0_31 = arith.constant 0 : index
    %38 = vector.load %arg3[%c448, %c0_31] : memref<576x64xbf16, #tpu.memory_space<vmem>>, vector<64x64xbf16>
    %cst_32 = arith.constant dense<0.000000e+00> : vector<46x64xf32>
    %39 = tpu.matmul %37, %38, %cst_32 {dimension_numbers = #tpu.dot_dimension_numbers<[1], [0], [0], [1], [0, 0, 1, 1], [], []>} : vector<46x64xbf16>, vector<64x64xbf16>, vector<46x64xf32> -> vector<46x64xf32>
    %40 = arith.addf %35, %39 : vector<46x64xf32>
    %c0_33 = arith.constant 0 : index
    %c18 = arith.constant 18 : index
    %c0_34 = arith.constant 0 : index
    %41 = vector.load %arg1[%c0_33, %c18, %c0_34] : memref<1x64x64xbf16, #tpu.memory_space<vmem>>, vector<1x46x64xbf16>
    %42 = vector.shape_cast %41 : vector<1x46x64xbf16> to vector<46x64xbf16>
    %c512 = arith.constant 512 : index
    %c0_35 = arith.constant 0 : index
    %43 = vector.load %arg3[%c512, %c0_35] : memref<576x64xbf16, #tpu.memory_space<vmem>>, vector<64x64xbf16>
    %cst_36 = arith.constant dense<0.000000e+00> : vector<46x64xf32>
    %44 = tpu.matmul %42, %43, %cst_36 {dimension_numbers = #tpu.dot_dimension_numbers<[1], [0], [0], [1], [0, 0, 1, 1], [], []>} : vector<46x64xbf16>, vector<64x64xbf16>, vector<46x64xf32> -> vector<46x64xf32>
    %45 = arith.addf %40, %44 : vector<46x64xf32>
    %c0_37 = arith.constant 0 : index
    %c0_38 = arith.constant 0 : index
    %c0_39 = arith.constant 0 : index
    %46 = vector.load %arg2[%c0_37, %c0_38, %c0_39] : memref<1x64x64xbf16, #tpu.memory_space<vmem>>, vector<1x46x64xbf16>
    %47 = vector.shape_cast %46 : vector<1x46x64xbf16> to vector<46x64xbf16>
    %c0_40 = arith.constant 0 : index
    %c0_41 = arith.constant 0 : index
    %48 = vector.load %arg4[%c0_40, %c0_41] : memref<576x64xbf16, #tpu.memory_space<vmem>>, vector<64x64xbf16>
    %cst_42 = arith.constant dense<0.000000e+00> : vector<46x64xf32>
    %49 = tpu.matmul %47, %48, %cst_42 {dimension_numbers = #tpu.dot_dimension_numbers<[1], [0], [0], [1], [0, 0, 1, 1], [], []>} : vector<46x64xbf16>, vector<64x64xbf16>, vector<46x64xf32> -> vector<46x64xf32>
    %50 = arith.addf %45, %49 : vector<46x64xf32>
    %c0_43 = arith.constant 0 : index
    %c1_44 = arith.constant 1 : index
    %c0_45 = arith.constant 0 : index
    %51 = vector.load %arg2[%c0_43, %c1_44, %c0_45] : memref<1x64x64xbf16, #tpu.memory_space<vmem>>, vector<1x46x64xbf16>
    %52 = vector.shape_cast %51 : vector<1x46x64xbf16> to vector<46x64xbf16>
    %c64_46 = arith.constant 64 : index
    %c0_47 = arith.constant 0 : index
    %53 = vector.load %arg4[%c64_46, %c0_47] : memref<576x64xbf16, #tpu.memory_space<vmem>>, vector<64x64xbf16>
    %cst_48 = arith.constant dense<0.000000e+00> : vector<46x64xf32>
    %54 = tpu.matmul %52, %53, %cst_48 {dimension_numbers = #tpu.dot_dimension_numbers<[1], [0], [0], [1], [0, 0, 1, 1], [], []>} : vector<46x64xbf16>, vector<64x64xbf16>, vector<46x64xf32> -> vector<46x64xf32>
    %55 = arith.addf %50, %54 : vector<46x64xf32>
    %c0_49 = arith.constant 0 : index
    %c2_50 = arith.constant 2 : index
    %c0_51 = arith.constant 0 : index
    %56 = vector.load %arg2[%c0_49, %c2_50, %c0_51] : memref<1x64x64xbf16, #tpu.memory_space<vmem>>, vector<1x46x64xbf16>
    %57 = vector.shape_cast %56 : vector<1x46x64xbf16> to vector<46x64xbf16>
    %c128_52 = arith.constant 128 : index
    %c0_53 = arith.constant 0 : index
    %58 = vector.load %arg4[%c128_52, %c0_53] : memref<576x64xbf16, #tpu.memory_space<vmem>>, vector<64x64xbf16>
    %cst_54 = arith.constant dense<0.000000e+00> : vector<46x64xf32>
    %59 = tpu.matmul %57, %58, %cst_54 {dimension_numbers = #tpu.dot_dimension_numbers<[1], [0], [0], [1], [0, 0, 1, 1], [], []>} : vector<46x64xbf16>, vector<64x64xbf16>, vector<46x64xf32> -> vector<46x64xf32>
    %60 = arith.addf %55, %59 : vector<46x64xf32>
    %c0_55 = arith.constant 0 : index
    %c8_56 = arith.constant 8 : index
    %c0_57 = arith.constant 0 : index
    %61 = vector.load %arg2[%c0_55, %c8_56, %c0_57] : memref<1x64x64xbf16, #tpu.memory_space<vmem>>, vector<1x46x64xbf16>
    %62 = vector.shape_cast %61 : vector<1x46x64xbf16> to vector<46x64xbf16>
    %c192_58 = arith.constant 192 : index
    %c0_59 = arith.constant 0 : index
    %63 = vector.load %arg4[%c192_58, %c0_59] : memref<576x64xbf16, #tpu.memory_space<vmem>>, vector<64x64xbf16>
    %cst_60 = arith.constant dense<0.000000e+00> : vector<46x64xf32>
    %64 = tpu.matmul %62, %63, %cst_60 {dimension_numbers = #tpu.dot_dimension_numbers<[1], [0], [0], [1], [0, 0, 1, 1], [], []>} : vector<46x64xbf16>, vector<64x64xbf16>, vector<46x64xf32> -> vector<46x64xf32>
    %65 = arith.addf %60, %64 : vector<46x64xf32>
    %c0_61 = arith.constant 0 : index
    %c9_62 = arith.constant 9 : index
    %c0_63 = arith.constant 0 : index
    %66 = vector.load %arg2[%c0_61, %c9_62, %c0_63] : memref<1x64x64xbf16, #tpu.memory_space<vmem>>, vector<1x46x64xbf16>
    %67 = vector.shape_cast %66 : vector<1x46x64xbf16> to vector<46x64xbf16>
    %c256_64 = arith.constant 256 : index
    %c0_65 = arith.constant 0 : index
    %68 = vector.load %arg4[%c256_64, %c0_65] : memref<576x64xbf16, #tpu.memory_space<vmem>>, vector<64x64xbf16>
    %cst_66 = arith.constant dense<0.000000e+00> : vector<46x64xf32>
    %69 = tpu.matmul %67, %68, %cst_66 {dimension_numbers = #tpu.dot_dimension_numbers<[1], [0], [0], [1], [0, 0, 1, 1], [], []>} : vector<46x64xbf16>, vector<64x64xbf16>, vector<46x64xf32> -> vector<46x64xf32>
    %70 = arith.addf %65, %69 : vector<46x64xf32>
    %c0_67 = arith.constant 0 : index
    %c10_68 = arith.constant 10 : index
    %c0_69 = arith.constant 0 : index
    %71 = vector.load %arg2[%c0_67, %c10_68, %c0_69] : memref<1x64x64xbf16, #tpu.memory_space<vmem>>, vector<1x46x64xbf16>
    %72 = vector.shape_cast %71 : vector<1x46x64xbf16> to vector<46x64xbf16>
    %c320_70 = arith.constant 320 : index
    %c0_71 = arith.constant 0 : index
    %73 = vector.load %arg4[%c320_70, %c0_71] : memref<576x64xbf16, #tpu.memory_space<vmem>>, vector<64x64xbf16>
    %cst_72 = arith.constant dense<0.000000e+00> : vector<46x64xf32>
    %74 = tpu.matmul %72, %73, %cst_72 {dimension_numbers = #tpu.dot_dimension_numbers<[1], [0], [0], [1], [0, 0, 1, 1], [], []>} : vector<46x64xbf16>, vector<64x64xbf16>, vector<46x64xf32> -> vector<46x64xf32>
    %75 = arith.addf %70, %74 : vector<46x64xf32>
    %c0_73 = arith.constant 0 : index
    %c16_74 = arith.constant 16 : index
    %c0_75 = arith.constant 0 : index
    %76 = vector.load %arg2[%c0_73, %c16_74, %c0_75] : memref<1x64x64xbf16, #tpu.memory_space<vmem>>, vector<1x46x64xbf16>
    %77 = vector.shape_cast %76 : vector<1x46x64xbf16> to vector<46x64xbf16>
    %c384_76 = arith.constant 384 : index
    %c0_77 = arith.constant 0 : index
    %78 = vector.load %arg4[%c384_76, %c0_77] : memref<576x64xbf16, #tpu.memory_space<vmem>>, vector<64x64xbf16>
    %cst_78 = arith.constant dense<0.000000e+00> : vector<46x64xf32>
    %79 = tpu.matmul %77, %78, %cst_78 {dimension_numbers = #tpu.dot_dimension_numbers<[1], [0], [0], [1], [0, 0, 1, 1], [], []>} : vector<46x64xbf16>, vector<64x64xbf16>, vector<46x64xf32> -> vector<46x64xf32>
    %80 = arith.addf %75, %79 : vector<46x64xf32>
    %c0_79 = arith.constant 0 : index
    %c17_80 = arith.constant 17 : index
    %c0_81 = arith.constant 0 : index
    %81 = vector.load %arg2[%c0_79, %c17_80, %c0_81] : memref<1x64x64xbf16, #tpu.memory_space<vmem>>, vector<1x46x64xbf16>
    %82 = vector.shape_cast %81 : vector<1x46x64xbf16> to vector<46x64xbf16>
    %c448_82 = arith.constant 448 : index
    %c0_83 = arith.constant 0 : index
    %83 = vector.load %arg4[%c448_82, %c0_83] : memref<576x64xbf16, #tpu.memory_space<vmem>>, vector<64x64xbf16>
    %cst_84 = arith.constant dense<0.000000e+00> : vector<46x64xf32>
    %84 = tpu.matmul %82, %83, %cst_84 {dimension_numbers = #tpu.dot_dimension_numbers<[1], [0], [0], [1], [0, 0, 1, 1], [], []>} : vector<46x64xbf16>, vector<64x64xbf16>, vector<46x64xf32> -> vector<46x64xf32>
    %85 = arith.addf %80, %84 : vector<46x64xf32>
    %c0_85 = arith.constant 0 : index
    %c18_86 = arith.constant 18 : index
    %c0_87 = arith.constant 0 : index
    %86 = vector.load %arg2[%c0_85, %c18_86, %c0_87] : memref<1x64x64xbf16, #tpu.memory_space<vmem>>, vector<1x46x64xbf16>
    %87 = vector.shape_cast %86 : vector<1x46x64xbf16> to vector<46x64xbf16>
    %c512_88 = arith.constant 512 : index
    %c0_89 = arith.constant 0 : index
    %88 = vector.load %arg4[%c512_88, %c0_89] : memref<576x64xbf16, #tpu.memory_space<vmem>>, vector<64x64xbf16>
    %cst_90 = arith.constant dense<0.000000e+00> : vector<46x64xf32>
    %89 = tpu.matmul %87, %88, %cst_90 {dimension_numbers = #tpu.dot_dimension_numbers<[1], [0], [0], [1], [0, 0, 1, 1], [], []>} : vector<46x64xbf16>, vector<64x64xbf16>, vector<46x64xf32> -> vector<46x64xf32>
    %90 = arith.addf %85, %89 : vector<46x64xf32>
    %c0_91 = arith.constant 0 : index
    %c0_92 = arith.constant 0 : index
    %91 = vector.load %arg5[%c0_91, %c0_92] : memref<1x64xf32, #tpu.memory_space<vmem>>, vector<1x64xf32>
    %92 = vector.broadcast %91 : vector<1x64xf32> to vector<46x64xf32>
    %93 = arith.addf %90, %92 : vector<46x64xf32>
    %cst_93 = arith.constant 0.000000e+00 : f32
    %94 = vector.broadcast %cst_93 : f32 to vector<46x64xf32>
    %95 = arith.maximumf %93, %94 : vector<46x64xf32>
    %96 = arith.truncf %95 : vector<46x64xf32> to vector<46x64xbf16>
    %c0_94 = arith.constant 0 : index
    %c0_95 = arith.constant 0 : index
    %c0_96 = arith.constant 0 : index
    %97 = vector.load %arg6[%c0_94, %c0_95, %c0_96] : memref<1x48x64xbf16, #tpu.memory_space<vmem>>, vector<1x46x64xbf16>
    %98 = vector.shape_cast %97 : vector<1x46x64xbf16> to vector<46x64xbf16>
    %99 = vector.shape_cast %96 : vector<46x64xbf16> to vector<1x46x64xbf16>
    tpu.vector_store %arg6[%c0_94, %c0_95, %c0_96], %99 {strides = array<i32>} : memref<1x48x64xbf16, #tpu.memory_space<vmem>>, vector<1x46x64xbf16>,
    return
  }
  func.func @transform_0(%arg0: i32) -> (i32, i32, i32) {
    %c0_i32 = arith.constant 0 : i32
    %c0_i32_0 = arith.constant 0 : i32
    %c0_i32_1 = arith.constant 0 : i32
    return %arg0, %c0_i32, %c0_i32_0 : i32, i32, i32
  }
  func.func @transform_1(%arg0: i32) -> (i32, i32, i32) {
    %c0_i32 = arith.constant 0 : i32
    %c0_i32_0 = arith.constant 0 : i32
    %c0_i32_1 = arith.constant 0 : i32
    return %arg0, %c0_i32, %c0_i32_0 : i32, i32, i32
  }
  func.func @transform_2(%arg0: i32) -> (i32, i32) {
    %c0_i32 = arith.constant 0 : i32
    %c0_i32_0 = arith.constant 0 : i32
    %c0_i32_1 = arith.constant 0 : i32
    return %c0_i32, %c0_i32_0 : i32, i32
  }
  func.func @transform_3(%arg0: i32) -> (i32, i32) {
    %c0_i32 = arith.constant 0 : i32
    %c0_i32_0 = arith.constant 0 : i32
    %c0_i32_1 = arith.constant 0 : i32
    return %c0_i32, %c0_i32_0 : i32, i32
  }
  func.func @transform_4(%arg0: i32) -> (i32, i32) {
    %c0_i32 = arith.constant 0 : i32
    %c0_i32_0 = arith.constant 0 : i32
    %c0_i32_1 = arith.constant 0 : i32
    return %c0_i32, %c0_i32_0 : i32, i32
  }
  func.func @transform_5(%arg0: i32) -> (i32, i32, i32) {
    %c0_i32 = arith.constant 0 : i32
    %c0_i32_0 = arith.constant 0 : i32
    %c0_i32_1 = arith.constant 0 : i32
    return %arg0, %c0_i32, %c0_i32_0 : i32, i32, i32
  }
}

module attributes {stable_mosaic.version = 11 : i64} {
  func.func @_conv3x3_kernel(%arg0: i32, %arg1: memref<1x36x64xbf16, #tpu.memory_space<vmem>>, %arg2: memref<576x64xbf16, #tpu.memory_space<vmem>>, %arg3: memref<1x64xf32, #tpu.memory_space<vmem>>, %arg4: memref<1x24x64xbf16, #tpu.memory_space<vmem>>) attributes {dimension_semantics = [#tpu.dimension_semantics<parallel>], iteration_bounds = array<i64: 2>, scalar_prefetch = 0 : i64, scratch_operands = 0 : i64, tpu.core_type = #tpu.core_type<tc>, window_params = [{transform_indices = @transform_0, window_bounds = array<i64: 1, 36, 64>}, {pipeline_mode = #tpu.pipeline_mode<synchronous>, transform_indices = @transform_1, window_bounds = array<i64: 576, 64>}, {pipeline_mode = #tpu.pipeline_mode<synchronous>, transform_indices = @transform_2, window_bounds = array<i64: 1, 64>}, {transform_indices = @transform_3, window_bounds = array<i64: 1, 24, 64>}]} {
    %cst = arith.constant 0.000000e+00 : f32
    %0 = vector.broadcast %cst : f32 to vector<22x64xf32>
    %c0 = arith.constant 0 : index
    %c0_0 = arith.constant 0 : index
    %c0_1 = arith.constant 0 : index
    %1 = vector.load %arg1[%c0, %c0_0, %c0_1] : memref<1x36x64xbf16, #tpu.memory_space<vmem>>, vector<1x22x64xbf16>
    %2 = vector.shape_cast %1 : vector<1x22x64xbf16> to vector<22x64xbf16>
    %c0_2 = arith.constant 0 : index
    %c0_3 = arith.constant 0 : index
    %3 = vector.load %arg2[%c0_2, %c0_3] : memref<576x64xbf16, #tpu.memory_space<vmem>>, vector<64x64xbf16>
    %cst_4 = arith.constant dense<0.000000e+00> : vector<22x64xf32>
    %4 = tpu.matmul %2, %3, %cst_4 {dimension_numbers = #tpu.dot_dimension_numbers<[1], [0], [0], [1], [0, 0, 1, 1], [], []>} : vector<22x64xbf16>, vector<64x64xbf16>, vector<22x64xf32> -> vector<22x64xf32>
    %5 = arith.addf %0, %4 : vector<22x64xf32>
    %c0_5 = arith.constant 0 : index
    %c1 = arith.constant 1 : index
    %c0_6 = arith.constant 0 : index
    %6 = vector.load %arg1[%c0_5, %c1, %c0_6] : memref<1x36x64xbf16, #tpu.memory_space<vmem>>, vector<1x22x64xbf16>
    %7 = vector.shape_cast %6 : vector<1x22x64xbf16> to vector<22x64xbf16>
    %c64 = arith.constant 64 : index
    %c0_7 = arith.constant 0 : index
    %8 = vector.load %arg2[%c64, %c0_7] : memref<576x64xbf16, #tpu.memory_space<vmem>>, vector<64x64xbf16>
    %cst_8 = arith.constant dense<0.000000e+00> : vector<22x64xf32>
    %9 = tpu.matmul %7, %8, %cst_8 {dimension_numbers = #tpu.dot_dimension_numbers<[1], [0], [0], [1], [0, 0, 1, 1], [], []>} : vector<22x64xbf16>, vector<64x64xbf16>, vector<22x64xf32> -> vector<22x64xf32>
    %10 = arith.addf %5, %9 : vector<22x64xf32>
    %c0_9 = arith.constant 0 : index
    %c2 = arith.constant 2 : index
    %c0_10 = arith.constant 0 : index
    %11 = vector.load %arg1[%c0_9, %c2, %c0_10] : memref<1x36x64xbf16, #tpu.memory_space<vmem>>, vector<1x22x64xbf16>
    %12 = vector.shape_cast %11 : vector<1x22x64xbf16> to vector<22x64xbf16>
    %c128 = arith.constant 128 : index
    %c0_11 = arith.constant 0 : index
    %13 = vector.load %arg2[%c128, %c0_11] : memref<576x64xbf16, #tpu.memory_space<vmem>>, vector<64x64xbf16>
    %cst_12 = arith.constant dense<0.000000e+00> : vector<22x64xf32>
    %14 = tpu.matmul %12, %13, %cst_12 {dimension_numbers = #tpu.dot_dimension_numbers<[1], [0], [0], [1], [0, 0, 1, 1], [], []>} : vector<22x64xbf16>, vector<64x64xbf16>, vector<22x64xf32> -> vector<22x64xf32>
    %15 = arith.addf %10, %14 : vector<22x64xf32>
    %c0_13 = arith.constant 0 : index
    %c6 = arith.constant 6 : index
    %c0_14 = arith.constant 0 : index
    %16 = vector.load %arg1[%c0_13, %c6, %c0_14] : memref<1x36x64xbf16, #tpu.memory_space<vmem>>, vector<1x22x64xbf16>
    %17 = vector.shape_cast %16 : vector<1x22x64xbf16> to vector<22x64xbf16>
    %c192 = arith.constant 192 : index
    %c0_15 = arith.constant 0 : index
    %18 = vector.load %arg2[%c192, %c0_15] : memref<576x64xbf16, #tpu.memory_space<vmem>>, vector<64x64xbf16>
    %cst_16 = arith.constant dense<0.000000e+00> : vector<22x64xf32>
    %19 = tpu.matmul %17, %18, %cst_16 {dimension_numbers = #tpu.dot_dimension_numbers<[1], [0], [0], [1], [0, 0, 1, 1], [], []>} : vector<22x64xbf16>, vector<64x64xbf16>, vector<22x64xf32> -> vector<22x64xf32>
    %20 = arith.addf %15, %19 : vector<22x64xf32>
    %c0_17 = arith.constant 0 : index
    %c7 = arith.constant 7 : index
    %c0_18 = arith.constant 0 : index
    %21 = vector.load %arg1[%c0_17, %c7, %c0_18] : memref<1x36x64xbf16, #tpu.memory_space<vmem>>, vector<1x22x64xbf16>
    %22 = vector.shape_cast %21 : vector<1x22x64xbf16> to vector<22x64xbf16>
    %c256 = arith.constant 256 : index
    %c0_19 = arith.constant 0 : index
    %23 = vector.load %arg2[%c256, %c0_19] : memref<576x64xbf16, #tpu.memory_space<vmem>>, vector<64x64xbf16>
    %cst_20 = arith.constant dense<0.000000e+00> : vector<22x64xf32>
    %24 = tpu.matmul %22, %23, %cst_20 {dimension_numbers = #tpu.dot_dimension_numbers<[1], [0], [0], [1], [0, 0, 1, 1], [], []>} : vector<22x64xbf16>, vector<64x64xbf16>, vector<22x64xf32> -> vector<22x64xf32>
    %25 = arith.addf %20, %24 : vector<22x64xf32>
    %c0_21 = arith.constant 0 : index
    %c8 = arith.constant 8 : index
    %c0_22 = arith.constant 0 : index
    %26 = vector.load %arg1[%c0_21, %c8, %c0_22] : memref<1x36x64xbf16, #tpu.memory_space<vmem>>, vector<1x22x64xbf16>
    %27 = vector.shape_cast %26 : vector<1x22x64xbf16> to vector<22x64xbf16>
    %c320 = arith.constant 320 : index
    %c0_23 = arith.constant 0 : index
    %28 = vector.load %arg2[%c320, %c0_23] : memref<576x64xbf16, #tpu.memory_space<vmem>>, vector<64x64xbf16>
    %cst_24 = arith.constant dense<0.000000e+00> : vector<22x64xf32>
    %29 = tpu.matmul %27, %28, %cst_24 {dimension_numbers = #tpu.dot_dimension_numbers<[1], [0], [0], [1], [0, 0, 1, 1], [], []>} : vector<22x64xbf16>, vector<64x64xbf16>, vector<22x64xf32> -> vector<22x64xf32>
    %30 = arith.addf %25, %29 : vector<22x64xf32>
    %c0_25 = arith.constant 0 : index
    %c12 = arith.constant 12 : index
    %c0_26 = arith.constant 0 : index
    %31 = vector.load %arg1[%c0_25, %c12, %c0_26] : memref<1x36x64xbf16, #tpu.memory_space<vmem>>, vector<1x22x64xbf16>
    %32 = vector.shape_cast %31 : vector<1x22x64xbf16> to vector<22x64xbf16>
    %c384 = arith.constant 384 : index
    %c0_27 = arith.constant 0 : index
    %33 = vector.load %arg2[%c384, %c0_27] : memref<576x64xbf16, #tpu.memory_space<vmem>>, vector<64x64xbf16>
    %cst_28 = arith.constant dense<0.000000e+00> : vector<22x64xf32>
    %34 = tpu.matmul %32, %33, %cst_28 {dimension_numbers = #tpu.dot_dimension_numbers<[1], [0], [0], [1], [0, 0, 1, 1], [], []>} : vector<22x64xbf16>, vector<64x64xbf16>, vector<22x64xf32> -> vector<22x64xf32>
    %35 = arith.addf %30, %34 : vector<22x64xf32>
    %c0_29 = arith.constant 0 : index
    %c13 = arith.constant 13 : index
    %c0_30 = arith.constant 0 : index
    %36 = vector.load %arg1[%c0_29, %c13, %c0_30] : memref<1x36x64xbf16, #tpu.memory_space<vmem>>, vector<1x22x64xbf16>
    %37 = vector.shape_cast %36 : vector<1x22x64xbf16> to vector<22x64xbf16>
    %c448 = arith.constant 448 : index
    %c0_31 = arith.constant 0 : index
    %38 = vector.load %arg2[%c448, %c0_31] : memref<576x64xbf16, #tpu.memory_space<vmem>>, vector<64x64xbf16>
    %cst_32 = arith.constant dense<0.000000e+00> : vector<22x64xf32>
    %39 = tpu.matmul %37, %38, %cst_32 {dimension_numbers = #tpu.dot_dimension_numbers<[1], [0], [0], [1], [0, 0, 1, 1], [], []>} : vector<22x64xbf16>, vector<64x64xbf16>, vector<22x64xf32> -> vector<22x64xf32>
    %40 = arith.addf %35, %39 : vector<22x64xf32>
    %c0_33 = arith.constant 0 : index
    %c14 = arith.constant 14 : index
    %c0_34 = arith.constant 0 : index
    %41 = vector.load %arg1[%c0_33, %c14, %c0_34] : memref<1x36x64xbf16, #tpu.memory_space<vmem>>, vector<1x22x64xbf16>
    %42 = vector.shape_cast %41 : vector<1x22x64xbf16> to vector<22x64xbf16>
    %c512 = arith.constant 512 : index
    %c0_35 = arith.constant 0 : index
    %43 = vector.load %arg2[%c512, %c0_35] : memref<576x64xbf16, #tpu.memory_space<vmem>>, vector<64x64xbf16>
    %cst_36 = arith.constant dense<0.000000e+00> : vector<22x64xf32>
    %44 = tpu.matmul %42, %43, %cst_36 {dimension_numbers = #tpu.dot_dimension_numbers<[1], [0], [0], [1], [0, 0, 1, 1], [], []>} : vector<22x64xbf16>, vector<64x64xbf16>, vector<22x64xf32> -> vector<22x64xf32>
    %45 = arith.addf %40, %44 : vector<22x64xf32>
    %c0_37 = arith.constant 0 : index
    %c0_38 = arith.constant 0 : index
    %46 = vector.load %arg3[%c0_37, %c0_38] : memref<1x64xf32, #tpu.memory_space<vmem>>, vector<1x64xf32>
    %47 = vector.broadcast %46 : vector<1x64xf32> to vector<22x64xf32>
    %48 = arith.addf %45, %47 : vector<22x64xf32>
    %cst_39 = arith.constant 0.000000e+00 : f32
    %49 = vector.broadcast %cst_39 : f32 to vector<22x64xf32>
    %50 = arith.maximumf %48, %49 : vector<22x64xf32>
    %51 = arith.truncf %50 : vector<22x64xf32> to vector<22x64xbf16>
    %c0_40 = arith.constant 0 : index
    %c0_41 = arith.constant 0 : index
    %c0_42 = arith.constant 0 : index
    %52 = vector.load %arg4[%c0_40, %c0_41, %c0_42] : memref<1x24x64xbf16, #tpu.memory_space<vmem>>, vector<1x22x64xbf16>
    %53 = vector.shape_cast %52 : vector<1x22x64xbf16> to vector<22x64xbf16>
    %54 = vector.shape_cast %51 : vector<22x64xbf16> to vector<1x22x64xbf16>
    tpu.vector_store %arg4[%c0_40, %c0_41, %c0_42], %54 {strides = array<i32>} : memref<1x24x64xbf16, #tpu.memory_space<vmem>>, vector<1x22x64xbf16>,
    return
  }
  func.func @transform_0(%arg0: i32) -> (i32, i32, i32) {
    %c0_i32 = arith.constant 0 : i32
    %c0_i32_0 = arith.constant 0 : i32
    %c0_i32_1 = arith.constant 0 : i32
    return %arg0, %c0_i32, %c0_i32_0 : i32, i32, i32
  }
  func.func @transform_1(%arg0: i32) -> (i32, i32) {
    %c0_i32 = arith.constant 0 : i32
    %c0_i32_0 = arith.constant 0 : i32
    %c0_i32_1 = arith.constant 0 : i32
    return %c0_i32, %c0_i32_0 : i32, i32
  }
  func.func @transform_2(%arg0: i32) -> (i32, i32) {
    %c0_i32 = arith.constant 0 : i32
    %c0_i32_0 = arith.constant 0 : i32
    %c0_i32_1 = arith.constant 0 : i32
    return %c0_i32, %c0_i32_0 : i32, i32
  }
  func.func @transform_3(%arg0: i32) -> (i32, i32, i32) {
    %c0_i32 = arith.constant 0 : i32
    %c0_i32_0 = arith.constant 0 : i32
    %c0_i32_1 = arith.constant 0 : i32
    return %arg0, %c0_i32, %c0_i32_0 : i32, i32, i32
  }
}

</mosaic_0001>

<llo_original>
// kernel: expanding_path_forward.9
$region0: #{expanding_path_forward.9}
  #allocation0 [shape = 'u32[]', space=smem, size = 0x4, offset = 0x4, fixed_abs, tag = 'smem constant byte address 0x4 - core index']
  #allocation1 [shape = 'u32[72,128]{1,0:T(1,128)}', space=vmem, size = 0x9000, scoped, tag = 'internal scratch']
  %s0 = inlined_call_operand.vmem [shape: bf16[32,128], index: 0, kind: input, shape index: {}]
  %s1 = inlined_call_operand.vmem [shape: bf16[128,256], index: 1, kind: input, shape index: {}]
  %s2 = inlined_call_operand.vmem [shape: f32[1,256], index: 2, kind: input, shape index: {}]
  %s3 = inlined_call_operand.vmem [shape: bf16[32,256], index: 3, kind: output, shape index: {}]
  %s4 = sld [smem:[#allocation0]]
  $region22: #{expanding_path_forward.9} parent=0
    _
  %s6 = ssub.s32 1, %s4
  %s7 = scalar_select 0, %s6, %s4
  // Predicated region
  $region2: #{expanding_path_forward.9} parent=0 // pred_check
    _
  $region3: #{expanding_path_forward.9} parent=0 // pred_check_branch
    %9 = sbr.rel (0) target = $region5
  $region4: #{expanding_path_forward.9} parent=0 // pred_region
    _
  $region5: #{expanding_path_forward.9} parent=0 // pred_fallthru
    _
  // Predicated region
  $region6: #{expanding_path_forward.9} parent=0 // pred_check
    _
  $region7: #{expanding_path_forward.9} parent=0 // pred_check_branch
    %11 = sbr.rel (0) target = $region9
  $region8: #{expanding_path_forward.9} parent=0 // pred_region
    _
  $region9: #{expanding_path_forward.9} parent=0 // pred_fallthru
    _
  // Predicated region
  $region10: #{expanding_path_forward.9} parent=0 // pred_check
    _
  $region11: #{expanding_path_forward.9} parent=0 // pred_check_branch
    %13 = sbr.rel (0) target = $region13
  $region12: #{expanding_path_forward.9} parent=0 // pred_region
    _
  $region13: #{expanding_path_forward.9} parent=0 // pred_fallthru
    _
  %v14 = vld [vmem:[%s0] sm:$0xf]
  %v15 = vld [vmem:[%s0 + $0x4] sm:$0xf]
  %v16 = vld [vmem:[%s0 + $0x8] sm:$0xf]
  %v17 = vld [vmem:[%s0 + $0xc] sm:$0xf]
  %v18 = vld [vmem:[%s1] sm:$0xff]
  %v19 = vld [vmem:[%s1 + $0x8] sm:$0xff]
  %v20 = vld [vmem:[%s1 + $0x10] sm:$0xff]
  %v21 = vld [vmem:[%s1 + $0x18] sm:$0xff]
  %v22 = vld [vmem:[%s1 + $0x20] sm:$0xff]
  %v23 = vld [vmem:[%s1 + $0x28] sm:$0xff]
  %v24 = vld [vmem:[%s1 + $0x30] sm:$0xff]
  %v25 = vld [vmem:[%s1 + $0x38] sm:$0xff]
  %v26 = vld [vmem:[%s1 + $0x40] sm:$0xff]
  %v27 = vld [vmem:[%s1 + $0x48] sm:$0xff]
  %v28 = vld [vmem:[%s1 + $0x50] sm:$0xff]
  %v29 = vld [vmem:[%s1 + $0x58] sm:$0xff]
  %v30 = vld [vmem:[%s1 + $0x60] sm:$0xff]
  %v31 = vld [vmem:[%s1 + $0x68] sm:$0xff]
  %v32 = vld [vmem:[%s1 + $0x70] sm:$0xff]
  %v33 = vld [vmem:[%s1 + $0x78] sm:$0xff]
  %v34 = vld [vmem:[%s2] sm:$0x3]
  %v36 = vperm.slane %v34, 0
  %v37 = vperm.slane %v34, 1
  %v44 = vunpack.c.l.b16 %v14
  %v45 = vunpack.c.l.b16 %v15
  %v46 = vunpack.c.l.b16 %v16
  %v47 = vunpack.c.l.b16 %v17
  %v48 = vpack.c.b16 %v45, %v44
  %v49 = vpack.c.b16 %v47, %v46
  %v68 = vunpack.c.l.b16 %v18
  %v69 = vunpack.c.h.b16 %v18
  %v70 = vunpack.c.l.b16 %v19
  %v71 = vunpack.c.h.b16 %v19
  %v72 = vunpack.c.l.b16 %v20
  %v73 = vunpack.c.h.b16 %v20
  %v74 = vunpack.c.l.b16 %v21
  %v75 = vunpack.c.h.b16 %v21
  %v76 = vunpack.c.l.b16 %v22
  %v77 = vunpack.c.h.b16 %v22
  %v78 = vunpack.c.l.b16 %v23
  %v79 = vunpack.c.h.b16 %v23
  %v80 = vunpack.c.l.b16 %v24
  %v81 = vunpack.c.h.b16 %v24
  %v82 = vunpack.c.l.b16 %v25
  %v83 = vunpack.c.h.b16 %v25
  %v84 = vunpack.c.l.b16 %v26
  %v85 = vunpack.c.h.b16 %v26
  %v86 = vunpack.c.l.b16 %v27
  %v87 = vunpack.c.h.b16 %v27
  %v88 = vunpack.c.l.b16 %v28
  %v89 = vunpack.c.h.b16 %v28
  %v90 = vunpack.c.l.b16 %v29
  %v91 = vunpack.c.h.b16 %v29
  %v92 = vunpack.c.l.b16 %v30
  %v93 = vunpack.c.h.b16 %v30
  %v94 = vunpack.c.l.b16 %v31
  %v95 = vunpack.c.h.b16 %v31
  %v96 = vunpack.c.l.b16 %v32
  %v97 = vunpack.c.h.b16 %v32
  %v98 = vunpack.c.l.b16 %v33
  %v99 = vunpack.c.h.b16 %v33
  %v100 = vpack.c.b16 %v70, %v68
  %v101 = vpack.c.b16 %v71, %v69
  %v102 = vpack.c.b16 %v74, %v72
  %v103 = vpack.c.b16 %v75, %v73
  %v104 = vpack.c.b16 %v78, %v76
  %v105 = vpack.c.b16 %v79, %v77
  %v106 = vpack.c.b16 %v82, %v80
  %v107 = vpack.c.b16 %v83, %v81
  %v108 = vpack.c.b16 %v86, %v84
  %v109 = vpack.c.b16 %v87, %v85
  %v110 = vpack.c.b16 %v90, %v88
  %v111 = vpack.c.b16 %v91, %v89
  %v112 = vpack.c.b16 %v94, %v92
  %v113 = vpack.c.b16 %v95, %v93
  %v114 = vpack.c.b16 %v98, %v96
  %v115 = vpack.c.b16 %v99, %v97
  %132 = vmatpush.bf16.msra.mxu0 %v114
  %133 = vmatpush.bf16.msra.mxu0 %v112
  %134 = vmatpush.bf16.msra.mxu0 %v110
  %135 = vmatpush.bf16.msra.mxu0 %v108
  %136 = vmatpush.bf16.msra.mxu0 %v106
  %137 = vmatpush.bf16.msra.mxu0 %v104
  %138 = vmatpush.bf16.msra.mxu0 %v102
  %139 = vmatpush.bf16.msra.mxu0 %v100
  %140 = vmatmul.bf16.gmra.mxu0 %v48
  %v141 = vpop.f32.mrf.mxu0
  %v142 = vadd.f32 %v36, %v141
  %v143 = vpop.f32.mrf.mxu0
  %v144 = vadd.f32 %v36, %v143
  %145 = vmatmul.bf16.gmra.mxu0 %v49
  %v146 = vpop.f32.mrf.mxu0
  %v147 = vadd.f32 %v36, %v146
  %v148 = vpop.f32.mrf.mxu0
  %v149 = vadd.f32 %v36, %v148
  %150 = vdwg.mxu0
  %151 = vmatpush.bf16.msra.mxu0 %v115
  %152 = vmatpush.bf16.msra.mxu0 %v113
  %153 = vmatpush.bf16.msra.mxu0 %v111
  %154 = vmatpush.bf16.msra.mxu0 %v109
  %155 = vmatpush.bf16.msra.mxu0 %v107
  %156 = vmatpush.bf16.msra.mxu0 %v105
  %157 = vmatpush.bf16.msra.mxu0 %v103
  %158 = vmatpush.bf16.msra.mxu0 %v101
  %159 = vmatmul.bf16.gmra.mxu0 %v48
  %v160 = vpop.f32.mrf.mxu0
  %v161 = vadd.f32 %v37, %v160
  %v162 = vpop.f32.mrf.mxu0
  %v163 = vadd.f32 %v37, %v162
  %164 = vmatmul.bf16.gmra.mxu0 %v49
  %v165 = vpop.f32.mrf.mxu0
  %v166 = vadd.f32 %v37, %v165
  %v167 = vpop.f32.mrf.mxu0
  %v168 = vadd.f32 %v37, %v167
  %169 = vdwg.mxu0
  %v170 = vpack.c.bf16 %v161, %v142
  %v171 = vpack.c.bf16 %v163, %v144
  %v172 = vpack.c.bf16 %v166, %v147
  %v173 = vpack.c.bf16 %v168, %v149
  %174 = vst [vmem:[%s3] sm:$0xff] %v170
  %175 = vst [vmem:[%s3 + $0x8] sm:$0xff] %v171
  %176 = vst [vmem:[%s3 + $0x10] sm:$0xff] %v172
  %177 = vst [vmem:[%s3 + $0x18] sm:$0xff] %v173
  // Predicated region
  $region14: #{expanding_path_forward.9} parent=0 // pred_check
    _
  $region15: #{expanding_path_forward.9} parent=0 // pred_check_branch
    %179 = sbr.rel (0) target = $region17
  $region16: #{expanding_path_forward.9} parent=0 // pred_region
    _
  $region17: #{expanding_path_forward.9} parent=0 // pred_fallthru
    _
  // Predicated region
  $region18: #{expanding_path_forward.9} parent=0 // pred_check
    _
  $region19: #{expanding_path_forward.9} parent=0 // pred_check_branch
    %181 = sbr.rel (0) target = $region21
  $region20: #{expanding_path_forward.9} parent=0 // pred_region
    _
  $region21: #{expanding_path_forward.9} parent=0 // pred_fallthru
    _

// kernel: expanding_path_forward.6
$region0: #{expanding_path_forward.6}
  #allocation0 [shape = 'u32[]', space=smem, size = 0x4, offset = 0x4, fixed_abs, tag = 'smem constant byte address 0x4 - core index']
  #allocation1 [shape = 'u32[72,128]{1,0:T(1,128)}', space=vmem, size = 0x9000, scoped, tag = 'internal scratch']
  %s0 = inlined_call_operand.vmem [shape: bf16[32,256], index: 0, kind: input, shape index: {}]
  %s1 = inlined_call_operand.hbm [shape: bf16[256,512], index: 1, kind: input, shape index: {}]
  %s2 = inlined_call_operand.vmem [shape: f32[1,512], index: 2, kind: input, shape index: {}]
  %s3 = inlined_call_operand.vmem [shape: bf16[32,512], index: 3, kind: output, shape index: {}]
  %s4 = sld [smem:[#allocation0]]
  $region26: #{expanding_path_forward.6} parent=0
    _
  %s6 = ssub.s32 1, %s4
  %s7 = scalar_select 0, %s6, %s4
  $region1: #{expanding_path_forward.6} parent=0
    #allocation2 [shape = 'u8[262144]{0}', space=vmem, size = 0x40000, scoped, tag = 'input window, operand 1, single buffered']
    #allocation3 [shape = 's32[1]{0}', space=sflag, size = 0x4, scoped, tag = 'scoped memory for expanding_path_forward.6']
    %8 = vsyncpa [#allocation3], 0
    // Predicated region
    $region2: #{expanding_path_forward.6} parent=1 // pred_check
      _
    $region3: #{expanding_path_forward.6} parent=1 // pred_check_branch
      %10 = sbr.rel (0) target = $region5
    $region4: #{expanding_path_forward.6} parent=1 // pred_region
      _
    $region5: #{expanding_path_forward.6} parent=1 // pred_fallthru
      _
    // Predicated region
    $region6: #{expanding_path_forward.6} parent=1 // pred_check
      _
    $region7: #{expanding_path_forward.6} parent=1 // pred_check_branch
      %12 = sbr.rel (0) target = $region9
    $region8: #{expanding_path_forward.6} parent=1 // pred_region
      %14 = vsyncadd [#allocation3], 0
      %s15 = sshll.u32 %s1, 4
      %s16 = int_to_ptr.hbm [resolvable:$true] %s15
      %s17 = sshll.u32 [#allocation2], 4
      %s18 = int_to_ptr.vmem [resolvable:$true] %s17
      %23 = dma.hbm_to_vmem [thread:$0]  %s16, 8192, %s18, [#allocation3], 256, 256, 16
    $region9: #{expanding_path_forward.6} parent=1 // pred_fallthru
      _
    // Predicated region
    $region10: #{expanding_path_forward.6} parent=1 // pred_check
      _
    $region11: #{expanding_path_forward.6} parent=1 // pred_check_branch
      %25 = sbr.rel (0) target = $region13
    $region12: #{expanding_path_forward.6} parent=1 // pred_region
      _
    $region13: #{expanding_path_forward.6} parent=1 // pred_fallthru
      _
    // Predicated region
    $region14: #{expanding_path_forward.6} parent=1 // pred_check
      _
    $region15: #{expanding_path_forward.6} parent=1 // pred_check_branch
      %27 = sbr.rel (0) target = $region17
    $region16: #{expanding_path_forward.6} parent=1 // pred_region
      %29 = dma.done [#allocation3], 8192
    $region17: #{expanding_path_forward.6} parent=1 // pred_fallthru
      _
    %v30 = vld [vmem:[%s0] sm:$0xff]
    %v31 = vld [vmem:[%s0 + $0x8] sm:$0xff]
    %v32 = vld [vmem:[%s0 + $0x10] sm:$0xff]
    %v33 = vld [vmem:[%s0 + $0x18] sm:$0xff]
    %v34 = vld [vmem:[#allocation2] sm:$0xff]
    %v35 = vld [vmem:[#allocation2 + $0x8] sm:$0xff]
    %v36 = vld [vmem:[#allocation2 + $0x10] sm:$0xff]
    %v37 = vld [vmem:[#allocation2 + $0x18] sm:$0xff]
    %v38 = vld [vmem:[#allocation2 + $0x20] sm:$0xff]
    %v39 = vld [vmem:[#allocation2 + $0x28] sm:$0xff]
    %v40 = vld [vmem:[#allocation2 + $0x30] sm:$0xff]
    %v41 = vld [vmem:[#allocation2 + $0x38] sm:$0xff]
    %v42 = vld [vmem:[#allocation2 + $0x40] sm:$0xff]
    %v43 = vld [vmem:[#allocation2 + $0x48] sm:$0xff]
    %v44 = vld [vmem:[#allocation2 + $0x50] sm:$0xff]
    %v45 = vld [vmem:[#allocation2 + $0x58] sm:$0xff]
    %v46 = vld [vmem:[#allocation2 + $0x60] sm:$0xff]
    %v47 = vld [vmem:[#allocation2 + $0x68] sm:$0xff]
    %v48 = vld [vmem:[#allocation2 + $0x70] sm:$0xff]
    %v49 = vld [vmem:[#allocation2 + $0x78] sm:$0xff]
    %v50 = vld [vmem:[#allocation2 + $0x80] sm:$0xff]
    %v51 = vld [vmem:[#allocation2 + $0x88] sm:$0xff]
    %v52 = vld [vmem:[#allocation2 + $0x90] sm:$0xff]
    %v53 = vld [vmem:[#allocation2 + $0x98] sm:$0xff]
    %v54 = vld [vmem:[#allocation2 + $0xa0] sm:$0xff]
    %v55 = vld [vmem:[#allocation2 + $0xa8] sm:$0xff]
    %v56 = vld [vmem:[#allocation2 + $0xb0] sm:$0xff]
    %v57 = vld [vmem:[#allocation2 + $0xb8] sm:$0xff]
    %v58 = vld [vmem:[#allocation2 + $0xc0] sm:$0xff]
    %v59 = vld [vmem:[#allocation2 + $0xc8] sm:$0xff]
    %v60 = vld [vmem:[#allocation2 + $0xd0] sm:$0xff]
    %v61 = vld [vmem:[#allocation2 + $0xd8] sm:$0xff]
    %v62 = vld [vmem:[#allocation2 + $0xe0] sm:$0xff]
    %v63 = vld [vmem:[#allocation2 + $0xe8] sm:$0xff]
    %v64 = vld [vmem:[#allocation2 + $0xf0] sm:$0xff]
    %v65 = vld [vmem:[#allocation2 + $0xf8] sm:$0xff]
    %v66 = vld [vmem:[#allocation2 + $0x100] sm:$0xff]
    %v67 = vld [vmem:[#allocation2 + $0x108] sm:$0xff]
    %v68 = vld [vmem:[#allocation2 + $0x110] sm:$0xff]
    %v69 = vld [vmem:[#allocation2 + $0x118] sm:$0xff]
    %v70 = vld [vmem:[#allocation2 + $0x120] sm:$0xff]
    %v71 = vld [vmem:[#allocation2 + $0x128] sm:$0xff]
    %v72 = vld [vmem:[#allocation2 + $0x130] sm:$0xff]
    %v73 = vld [vmem:[#allocation2 + $0x138] sm:$0xff]
    %v74 = vld [vmem:[#allocation2 + $0x140] sm:$0xff]
    %v75 = vld [vmem:[#allocation2 + $0x148] sm:$0xff]
    %v76 = vld [vmem:[#allocation2 + $0x150] sm:$0xff]
    %v77 = vld [vmem:[#allocation2 + $0x158] sm:$0xff]
    %v78 = vld [vmem:[#allocation2 + $0x160] sm:$0xff]
    %v79 = vld [vmem:[#allocation2 + $0x168] sm:$0xff]
    %v80 = vld [vmem:[#allocation2 + $0x170] sm:$0xff]
    %v81 = vld [vmem:[#allocation2 + $0x178] sm:$0xff]
    %v82 = vld [vmem:[#allocation2 + $0x180] sm:$0xff]
    %v83 = vld [vmem:[#allocation2 + $0x188] sm:$0xff]
    %v84 = vld [vmem:[#allocation2 + $0x190] sm:$0xff]
    %v85 = vld [vmem:[#allocation2 + $0x198] sm:$0xff]
    %v86 = vld [vmem:[#allocation2 + $0x1a0] sm:$0xff]
    %v87 = vld [vmem:[#allocation2 + $0x1a8] sm:$0xff]
    %v88 = vld [vmem:[#allocation2 + $0x1b0] sm:$0xff]
    %v89 = vld [vmem:[#allocation2 + $0x1b8] sm:$0xff]
    %v90 = vld [vmem:[#allocation2 + $0x1c0] sm:$0xff]
    %v91 = vld [vmem:[#allocation2 + $0x1c8] sm:$0xff]
    %v92 = vld [vmem:[#allocation2 + $0x1d0] sm:$0xff]
    %v93 = vld [vmem:[#allocation2 + $0x1d8] sm:$0xff]
    %v94 = vld [vmem:[#allocation2 + $0x1e0] sm:$0xff]
    %v95 = vld [vmem:[#allocation2 + $0x1e8] sm:$0xff]
    %v96 = vld [vmem:[#allocation2 + $0x1f0] sm:$0xff]
    %v97 = vld [vmem:[#allocation2 + $0x1f8] sm:$0xff]
    %v98 = vld [vmem:[%s2] sm:$0xf]
    %v100 = vperm.slane %v98, 0
    %v101 = vperm.slane %v98, 1
    %v102 = vperm.slane %v98, 2
    %v103 = vperm.slane %v98, 3
    %v112 = vunpack.c.l.b16 %v30
    %v113 = vunpack.c.h.b16 %v30
    %v114 = vunpack.c.l.b16 %v31
    %v115 = vunpack.c.h.b16 %v31
    %v116 = vunpack.c.l.b16 %v32
    %v117 = vunpack.c.h.b16 %v32
    %v118 = vunpack.c.l.b16 %v33
    %v119 = vunpack.c.h.b16 %v33
    %v120 = vpack.c.b16 %v114, %v112
    %v121 = vpack.c.b16 %v115, %v113
    %v122 = vpack.c.b16 %v118, %v116
    %v123 = vpack.c.b16 %v119, %v117
    %v192 = vunpack.c.l.b16 %v34
    %v193 = vunpack.c.h.b16 %v34
    %v194 = vunpack.c.l.b16 %v35
    %v195 = vunpack.c.h.b16 %v35
    %v196 = vunpack.c.l.b16 %v36
    %v197 = vunpack.c.h.b16 %v36
    %v198 = vunpack.c.l.b16 %v37
    %v199 = vunpack.c.h.b16 %v37
    %v200 = vunpack.c.l.b16 %v38
    %v201 = vunpack.c.h.b16 %v38
    %v202 = vunpack.c.l.b16 %v39
    %v203 = vunpack.c.h.b16 %v39
    %v204 = vunpack.c.l.b16 %v40
    %v205 = vunpack.c.h.b16 %v40
    %v206 = vunpack.c.l.b16 %v41
    %v207 = vunpack.c.h.b16 %v41
    %v208 = vunpack.c.l.b16 %v42
    %v209 = vunpack.c.h.b16 %v42
    %v210 = vunpack.c.l.b16 %v43
    %v211 = vunpack.c.h.b16 %v43
    %v212 = vunpack.c.l.b16 %v44
    %v213 = vunpack.c.h.b16 %v44
    %v214 = vunpack.c.l.b16 %v45
    %v215 = vunpack.c.h.b16 %v45
    %v216 = vunpack.c.l.b16 %v46
    %v217 = vunpack.c.h.b16 %v46
    %v218 = vunpack.c.l.b16 %v47
    %v219 = vunpack.c.h.b16 %v47
    %v220 = vunpack.c.l.b16 %v48
    %v221 = vunpack.c.h.b16 %v48
    %v222 = vunpack.c.l.b16 %v49
    %v223 = vunpack.c.h.b16 %v49
    %v224 = vunpack.c.l.b16 %v50
    %v225 = vunpack.c.h.b16 %v50
    %v226 = vunpack.c.l.b16 %v51
    %v227 = vunpack.c.h.b16 %v51
    %v228 = vunpack.c.l.b16 %v52
    %v229 = vunpack.c.h.b16 %v52
    %v230 = vunpack.c.l.b16 %v53
    %v231 = vunpack.c.h.b16 %v53
    %v232 = vunpack.c.l.b16 %v54
    %v233 = vunpack.c.h.b16 %v54
    %v234 = vunpack.c.l.b16 %v55
    %v235 = vunpack.c.h.b16 %v55
    %v236 = vunpack.c.l.b16 %v56
    %v237 = vunpack.c.h.b16 %v56
    %v238 = vunpack.c.l.b16 %v57
    %v239 = vunpack.c.h.b16 %v57
    %v240 = vunpack.c.l.b16 %v58
    %v241 = vunpack.c.h.b16 %v58
    %v242 = vunpack.c.l.b16 %v59
    %v243 = vunpack.c.h.b16 %v59
    %v244 = vunpack.c.l.b16 %v60
    %v245 = vunpack.c.h.b16 %v60
    %v246 = vunpack.c.l.b16 %v61
    %v247 = vunpack.c.h.b16 %v61
    %v248 = vunpack.c.l.b16 %v62
    %v249 = vunpack.c.h.b16 %v62
    %v250 = vunpack.c.l.b16 %v63
    %v251 = vunpack.c.h.b16 %v63
    %v252 = vunpack.c.l.b16 %v64
    %v253 = vunpack.c.h.b16 %v64
    %v254 = vunpack.c.l.b16 %v65
    %v255 = vunpack.c.h.b16 %v65
    %v256 = vunpack.c.l.b16 %v66
    %v257 = vunpack.c.h.b16 %v66
    %v258 = vunpack.c.l.b16 %v67
    %v259 = vunpack.c.h.b16 %v67
    %v260 = vunpack.c.l.b16 %v68
    %v261 = vunpack.c.h.b16 %v68
    %v262 = vunpack.c.l.b16 %v69
    %v263 = vunpack.c.h.b16 %v69
    %v264 = vunpack.c.l.b16 %v70
    %v265 = vunpack.c.h.b16 %v70
    %v266 = vunpack.c.l.b16 %v71
    %v267 = vunpack.c.h.b16 %v71
    %v268 = vunpack.c.l.b16 %v72
    %v269 = vunpack.c.h.b16 %v72
    %v270 = vunpack.c.l.b16 %v73
    %v271 = vunpack.c.h.b16 %v73
    %v272 = vunpack.c.l.b16 %v74
    %v273 = vunpack.c.h.b16 %v74
    %v274 = vunpack.c.l.b16 %v75
    %v275 = vunpack.c.h.b16 %v75
    %v276 = vunpack.c.l.b16 %v76
    %v277 = vunpack.c.h.b16 %v76
    %v278 = vunpack.c.l.b16 %v77
    %v279 = vunpack.c.h.b16 %v77
    %v280 = vunpack.c.l.b16 %v78
    %v281 = vunpack.c.h.b16 %v78
    %v282 = vunpack.c.l.b16 %v79
    %v283 = vunpack.c.h.b16 %v79
    %v284 = vunpack.c.l.b16 %v80
    %v285 = vunpack.c.h.b16 %v80
    %v286 = vunpack.c.l.b16 %v81
    %v287 = vunpack.c.h.b16 %v81
    %v288 = vunpack.c.l.b16 %v82
    %v289 = vunpack.c.h.b16 %v82
    %v290 = vunpack.c.l.b16 %v83
    %v291 = vunpack.c.h.b16 %v83
    %v292 = vunpack.c.l.b16 %v84
    %v293 = vunpack.c.h.b16 %v84
    %v294 = vunpack.c.l.b16 %v85
    %v295 = vunpack.c.h.b16 %v85
    %v296 = vunpack.c.l.b16 %v86
    %v297 = vunpack.c.h.b16 %v86
    %v298 = vunpack.c.l.b16 %v87
    %v299 = vunpack.c.h.b16 %v87
    %v300 = vunpack.c.l.b16 %v88
    %v301 = vunpack.c.h.b16 %v88
    %v302 = vunpack.c.l.b16 %v89
    %v303 = vunpack.c.h.b16 %v89
    %v304 = vunpack.c.l.b16 %v90
    %v305 = vunpack.c.h.b16 %v90
    %v306 = vunpack.c.l.b16 %v91
    %v307 = vunpack.c.h.b16 %v91
    %v308 = vunpack.c.l.b16 %v92
    %v309 = vunpack.c.h.b16 %v92
    %v310 = vunpack.c.l.b16 %v93
    %v311 = vunpack.c.h.b16 %v93
    %v312 = vunpack.c.l.b16 %v94
    %v313 = vunpack.c.h.b16 %v94
    %v314 = vunpack.c.l.b16 %v95
    %v315 = vunpack.c.h.b16 %v95
    %v316 = vunpack.c.l.b16 %v96
    %v317 = vunpack.c.h.b16 %v96
    %v318 = vunpack.c.l.b16 %v97
    %v319 = vunpack.c.h.b16 %v97
    %v320 = vpack.c.b16 %v196, %v192
    %v321 = vpack.c.b16 %v197, %v193
    %v322 = vpack.c.b16 %v198, %v194
    %v323 = vpack.c.b16 %v199, %v195
    %v324 = vpack.c.b16 %v204, %v200
    %v325 = vpack.c.b16 %v205, %v201
    %v326 = vpack.c.b16 %v206, %v202
    %v327 = vpack.c.b16 %v207, %v203
    %v328 = vpack.c.b16 %v212, %v208
    %v329 = vpack.c.b16 %v213, %v209
    %v330 = vpack.c.b16 %v214, %v210
    %v331 = vpack.c.b16 %v215, %v211
    %v332 = vpack.c.b16 %v220, %v216
    %v333 = vpack.c.b16 %v221, %v217
    %v334 = vpack.c.b16 %v222, %v218
    %v335 = vpack.c.b16 %v223, %v219
    %v336 = vpack.c.b16 %v228, %v224
    %v337 = vpack.c.b16 %v229, %v225
    %v338 = vpack.c.b16 %v230, %v226
    %v339 = vpack.c.b16 %v231, %v227
    %v340 = vpack.c.b16 %v236, %v232
    %v341 = vpack.c.b16 %v237, %v233
    %v342 = vpack.c.b16 %v238, %v234
    %v343 = vpack.c.b16 %v239, %v235
    %v344 = vpack.c.b16 %v244, %v240
    %v345 = vpack.c.b16 %v245, %v241
    %v346 = vpack.c.b16 %v246, %v242
    %v347 = vpack.c.b16 %v247, %v243
    %v348 = vpack.c.b16 %v252, %v248
    %v349 = vpack.c.b16 %v253, %v249
    %v350 = vpack.c.b16 %v254, %v250
    %v351 = vpack.c.b16 %v255, %v251
    %v352 = vpack.c.b16 %v260, %v256
    %v353 = vpack.c.b16 %v261, %v257
    %v354 = vpack.c.b16 %v262, %v258
    %v355 = vpack.c.b16 %v263, %v259
    %v356 = vpack.c.b16 %v268, %v264
    %v357 = vpack.c.b16 %v269, %v265
    %v358 = vpack.c.b16 %v270, %v266
    %v359 = vpack.c.b16 %v271, %v267
    %v360 = vpack.c.b16 %v276, %v272
    %v361 = vpack.c.b16 %v277, %v273
    %v362 = vpack.c.b16 %v278, %v274
    %v363 = vpack.c.b16 %v279, %v275
    %v364 = vpack.c.b16 %v284, %v280
    %v365 = vpack.c.b16 %v285, %v281
    %v366 = vpack.c.b16 %v286, %v282
    %v367 = vpack.c.b16 %v287, %v283
    %v368 = vpack.c.b16 %v292, %v288
    %v369 = vpack.c.b16 %v293, %v289
    %v370 = vpack.c.b16 %v294, %v290
    %v371 = vpack.c.b16 %v295, %v291
    %v372 = vpack.c.b16 %v300, %v296
    %v373 = vpack.c.b16 %v301, %v297
    %v374 = vpack.c.b16 %v302, %v298
    %v375 = vpack.c.b16 %v303, %v299
    %v376 = vpack.c.b16 %v308, %v304
    %v377 = vpack.c.b16 %v309, %v305
    %v378 = vpack.c.b16 %v310, %v306
    %v379 = vpack.c.b16 %v311, %v307
    %v380 = vpack.c.b16 %v316, %v312
    %v381 = vpack.c.b16 %v317, %v313
    %v382 = vpack.c.b16 %v318, %v314
    %v383 = vpack.c.b16 %v319, %v315
    %448 = vmatpush.bf16.msra.mxu0 %v348
    %449 = vmatpush.bf16.msra.mxu0 %v344
    %450 = vmatpush.bf16.msra.mxu0 %v340
    %451 = vmatpush.bf16.msra.mxu0 %v336
    %452 = vmatpush.bf16.msra.mxu0 %v332
    %453 = vmatpush.bf16.msra.mxu0 %v328
    %454 = vmatpush.bf16.msra.mxu0 %v324
    %455 = vmatpush.bf16.msra.mxu0 %v320
    %456 = vmatmul.bf16.gmra.mxu0 %v120
    %v457 = vpop.f32.mrf.mxu0
    %v458 = vadd.f32 %v100, %v457
    %v459 = vpop.f32.mrf.mxu0
    %v460 = vadd.f32 %v100, %v459
    %461 = vmatmul.bf16.gmra.mxu0 %v122
    %v462 = vpop.f32.mrf.mxu0
    %v463 = vadd.f32 %v100, %v462
    %v464 = vpop.f32.mrf.mxu0
    %v465 = vadd.f32 %v100, %v464
    %466 = vdwg.mxu0
    %467 = vmatpush.bf16.msra.mxu0 %v380
    %468 = vmatpush.bf16.msra.mxu0 %v376
    %469 = vmatpush.bf16.msra.mxu0 %v372
    %470 = vmatpush.bf16.msra.mxu0 %v368
    %471 = vmatpush.bf16.msra.mxu0 %v364
    %472 = vmatpush.bf16.msra.mxu0 %v360
    %473 = vmatpush.bf16.msra.mxu0 %v356
    %474 = vmatpush.bf16.msra.mxu0 %v352
    %475 = vmatmul.bf16.gmra.mxu0 %v121
    %v476 = vpop.f32.mrf.mxu0
    %v477 = vadd.f32 %v458, %v476
    %v478 = vpop.f32.mrf.mxu0
    %v479 = vadd.f32 %v460, %v478
    %480 = vmatmul.bf16.gmra.mxu0 %v123
    %v481 = vpop.f32.mrf.mxu0
    %v482 = vadd.f32 %v463, %v481
    %v483 = vpop.f32.mrf.mxu0
    %v484 = vadd.f32 %v465, %v483
    %485 = vdwg.mxu0
    %486 = vmatpush.bf16.msra.mxu0 %v349
    %487 = vmatpush.bf16.msra.mxu0 %v345
    %488 = vmatpush.bf16.msra.mxu0 %v341
    %489 = vmatpush.bf16.msra.mxu0 %v337
    %490 = vmatpush.bf16.msra.mxu0 %v333
    %491 = vmatpush.bf16.msra.mxu0 %v329
    %492 = vmatpush.bf16.msra.mxu0 %v325
    %493 = vmatpush.bf16.msra.mxu0 %v321
    %494 = vmatmul.bf16.gmra.mxu0 %v120
    %v495 = vpop.f32.mrf.mxu0
    %v496 = vadd.f32 %v101, %v495
    %v497 = vpop.f32.mrf.mxu0
    %v498 = vadd.f32 %v101, %v497
    %499 = vmatmul.bf16.gmra.mxu0 %v122
    %v500 = vpop.f32.mrf.mxu0
    %v501 = vadd.f32 %v101, %v500
    %v502 = vpop.f32.mrf.mxu0
    %v503 = vadd.f32 %v101, %v502
    %504 = vdwg.mxu0
    %505 = vmatpush.bf16.msra.mxu0 %v381
    %506 = vmatpush.bf16.msra.mxu0 %v377
    %507 = vmatpush.bf16.msra.mxu0 %v373
    %508 = vmatpush.bf16.msra.mxu0 %v369
    %509 = vmatpush.bf16.msra.mxu0 %v365
    %510 = vmatpush.bf16.msra.mxu0 %v361
    %511 = vmatpush.bf16.msra.mxu0 %v357
    %512 = vmatpush.bf16.msra.mxu0 %v353
    %513 = vmatmul.bf16.gmra.mxu0 %v121
    %v514 = vpop.f32.mrf.mxu0
    %v515 = vadd.f32 %v496, %v514
    %v516 = vpop.f32.mrf.mxu0
    %v517 = vadd.f32 %v498, %v516
    %518 = vmatmul.bf16.gmra.mxu0 %v123
    %v519 = vpop.f32.mrf.mxu0
    %v520 = vadd.f32 %v501, %v519
    %v521 = vpop.f32.mrf.mxu0
    %v522 = vadd.f32 %v503, %v521
    %523 = vdwg.mxu0
    %524 = vmatpush.bf16.msra.mxu0 %v350
    %525 = vmatpush.bf16.msra.mxu0 %v346
    %526 = vmatpush.bf16.msra.mxu0 %v342
    %527 = vmatpush.bf16.msra.mxu0 %v338
    %528 = vmatpush.bf16.msra.mxu0 %v334
    %529 = vmatpush.bf16.msra.mxu0 %v330
    %530 = vmatpush.bf16.msra.mxu0 %v326
    %531 = vmatpush.bf16.msra.mxu0 %v322
    %532 = vmatmul.bf16.gmra.mxu0 %v120
    %v533 = vpop.f32.mrf.mxu0
    %v534 = vadd.f32 %v102, %v533
    %v535 = vpop.f32.mrf.mxu0
    %v536 = vadd.f32 %v102, %v535
    %537 = vmatmul.bf16.gmra.mxu0 %v122
    %v538 = vpop.f32.mrf.mxu0
    %v539 = vadd.f32 %v102, %v538
    %v540 = vpop.f32.mrf.mxu0
    %v541 = vadd.f32 %v102, %v540
    %542 = vdwg.mxu0
    %543 = vmatpush.bf16.msra.mxu0 %v382
    %544 = vmatpush.bf16.msra.mxu0 %v378
    %545 = vmatpush.bf16.msra.mxu0 %v374
    %546 = vmatpush.bf16.msra.mxu0 %v370
    %547 = vmatpush.bf16.msra.mxu0 %v366
    %548 = vmatpush.bf16.msra.mxu0 %v362
    %549 = vmatpush.bf16.msra.mxu0 %v358
    %550 = vmatpush.bf16.msra.mxu0 %v354
    %551 = vmatmul.bf16.gmra.mxu0 %v121
    %v552 = vpop.f32.mrf.mxu0
    %v553 = vadd.f32 %v534, %v552
    %v554 = vpop.f32.mrf.mxu0
    %v555 = vadd.f32 %v536, %v554
    %556 = vmatmul.bf16.gmra.mxu0 %v123
    %v557 = vpop.f32.mrf.mxu0
    %v558 = vadd.f32 %v539, %v557
    %v559 = vpop.f32.mrf.mxu0
    %v560 = vadd.f32 %v541, %v559
    %561 = vdwg.mxu0
    %562 = vmatpush.bf16.msra.mxu0 %v351
    %563 = vmatpush.bf16.msra.mxu0 %v347
    %564 = vmatpush.bf16.msra.mxu0 %v343
    %565 = vmatpush.bf16.msra.mxu0 %v339
    %566 = vmatpush.bf16.msra.mxu0 %v335
    %567 = vmatpush.bf16.msra.mxu0 %v331
    %568 = vmatpush.bf16.msra.mxu0 %v327
    %569 = vmatpush.bf16.msra.mxu0 %v323
    %570 = vmatmul.bf16.gmra.mxu0 %v120
    %v571 = vpop.f32.mrf.mxu0
    %v572 = vadd.f32 %v103, %v571
    %v573 = vpop.f32.mrf.mxu0
    %v574 = vadd.f32 %v103, %v573
    %575 = vmatmul.bf16.gmra.mxu0 %v122
    %v576 = vpop.f32.mrf.mxu0
    %v577 = vadd.f32 %v103, %v576
    %v578 = vpop.f32.mrf.mxu0
    %v579 = vadd.f32 %v103, %v578
    %580 = vdwg.mxu0
    %581 = vmatpush.bf16.msra.mxu0 %v383
    %582 = vmatpush.bf16.msra.mxu0 %v379
    %583 = vmatpush.bf16.msra.mxu0 %v375
    %584 = vmatpush.bf16.msra.mxu0 %v371
    %585 = vmatpush.bf16.msra.mxu0 %v367
    %586 = vmatpush.bf16.msra.mxu0 %v363
    %587 = vmatpush.bf16.msra.mxu0 %v359
    %588 = vmatpush.bf16.msra.mxu0 %v355
    %589 = vmatmul.bf16.gmra.mxu0 %v121
    %v590 = vpop.f32.mrf.mxu0
    %v591 = vadd.f32 %v572, %v590
    %v592 = vpop.f32.mrf.mxu0
    %v593 = vadd.f32 %v574, %v592
    %594 = vmatmul.bf16.gmra.mxu0 %v123
    %v595 = vpop.f32.mrf.mxu0
    %v596 = vadd.f32 %v577, %v595
    %v597 = vpop.f32.mrf.mxu0
    %v598 = vadd.f32 %v579, %v597
    %599 = vdwg.mxu0
    %v600 = vpack.c.bf16 %v515, %v477
    %v601 = vpack.c.bf16 %v591, %v553
    %v602 = vpack.c.bf16 %v517, %v479
    %v603 = vpack.c.bf16 %v593, %v555
    %v604 = vpack.c.bf16 %v520, %v482
    %v605 = vpack.c.bf16 %v596, %v558
    %v606 = vpack.c.bf16 %v522, %v484
    %v607 = vpack.c.bf16 %v598, %v560
    %608 = vst [vmem:[%s3] sm:$0xff] %v600
    %609 = vst [vmem:[%s3 + $0x8] sm:$0xff] %v601
    %610 = vst [vmem:[%s3 + $0x10] sm:$0xff] %v602
    %611 = vst [vmem:[%s3 + $0x18] sm:$0xff] %v603
    %612 = vst [vmem:[%s3 + $0x20] sm:$0xff] %v604
    %613 = vst [vmem:[%s3 + $0x28] sm:$0xff] %v605
    %614 = vst [vmem:[%s3 + $0x30] sm:$0xff] %v606
    %615 = vst [vmem:[%s3 + $0x38] sm:$0xff] %v607
    // Predicated region
    $region18: #{expanding_path_forward.6} parent=1 // pred_check
      _
    $region19: #{expanding_path_forward.6} parent=1 // pred_check_branch
      %617 = sbr.rel (0) target = $region21
    $region20: #{expanding_path_forward.6} parent=1 // pred_region
      _
    $region21: #{expanding_path_forward.6} parent=1 // pred_fallthru
      _
    // Predicated region
    $region22: #{expanding_path_forward.6} parent=1 // pred_check
      _
    $region23: #{expanding_path_forward.6} parent=1 // pred_check_branch
      %619 = sbr.rel (0) target = $region25
    $region24: #{expanding_path_forward.6} parent=1 // pred_region
      _
    $region25: #{expanding_path_forward.6} parent=1 // pred_fallthru
      _
    %620 = vsyncpa [#allocation3], 1

// kernel: expanding_path_forward.8
$region0: #{expanding_path_forward.8}
  #allocation0 [shape = 'u32[]', space=smem, size = 0x4, offset = 0x4, fixed_abs, tag = 'smem constant byte address 0x4 - core index']
  #allocation1 [shape = 'u32[72,128]{1,0:T(1,128)}', space=vmem, size = 0x9000, scoped, tag = 'internal scratch']
  %s0 = inlined_call_operand.vmem [shape: bf16[2,36,128], index: 0, kind: input, shape index: {}]
  %s1 = inlined_call_operand.vmem [shape: bf16[1152,128], index: 1, kind: input, shape index: {}]
  %s2 = inlined_call_operand.vmem [shape: f32[1,128], index: 2, kind: input, shape index: {}]
  %s3 = inlined_call_operand.vmem [shape: bf16[2,24,128], index: 3, kind: output, shape index: {}]
  %s4 = sld [smem:[#allocation0]]
  $region45: #{expanding_path_forward.8} parent=0
    _
  %s6 = ssub.s32 1, %s4
  %s7 = scalar_select 0, %s6, %s4
  loop: start=0, step=1, limit=4
  $region2: #{expanding_path_forward.8} parent=0 // loop_pre_header
    _
  $region3: #{expanding_path_forward.8} parent=0 // loop_header
    %s9 = sphi 0, %s13
    %p10 = scmp.ge.s32.totalorder %s9, 4
    %s19 = sphi 0, %s21
    %s22 = sphi 0, %s19
    %s23 = sphi 0, %s22
    %s39 = sphi 0, %s23
    %s43 = sphi 0, %s43
    %s45 = sphi 0, %s43
    %s46 = sphi 0, %s45
    %s60 = sphi 0, %s46
    %s64 = sphi 0, %s64
    %s66 = sphi 0, %s64
    %s67 = sphi 0, %s66
    %s81 = sphi 0, %s67
    %s87 = sphi 0, %s89
    %s90 = sphi 0, %s87
    %s91 = sphi 0, %s90
    %s107 = sphi 0, %s91
  $region4: #{expanding_path_forward.8} parent=0 // loop_header_branch
    %12 = sbr.rel (%p10) target = $region8
  $region5: #{expanding_path_forward.8} parent=0 // loop_body
    %s14 = ssub.s32 %s9, 1
    %s15 = ssub.s32 %s9, 2
    %s16 = sadd.s32 %s9, 1
    %s17 = ssub.s32 %s9, %s16
    %p18 = scmp.eq.s32.totalorder %s17, 0
    %s20 = sadd.s32 %s19, 1
    %s21 = scalar_select %p18, %s19, %s20
    %p24 = pneg %p18
    %p25 = scmp.eq.s32.totalorder %s9, 1
    %p26 = por %p24, %p25
    %p27 = scmp.ne.s32.totalorder %s19, %s22
    %p28 = scmp.eq.s32.totalorder %s9, 0
    %p29 = por %p27, %p28
    %p30 = scmp.ne.s32.totalorder %s19, %s22
    %p31 = scmp.eq.s32.totalorder %s14, 1
    %p32 = por %p30, %p31
    %p33 = scmp.ne.s32.totalorder %s22, %s23
    %p34 = scmp.eq.s32.totalorder %s14, 0
    %p35 = por %p33, %p34
    %p36 = scmp.ne.s32.totalorder %s22, %s23
    %p37 = scmp.eq.s32.totalorder %s15, 1
    %p38 = por %p36, %p37
    %p40 = scmp.ne.s32.totalorder %s23, %s39
    %p41 = scmp.eq.s32.totalorder %s15, 0
    %p42 = por %p40, %p41
    %s44 = sadd.s32 %s43, 1
    %p47 = scmp.eq.s32.totalorder %s9, 1
    %p48 = scmp.ne.s32.totalorder %s43, %s45
    %p49 = scmp.eq.s32.totalorder %s9, 0
    %p50 = por %p48, %p49
    %p51 = scmp.ne.s32.totalorder %s43, %s45
    %p52 = scmp.eq.s32.totalorder %s14, 1
    %p53 = por %p51, %p52
    %p54 = scmp.ne.s32.totalorder %s45, %s46
    %p55 = scmp.eq.s32.totalorder %s14, 0
    %p56 = por %p54, %p55
    %p57 = scmp.ne.s32.totalorder %s45, %s46
    %p58 = scmp.eq.s32.totalorder %s15, 1
    %p59 = por %p57, %p58
    %p61 = scmp.ne.s32.totalorder %s46, %s60
    %p62 = scmp.eq.s32.totalorder %s15, 0
    %p63 = por %p61, %p62
    %s65 = sadd.s32 %s64, 1
    %p68 = scmp.eq.s32.totalorder %s9, 1
    %p69 = scmp.ne.s32.totalorder %s64, %s66
    %p70 = scmp.eq.s32.totalorder %s9, 0
    %p71 = por %p69, %p70
    %p72 = scmp.ne.s32.totalorder %s64, %s66
    %p73 = scmp.eq.s32.totalorder %s14, 1
    %p74 = por %p72, %p73
    %p75 = scmp.ne.s32.totalorder %s66, %s67
    %p76 = scmp.eq.s32.totalorder %s14, 0
    %p77 = por %p75, %p76
    %p78 = scmp.ne.s32.totalorder %s66, %s67
    %p79 = scmp.eq.s32.totalorder %s15, 1
    %p80 = por %p78, %p79
    %p82 = scmp.ne.s32.totalorder %s67, %s81
    %p83 = scmp.eq.s32.totalorder %s15, 0
    %p84 = por %p82, %p83
    %s85 = ssub.s32 %s9, %s16
    %p86 = scmp.eq.s32.totalorder %s85, 0
    %s88 = sadd.s32 %s87, 1
    %s89 = scalar_select %p86, %s87, %s88
    %p92 = pneg %p86
    %p93 = scmp.eq.s32.totalorder %s9, 1
    %p94 = por %p92, %p93
    %p95 = scmp.ne.s32.totalorder %s87, %s90
    %p96 = scmp.eq.s32.totalorder %s9, 0
    %p97 = por %p95, %p96
    %p98 = scmp.ne.s32.totalorder %s87, %s90
    %p99 = scmp.eq.s32.totalorder %s14, 1
    %p100 = por %p98, %p99
    %p101 = scmp.ne.s32.totalorder %s90, %s91
    %p102 = scmp.eq.s32.totalorder %s14, 0
    %p103 = por %p101, %p102
    %p104 = scmp.ne.s32.totalorder %s90, %s91
    %p105 = scmp.eq.s32.totalorder %s15, 1
    %p106 = por %p104, %p105
    %p108 = scmp.ne.s32.totalorder %s91, %s107
    %p109 = scmp.eq.s32.totalorder %s15, 0
    %p110 = por %p108, %p109
    %p111 = scmp.le.s32.totalorder 1, %s9
    %p112 = scmp.lt.s32.totalorder %s9, 3
    %p113 = pnand %p111, %p112
    %p114 = pneg %p113
    // Predicated region
    $region9: #{expanding_path_forward.8} parent=5 // pred_check
      _
    $region10: #{expanding_path_forward.8} parent=5 // pred_check_branch
      %116 = sbr.rel (%p113) target = $region12
    $region11: #{expanding_path_forward.8} parent=5 // pred_region
      %s117 = ssub.s32 %s9, 1
      // Predicated region
      $region13: #{expanding_path_forward.8} parent=11 // pred_check
        %p118 = pneg %p56
      $region14: #{expanding_path_forward.8} parent=11 // pred_check_branch
        %120 = sbr.rel (%p118) target = $region16
      $region15: #{expanding_path_forward.8} parent=11 // pred_region
        _
      $region16: #{expanding_path_forward.8} parent=11 // pred_fallthru
        _
      // Predicated region
      $region17: #{expanding_path_forward.8} parent=11 // pred_check
        %p121 = pneg %p77
      $region18: #{expanding_path_forward.8} parent=11 // pred_check_branch
        %123 = sbr.rel (%p121) target = $region20
      $region19: #{expanding_path_forward.8} parent=11 // pred_region
        _
      $region20: #{expanding_path_forward.8} parent=11 // pred_fallthru
        _
    $region12: #{expanding_path_forward.8} parent=5 // pred_fallthru
      _
    %p124 = scmp.lt.s32.totalorder %s9, 2
    // Predicated region
    $region21: #{expanding_path_forward.8} parent=5 // pred_check
      %p125 = pneg %p124
    $region22: #{expanding_path_forward.8} parent=5 // pred_check_branch
      %127 = sbr.rel (%p125) target = $region24
    $region23: #{expanding_path_forward.8} parent=5 // pred_region
      // Predicated region
      $region25: #{expanding_path_forward.8} parent=23 // pred_check
        %p128 = pneg %p29
      $region26: #{expanding_path_forward.8} parent=23 // pred_check_branch
        %130 = sbr.rel (%p128) target = $region28
      $region27: #{expanding_path_forward.8} parent=23 // pred_region
        %p131 = scmp.lt.s32.totalorder %s9, 1
        %s132 = scalar_select %p131, %s9, 1
        %s133 = smul.addr %s132, 5
        %s134 = smul.addr %s133, 4
        %s135 = scalar_lea.vmem %s0, %s134
      $region28: #{expanding_path_forward.8} parent=23 // pred_fallthru
        _
    $region24: #{expanding_path_forward.8} parent=5 // pred_fallthru
      _
    %p136 = scmp.le.s32.totalorder 1, %s9
    %p137 = scmp.lt.s32.totalorder %s9, 3
    %p138 = pnand %p136, %p137
    %p139 = pneg %p138
    // Predicated region
    $region29: #{expanding_path_forward.8} parent=5 // pred_check
      _
    $region30: #{expanding_path_forward.8} parent=5 // pred_check_branch
      %141 = sbr.rel (%p138) target = $region32
    $region31: #{expanding_path_forward.8} parent=5 // pred_region
      %s142 = ssub.s32 %s9, 1
      %p143 = scmp.lt.s32.totalorder %s14, 1
      %s144 = scalar_select %p143, %s14, 1
      %s145 = smul.addr %s144, 5
      %s146 = smul.addr %s145, 4
      %s147 = scalar_lea.vmem %s0, %s146
      %p148 = pneg %p35
      %p149 = pneg %p32
      %p150 = pneg %p56
      %p151 = pneg %p53
      %p152 = pneg %p77
      %p153 = pneg %p74
      %p154 = pneg %p103
      %p155 = pneg %p100
      %p156 = scmp.lt.s32.totalorder %s14, 1
      %s157 = scalar_select %p156, %s14, 1
      %s158 = smul.addr %s157, 3
      %s159 = smul.addr %s158, 4
      %s160 = scalar_lea.vmem %s3, %s159
      %p161 = scmp.lt.s32.totalorder %s14, 1
      %s162 = scalar_select %p161, %s14, 1
      %s163 = smul.addr %s162, 5
      %s164 = smul.addr %s163, 4
      %s165 = scalar_lea.vmem %s0, %s164
      %p166 = scmp.lt.s32.totalorder %s14, 1
      %s167 = scalar_select %p166, %s14, 1
      %s168 = smul.addr %s167, 3
      %s169 = smul.addr %s168, 4
      %s170 = scalar_lea.vmem %s3, %s169
      %v171 = vld [vmem:[%s165] sm:$0xf]
      %v172 = vld [vmem:[%s165 + $0x4] sm:$0xf]
      %v173 = vld [vmem:[%s165 + $0x8] sm:$0x7]
      %v174 = vld [vmem:[%s1] sm:$0xf]
      %v175 = vld [vmem:[%s1 + $0x4] sm:$0xf]
      %v176 = vld [vmem:[%s1 + $0x8] sm:$0xf]
      %v177 = vld [vmem:[%s1 + $0xc] sm:$0xf]
      %v178 = vld [vmem:[%s1 + $0x10] sm:$0xf]
      %v179 = vld [vmem:[%s1 + $0x14] sm:$0xf]
      %v180 = vld [vmem:[%s1 + $0x18] sm:$0xf]
      %v181 = vld [vmem:[%s1 + $0x1c] sm:$0xf]
      %v182 = vld [vmem:[%s1 + $0x20] sm:$0xf]
      %v183 = vld [vmem:[%s1 + $0x24] sm:$0xf]
      %v184 = vld [vmem:[%s1 + $0x28] sm:$0xf]
      %v185 = vld [vmem:[%s1 + $0x2c] sm:$0xf]
      %v186 = vld [vmem:[%s1 + $0x30] sm:$0xf]
      %v187 = vld [vmem:[%s1 + $0x34] sm:$0xf]
      %v188 = vld [vmem:[%s1 + $0x38] sm:$0xf]
      %v189 = vld [vmem:[%s1 + $0x3c] sm:$0xf]
      %v190 = vld [vmem:[%s165 + $0x8] sm:$0xf]
      %v191 = vld [vmem:[%s1 + $0x40] sm:$0xf]
      %v192 = vld [vmem:[%s1 + $0x44] sm:$0xf]
      %v193 = vld [vmem:[%s1 + $0x48] sm:$0xf]
      %v194 = vld [vmem:[%s1 + $0x4c] sm:$0xf]
      %v195 = vld [vmem:[%s1 + $0x50] sm:$0xf]
      %v196 = vld [vmem:[%s1 + $0x54] sm:$0xf]
      %v197 = vld [vmem:[%s1 + $0x58] sm:$0xf]
      %v198 = vld [vmem:[%s1 + $0x5c] sm:$0xf]
      %v199 = vld [vmem:[%s1 + $0x60] sm:$0xf]
      %v200 = vld [vmem:[%s1 + $0x64] sm:$0xf]
      %v201 = vld [vmem:[%s1 + $0x68] sm:$0xf]
      %v202 = vld [vmem:[%s1 + $0x6c] sm:$0xf]
      %v203 = vld [vmem:[%s1 + $0x70] sm:$0xf]
      %v204 = vld [vmem:[%s1 + $0x74] sm:$0xf]
      %v205 = vld [vmem:[%s1 + $0x78] sm:$0xf]
      %v206 = vld [vmem:[%s1 + $0x7c] sm:$0xf]
      %v210 = vunpack.c.l.b16 %v171
      %v211 = vunpack.c.l.b16 %v172
      %v212 = vunpack.c.l.b16 %v190
      %v213 = vpack.c.b16 %v211, %v210
      %v214 = vpack.c.b16 %v212, %v212
      %vm215 = vsmask.f32 7424
      %v217 = vshrl.u32 %v213, 16
      %v219 = vshll.u32 %v213, 16
      %v221 = vrot.slane %v219, 1
      %v222 = vor.u32 %v217, %v221
      %v224 = vshll.u32 %v214, 16
      %v226 = vrot.slane %v224, 1
      %v227 = vsel %vm215, %v222, %v226
      %v228 = vshrl.u32 %v214, 16
      %v230 = vor.u32 %v228, %v226
      %v249 = vunpack.c.l.b16 %v191
      %v250 = vunpack.c.l.b16 %v192
      %v251 = vunpack.c.l.b16 %v193
      %v252 = vunpack.c.l.b16 %v194
      %v253 = vunpack.c.l.b16 %v195
      %v254 = vunpack.c.l.b16 %v196
      %v255 = vunpack.c.l.b16 %v197
      %v256 = vunpack.c.l.b16 %v198
      %v257 = vunpack.c.l.b16 %v199
      %v258 = vunpack.c.l.b16 %v200
      %v259 = vunpack.c.l.b16 %v201
      %v260 = vunpack.c.l.b16 %v202
      %v261 = vunpack.c.l.b16 %v203
      %v262 = vunpack.c.l.b16 %v204
      %v263 = vunpack.c.l.b16 %v205
      %v264 = vunpack.c.l.b16 %v206
      %v265 = vpack.c.b16 %v250, %v249
      %v266 = vpack.c.b16 %v252, %v251
      %v267 = vpack.c.b16 %v254, %v253
      %v268 = vpack.c.b16 %v256, %v255
      %v269 = vpack.c.b16 %v258, %v257
      %v270 = vpack.c.b16 %v260, %v259
      %v271 = vpack.c.b16 %v262, %v261
      %v272 = vpack.c.b16 %v264, %v263
      %281 = vmatpush.bf16.msra.mxu0 %v272
      %282 = vmatpush.bf16.msra.mxu0 %v271
      %283 = vmatpush.bf16.msra.mxu0 %v270
      %284 = vmatpush.bf16.msra.mxu0 %v269
      %285 = vmatpush.bf16.msra.mxu0 %v268
      %286 = vmatpush.bf16.msra.mxu0 %v267
      %287 = vmatpush.bf16.msra.mxu0 %v266
      %288 = vmatpush.bf16.msra.mxu0 %v265
      %289 = vmatmul.bf16.gmra.mxu0 %v227
      %v290 = vpop.f32.mrf.mxu0
      %v291 = vadd.f32 0.0, %v290
      %v292 = vpop.f32.mrf.mxu0
      %v293 = vadd.f32 0.0, %v292
      %294 = vmatmul.bf16.gmra.mxu0 %v230
      %v295 = vpop.f32.mrf.mxu0
      %v296 = vadd.f32 0.0, %v295
      %v297 = vpop.f32.mrf.mxu0
      %298 = vdwg.mxu0
      %v300 = vunpack.c.l.b16 %v173
      %v301 = vpack.c.b16 %v300, %v300
      %v320 = vunpack.c.l.b16 %v174
      %v321 = vunpack.c.l.b16 %v175
      %v322 = vunpack.c.l.b16 %v176
      %v323 = vunpack.c.l.b16 %v177
      %v324 = vunpack.c.l.b16 %v178
      %v325 = vunpack.c.l.b16 %v179
      %v326 = vunpack.c.l.b16 %v180
      %v327 = vunpack.c.l.b16 %v181
      %v328 = vunpack.c.l.b16 %v182
      %v329 = vunpack.c.l.b16 %v183
      %v330 = vunpack.c.l.b16 %v184
      %v331 = vunpack.c.l.b16 %v185
      %v332 = vunpack.c.l.b16 %v186
      %v333 = vunpack.c.l.b16 %v187
      %v334 = vunpack.c.l.b16 %v188
      %v335 = vunpack.c.l.b16 %v189
      %v336 = vpack.c.b16 %v321, %v320
      %v337 = vpack.c.b16 %v323, %v322
      %v338 = vpack.c.b16 %v325, %v324
      %v339 = vpack.c.b16 %v327, %v326
      %v340 = vpack.c.b16 %v329, %v328
      %v341 = vpack.c.b16 %v331, %v330
      %v342 = vpack.c.b16 %v333, %v332
      %v343 = vpack.c.b16 %v335, %v334
      %352 = vmatpush.bf16.msra.mxu0 %v343
      %353 = vmatpush.bf16.msra.mxu0 %v342
      %354 = vmatpush.bf16.msra.mxu0 %v341
      %355 = vmatpush.bf16.msra.mxu0 %v340
      %356 = vmatpush.bf16.msra.mxu0 %v339
      %357 = vmatpush.bf16.msra.mxu0 %v338
      %358 = vmatpush.bf16.msra.mxu0 %v337
      %359 = vmatpush.bf16.msra.mxu0 %v336
      %360 = vmatmul.bf16.gmra.mxu0 %v213
      %v361 = vpop.f32.mrf.mxu0
      %v362 = vadd.f32 %v291, %v361
      %v363 = vpop.f32.mrf.mxu0
      %v364 = vadd.f32 %v293, %v363
      %365 = vmatmul.bf16.gmra.mxu0 %v301
      %v366 = vpop.f32.mrf.mxu0
      %v367 = vadd.f32 %v296, %v366
      %v368 = vpop.f32.mrf.mxu0
      %369 = vdwg.mxu0
      %v370 = vld [vmem:[%s165] sm:$0xe]
      %v371 = vld [vmem:[%s1 + $0x80] sm:$0xf]
      %v372 = vld [vmem:[%s1 + $0x84] sm:$0xf]
      %v373 = vld [vmem:[%s1 + $0x88] sm:$0xf]
      %v374 = vld [vmem:[%s1 + $0x8c] sm:$0xf]
      %v375 = vld [vmem:[%s1 + $0x90] sm:$0xf]
      %v376 = vld [vmem:[%s1 + $0x94] sm:$0xf]
      %v377 = vld [vmem:[%s1 + $0x98] sm:$0xf]
      %v378 = vld [vmem:[%s1 + $0x9c] sm:$0xf]
      %v379 = vld [vmem:[%s1 + $0xa0] sm:$0xf]
      %v380 = vld [vmem:[%s1 + $0xa4] sm:$0xf]
      %v381 = vld [vmem:[%s1 + $0xa8] sm:$0xf]
      %v382 = vld [vmem:[%s1 + $0xac] sm:$0xf]
      %v383 = vld [vmem:[%s1 + $0xb0] sm:$0xf]
      %v384 = vld [vmem:[%s1 + $0xb4] sm:$0xf]
      %v385 = vld [vmem:[%s1 + $0xb8] sm:$0xf]
      %v386 = vld [vmem:[%s1 + $0xbc] sm:$0xf]
      %v388 = vunpack.c.l.b16 %v370
      %v389 = vpack.c.b16 %v211, %v388
      %vm390 = vcmask 1046528
      %v391 = vrot.slane %v389, 1
      %v392 = vrot.slane %v214, 1
      %v393 = vsel %vm390, %v391, %v392
      %v412 = vunpack.c.l.b16 %v371
      %v413 = vunpack.c.l.b16 %v372
      %v414 = vunpack.c.l.b16 %v373
      %v415 = vunpack.c.l.b16 %v374
      %v416 = vunpack.c.l.b16 %v375
      %v417 = vunpack.c.l.b16 %v376
      %v418 = vunpack.c.l.b16 %v377
      %v419 = vunpack.c.l.b16 %v378
      %v420 = vunpack.c.l.b16 %v379
      %v421 = vunpack.c.l.b16 %v380
      %v422 = vunpack.c.l.b16 %v381
      %v423 = vunpack.c.l.b16 %v382
      %v424 = vunpack.c.l.b16 %v383
      %v425 = vunpack.c.l.b16 %v384
      %v426 = vunpack.c.l.b16 %v385
      %v427 = vunpack.c.l.b16 %v386
      %v428 = vpack.c.b16 %v413, %v412
      %v429 = vpack.c.b16 %v415, %v414
      %v430 = vpack.c.b16 %v417, %v416
      %v431 = vpack.c.b16 %v419, %v418
      %v432 = vpack.c.b16 %v421, %v420
      %v433 = vpack.c.b16 %v423, %v422
      %v434 = vpack.c.b16 %v425, %v424
      %v435 = vpack.c.b16 %v427, %v426
      %444 = vmatpush.bf16.msra.mxu0 %v435
      %445 = vmatpush.bf16.msra.mxu0 %v434
      %446 = vmatpush.bf16.msra.mxu0 %v433
      %447 = vmatpush.bf16.msra.mxu0 %v432
      %448 = vmatpush.bf16.msra.mxu0 %v431
      %449 = vmatpush.bf16.msra.mxu0 %v430
      %450 = vmatpush.bf16.msra.mxu0 %v429
      %451 = vmatpush.bf16.msra.mxu0 %v428
      %452 = vmatmul.bf16.gmra.mxu0 %v393
      %v453 = vpop.f32.mrf.mxu0
      %v454 = vadd.f32 0.0, %v453
      %v455 = vpop.f32.mrf.mxu0
      %v456 = vadd.f32 0.0, %v455
      %457 = vmatmul.bf16.gmra.mxu0 %v392
      %v458 = vpop.f32.mrf.mxu0
      %v459 = vadd.f32 0.0, %v458
      %v460 = vpop.f32.mrf.mxu0
      %461 = vdwg.mxu0
      %v462 = vadd.f32 %v362, %v454
      %v463 = vadd.f32 %v364, %v456
      %v464 = vadd.f32 %v367, %v459
      %v465 = vld [vmem:[%s165] sm:$0x8]
      %v466 = vld [vmem:[%s165 + $0x4] sm:$0xf]
      %v467 = vld [vmem:[%s165 + $0x8] sm:$0xf]
      %v468 = vld [vmem:[%s165 + $0xc] sm:$0x3]
      %v469 = vld [vmem:[%s1 + $0xc0] sm:$0xf]
      %v470 = vld [vmem:[%s1 + $0xc4] sm:$0xf]
      %v471 = vld [vmem:[%s1 + $0xc8] sm:$0xf]
      %v472 = vld [vmem:[%s1 + $0xcc] sm:$0xf]
      %v473 = vld [vmem:[%s1 + $0xd0] sm:$0xf]
      %v474 = vld [vmem:[%s1 + $0xd4] sm:$0xf]
      %v475 = vld [vmem:[%s1 + $0xd8] sm:$0xf]
      %v476 = vld [vmem:[%s1 + $0xdc] sm:$0xf]
      %v477 = vld [vmem:[%s1 + $0xe0] sm:$0xf]
      %v478 = vld [vmem:[%s1 + $0xe4] sm:$0xf]
      %v479 = vld [vmem:[%s1 + $0xe8] sm:$0xf]
      %v480 = vld [vmem:[%s1 + $0xec] sm:$0xf]
      %v481 = vld [vmem:[%s1 + $0xf0] sm:$0xf]
      %v482 = vld [vmem:[%s1 + $0xf4] sm:$0xf]
      %v483 = vld [vmem:[%s1 + $0xf8] sm:$0xf]
      %v484 = vld [vmem:[%s1 + $0xfc] sm:$0xf]
      %v489 = vunpack.c.l.b16 %v465
      %v490 = vunpack.c.l.b16 %v466
      %v491 = vunpack.c.l.b16 %v467
      %v492 = vunpack.c.l.b16 %v468
      %v493 = vpack.c.b16 %v490, %v489
      %v494 = vpack.c.b16 %v492, %v491
      %vm495 = vcmask 1044480
      %v496 = vrot.slane %v493, 3
      %v497 = vrot.slane %v494, 3
      %v498 = vsel %vm495, %v496, %v497
      %v517 = vunpack.c.l.b16 %v469
      %v518 = vunpack.c.l.b16 %v470
      %v519 = vunpack.c.l.b16 %v471
      %v520 = vunpack.c.l.b16 %v472
      %v521 = vunpack.c.l.b16 %v473
      %v522 = vunpack.c.l.b16 %v474
      %v523 = vunpack.c.l.b16 %v475
      %v524 = vunpack.c.l.b16 %v476
      %v525 = vunpack.c.l.b16 %v477
      %v526 = vunpack.c.l.b16 %v478
      %v527 = vunpack.c.l.b16 %v479
      %v528 = vunpack.c.l.b16 %v480
      %v529 = vunpack.c.l.b16 %v481
      %v530 = vunpack.c.l.b16 %v482
      %v531 = vunpack.c.l.b16 %v483
      %v532 = vunpack.c.l.b16 %v484
      %v533 = vpack.c.b16 %v518, %v517
      %v534 = vpack.c.b16 %v520, %v519
      %v535 = vpack.c.b16 %v522, %v521
      %v536 = vpack.c.b16 %v524, %v523
      %v537 = vpack.c.b16 %v526, %v525
      %v538 = vpack.c.b16 %v528, %v527
      %v539 = vpack.c.b16 %v530, %v529
      %v540 = vpack.c.b16 %v532, %v531
      %549 = vmatpush.bf16.msra.mxu0 %v540
      %550 = vmatpush.bf16.msra.mxu0 %v539
      %551 = vmatpush.bf16.msra.mxu0 %v538
      %552 = vmatpush.bf16.msra.mxu0 %v537
      %553 = vmatpush.bf16.msra.mxu0 %v536
      %554 = vmatpush.bf16.msra.mxu0 %v535
      %555 = vmatpush.bf16.msra.mxu0 %v534
      %556 = vmatpush.bf16.msra.mxu0 %v533
      %557 = vmatmul.bf16.gmra.mxu0 %v498
      %v558 = vpop.f32.mrf.mxu0
      %v559 = vadd.f32 0.0, %v558
      %v560 = vpop.f32.mrf.mxu0
      %v561 = vadd.f32 0.0, %v560
      %562 = vmatmul.bf16.gmra.mxu0 %v497
      %v563 = vpop.f32.mrf.mxu0
      %v564 = vadd.f32 0.0, %v563
      %v565 = vpop.f32.mrf.mxu0
      %566 = vdwg.mxu0
      %v567 = vadd.f32 %v462, %v559
      %v568 = vadd.f32 %v463, %v561
      %v569 = vadd.f32 %v464, %v564
      %v570 = vld [vmem:[%s165 + $0xc] sm:$0x7]
      %v571 = vld [vmem:[%s1 + $0x100] sm:$0xf]
      %v572 = vld [vmem:[%s1 + $0x104] sm:$0xf]
      %v573 = vld [vmem:[%s1 + $0x108] sm:$0xf]
      %v574 = vld [vmem:[%s1 + $0x10c] sm:$0xf]
      %v575 = vld [vmem:[%s1 + $0x110] sm:$0xf]
      %v576 = vld [vmem:[%s1 + $0x114] sm:$0xf]
      %v577 = vld [vmem:[%s1 + $0x118] sm:$0xf]
      %v578 = vld [vmem:[%s1 + $0x11c] sm:$0xf]
      %v579 = vld [vmem:[%s1 + $0x120] sm:$0xf]
      %v580 = vld [vmem:[%s1 + $0x124] sm:$0xf]
      %v581 = vld [vmem:[%s1 + $0x128] sm:$0xf]
      %v582 = vld [vmem:[%s1 + $0x12c] sm:$0xf]
      %v583 = vld [vmem:[%s1 + $0x130] sm:$0xf]
      %v584 = vld [vmem:[%s1 + $0x134] sm:$0xf]
      %v585 = vld [vmem:[%s1 + $0x138] sm:$0xf]
      %v586 = vld [vmem:[%s1 + $0x13c] sm:$0xf]
      %v588 = vunpack.c.l.b16 %v570
      %v589 = vpack.c.b16 %v588, %v491
      %vm590 = vsmask.f32 4352
      %v592 = vshrl.u32 %v493, 16
      %v594 = vrot.slane %v592, 3
      %v595 = vshll.u32 %v493, 16
      %v597 = vrot.slane %v595, 4
      %v598 = vor.u32 %v594, %v597
      %v600 = vshrl.u32 %v589, 16
      %v602 = vrot.slane %v600, 3
      %v603 = vshll.u32 %v589, 16
      %v605 = vrot.slane %v603, 4
      %v606 = vor.u32 %v602, %v605
      %v607 = vsel %vm590, %v598, %v606
      %v626 = vunpack.c.l.b16 %v571
      %v627 = vunpack.c.l.b16 %v572
      %v628 = vunpack.c.l.b16 %v573
      %v629 = vunpack.c.l.b16 %v574
      %v630 = vunpack.c.l.b16 %v575
      %v631 = vunpack.c.l.b16 %v576
      %v632 = vunpack.c.l.b16 %v577
      %v633 = vunpack.c.l.b16 %v578
      %v634 = vunpack.c.l.b16 %v579
      %v635 = vunpack.c.l.b16 %v580
      %v636 = vunpack.c.l.b16 %v581
      %v637 = vunpack.c.l.b16 %v582
      %v638 = vunpack.c.l.b16 %v583
      %v639 = vunpack.c.l.b16 %v584
      %v640 = vunpack.c.l.b16 %v585
      %v641 = vunpack.c.l.b16 %v586
      %v642 = vpack.c.b16 %v627, %v626
      %v643 = vpack.c.b16 %v629, %v628
      %v644 = vpack.c.b16 %v631, %v630
      %v645 = vpack.c.b16 %v633, %v632
      %v646 = vpack.c.b16 %v635, %v634
      %v647 = vpack.c.b16 %v637, %v636
      %v648 = vpack.c.b16 %v639, %v638
      %v649 = vpack.c.b16 %v641, %v640
      %658 = vmatpush.bf16.msra.mxu0 %v649
      %659 = vmatpush.bf16.msra.mxu0 %v648
      %660 = vmatpush.bf16.msra.mxu0 %v647
      %661 = vmatpush.bf16.msra.mxu0 %v646
      %662 = vmatpush.bf16.msra.mxu0 %v645
      %663 = vmatpush.bf16.msra.mxu0 %v644
      %664 = vmatpush.bf16.msra.mxu0 %v643
      %665 = vmatpush.bf16.msra.mxu0 %v642
      %666 = vmatmul.bf16.gmra.mxu0 %v607
      %v667 = vpop.f32.mrf.mxu0
      %v668 = vadd.f32 0.0, %v667
      %v669 = vpop.f32.mrf.mxu0
      %v670 = vadd.f32 0.0, %v669
      %671 = vmatmul.bf16.gmra.mxu0 %v606
      %v672 = vpop.f32.mrf.mxu0
      %v673 = vadd.f32 0.0, %v672
      %v674 = vpop.f32.mrf.mxu0
      %675 = vdwg.mxu0
      %v676 = vadd.f32 %v567, %v668
      %v677 = vadd.f32 %v568, %v670
      %v678 = vadd.f32 %v569, %v673
      %v679 = vld [vmem:[%s1 + $0x140] sm:$0xf]
      %v680 = vld [vmem:[%s1 + $0x144] sm:$0xf]
      %v681 = vld [vmem:[%s1 + $0x148] sm:$0xf]
      %v682 = vld [vmem:[%s1 + $0x14c] sm:$0xf]
      %v683 = vld [vmem:[%s1 + $0x150] sm:$0xf]
      %v684 = vld [vmem:[%s1 + $0x154] sm:$0xf]
      %v685 = vld [vmem:[%s1 + $0x158] sm:$0xf]
      %v686 = vld [vmem:[%s1 + $0x15c] sm:$0xf]
      %v687 = vld [vmem:[%s1 + $0x160] sm:$0xf]
      %v688 = vld [vmem:[%s1 + $0x164] sm:$0xf]
      %v689 = vld [vmem:[%s1 + $0x168] sm:$0xf]
      %v690 = vld [vmem:[%s1 + $0x16c] sm:$0xf]
      %v691 = vld [vmem:[%s1 + $0x170] sm:$0xf]
      %v692 = vld [vmem:[%s1 + $0x174] sm:$0xf]
      %v693 = vld [vmem:[%s1 + $0x178] sm:$0xf]
      %v694 = vld [vmem:[%s1 + $0x17c] sm:$0xf]
      %v695 = vpack.c.b16 %v491, %v490
      %v696 = vpack.c.b16 %v588, %v588
      %v715 = vunpack.c.l.b16 %v679
      %v716 = vunpack.c.l.b16 %v680
      %v717 = vunpack.c.l.b16 %v681
      %v718 = vunpack.c.l.b16 %v682
      %v719 = vunpack.c.l.b16 %v683
      %v720 = vunpack.c.l.b16 %v684
      %v721 = vunpack.c.l.b16 %v685
      %v722 = vunpack.c.l.b16 %v686
      %v723 = vunpack.c.l.b16 %v687
      %v724 = vunpack.c.l.b16 %v688
      %v725 = vunpack.c.l.b16 %v689
      %v726 = vunpack.c.l.b16 %v690
      %v727 = vunpack.c.l.b16 %v691
      %v728 = vunpack.c.l.b16 %v692
      %v729 = vunpack.c.l.b16 %v693
      %v730 = vunpack.c.l.b16 %v694
      %v731 = vpack.c.b16 %v716, %v715
      %v732 = vpack.c.b16 %v718, %v717
      %v733 = vpack.c.b16 %v720, %v719
      %v734 = vpack.c.b16 %v722, %v721
      %v735 = vpack.c.b16 %v724, %v723
      %v736 = vpack.c.b16 %v726, %v725
      %v737 = vpack.c.b16 %v728, %v727
      %v738 = vpack.c.b16 %v730, %v729
      %747 = vmatpush.bf16.msra.mxu0 %v738
      %748 = vmatpush.bf16.msra.mxu0 %v737
      %749 = vmatpush.bf16.msra.mxu0 %v736
      %750 = vmatpush.bf16.msra.mxu0 %v735
      %751 = vmatpush.bf16.msra.mxu0 %v734
      %752 = vmatpush.bf16.msra.mxu0 %v733
      %753 = vmatpush.bf16.msra.mxu0 %v732
      %754 = vmatpush.bf16.msra.mxu0 %v731
      %755 = vmatmul.bf16.gmra.mxu0 %v695
      %v756 = vpop.f32.mrf.mxu0
      %v757 = vadd.f32 0.0, %v756
      %v758 = vpop.f32.mrf.mxu0
      %v759 = vadd.f32 0.0, %v758
      %760 = vmatmul.bf16.gmra.mxu0 %v696
      %v761 = vpop.f32.mrf.mxu0
      %v762 = vadd.f32 0.0, %v761
      %v763 = vpop.f32.mrf.mxu0
      %764 = vdwg.mxu0
      %v765 = vadd.f32 %v676, %v757
      %v766 = vadd.f32 %v677, %v759
      %v767 = vadd.f32 %v678, %v762
      %v768 = vld [vmem:[%s165 + $0x4] sm:$0xc]
      %v769 = vld [vmem:[%s165 + $0x8] sm:$0xf]
      %v770 = vld [vmem:[%s165 + $0xc] sm:$0xf]
      %v771 = vld [vmem:[%s165 + $0x10] sm:$0x1]
      %v772 = vld [vmem:[%s1 + $0x180] sm:$0xf]
      %v773 = vld [vmem:[%s1 + $0x184] sm:$0xf]
      %v774 = vld [vmem:[%s1 + $0x188] sm:$0xf]
      %v775 = vld [vmem:[%s1 + $0x18c] sm:$0xf]
      %v776 = vld [vmem:[%s1 + $0x190] sm:$0xf]
      %v777 = vld [vmem:[%s1 + $0x194] sm:$0xf]
      %v778 = vld [vmem:[%s1 + $0x198] sm:$0xf]
      %v779 = vld [vmem:[%s1 + $0x19c] sm:$0xf]
      %v780 = vld [vmem:[%s1 + $0x1a0] sm:$0xf]
      %v781 = vld [vmem:[%s1 + $0x1a4] sm:$0xf]
      %v782 = vld [vmem:[%s1 + $0x1a8] sm:$0xf]
      %v783 = vld [vmem:[%s1 + $0x1ac] sm:$0xf]
      %v784 = vld [vmem:[%s1 + $0x1b0] sm:$0xf]
      %v785 = vld [vmem:[%s1 + $0x1b4] sm:$0xf]
      %v786 = vld [vmem:[%s1 + $0x1b8] sm:$0xf]
      %v787 = vld [vmem:[%s1 + $0x1bc] sm:$0xf]
      %v792 = vunpack.c.l.b16 %v768
      %v793 = vunpack.c.l.b16 %v769
      %v794 = vunpack.c.l.b16 %v770
      %v795 = vunpack.c.l.b16 %v771
      %v796 = vpack.c.b16 %v793, %v792
      %v797 = vpack.c.b16 %v795, %v794
      %vm798 = vcmask 1045504
      %v799 = vrot.slane %v796, 2
      %v800 = vrot.slane %v797, 2
      %v801 = vsel %vm798, %v799, %v800
      %v820 = vunpack.c.l.b16 %v772
      %v821 = vunpack.c.l.b16 %v773
      %v822 = vunpack.c.l.b16 %v774
      %v823 = vunpack.c.l.b16 %v775
      %v824 = vunpack.c.l.b16 %v776
      %v825 = vunpack.c.l.b16 %v777
      %v826 = vunpack.c.l.b16 %v778
      %v827 = vunpack.c.l.b16 %v779
      %v828 = vunpack.c.l.b16 %v780
      %v829 = vunpack.c.l.b16 %v781
      %v830 = vunpack.c.l.b16 %v782
      %v831 = vunpack.c.l.b16 %v783
      %v832 = vunpack.c.l.b16 %v784
      %v833 = vunpack.c.l.b16 %v785
      %v834 = vunpack.c.l.b16 %v786
      %v835 = vunpack.c.l.b16 %v787
      %v836 = vpack.c.b16 %v821, %v820
      %v837 = vpack.c.b16 %v823, %v822
      %v838 = vpack.c.b16 %v825, %v824
      %v839 = vpack.c.b16 %v827, %v826
      %v840 = vpack.c.b16 %v829, %v828
      %v841 = vpack.c.b16 %v831, %v830
      %v842 = vpack.c.b16 %v833, %v832
      %v843 = vpack.c.b16 %v835, %v834
      %852 = vmatpush.bf16.msra.mxu0 %v843
      %853 = vmatpush.bf16.msra.mxu0 %v842
      %854 = vmatpush.bf16.msra.mxu0 %v841
      %855 = vmatpush.bf16.msra.mxu0 %v840
      %856 = vmatpush.bf16.msra.mxu0 %v839
      %857 = vmatpush.bf16.msra.mxu0 %v838
      %858 = vmatpush.bf16.msra.mxu0 %v837
      %859 = vmatpush.bf16.msra.mxu0 %v836
      %860 = vmatmul.bf16.gmra.mxu0 %v801
      %v861 = vpop.f32.mrf.mxu0
      %v862 = vadd.f32 0.0, %v861
      %v863 = vpop.f32.mrf.mxu0
      %v864 = vadd.f32 0.0, %v863
      %865 = vmatmul.bf16.gmra.mxu0 %v800
      %v866 = vpop.f32.mrf.mxu0
      %v867 = vadd.f32 0.0, %v866
      %v868 = vpop.f32.mrf.mxu0
      %869 = vdwg.mxu0
      %v870 = vadd.f32 %v765, %v862
      %v871 = vadd.f32 %v766, %v864
      %v872 = vadd.f32 %v767, %v867
      %v873 = vld [vmem:[%s165 + $0x10] sm:$0x3]
      %v874 = vld [vmem:[%s1 + $0x1c0] sm:$0xf]
      %v875 = vld [vmem:[%s1 + $0x1c4] sm:$0xf]
      %v876 = vld [vmem:[%s1 + $0x1c8] sm:$0xf]
      %v877 = vld [vmem:[%s1 + $0x1cc] sm:$0xf]
      %v878 = vld [vmem:[%s1 + $0x1d0] sm:$0xf]
      %v879 = vld [vmem:[%s1 + $0x1d4] sm:$0xf]
      %v880 = vld [vmem:[%s1 + $0x1d8] sm:$0xf]
      %v881 = vld [vmem:[%s1 + $0x1dc] sm:$0xf]
      %v882 = vld [vmem:[%s1 + $0x1e0] sm:$0xf]
      %v883 = vld [vmem:[%s1 + $0x1e4] sm:$0xf]
      %v884 = vld [vmem:[%s1 + $0x1e8] sm:$0xf]
      %v885 = vld [vmem:[%s1 + $0x1ec] sm:$0xf]
      %v886 = vld [vmem:[%s1 + $0x1f0] sm:$0xf]
      %v887 = vld [vmem:[%s1 + $0x1f4] sm:$0xf]
      %v888 = vld [vmem:[%s1 + $0x1f8] sm:$0xf]
      %v889 = vld [vmem:[%s1 + $0x1fc] sm:$0xf]
      %v891 = vunpack.c.l.b16 %v873
      %v892 = vpack.c.b16 %v891, %v794
      %vm893 = vsmask.f32 5376
      %v895 = vshrl.u32 %v796, 16
      %v897 = vrot.slane %v895, 2
      %v898 = vshll.u32 %v796, 16
      %v900 = vrot.slane %v898, 3
      %v901 = vor.u32 %v897, %v900
      %v903 = vshrl.u32 %v892, 16
      %v905 = vrot.slane %v903, 2
      %v906 = vshll.u32 %v892, 16
      %v908 = vrot.slane %v906, 3
      %v909 = vor.u32 %v905, %v908
      %v910 = vsel %vm893, %v901, %v909
      %v929 = vunpack.c.l.b16 %v874
      %v930 = vunpack.c.l.b16 %v875
      %v931 = vunpack.c.l.b16 %v876
      %v932 = vunpack.c.l.b16 %v877
      %v933 = vunpack.c.l.b16 %v878
      %v934 = vunpack.c.l.b16 %v879
      %v935 = vunpack.c.l.b16 %v880
      %v936 = vunpack.c.l.b16 %v881
      %v937 = vunpack.c.l.b16 %v882
      %v938 = vunpack.c.l.b16 %v883
      %v939 = vunpack.c.l.b16 %v884
      %v940 = vunpack.c.l.b16 %v885
      %v941 = vunpack.c.l.b16 %v886
      %v942 = vunpack.c.l.b16 %v887
      %v943 = vunpack.c.l.b16 %v888
      %v944 = vunpack.c.l.b16 %v889
      %v945 = vpack.c.b16 %v930, %v929
      %v946 = vpack.c.b16 %v932, %v931
      %v947 = vpack.c.b16 %v934, %v933
      %v948 = vpack.c.b16 %v936, %v935
      %v949 = vpack.c.b16 %v938, %v937
      %v950 = vpack.c.b16 %v940, %v939
      %v951 = vpack.c.b16 %v942, %v941
      %v952 = vpack.c.b16 %v944, %v943
      %961 = vmatpush.bf16.msra.mxu0 %v952
      %962 = vmatpush.bf16.msra.mxu0 %v951
      %963 = vmatpush.bf16.msra.mxu0 %v950
      %964 = vmatpush.bf16.msra.mxu0 %v949
      %965 = vmatpush.bf16.msra.mxu0 %v948
      %966 = vmatpush.bf16.msra.mxu0 %v947
      %967 = vmatpush.bf16.msra.mxu0 %v946
      %968 = vmatpush.bf16.msra.mxu0 %v945
      %969 = vmatmul.bf16.gmra.mxu0 %v910
      %v970 = vpop.f32.mrf.mxu0
      %v971 = vadd.f32 0.0, %v970
      %v972 = vpop.f32.mrf.mxu0
      %v973 = vadd.f32 0.0, %v972
      %974 = vmatmul.bf16.gmra.mxu0 %v909
      %v975 = vpop.f32.mrf.mxu0
      %v976 = vadd.f32 0.0, %v975
      %v977 = vpop.f32.mrf.mxu0
      %978 = vdwg.mxu0
      %v979 = vadd.f32 %v870, %v971
      %v980 = vadd.f32 %v871, %v973
      %v981 = vadd.f32 %v872, %v976
      %v982 = vld [vmem:[%s165 + $0x4] sm:$0x8]
      %v983 = vld [vmem:[%s1 + $0x200] sm:$0xf]
      %v984 = vld [vmem:[%s1 + $0x204] sm:$0xf]
      %v985 = vld [vmem:[%s1 + $0x208] sm:$0xf]
      %v986 = vld [vmem:[%s1 + $0x20c] sm:$0xf]
      %v987 = vld [vmem:[%s1 + $0x210] sm:$0xf]
      %v988 = vld [vmem:[%s1 + $0x214] sm:$0xf]
      %v989 = vld [vmem:[%s1 + $0x218] sm:$0xf]
      %v990 = vld [vmem:[%s1 + $0x21c] sm:$0xf]
      %v991 = vld [vmem:[%s1 + $0x220] sm:$0xf]
      %v992 = vld [vmem:[%s1 + $0x224] sm:$0xf]
      %v993 = vld [vmem:[%s1 + $0x228] sm:$0xf]
      %v994 = vld [vmem:[%s1 + $0x22c] sm:$0xf]
      %v995 = vld [vmem:[%s1 + $0x230] sm:$0xf]
      %v996 = vld [vmem:[%s1 + $0x234] sm:$0xf]
      %v997 = vld [vmem:[%s1 + $0x238] sm:$0xf]
      %v998 = vld [vmem:[%s1 + $0x23c] sm:$0xf]
      %v1000 = vunpack.c.l.b16 %v982
      %v1001 = vpack.c.b16 %v793, %v1000
      %v1002 = vrot.slane %v1001, 3
      %v1003 = vrot.slane %v892, 3
      %v1004 = vsel %vm495, %v1002, %v1003
      %v1023 = vunpack.c.l.b16 %v983
      %v1024 = vunpack.c.l.b16 %v984
      %v1025 = vunpack.c.l.b16 %v985
      %v1026 = vunpack.c.l.b16 %v986
      %v1027 = vunpack.c.l.b16 %v987
      %v1028 = vunpack.c.l.b16 %v988
      %v1029 = vunpack.c.l.b16 %v989
      %v1030 = vunpack.c.l.b16 %v990
      %v1031 = vunpack.c.l.b16 %v991
      %v1032 = vunpack.c.l.b16 %v992
      %v1033 = vunpack.c.l.b16 %v993
      %v1034 = vunpack.c.l.b16 %v994
      %v1035 = vunpack.c.l.b16 %v995
      %v1036 = vunpack.c.l.b16 %v996
      %v1037 = vunpack.c.l.b16 %v997
      %v1038 = vunpack.c.l.b16 %v998
      %v1039 = vpack.c.b16 %v1024, %v1023
      %v1040 = vpack.c.b16 %v1026, %v1025
      %v1041 = vpack.c.b16 %v1028, %v1027
      %v1042 = vpack.c.b16 %v1030, %v1029
      %v1043 = vpack.c.b16 %v1032, %v1031
      %v1044 = vpack.c.b16 %v1034, %v1033
      %v1045 = vpack.c.b16 %v1036, %v1035
      %v1046 = vpack.c.b16 %v1038, %v1037
      %1055 = vmatpush.bf16.msra.mxu0 %v1046
      %1056 = vmatpush.bf16.msra.mxu0 %v1045
      %1057 = vmatpush.bf16.msra.mxu0 %v1044
      %1058 = vmatpush.bf16.msra.mxu0 %v1043
      %1059 = vmatpush.bf16.msra.mxu0 %v1042
      %1060 = vmatpush.bf16.msra.mxu0 %v1041
      %1061 = vmatpush.bf16.msra.mxu0 %v1040
      %1062 = vmatpush.bf16.msra.mxu0 %v1039
      %1063 = vmatmul.bf16.gmra.mxu0 %v1004
      %v1064 = vpop.f32.mrf.mxu0
      %v1065 = vadd.f32 0.0, %v1064
      %v1066 = vpop.f32.mrf.mxu0
      %v1067 = vadd.f32 0.0, %v1066
      %1068 = vmatmul.bf16.gmra.mxu0 %v1003
      %v1069 = vpop.f32.mrf.mxu0
      %v1070 = vadd.f32 0.0, %v1069
      %v1071 = vpop.f32.mrf.mxu0
      %1072 = vdwg.mxu0
      %v1073 = vadd.f32 %v979, %v1065
      %v1074 = vadd.f32 %v980, %v1067
      %v1075 = vadd.f32 %v981, %v1070
      %v1076 = vld [vmem:[%s2] sm:$0x1]
      %v1078 = vperm.slane %v1076, 0
      %v1080 = vadd.f32 %v1073, %v1078
      %v1081 = vadd.f32 %v1074, %v1078
      %v1082 = vadd.f32 %v1075, %v1078
      %v1083 = vmax.f32 %v1080, 0.0
      %v1084 = vmax.f32 %v1081, 0.0
      %v1085 = vmax.f32 %v1082, 0.0
      %v1086 = vpack.c.bf16 %v1083, %v1083
      %v1087 = vpack.c.bf16 %v1084, %v1084
      %v1088 = vpack.c.bf16 %v1085, %v1085
      %1089 = vst [vmem:[%s170] sm:$0xf] %v1086
      %1090 = vst [vmem:[%s170 + $0x4] sm:$0xf] %v1087
      %1091 = vst [vmem:[%s170 + $0x8] sm:$0x7] %v1088
      %p1092 = scmp.lt.s32.totalorder %s14, 1
      %s1093 = scalar_select %p1092, %s14, 1
      %s1094 = smul.addr %s1093, 3
      %s1095 = smul.addr %s1094, 4
      %s1096 = scalar_lea.vmem %s3, %s1095
      // Predicated region
      $region33: #{expanding_path_forward.8} parent=31 // pred_check
        %p1097 = pneg %p100
      $region34: #{expanding_path_forward.8} parent=31 // pred_check_branch
        %1099 = sbr.rel (%p1097) target = $region36
      $region35: #{expanding_path_forward.8} parent=31 // pred_region
        _
      $region36: #{expanding_path_forward.8} parent=31 // pred_fallthru
        _
    $region32: #{expanding_path_forward.8} parent=5 // pred_fallthru
      _
    %p1100 = scmp.le.s32.totalorder 2, %s9
    // Predicated region
    $region37: #{expanding_path_forward.8} parent=5 // pred_check
      %p1101 = pneg %p1100
    $region38: #{expanding_path_forward.8} parent=5 // pred_check_branch
      %1103 = sbr.rel (%p1101) target = $region40
    $region39: #{expanding_path_forward.8} parent=5 // pred_region
      %s1104 = ssub.s32 %s9, 2
      // Predicated region
      $region41: #{expanding_path_forward.8} parent=39 // pred_check
        %p1105 = pneg %p106
      $region42: #{expanding_path_forward.8} parent=39 // pred_check_branch
        %1107 = sbr.rel (%p1105) target = $region44
      $region43: #{expanding_path_forward.8} parent=39 // pred_region
        %p1108 = scmp.lt.s32.totalorder %s15, 1
        %s1109 = scalar_select %p1108, %s15, 1
        %s1110 = smul.addr %s1109, 3
        %s1111 = smul.addr %s1110, 4
        %s1112 = scalar_lea.vmem %s3, %s1111
      $region44: #{expanding_path_forward.8} parent=39 // pred_fallthru
        _
    $region40: #{expanding_path_forward.8} parent=5 // pred_fallthru
      _
  $region6: #{expanding_path_forward.8} parent=0 // loop_footer
    %s13 = sadd.s32 1, %s9
  $region7: #{expanding_path_forward.8} parent=0 // loop_footer_branch
    %8 = sbr.rel target = $region3
  $region8: #{expanding_path_forward.8} parent=0 // loop_exit
    _

// kernel: expanding_path_forward.7
$region0: #{expanding_path_forward.7}
  #allocation0 [shape = 'u32[]', space=smem, size = 0x4, offset = 0x4, fixed_abs, tag = 'smem constant byte address 0x4 - core index']
  #allocation1 [shape = 'u32[72,128]{1,0:T(1,128)}', space=vmem, size = 0x9000, scoped, tag = 'internal scratch']
  %s0 = inlined_call_operand.vmem [shape: bf16[2,64,128], index: 0, kind: input, shape index: {}]
  %s1 = inlined_call_operand.vmem [shape: bf16[2,64,128], index: 1, kind: input, shape index: {}]
  %s2 = inlined_call_operand.vmem [shape: bf16[1152,128], index: 2, kind: input, shape index: {}]
  %s3 = inlined_call_operand.vmem [shape: bf16[1152,128], index: 3, kind: input, shape index: {}]
  %s4 = inlined_call_operand.vmem [shape: f32[1,128], index: 4, kind: input, shape index: {}]
  %s5 = inlined_call_operand.vmem [shape: bf16[2,48,128], index: 5, kind: output, shape index: {}]
  %s6 = sld [smem:[#allocation0]]
  $region53: #{expanding_path_forward.7} parent=0
    _
  %s8 = ssub.s32 1, %s6
  %s9 = scalar_select 0, %s8, %s6
  loop: start=0, step=1, limit=4
  $region2: #{expanding_path_forward.7} parent=0 // loop_pre_header
    _
  $region3: #{expanding_path_forward.7} parent=0 // loop_header
    %s11 = sphi 0, %s15
    %p12 = scmp.ge.s32.totalorder %s11, 4
    %s21 = sphi 0, %s23
    %s24 = sphi 0, %s21
    %s25 = sphi 0, %s24
    %s41 = sphi 0, %s25
    %s47 = sphi 0, %s49
    %s50 = sphi 0, %s47
    %s51 = sphi 0, %s50
    %s67 = sphi 0, %s51
    %s71 = sphi 0, %s71
    %s73 = sphi 0, %s71
    %s74 = sphi 0, %s73
    %s88 = sphi 0, %s74
    %s92 = sphi 0, %s92
    %s94 = sphi 0, %s92
    %s95 = sphi 0, %s94
    %s109 = sphi 0, %s95
    %s113 = sphi 0, %s113
    %s115 = sphi 0, %s113
    %s116 = sphi 0, %s115
    %s130 = sphi 0, %s116
    %s136 = sphi 0, %s138
    %s139 = sphi 0, %s136
    %s140 = sphi 0, %s139
    %s156 = sphi 0, %s140
  $region4: #{expanding_path_forward.7} parent=0 // loop_header_branch
    %14 = sbr.rel (%p12) target = $region8
  $region5: #{expanding_path_forward.7} parent=0 // loop_body
    %s16 = ssub.s32 %s11, 1
    %s17 = ssub.s32 %s11, 2
    %s18 = sadd.s32 %s11, 1
    %s19 = ssub.s32 %s11, %s18
    %p20 = scmp.eq.s32.totalorder %s19, 0
    %s22 = sadd.s32 %s21, 1
    %s23 = scalar_select %p20, %s21, %s22
    %p26 = pneg %p20
    %p27 = scmp.eq.s32.totalorder %s11, 1
    %p28 = por %p26, %p27
    %p29 = scmp.ne.s32.totalorder %s21, %s24
    %p30 = scmp.eq.s32.totalorder %s11, 0
    %p31 = por %p29, %p30
    %p32 = scmp.ne.s32.totalorder %s21, %s24
    %p33 = scmp.eq.s32.totalorder %s16, 1
    %p34 = por %p32, %p33
    %p35 = scmp.ne.s32.totalorder %s24, %s25
    %p36 = scmp.eq.s32.totalorder %s16, 0
    %p37 = por %p35, %p36
    %p38 = scmp.ne.s32.totalorder %s24, %s25
    %p39 = scmp.eq.s32.totalorder %s17, 1
    %p40 = por %p38, %p39
    %p42 = scmp.ne.s32.totalorder %s25, %s41
    %p43 = scmp.eq.s32.totalorder %s17, 0
    %p44 = por %p42, %p43
    %s45 = ssub.s32 %s11, %s18
    %p46 = scmp.eq.s32.totalorder %s45, 0
    %s48 = sadd.s32 %s47, 1
    %s49 = scalar_select %p46, %s47, %s48
    %p52 = pneg %p46
    %p53 = scmp.eq.s32.totalorder %s11, 1
    %p54 = por %p52, %p53
    %p55 = scmp.ne.s32.totalorder %s47, %s50
    %p56 = scmp.eq.s32.totalorder %s11, 0
    %p57 = por %p55, %p56
    %p58 = scmp.ne.s32.totalorder %s47, %s50
    %p59 = scmp.eq.s32.totalorder %s16, 1
    %p60 = por %p58, %p59
    %p61 = scmp.ne.s32.totalorder %s50, %s51
    %p62 = scmp.eq.s32.totalorder %s16, 0
    %p63 = por %p61, %p62
    %p64 = scmp.ne.s32.totalorder %s50, %s51
    %p65 = scmp.eq.s32.totalorder %s17, 1
    %p66 = por %p64, %p65
    %p68 = scmp.ne.s32.totalorder %s51, %s67
    %p69 = scmp.eq.s32.totalorder %s17, 0
    %p70 = por %p68, %p69
    %s72 = sadd.s32 %s71, 1
    %p75 = scmp.eq.s32.totalorder %s11, 1
    %p76 = scmp.ne.s32.totalorder %s71, %s73
    %p77 = scmp.eq.s32.totalorder %s11, 0
    %p78 = por %p76, %p77
    %p79 = scmp.ne.s32.totalorder %s71, %s73
    %p80 = scmp.eq.s32.totalorder %s16, 1
    %p81 = por %p79, %p80
    %p82 = scmp.ne.s32.totalorder %s73, %s74
    %p83 = scmp.eq.s32.totalorder %s16, 0
    %p84 = por %p82, %p83
    %p85 = scmp.ne.s32.totalorder %s73, %s74
    %p86 = scmp.eq.s32.totalorder %s17, 1
    %p87 = por %p85, %p86
    %p89 = scmp.ne.s32.totalorder %s74, %s88
    %p90 = scmp.eq.s32.totalorder %s17, 0
    %p91 = por %p89, %p90
    %s93 = sadd.s32 %s92, 1
    %p96 = scmp.eq.s32.totalorder %s11, 1
    %p97 = scmp.ne.s32.totalorder %s92, %s94
    %p98 = scmp.eq.s32.totalorder %s11, 0
    %p99 = por %p97, %p98
    %p100 = scmp.ne.s32.totalorder %s92, %s94
    %p101 = scmp.eq.s32.totalorder %s16, 1
    %p102 = por %p100, %p101
    %p103 = scmp.ne.s32.totalorder %s94, %s95
    %p104 = scmp.eq.s32.totalorder %s16, 0
    %p105 = por %p103, %p104
    %p106 = scmp.ne.s32.totalorder %s94, %s95
    %p107 = scmp.eq.s32.totalorder %s17, 1
    %p108 = por %p106, %p107
    %p110 = scmp.ne.s32.totalorder %s95, %s109
    %p111 = scmp.eq.s32.totalorder %s17, 0
    %p112 = por %p110, %p111
    %s114 = sadd.s32 %s113, 1
    %p117 = scmp.eq.s32.totalorder %s11, 1
    %p118 = scmp.ne.s32.totalorder %s113, %s115
    %p119 = scmp.eq.s32.totalorder %s11, 0
    %p120 = por %p118, %p119
    %p121 = scmp.ne.s32.totalorder %s113, %s115
    %p122 = scmp.eq.s32.totalorder %s16, 1
    %p123 = por %p121, %p122
    %p124 = scmp.ne.s32.totalorder %s115, %s116
    %p125 = scmp.eq.s32.totalorder %s16, 0
    %p126 = por %p124, %p125
    %p127 = scmp.ne.s32.totalorder %s115, %s116
    %p128 = scmp.eq.s32.totalorder %s17, 1
    %p129 = por %p127, %p128
    %p131 = scmp.ne.s32.totalorder %s116, %s130
    %p132 = scmp.eq.s32.totalorder %s17, 0
    %p133 = por %p131, %p132
    %s134 = ssub.s32 %s11, %s18
    %p135 = scmp.eq.s32.totalorder %s134, 0
    %s137 = sadd.s32 %s136, 1
    %s138 = scalar_select %p135, %s136, %s137
    %p141 = pneg %p135
    %p142 = scmp.eq.s32.totalorder %s11, 1
    %p143 = por %p141, %p142
    %p144 = scmp.ne.s32.totalorder %s136, %s139
    %p145 = scmp.eq.s32.totalorder %s11, 0
    %p146 = por %p144, %p145
    %p147 = scmp.ne.s32.totalorder %s136, %s139
    %p148 = scmp.eq.s32.totalorder %s16, 1
    %p149 = por %p147, %p148
    %p150 = scmp.ne.s32.totalorder %s139, %s140
    %p151 = scmp.eq.s32.totalorder %s16, 0
    %p152 = por %p150, %p151
    %p153 = scmp.ne.s32.totalorder %s139, %s140
    %p154 = scmp.eq.s32.totalorder %s17, 1
    %p155 = por %p153, %p154
    %p157 = scmp.ne.s32.totalorder %s140, %s156
    %p158 = scmp.eq.s32.totalorder %s17, 0
    %p159 = por %p157, %p158
    %p160 = scmp.le.s32.totalorder 1, %s11
    %p161 = scmp.lt.s32.totalorder %s11, 3
    %p162 = pnand %p160, %p161
    %p163 = pneg %p162
    // Predicated region
    $region9: #{expanding_path_forward.7} parent=5 // pred_check
      _
    $region10: #{expanding_path_forward.7} parent=5 // pred_check_branch
      %165 = sbr.rel (%p162) target = $region12
    $region11: #{expanding_path_forward.7} parent=5 // pred_region
      %s166 = ssub.s32 %s11, 1
      // Predicated region
      $region13: #{expanding_path_forward.7} parent=11 // pred_check
        %p167 = pneg %p84
      $region14: #{expanding_path_forward.7} parent=11 // pred_check_branch
        %169 = sbr.rel (%p167) target = $region16
      $region15: #{expanding_path_forward.7} parent=11 // pred_region
        _
      $region16: #{expanding_path_forward.7} parent=11 // pred_fallthru
        _
      // Predicated region
      $region17: #{expanding_path_forward.7} parent=11 // pred_check
        %p170 = pneg %p105
      $region18: #{expanding_path_forward.7} parent=11 // pred_check_branch
        %172 = sbr.rel (%p170) target = $region20
      $region19: #{expanding_path_forward.7} parent=11 // pred_region
        _
      $region20: #{expanding_path_forward.7} parent=11 // pred_fallthru
        _
      // Predicated region
      $region21: #{expanding_path_forward.7} parent=11 // pred_check
        %p173 = pneg %p126
      $region22: #{expanding_path_forward.7} parent=11 // pred_check_branch
        %175 = sbr.rel (%p173) target = $region24
      $region23: #{expanding_path_forward.7} parent=11 // pred_region
        _
      $region24: #{expanding_path_forward.7} parent=11 // pred_fallthru
        _
    $region12: #{expanding_path_forward.7} parent=5 // pred_fallthru
      _
    %p176 = scmp.lt.s32.totalorder %s11, 2
    // Predicated region
    $region25: #{expanding_path_forward.7} parent=5 // pred_check
      %p177 = pneg %p176
    $region26: #{expanding_path_forward.7} parent=5 // pred_check_branch
      %179 = sbr.rel (%p177) target = $region28
    $region27: #{expanding_path_forward.7} parent=5 // pred_region
      // Predicated region
      $region29: #{expanding_path_forward.7} parent=27 // pred_check
        %p180 = pneg %p31
      $region30: #{expanding_path_forward.7} parent=27 // pred_check_branch
        %182 = sbr.rel (%p180) target = $region32
      $region31: #{expanding_path_forward.7} parent=27 // pred_region
        %p183 = scmp.lt.s32.totalorder %s11, 1
        %s184 = scalar_select %p183, %s11, 1
        %s185 = smul.addr %s184, 8
        %s186 = smul.addr %s185, 4
        %s187 = scalar_lea.vmem %s0, %s186
      $region32: #{expanding_path_forward.7} parent=27 // pred_fallthru
        _
      // Predicated region
      $region33: #{expanding_path_forward.7} parent=27 // pred_check
        %p188 = pneg %p57
      $region34: #{expanding_path_forward.7} parent=27 // pred_check_branch
        %190 = sbr.rel (%p188) target = $region36
      $region35: #{expanding_path_forward.7} parent=27 // pred_region
        %p191 = scmp.lt.s32.totalorder %s11, 1
        %s192 = scalar_select %p191, %s11, 1
        %s193 = smul.addr %s192, 8
        %s194 = smul.addr %s193, 4
        %s195 = scalar_lea.vmem %s1, %s194
      $region36: #{expanding_path_forward.7} parent=27 // pred_fallthru
        _
    $region28: #{expanding_path_forward.7} parent=5 // pred_fallthru
      _
    %p196 = scmp.le.s32.totalorder 1, %s11
    %p197 = scmp.lt.s32.totalorder %s11, 3
    %p198 = pnand %p196, %p197
    %p199 = pneg %p198
    // Predicated region
    $region37: #{expanding_path_forward.7} parent=5 // pred_check
      _
    $region38: #{expanding_path_forward.7} parent=5 // pred_check_branch
      %201 = sbr.rel (%p198) target = $region40
    $region39: #{expanding_path_forward.7} parent=5 // pred_region
      %s202 = ssub.s32 %s11, 1
      %p203 = scmp.lt.s32.totalorder %s16, 1
      %s204 = scalar_select %p203, %s16, 1
      %s205 = smul.addr %s204, 8
      %s206 = smul.addr %s205, 4
      %s207 = scalar_lea.vmem %s0, %s206
      %p208 = pneg %p37
      %p209 = pneg %p34
      %p210 = scmp.lt.s32.totalorder %s16, 1
      %s211 = scalar_select %p210, %s16, 1
      %s212 = smul.addr %s211, 8
      %s213 = smul.addr %s212, 4
      %s214 = scalar_lea.vmem %s1, %s213
      %p215 = pneg %p63
      %p216 = pneg %p60
      %p217 = pneg %p84
      %p218 = pneg %p81
      %p219 = pneg %p105
      %p220 = pneg %p102
      %p221 = pneg %p126
      %p222 = pneg %p123
      %p223 = pneg %p152
      %p224 = pneg %p149
      %p225 = scmp.lt.s32.totalorder %s16, 1
      %s226 = scalar_select %p225, %s16, 1
      %s227 = smul.addr %s226, 6
      %s228 = smul.addr %s227, 4
      %s229 = scalar_lea.vmem %s5, %s228
      %p230 = scmp.lt.s32.totalorder %s16, 1
      %s231 = scalar_select %p230, %s16, 1
      %s232 = smul.addr %s231, 8
      %s233 = smul.addr %s232, 4
      %s234 = scalar_lea.vmem %s0, %s233
      %p235 = scmp.lt.s32.totalorder %s16, 1
      %s236 = scalar_select %p235, %s16, 1
      %s237 = smul.addr %s236, 8
      %s238 = smul.addr %s237, 4
      %s239 = scalar_lea.vmem %s1, %s238
      %p240 = scmp.lt.s32.totalorder %s16, 1
      %s241 = scalar_select %p240, %s16, 1
      %s242 = smul.addr %s241, 6
      %s243 = smul.addr %s242, 4
      %s244 = scalar_lea.vmem %s5, %s243
      %v245 = vld [vmem:[%s234] sm:$0xf]
      %v246 = vld [vmem:[%s234 + $0x4] sm:$0xf]
      %v247 = vld [vmem:[%s234 + $0x8] sm:$0xf]
      %v248 = vld [vmem:[%s234 + $0xc] sm:$0xf]
      %v249 = vld [vmem:[%s234 + $0x10] sm:$0xf]
      %v250 = vld [vmem:[%s234 + $0x14] sm:$0x7]
      %v251 = vld [vmem:[%s2] sm:$0xf]
      %v252 = vld [vmem:[%s2 + $0x4] sm:$0xf]
      %v253 = vld [vmem:[%s2 + $0x8] sm:$0xf]
      %v254 = vld [vmem:[%s2 + $0xc] sm:$0xf]
      %v255 = vld [vmem:[%s2 + $0x10] sm:$0xf]
      %v256 = vld [vmem:[%s2 + $0x14] sm:$0xf]
      %v257 = vld [vmem:[%s2 + $0x18] sm:$0xf]
      %v258 = vld [vmem:[%s2 + $0x1c] sm:$0xf]
      %v259 = vld [vmem:[%s2 + $0x20] sm:$0xf]
      %v260 = vld [vmem:[%s2 + $0x24] sm:$0xf]
      %v261 = vld [vmem:[%s2 + $0x28] sm:$0xf]
      %v262 = vld [vmem:[%s2 + $0x2c] sm:$0xf]
      %v263 = vld [vmem:[%s2 + $0x30] sm:$0xf]
      %v264 = vld [vmem:[%s2 + $0x34] sm:$0xf]
      %v265 = vld [vmem:[%s2 + $0x38] sm:$0xf]
      %v266 = vld [vmem:[%s2 + $0x3c] sm:$0xf]
      %v267 = vld [vmem:[%s234 + $0x14] sm:$0xf]
      %v268 = vld [vmem:[%s2 + $0x40] sm:$0xf]
      %v269 = vld [vmem:[%s2 + $0x44] sm:$0xf]
      %v270 = vld [vmem:[%s2 + $0x48] sm:$0xf]
      %v271 = vld [vmem:[%s2 + $0x4c] sm:$0xf]
      %v272 = vld [vmem:[%s2 + $0x50] sm:$0xf]
      %v273 = vld [vmem:[%s2 + $0x54] sm:$0xf]
      %v274 = vld [vmem:[%s2 + $0x58] sm:$0xf]
      %v275 = vld [vmem:[%s2 + $0x5c] sm:$0xf]
      %v276 = vld [vmem:[%s2 + $0x60] sm:$0xf]
      %v277 = vld [vmem:[%s2 + $0x64] sm:$0xf]
      %v278 = vld [vmem:[%s2 + $0x68] sm:$0xf]
      %v279 = vld [vmem:[%s2 + $0x6c] sm:$0xf]
      %v280 = vld [vmem:[%s2 + $0x70] sm:$0xf]
      %v281 = vld [vmem:[%s2 + $0x74] sm:$0xf]
      %v282 = vld [vmem:[%s2 + $0x78] sm:$0xf]
      %v283 = vld [vmem:[%s2 + $0x7c] sm:$0xf]
      %v290 = vunpack.c.l.b16 %v245
      %v291 = vunpack.c.l.b16 %v246
      %v292 = vunpack.c.l.b16 %v247
      %v293 = vunpack.c.l.b16 %v248
      %v294 = vunpack.c.l.b16 %v249
      %v295 = vunpack.c.l.b16 %v267
      %v296 = vpack.c.b16 %v291, %v290
      %v297 = vpack.c.b16 %v293, %v292
      %v298 = vpack.c.b16 %v295, %v294
      %vm299 = vsmask.f32 7424
      %v301 = vshrl.u32 %v296, 16
      %v303 = vshll.u32 %v296, 16
      %v305 = vrot.slane %v303, 1
      %v306 = vor.u32 %v301, %v305
      %v308 = vshll.u32 %v297, 16
      %v310 = vrot.slane %v308, 1
      %v311 = vsel %vm299, %v306, %v310
      %v312 = vshrl.u32 %v297, 16
      %v314 = vor.u32 %v312, %v310
      %v316 = vshll.u32 %v298, 16
      %v318 = vrot.slane %v316, 1
      %v319 = vsel %vm299, %v314, %v318
      %v320 = vshrl.u32 %v298, 16
      %v322 = vor.u32 %v320, %v318
      %v342 = vunpack.c.l.b16 %v268
      %v343 = vunpack.c.l.b16 %v269
      %v344 = vunpack.c.l.b16 %v270
      %v345 = vunpack.c.l.b16 %v271
      %v346 = vunpack.c.l.b16 %v272
      %v347 = vunpack.c.l.b16 %v273
      %v348 = vunpack.c.l.b16 %v274
      %v349 = vunpack.c.l.b16 %v275
      %v350 = vunpack.c.l.b16 %v276
      %v351 = vunpack.c.l.b16 %v277
      %v352 = vunpack.c.l.b16 %v278
      %v353 = vunpack.c.l.b16 %v279
      %v354 = vunpack.c.l.b16 %v280
      %v355 = vunpack.c.l.b16 %v281
      %v356 = vunpack.c.l.b16 %v282
      %v357 = vunpack.c.l.b16 %v283
      %v358 = vpack.c.b16 %v343, %v342
      %v359 = vpack.c.b16 %v345, %v344
      %v360 = vpack.c.b16 %v347, %v346
      %v361 = vpack.c.b16 %v349, %v348
      %v362 = vpack.c.b16 %v351, %v350
      %v363 = vpack.c.b16 %v353, %v352
      %v364 = vpack.c.b16 %v355, %v354
      %v365 = vpack.c.b16 %v357, %v356
      %374 = vmatpush.bf16.msra.mxu0 %v365
      %375 = vmatpush.bf16.msra.mxu0 %v364
      %376 = vmatpush.bf16.msra.mxu0 %v363
      %377 = vmatpush.bf16.msra.mxu0 %v362
      %378 = vmatpush.bf16.msra.mxu0 %v361
      %379 = vmatpush.bf16.msra.mxu0 %v360
      %380 = vmatpush.bf16.msra.mxu0 %v359
      %381 = vmatpush.bf16.msra.mxu0 %v358
      %382 = vmatmul.bf16.gmra.mxu0 %v311
      %v383 = vpop.f32.mrf.mxu0
      %v384 = vadd.f32 0.0, %v383
      %v385 = vpop.f32.mrf.mxu0
      %v386 = vadd.f32 0.0, %v385
      %387 = vmatmul.bf16.gmra.mxu0 %v319
      %v388 = vpop.f32.mrf.mxu0
      %v389 = vadd.f32 0.0, %v388
      %v390 = vpop.f32.mrf.mxu0
      %v391 = vadd.f32 0.0, %v390
      %392 = vmatmul.bf16.gmra.mxu0 %v322
      %v393 = vpop.f32.mrf.mxu0
      %v394 = vadd.f32 0.0, %v393
      %v395 = vpop.f32.mrf.mxu0
      %v396 = vadd.f32 0.0, %v395
      %397 = vdwg.mxu0
      %v399 = vunpack.c.l.b16 %v250
      %v400 = vpack.c.b16 %v399, %v294
      %v420 = vunpack.c.l.b16 %v251
      %v421 = vunpack.c.l.b16 %v252
      %v422 = vunpack.c.l.b16 %v253
      %v423 = vunpack.c.l.b16 %v254
      %v424 = vunpack.c.l.b16 %v255
      %v425 = vunpack.c.l.b16 %v256
      %v426 = vunpack.c.l.b16 %v257
      %v427 = vunpack.c.l.b16 %v258
      %v428 = vunpack.c.l.b16 %v259
      %v429 = vunpack.c.l.b16 %v260
      %v430 = vunpack.c.l.b16 %v261
      %v431 = vunpack.c.l.b16 %v262
      %v432 = vunpack.c.l.b16 %v263
      %v433 = vunpack.c.l.b16 %v264
      %v434 = vunpack.c.l.b16 %v265
      %v435 = vunpack.c.l.b16 %v266
      %v436 = vpack.c.b16 %v421, %v420
      %v437 = vpack.c.b16 %v423, %v422
      %v438 = vpack.c.b16 %v425, %v424
      %v439 = vpack.c.b16 %v427, %v426
      %v440 = vpack.c.b16 %v429, %v428
      %v441 = vpack.c.b16 %v431, %v430
      %v442 = vpack.c.b16 %v433, %v432
      %v443 = vpack.c.b16 %v435, %v434
      %452 = vmatpush.bf16.msra.mxu0 %v443
      %453 = vmatpush.bf16.msra.mxu0 %v442
      %454 = vmatpush.bf16.msra.mxu0 %v441
      %455 = vmatpush.bf16.msra.mxu0 %v440
      %456 = vmatpush.bf16.msra.mxu0 %v439
      %457 = vmatpush.bf16.msra.mxu0 %v438
      %458 = vmatpush.bf16.msra.mxu0 %v437
      %459 = vmatpush.bf16.msra.mxu0 %v436
      %460 = vmatmul.bf16.gmra.mxu0 %v296
      %v461 = vpop.f32.mrf.mxu0
      %v462 = vadd.f32 %v384, %v461
      %v463 = vpop.f32.mrf.mxu0
      %v464 = vadd.f32 %v386, %v463
      %465 = vmatmul.bf16.gmra.mxu0 %v297
      %v466 = vpop.f32.mrf.mxu0
      %v467 = vadd.f32 %v389, %v466
      %v468 = vpop.f32.mrf.mxu0
      %v469 = vadd.f32 %v391, %v468
      %470 = vmatmul.bf16.gmra.mxu0 %v400
      %v471 = vpop.f32.mrf.mxu0
      %v472 = vadd.f32 %v394, %v471
      %v473 = vpop.f32.mrf.mxu0
      %v474 = vadd.f32 %v396, %v473
      %475 = vdwg.mxu0
      %v476 = vld [vmem:[%s234] sm:$0xe]
      %v477 = vld [vmem:[%s2 + $0x80] sm:$0xf]
      %v478 = vld [vmem:[%s2 + $0x84] sm:$0xf]
      %v479 = vld [vmem:[%s2 + $0x88] sm:$0xf]
      %v480 = vld [vmem:[%s2 + $0x8c] sm:$0xf]
      %v481 = vld [vmem:[%s2 + $0x90] sm:$0xf]
      %v482 = vld [vmem:[%s2 + $0x94] sm:$0xf]
      %v483 = vld [vmem:[%s2 + $0x98] sm:$0xf]
      %v484 = vld [vmem:[%s2 + $0x9c] sm:$0xf]
      %v485 = vld [vmem:[%s2 + $0xa0] sm:$0xf]
      %v486 = vld [vmem:[%s2 + $0xa4] sm:$0xf]
      %v487 = vld [vmem:[%s2 + $0xa8] sm:$0xf]
      %v488 = vld [vmem:[%s2 + $0xac] sm:$0xf]
      %v489 = vld [vmem:[%s2 + $0xb0] sm:$0xf]
      %v490 = vld [vmem:[%s2 + $0xb4] sm:$0xf]
      %v491 = vld [vmem:[%s2 + $0xb8] sm:$0xf]
      %v492 = vld [vmem:[%s2 + $0xbc] sm:$0xf]
      %v494 = vunpack.c.l.b16 %v476
      %v495 = vpack.c.b16 %v291, %v494
      %vm496 = vcmask 1046528
      %v497 = vrot.slane %v495, 1
      %v498 = vrot.slane %v297, 1
      %v499 = vsel %vm496, %v497, %v498
      %v500 = vrot.slane %v298, 1
      %v501 = vsel %vm496, %v498, %v500
      %v521 = vunpack.c.l.b16 %v477
      %v522 = vunpack.c.l.b16 %v478
      %v523 = vunpack.c.l.b16 %v479
      %v524 = vunpack.c.l.b16 %v480
      %v525 = vunpack.c.l.b16 %v481
      %v526 = vunpack.c.l.b16 %v482
      %v527 = vunpack.c.l.b16 %v483
      %v528 = vunpack.c.l.b16 %v484
      %v529 = vunpack.c.l.b16 %v485
      %v530 = vunpack.c.l.b16 %v486
      %v531 = vunpack.c.l.b16 %v487
      %v532 = vunpack.c.l.b16 %v488
      %v533 = vunpack.c.l.b16 %v489
      %v534 = vunpack.c.l.b16 %v490
      %v535 = vunpack.c.l.b16 %v491
      %v536 = vunpack.c.l.b16 %v492
      %v537 = vpack.c.b16 %v522, %v521
      %v538 = vpack.c.b16 %v524, %v523
      %v539 = vpack.c.b16 %v526, %v525
      %v540 = vpack.c.b16 %v528, %v527
      %v541 = vpack.c.b16 %v530, %v529
      %v542 = vpack.c.b16 %v532, %v531
      %v543 = vpack.c.b16 %v534, %v533
      %v544 = vpack.c.b16 %v536, %v535
      %553 = vmatpush.bf16.msra.mxu0 %v544
      %554 = vmatpush.bf16.msra.mxu0 %v543
      %555 = vmatpush.bf16.msra.mxu0 %v542
      %556 = vmatpush.bf16.msra.mxu0 %v541
      %557 = vmatpush.bf16.msra.mxu0 %v540
      %558 = vmatpush.bf16.msra.mxu0 %v539
      %559 = vmatpush.bf16.msra.mxu0 %v538
      %560 = vmatpush.bf16.msra.mxu0 %v537
      %561 = vmatmul.bf16.gmra.mxu0 %v499
      %v562 = vpop.f32.mrf.mxu0
      %v563 = vadd.f32 0.0, %v562
      %v564 = vpop.f32.mrf.mxu0
      %v565 = vadd.f32 0.0, %v564
      %566 = vmatmul.bf16.gmra.mxu0 %v501
      %v567 = vpop.f32.mrf.mxu0
      %v568 = vadd.f32 0.0, %v567
      %v569 = vpop.f32.mrf.mxu0
      %v570 = vadd.f32 0.0, %v569
      %571 = vmatmul.bf16.gmra.mxu0 %v500
      %v572 = vpop.f32.mrf.mxu0
      %v573 = vadd.f32 0.0, %v572
      %v574 = vpop.f32.mrf.mxu0
      %v575 = vadd.f32 0.0, %v574
      %576 = vdwg.mxu0
      %v577 = vadd.f32 %v462, %v563
      %v578 = vadd.f32 %v464, %v565
      %v579 = vadd.f32 %v467, %v568
      %v580 = vadd.f32 %v469, %v570
      %v581 = vadd.f32 %v472, %v573
      %v582 = vadd.f32 %v474, %v575
      %v583 = vld [vmem:[%s234 + $0x4] sm:$0xf]
      %v584 = vld [vmem:[%s234 + $0x8] sm:$0xf]
      %v585 = vld [vmem:[%s234 + $0xc] sm:$0xf]
      %v586 = vld [vmem:[%s234 + $0x10] sm:$0xf]
      %v587 = vld [vmem:[%s234 + $0x14] sm:$0xf]
      %v588 = vld [vmem:[%s234 + $0x18] sm:$0x7]
      %v589 = vld [vmem:[%s2 + $0xc0] sm:$0xf]
      %v590 = vld [vmem:[%s2 + $0xc4] sm:$0xf]
      %v591 = vld [vmem:[%s2 + $0xc8] sm:$0xf]
      %v592 = vld [vmem:[%s2 + $0xcc] sm:$0xf]
      %v593 = vld [vmem:[%s2 + $0xd0] sm:$0xf]
      %v594 = vld [vmem:[%s2 + $0xd4] sm:$0xf]
      %v595 = vld [vmem:[%s2 + $0xd8] sm:$0xf]
      %v596 = vld [vmem:[%s2 + $0xdc] sm:$0xf]
      %v597 = vld [vmem:[%s2 + $0xe0] sm:$0xf]
      %v598 = vld [vmem:[%s2 + $0xe4] sm:$0xf]
      %v599 = vld [vmem:[%s2 + $0xe8] sm:$0xf]
      %v600 = vld [vmem:[%s2 + $0xec] sm:$0xf]
      %v601 = vld [vmem:[%s2 + $0xf0] sm:$0xf]
      %v602 = vld [vmem:[%s2 + $0xf4] sm:$0xf]
      %v603 = vld [vmem:[%s2 + $0xf8] sm:$0xf]
      %v604 = vld [vmem:[%s2 + $0xfc] sm:$0xf]
      %v611 = vunpack.c.l.b16 %v583
      %v612 = vunpack.c.l.b16 %v584
      %v613 = vunpack.c.l.b16 %v585
      %v614 = vunpack.c.l.b16 %v586
      %v615 = vunpack.c.l.b16 %v587
      %v616 = vunpack.c.l.b16 %v588
      %v617 = vpack.c.b16 %v612, %v611
      %v618 = vpack.c.b16 %v614, %v613
      %v619 = vpack.c.b16 %v616, %v615
      %v639 = vunpack.c.l.b16 %v589
      %v640 = vunpack.c.l.b16 %v590
      %v641 = vunpack.c.l.b16 %v591
      %v642 = vunpack.c.l.b16 %v592
      %v643 = vunpack.c.l.b16 %v593
      %v644 = vunpack.c.l.b16 %v594
      %v645 = vunpack.c.l.b16 %v595
      %v646 = vunpack.c.l.b16 %v596
      %v647 = vunpack.c.l.b16 %v597
      %v648 = vunpack.c.l.b16 %v598
      %v649 = vunpack.c.l.b16 %v599
      %v650 = vunpack.c.l.b16 %v600
      %v651 = vunpack.c.l.b16 %v601
      %v652 = vunpack.c.l.b16 %v602
      %v653 = vunpack.c.l.b16 %v603
      %v654 = vunpack.c.l.b16 %v604
      %v655 = vpack.c.b16 %v640, %v639
      %v656 = vpack.c.b16 %v642, %v641
      %v657 = vpack.c.b16 %v644, %v643
      %v658 = vpack.c.b16 %v646, %v645
      %v659 = vpack.c.b16 %v648, %v647
      %v660 = vpack.c.b16 %v650, %v649
      %v661 = vpack.c.b16 %v652, %v651
      %v662 = vpack.c.b16 %v654, %v653
      %671 = vmatpush.bf16.msra.mxu0 %v662
      %672 = vmatpush.bf16.msra.mxu0 %v661
      %673 = vmatpush.bf16.msra.mxu0 %v660
      %674 = vmatpush.bf16.msra.mxu0 %v659
      %675 = vmatpush.bf16.msra.mxu0 %v658
      %676 = vmatpush.bf16.msra.mxu0 %v657
      %677 = vmatpush.bf16.msra.mxu0 %v656
      %678 = vmatpush.bf16.msra.mxu0 %v655
      %679 = vmatmul.bf16.gmra.mxu0 %v617
      %v680 = vpop.f32.mrf.mxu0
      %v681 = vadd.f32 0.0, %v680
      %v682 = vpop.f32.mrf.mxu0
      %v683 = vadd.f32 0.0, %v682
      %684 = vmatmul.bf16.gmra.mxu0 %v618
      %v685 = vpop.f32.mrf.mxu0
      %v686 = vadd.f32 0.0, %v685
      %v687 = vpop.f32.mrf.mxu0
      %v688 = vadd.f32 0.0, %v687
      %689 = vmatmul.bf16.gmra.mxu0 %v619
      %v690 = vpop.f32.mrf.mxu0
      %v691 = vadd.f32 0.0, %v690
      %v692 = vpop.f32.mrf.mxu0
      %v693 = vadd.f32 0.0, %v692
      %694 = vdwg.mxu0
      %v695 = vadd.f32 %v577, %v681
      %v696 = vadd.f32 %v578, %v683
      %v697 = vadd.f32 %v579, %v686
      %v698 = vadd.f32 %v580, %v688
      %v699 = vadd.f32 %v581, %v691
      %v700 = vadd.f32 %v582, %v693
      %v701 = vld [vmem:[%s234 + $0x18] sm:$0xf]
      %v702 = vld [vmem:[%s2 + $0x100] sm:$0xf]
      %v703 = vld [vmem:[%s2 + $0x104] sm:$0xf]
      %v704 = vld [vmem:[%s2 + $0x108] sm:$0xf]
      %v705 = vld [vmem:[%s2 + $0x10c] sm:$0xf]
      %v706 = vld [vmem:[%s2 + $0x110] sm:$0xf]
      %v707 = vld [vmem:[%s2 + $0x114] sm:$0xf]
      %v708 = vld [vmem:[%s2 + $0x118] sm:$0xf]
      %v709 = vld [vmem:[%s2 + $0x11c] sm:$0xf]
      %v710 = vld [vmem:[%s2 + $0x120] sm:$0xf]
      %v711 = vld [vmem:[%s2 + $0x124] sm:$0xf]
      %v712 = vld [vmem:[%s2 + $0x128] sm:$0xf]
      %v713 = vld [vmem:[%s2 + $0x12c] sm:$0xf]
      %v714 = vld [vmem:[%s2 + $0x130] sm:$0xf]
      %v715 = vld [vmem:[%s2 + $0x134] sm:$0xf]
      %v716 = vld [vmem:[%s2 + $0x138] sm:$0xf]
      %v717 = vld [vmem:[%s2 + $0x13c] sm:$0xf]
      %v719 = vunpack.c.l.b16 %v701
      %v720 = vpack.c.b16 %v719, %v615
      %v722 = vshrl.u32 %v617, 16
      %v724 = vshll.u32 %v617, 16
      %v726 = vrot.slane %v724, 1
      %v727 = vor.u32 %v722, %v726
      %v729 = vshll.u32 %v618, 16
      %v731 = vrot.slane %v729, 1
      %v732 = vsel %vm299, %v727, %v731
      %v733 = vshrl.u32 %v618, 16
      %v735 = vor.u32 %v733, %v731
      %v737 = vshll.u32 %v720, 16
      %v739 = vrot.slane %v737, 1
      %v740 = vsel %vm299, %v735, %v739
      %v741 = vshrl.u32 %v720, 16
      %v743 = vor.u32 %v741, %v739
      %v763 = vunpack.c.l.b16 %v702
      %v764 = vunpack.c.l.b16 %v703
      %v765 = vunpack.c.l.b16 %v704
      %v766 = vunpack.c.l.b16 %v705
      %v767 = vunpack.c.l.b16 %v706
      %v768 = vunpack.c.l.b16 %v707
      %v769 = vunpack.c.l.b16 %v708
      %v770 = vunpack.c.l.b16 %v709
      %v771 = vunpack.c.l.b16 %v710
      %v772 = vunpack.c.l.b16 %v711
      %v773 = vunpack.c.l.b16 %v712
      %v774 = vunpack.c.l.b16 %v713
      %v775 = vunpack.c.l.b16 %v714
      %v776 = vunpack.c.l.b16 %v715
      %v777 = vunpack.c.l.b16 %v716
      %v778 = vunpack.c.l.b16 %v717
      %v779 = vpack.c.b16 %v764, %v763
      %v780 = vpack.c.b16 %v766, %v765
      %v781 = vpack.c.b16 %v768, %v767
      %v782 = vpack.c.b16 %v770, %v769
      %v783 = vpack.c.b16 %v772, %v771
      %v784 = vpack.c.b16 %v774, %v773
      %v785 = vpack.c.b16 %v776, %v775
      %v786 = vpack.c.b16 %v778, %v777
      %795 = vmatpush.bf16.msra.mxu0 %v786
      %796 = vmatpush.bf16.msra.mxu0 %v785
      %797 = vmatpush.bf16.msra.mxu0 %v784
      %798 = vmatpush.bf16.msra.mxu0 %v783
      %799 = vmatpush.bf16.msra.mxu0 %v782
      %800 = vmatpush.bf16.msra.mxu0 %v781
      %801 = vmatpush.bf16.msra.mxu0 %v780
      %802 = vmatpush.bf16.msra.mxu0 %v779
      %803 = vmatmul.bf16.gmra.mxu0 %v732
      %v804 = vpop.f32.mrf.mxu0
      %v805 = vadd.f32 0.0, %v804
      %v806 = vpop.f32.mrf.mxu0
      %v807 = vadd.f32 0.0, %v806
      %808 = vmatmul.bf16.gmra.mxu0 %v740
      %v809 = vpop.f32.mrf.mxu0
      %v810 = vadd.f32 0.0, %v809
      %v811 = vpop.f32.mrf.mxu0
      %v812 = vadd.f32 0.0, %v811
      %813 = vmatmul.bf16.gmra.mxu0 %v743
      %v814 = vpop.f32.mrf.mxu0
      %v815 = vadd.f32 0.0, %v814
      %v816 = vpop.f32.mrf.mxu0
      %v817 = vadd.f32 0.0, %v816
      %818 = vdwg.mxu0
      %v819 = vadd.f32 %v695, %v805
      %v820 = vadd.f32 %v696, %v807
      %v821 = vadd.f32 %v697, %v810
      %v822 = vadd.f32 %v698, %v812
      %v823 = vadd.f32 %v699, %v815
      %v824 = vadd.f32 %v700, %v817
      %v825 = vld [vmem:[%s234 + $0x4] sm:$0xe]
      %v826 = vld [vmem:[%s2 + $0x140] sm:$0xf]
      %v827 = vld [vmem:[%s2 + $0x144] sm:$0xf]
      %v828 = vld [vmem:[%s2 + $0x148] sm:$0xf]
      %v829 = vld [vmem:[%s2 + $0x14c] sm:$0xf]
      %v830 = vld [vmem:[%s2 + $0x150] sm:$0xf]
      %v831 = vld [vmem:[%s2 + $0x154] sm:$0xf]
      %v832 = vld [vmem:[%s2 + $0x158] sm:$0xf]
      %v833 = vld [vmem:[%s2 + $0x15c] sm:$0xf]
      %v834 = vld [vmem:[%s2 + $0x160] sm:$0xf]
      %v835 = vld [vmem:[%s2 + $0x164] sm:$0xf]
      %v836 = vld [vmem:[%s2 + $0x168] sm:$0xf]
      %v837 = vld [vmem:[%s2 + $0x16c] sm:$0xf]
      %v838 = vld [vmem:[%s2 + $0x170] sm:$0xf]
      %v839 = vld [vmem:[%s2 + $0x174] sm:$0xf]
      %v840 = vld [vmem:[%s2 + $0x178] sm:$0xf]
      %v841 = vld [vmem:[%s2 + $0x17c] sm:$0xf]
      %v843 = vunpack.c.l.b16 %v825
      %v844 = vpack.c.b16 %v612, %v843
      %v845 = vrot.slane %v844, 1
      %v846 = vrot.slane %v618, 1
      %v847 = vsel %vm496, %v845, %v846
      %v848 = vrot.slane %v720, 1
      %v849 = vsel %vm496, %v846, %v848
      %v869 = vunpack.c.l.b16 %v826
      %v870 = vunpack.c.l.b16 %v827
      %v871 = vunpack.c.l.b16 %v828
      %v872 = vunpack.c.l.b16 %v829
      %v873 = vunpack.c.l.b16 %v830
      %v874 = vunpack.c.l.b16 %v831
      %v875 = vunpack.c.l.b16 %v832
      %v876 = vunpack.c.l.b16 %v833
      %v877 = vunpack.c.l.b16 %v834
      %v878 = vunpack.c.l.b16 %v835
      %v879 = vunpack.c.l.b16 %v836
      %v880 = vunpack.c.l.b16 %v837
      %v881 = vunpack.c.l.b16 %v838
      %v882 = vunpack.c.l.b16 %v839
      %v883 = vunpack.c.l.b16 %v840
      %v884 = vunpack.c.l.b16 %v841
      %v885 = vpack.c.b16 %v870, %v869
      %v886 = vpack.c.b16 %v872, %v871
      %v887 = vpack.c.b16 %v874, %v873
      %v888 = vpack.c.b16 %v876, %v875
      %v889 = vpack.c.b16 %v878, %v877
      %v890 = vpack.c.b16 %v880, %v879
      %v891 = vpack.c.b16 %v882, %v881
      %v892 = vpack.c.b16 %v884, %v883
      %901 = vmatpush.bf16.msra.mxu0 %v892
      %902 = vmatpush.bf16.msra.mxu0 %v891
      %903 = vmatpush.bf16.msra.mxu0 %v890
      %904 = vmatpush.bf16.msra.mxu0 %v889
      %905 = vmatpush.bf16.msra.mxu0 %v888
      %906 = vmatpush.bf16.msra.mxu0 %v887
      %907 = vmatpush.bf16.msra.mxu0 %v886
      %908 = vmatpush.bf16.msra.mxu0 %v885
      %909 = vmatmul.bf16.gmra.mxu0 %v847
      %v910 = vpop.f32.mrf.mxu0
      %v911 = vadd.f32 0.0, %v910
      %v912 = vpop.f32.mrf.mxu0
      %v913 = vadd.f32 0.0, %v912
      %914 = vmatmul.bf16.gmra.mxu0 %v849
      %v915 = vpop.f32.mrf.mxu0
      %v916 = vadd.f32 0.0, %v915
      %v917 = vpop.f32.mrf.mxu0
      %v918 = vadd.f32 0.0, %v917
      %919 = vmatmul.bf16.gmra.mxu0 %v848
      %v920 = vpop.f32.mrf.mxu0
      %v921 = vadd.f32 0.0, %v920
      %v922 = vpop.f32.mrf.mxu0
      %v923 = vadd.f32 0.0, %v922
      %924 = vdwg.mxu0
      %v925 = vadd.f32 %v819, %v911
      %v926 = vadd.f32 %v820, %v913
      %v927 = vadd.f32 %v821, %v916
      %v928 = vadd.f32 %v822, %v918
      %v929 = vadd.f32 %v823, %v921
      %v930 = vadd.f32 %v824, %v923
      %v931 = vld [vmem:[%s234 + $0x8] sm:$0xf]
      %v932 = vld [vmem:[%s234 + $0xc] sm:$0xf]
      %v933 = vld [vmem:[%s234 + $0x10] sm:$0xf]
      %v934 = vld [vmem:[%s234 + $0x14] sm:$0xf]
      %v935 = vld [vmem:[%s234 + $0x18] sm:$0xf]
      %v936 = vld [vmem:[%s234 + $0x1c] sm:$0x7]
      %v937 = vld [vmem:[%s2 + $0x180] sm:$0xf]
      %v938 = vld [vmem:[%s2 + $0x184] sm:$0xf]
      %v939 = vld [vmem:[%s2 + $0x188] sm:$0xf]
      %v940 = vld [vmem:[%s2 + $0x18c] sm:$0xf]
      %v941 = vld [vmem:[%s2 + $0x190] sm:$0xf]
      %v942 = vld [vmem:[%s2 + $0x194] sm:$0xf]
      %v943 = vld [vmem:[%s2 + $0x198] sm:$0xf]
      %v944 = vld [vmem:[%s2 + $0x19c] sm:$0xf]
      %v945 = vld [vmem:[%s2 + $0x1a0] sm:$0xf]
      %v946 = vld [vmem:[%s2 + $0x1a4] sm:$0xf]
      %v947 = vld [vmem:[%s2 + $0x1a8] sm:$0xf]
      %v948 = vld [vmem:[%s2 + $0x1ac] sm:$0xf]
      %v949 = vld [vmem:[%s2 + $0x1b0] sm:$0xf]
      %v950 = vld [vmem:[%s2 + $0x1b4] sm:$0xf]
      %v951 = vld [vmem:[%s2 + $0x1b8] sm:$0xf]
      %v952 = vld [vmem:[%s2 + $0x1bc] sm:$0xf]
      %v959 = vunpack.c.l.b16 %v931
      %v960 = vunpack.c.l.b16 %v932
      %v961 = vunpack.c.l.b16 %v933
      %v962 = vunpack.c.l.b16 %v934
      %v963 = vunpack.c.l.b16 %v935
      %v964 = vunpack.c.l.b16 %v936
      %v965 = vpack.c.b16 %v960, %v959
      %v966 = vpack.c.b16 %v962, %v961
      %v967 = vpack.c.b16 %v964, %v963
      %v987 = vunpack.c.l.b16 %v937
      %v988 = vunpack.c.l.b16 %v938
      %v989 = vunpack.c.l.b16 %v939
      %v990 = vunpack.c.l.b16 %v940
      %v991 = vunpack.c.l.b16 %v941
      %v992 = vunpack.c.l.b16 %v942
      %v993 = vunpack.c.l.b16 %v943
      %v994 = vunpack.c.l.b16 %v944
      %v995 = vunpack.c.l.b16 %v945
      %v996 = vunpack.c.l.b16 %v946
      %v997 = vunpack.c.l.b16 %v947
      %v998 = vunpack.c.l.b16 %v948
      %v999 = vunpack.c.l.b16 %v949
      %v1000 = vunpack.c.l.b16 %v950
      %v1001 = vunpack.c.l.b16 %v951
      %v1002 = vunpack.c.l.b16 %v952
      %v1003 = vpack.c.b16 %v988, %v987
      %v1004 = vpack.c.b16 %v990, %v989
      %v1005 = vpack.c.b16 %v992, %v991
      %v1006 = vpack.c.b16 %v994, %v993
      %v1007 = vpack.c.b16 %v996, %v995
      %v1008 = vpack.c.b16 %v998, %v997
      %v1009 = vpack.c.b16 %v1000, %v999
      %v1010 = vpack.c.b16 %v1002, %v1001
      %1019 = vmatpush.bf16.msra.mxu0 %v1010
      %1020 = vmatpush.bf16.msra.mxu0 %v1009
      %1021 = vmatpush.bf16.msra.mxu0 %v1008
      %1022 = vmatpush.bf16.msra.mxu0 %v1007
      %1023 = vmatpush.bf16.msra.mxu0 %v1006
      %1024 = vmatpush.bf16.msra.mxu0 %v1005
      %1025 = vmatpush.bf16.msra.mxu0 %v1004
      %1026 = vmatpush.bf16.msra.mxu0 %v1003
      %1027 = vmatmul.bf16.gmra.mxu0 %v965
      %v1028 = vpop.f32.mrf.mxu0
      %v1029 = vadd.f32 0.0, %v1028
      %v1030 = vpop.f32.mrf.mxu0
      %v1031 = vadd.f32 0.0, %v1030
      %1032 = vmatmul.bf16.gmra.mxu0 %v966
      %v1033 = vpop.f32.mrf.mxu0
      %v1034 = vadd.f32 0.0, %v1033
      %v1035 = vpop.f32.mrf.mxu0
      %v1036 = vadd.f32 0.0, %v1035
      %1037 = vmatmul.bf16.gmra.mxu0 %v967
      %v1038 = vpop.f32.mrf.mxu0
      %v1039 = vadd.f32 0.0, %v1038
      %v1040 = vpop.f32.mrf.mxu0
      %v1041 = vadd.f32 0.0, %v1040
      %1042 = vdwg.mxu0
      %v1043 = vadd.f32 %v925, %v1029
      %v1044 = vadd.f32 %v926, %v1031
      %v1045 = vadd.f32 %v927, %v1034
      %v1046 = vadd.f32 %v928, %v1036
      %v1047 = vadd.f32 %v929, %v1039
      %v1048 = vadd.f32 %v930, %v1041
      %v1049 = vld [vmem:[%s234 + $0x1c] sm:$0xf]
      %v1050 = vld [vmem:[%s2 + $0x1c0] sm:$0xf]
      %v1051 = vld [vmem:[%s2 + $0x1c4] sm:$0xf]
      %v1052 = vld [vmem:[%s2 + $0x1c8] sm:$0xf]
      %v1053 = vld [vmem:[%s2 + $0x1cc] sm:$0xf]
      %v1054 = vld [vmem:[%s2 + $0x1d0] sm:$0xf]
      %v1055 = vld [vmem:[%s2 + $0x1d4] sm:$0xf]
      %v1056 = vld [vmem:[%s2 + $0x1d8] sm:$0xf]
      %v1057 = vld [vmem:[%s2 + $0x1dc] sm:$0xf]
      %v1058 = vld [vmem:[%s2 + $0x1e0] sm:$0xf]
      %v1059 = vld [vmem:[%s2 + $0x1e4] sm:$0xf]
      %v1060 = vld [vmem:[%s2 + $0x1e8] sm:$0xf]
      %v1061 = vld [vmem:[%s2 + $0x1ec] sm:$0xf]
      %v1062 = vld [vmem:[%s2 + $0x1f0] sm:$0xf]
      %v1063 = vld [vmem:[%s2 + $0x1f4] sm:$0xf]
      %v1064 = vld [vmem:[%s2 + $0x1f8] sm:$0xf]
      %v1065 = vld [vmem:[%s2 + $0x1fc] sm:$0xf]
      %v1067 = vunpack.c.l.b16 %v1049
      %v1068 = vpack.c.b16 %v1067, %v963
      %v1070 = vshrl.u32 %v965, 16
      %v1072 = vshll.u32 %v965, 16
      %v1074 = vrot.slane %v1072, 1
      %v1075 = vor.u32 %v1070, %v1074
      %v1077 = vshll.u32 %v966, 16
      %v1079 = vrot.slane %v1077, 1
      %v1080 = vsel %vm299, %v1075, %v1079
      %v1081 = vshrl.u32 %v966, 16
      %v1083 = vor.u32 %v1081, %v1079
      %v1085 = vshll.u32 %v1068, 16
      %v1087 = vrot.slane %v1085, 1
      %v1088 = vsel %vm299, %v1083, %v1087
      %v1089 = vshrl.u32 %v1068, 16
      %v1091 = vor.u32 %v1089, %v1087
      %v1111 = vunpack.c.l.b16 %v1050
      %v1112 = vunpack.c.l.b16 %v1051
      %v1113 = vunpack.c.l.b16 %v1052
      %v1114 = vunpack.c.l.b16 %v1053
      %v1115 = vunpack.c.l.b16 %v1054
      %v1116 = vunpack.c.l.b16 %v1055
      %v1117 = vunpack.c.l.b16 %v1056
      %v1118 = vunpack.c.l.b16 %v1057
      %v1119 = vunpack.c.l.b16 %v1058
      %v1120 = vunpack.c.l.b16 %v1059
      %v1121 = vunpack.c.l.b16 %v1060
      %v1122 = vunpack.c.l.b16 %v1061
      %v1123 = vunpack.c.l.b16 %v1062
      %v1124 = vunpack.c.l.b16 %v1063
      %v1125 = vunpack.c.l.b16 %v1064
      %v1126 = vunpack.c.l.b16 %v1065
      %v1127 = vpack.c.b16 %v1112, %v1111
      %v1128 = vpack.c.b16 %v1114, %v1113
      %v1129 = vpack.c.b16 %v1116, %v1115
      %v1130 = vpack.c.b16 %v1118, %v1117
      %v1131 = vpack.c.b16 %v1120, %v1119
      %v1132 = vpack.c.b16 %v1122, %v1121
      %v1133 = vpack.c.b16 %v1124, %v1123
      %v1134 = vpack.c.b16 %v1126, %v1125
      %1143 = vmatpush.bf16.msra.mxu0 %v1134
      %1144 = vmatpush.bf16.msra.mxu0 %v1133
      %1145 = vmatpush.bf16.msra.mxu0 %v1132
      %1146 = vmatpush.bf16.msra.mxu0 %v1131
      %1147 = vmatpush.bf16.msra.mxu0 %v1130
      %1148 = vmatpush.bf16.msra.mxu0 %v1129
      %1149 = vmatpush.bf16.msra.mxu0 %v1128
      %1150 = vmatpush.bf16.msra.mxu0 %v1127
      %1151 = vmatmul.bf16.gmra.mxu0 %v1080
      %v1152 = vpop.f32.mrf.mxu0
      %v1153 = vadd.f32 0.0, %v1152
      %v1154 = vpop.f32.mrf.mxu0
      %v1155 = vadd.f32 0.0, %v1154
      %1156 = vmatmul.bf16.gmra.mxu0 %v1088
      %v1157 = vpop.f32.mrf.mxu0
      %v1158 = vadd.f32 0.0, %v1157
      %v1159 = vpop.f32.mrf.mxu0
      %v1160 = vadd.f32 0.0, %v1159
      %1161 = vmatmul.bf16.gmra.mxu0 %v1091
      %v1162 = vpop.f32.mrf.mxu0
      %v1163 = vadd.f32 0.0, %v1162
      %v1164 = vpop.f32.mrf.mxu0
      %v1165 = vadd.f32 0.0, %v1164
      %1166 = vdwg.mxu0
      %v1167 = vadd.f32 %v1043, %v1153
      %v1168 = vadd.f32 %v1044, %v1155
      %v1169 = vadd.f32 %v1045, %v1158
      %v1170 = vadd.f32 %v1046, %v1160
      %v1171 = vadd.f32 %v1047, %v1163
      %v1172 = vadd.f32 %v1048, %v1165
      %v1173 = vld [vmem:[%s234 + $0x8] sm:$0xe]
      %v1174 = vld [vmem:[%s2 + $0x200] sm:$0xf]
      %v1175 = vld [vmem:[%s2 + $0x204] sm:$0xf]
      %v1176 = vld [vmem:[%s2 + $0x208] sm:$0xf]
      %v1177 = vld [vmem:[%s2 + $0x20c] sm:$0xf]
      %v1178 = vld [vmem:[%s2 + $0x210] sm:$0xf]
      %v1179 = vld [vmem:[%s2 + $0x214] sm:$0xf]
      %v1180 = vld [vmem:[%s2 + $0x218] sm:$0xf]
      %v1181 = vld [vmem:[%s2 + $0x21c] sm:$0xf]
      %v1182 = vld [vmem:[%s2 + $0x220] sm:$0xf]
      %v1183 = vld [vmem:[%s2 + $0x224] sm:$0xf]
      %v1184 = vld [vmem:[%s2 + $0x228] sm:$0xf]
      %v1185 = vld [vmem:[%s2 + $0x22c] sm:$0xf]
      %v1186 = vld [vmem:[%s2 + $0x230] sm:$0xf]
      %v1187 = vld [vmem:[%s2 + $0x234] sm:$0xf]
      %v1188 = vld [vmem:[%s2 + $0x238] sm:$0xf]
      %v1189 = vld [vmem:[%s2 + $0x23c] sm:$0xf]
      %v1191 = vunpack.c.l.b16 %v1173
      %v1192 = vpack.c.b16 %v960, %v1191
      %v1193 = vrot.slane %v1192, 1
      %v1194 = vrot.slane %v966, 1
      %v1195 = vsel %vm496, %v1193, %v1194
      %v1196 = vrot.slane %v1068, 1
      %v1197 = vsel %vm496, %v1194, %v1196
      %v1217 = vunpack.c.l.b16 %v1174
      %v1218 = vunpack.c.l.b16 %v1175
      %v1219 = vunpack.c.l.b16 %v1176
      %v1220 = vunpack.c.l.b16 %v1177
      %v1221 = vunpack.c.l.b16 %v1178
      %v1222 = vunpack.c.l.b16 %v1179
      %v1223 = vunpack.c.l.b16 %v1180
      %v1224 = vunpack.c.l.b16 %v1181
      %v1225 = vunpack.c.l.b16 %v1182
      %v1226 = vunpack.c.l.b16 %v1183
      %v1227 = vunpack.c.l.b16 %v1184
      %v1228 = vunpack.c.l.b16 %v1185
      %v1229 = vunpack.c.l.b16 %v1186
      %v1230 = vunpack.c.l.b16 %v1187
      %v1231 = vunpack.c.l.b16 %v1188
      %v1232 = vunpack.c.l.b16 %v1189
      %v1233 = vpack.c.b16 %v1218, %v1217
      %v1234 = vpack.c.b16 %v1220, %v1219
      %v1235 = vpack.c.b16 %v1222, %v1221
      %v1236 = vpack.c.b16 %v1224, %v1223
      %v1237 = vpack.c.b16 %v1226, %v1225
      %v1238 = vpack.c.b16 %v1228, %v1227
      %v1239 = vpack.c.b16 %v1230, %v1229
      %v1240 = vpack.c.b16 %v1232, %v1231
      %1249 = vmatpush.bf16.msra.mxu0 %v1240
      %1250 = vmatpush.bf16.msra.mxu0 %v1239
      %1251 = vmatpush.bf16.msra.mxu0 %v1238
      %1252 = vmatpush.bf16.msra.mxu0 %v1237
      %1253 = vmatpush.bf16.msra.mxu0 %v1236
      %1254 = vmatpush.bf16.msra.mxu0 %v1235
      %1255 = vmatpush.bf16.msra.mxu0 %v1234
      %1256 = vmatpush.bf16.msra.mxu0 %v1233
      %1257 = vmatmul.bf16.gmra.mxu0 %v1195
      %v1258 = vpop.f32.mrf.mxu0
      %v1259 = vadd.f32 0.0, %v1258
      %v1260 = vpop.f32.mrf.mxu0
      %v1261 = vadd.f32 0.0, %v1260
      %1262 = vmatmul.bf16.gmra.mxu0 %v1197
      %v1263 = vpop.f32.mrf.mxu0
      %v1264 = vadd.f32 0.0, %v1263
      %v1265 = vpop.f32.mrf.mxu0
      %v1266 = vadd.f32 0.0, %v1265
      %1267 = vmatmul.bf16.gmra.mxu0 %v1196
      %v1268 = vpop.f32.mrf.mxu0
      %v1269 = vadd.f32 0.0, %v1268
      %v1270 = vpop.f32.mrf.mxu0
      %v1271 = vadd.f32 0.0, %v1270
      %1272 = vdwg.mxu0
      %v1273 = vadd.f32 %v1167, %v1259
      %v1274 = vadd.f32 %v1168, %v1261
      %v1275 = vadd.f32 %v1169, %v1264
      %v1276 = vadd.f32 %v1170, %v1266
      %v1277 = vadd.f32 %v1171, %v1269
      %v1278 = vadd.f32 %v1172, %v1271
      %v1279 = vld [vmem:[%s239] sm:$0xf]
      %v1280 = vld [vmem:[%s239 + $0x4] sm:$0xf]
      %v1281 = vld [vmem:[%s239 + $0x8] sm:$0xf]
      %v1282 = vld [vmem:[%s239 + $0xc] sm:$0xf]
      %v1283 = vld [vmem:[%s239 + $0x10] sm:$0xf]
      %v1284 = vld [vmem:[%s239 + $0x14] sm:$0x7]
      %v1285 = vld [vmem:[%s3] sm:$0xf]
      %v1286 = vld [vmem:[%s3 + $0x4] sm:$0xf]
      %v1287 = vld [vmem:[%s3 + $0x8] sm:$0xf]
      %v1288 = vld [vmem:[%s3 + $0xc] sm:$0xf]
      %v1289 = vld [vmem:[%s3 + $0x10] sm:$0xf]
      %v1290 = vld [vmem:[%s3 + $0x14] sm:$0xf]
      %v1291 = vld [vmem:[%s3 + $0x18] sm:$0xf]
      %v1292 = vld [vmem:[%s3 + $0x1c] sm:$0xf]
      %v1293 = vld [vmem:[%s3 + $0x20] sm:$0xf]
      %v1294 = vld [vmem:[%s3 + $0x24] sm:$0xf]
      %v1295 = vld [vmem:[%s3 + $0x28] sm:$0xf]
      %v1296 = vld [vmem:[%s3 + $0x2c] sm:$0xf]
      %v1297 = vld [vmem:[%s3 + $0x30] sm:$0xf]
      %v1298 = vld [vmem:[%s3 + $0x34] sm:$0xf]
      %v1299 = vld [vmem:[%s3 + $0x38] sm:$0xf]
      %v1300 = vld [vmem:[%s3 + $0x3c] sm:$0xf]
      %v1307 = vunpack.c.l.b16 %v1279
      %v1308 = vunpack.c.l.b16 %v1280
      %v1309 = vunpack.c.l.b16 %v1281
      %v1310 = vunpack.c.l.b16 %v1282
      %v1311 = vunpack.c.l.b16 %v1283
      %v1312 = vunpack.c.l.b16 %v1284
      %v1313 = vpack.c.b16 %v1308, %v1307
      %v1314 = vpack.c.b16 %v1310, %v1309
      %v1315 = vpack.c.b16 %v1312, %v1311
      %v1335 = vunpack.c.l.b16 %v1285
      %v1336 = vunpack.c.l.b16 %v1286
      %v1337 = vunpack.c.l.b16 %v1287
      %v1338 = vunpack.c.l.b16 %v1288
      %v1339 = vunpack.c.l.b16 %v1289
      %v1340 = vunpack.c.l.b16 %v1290
      %v1341 = vunpack.c.l.b16 %v1291
      %v1342 = vunpack.c.l.b16 %v1292
      %v1343 = vunpack.c.l.b16 %v1293
      %v1344 = vunpack.c.l.b16 %v1294
      %v1345 = vunpack.c.l.b16 %v1295
      %v1346 = vunpack.c.l.b16 %v1296
      %v1347 = vunpack.c.l.b16 %v1297
      %v1348 = vunpack.c.l.b16 %v1298
      %v1349 = vunpack.c.l.b16 %v1299
      %v1350 = vunpack.c.l.b16 %v1300
      %v1351 = vpack.c.b16 %v1336, %v1335
      %v1352 = vpack.c.b16 %v1338, %v1337
      %v1353 = vpack.c.b16 %v1340, %v1339
      %v1354 = vpack.c.b16 %v1342, %v1341
      %v1355 = vpack.c.b16 %v1344, %v1343
      %v1356 = vpack.c.b16 %v1346, %v1345
      %v1357 = vpack.c.b16 %v1348, %v1347
      %v1358 = vpack.c.b16 %v1350, %v1349
      %1367 = vmatpush.bf16.msra.mxu0 %v1358
      %1368 = vmatpush.bf16.msra.mxu0 %v1357
      %1369 = vmatpush.bf16.msra.mxu0 %v1356
      %1370 = vmatpush.bf16.msra.mxu0 %v1355
      %1371 = vmatpush.bf16.msra.mxu0 %v1354
      %1372 = vmatpush.bf16.msra.mxu0 %v1353
      %1373 = vmatpush.bf16.msra.mxu0 %v1352
      %1374 = vmatpush.bf16.msra.mxu0 %v1351
      %1375 = vmatmul.bf16.gmra.mxu0 %v1313
      %v1376 = vpop.f32.mrf.mxu0
      %v1377 = vadd.f32 0.0, %v1376
      %v1378 = vpop.f32.mrf.mxu0
      %v1379 = vadd.f32 0.0, %v1378
      %1380 = vmatmul.bf16.gmra.mxu0 %v1314
      %v1381 = vpop.f32.mrf.mxu0
      %v1382 = vadd.f32 0.0, %v1381
      %v1383 = vpop.f32.mrf.mxu0
      %v1384 = vadd.f32 0.0, %v1383
      %1385 = vmatmul.bf16.gmra.mxu0 %v1315
      %v1386 = vpop.f32.mrf.mxu0
      %v1387 = vadd.f32 0.0, %v1386
      %v1388 = vpop.f32.mrf.mxu0
      %v1389 = vadd.f32 0.0, %v1388
      %1390 = vdwg.mxu0
      %v1391 = vadd.f32 %v1273, %v1377
      %v1392 = vadd.f32 %v1274, %v1379
      %v1393 = vadd.f32 %v1275, %v1382
      %v1394 = vadd.f32 %v1276, %v1384
      %v1395 = vadd.f32 %v1277, %v1387
      %v1396 = vadd.f32 %v1278, %v1389
      %v1397 = vld [vmem:[%s239 + $0x14] sm:$0xf]
      %v1398 = vld [vmem:[%s3 + $0x40] sm:$0xf]
      %v1399 = vld [vmem:[%s3 + $0x44] sm:$0xf]
      %v1400 = vld [vmem:[%s3 + $0x48] sm:$0xf]
      %v1401 = vld [vmem:[%s3 + $0x4c] sm:$0xf]
      %v1402 = vld [vmem:[%s3 + $0x50] sm:$0xf]
      %v1403 = vld [vmem:[%s3 + $0x54] sm:$0xf]
      %v1404 = vld [vmem:[%s3 + $0x58] sm:$0xf]
      %v1405 = vld [vmem:[%s3 + $0x5c] sm:$0xf]
      %v1406 = vld [vmem:[%s3 + $0x60] sm:$0xf]
      %v1407 = vld [vmem:[%s3 + $0x64] sm:$0xf]
      %v1408 = vld [vmem:[%s3 + $0x68] sm:$0xf]
      %v1409 = vld [vmem:[%s3 + $0x6c] sm:$0xf]
      %v1410 = vld [vmem:[%s3 + $0x70] sm:$0xf]
      %v1411 = vld [vmem:[%s3 + $0x74] sm:$0xf]
      %v1412 = vld [vmem:[%s3 + $0x78] sm:$0xf]
      %v1413 = vld [vmem:[%s3 + $0x7c] sm:$0xf]
      %v1415 = vunpack.c.l.b16 %v1397
      %v1416 = vpack.c.b16 %v1415, %v1311
      %v1418 = vshrl.u32 %v1313, 16
      %v1420 = vshll.u32 %v1313, 16
      %v1422 = vrot.slane %v1420, 1
      %v1423 = vor.u32 %v1418, %v1422
      %v1425 = vshll.u32 %v1314, 16
      %v1427 = vrot.slane %v1425, 1
      %v1428 = vsel %vm299, %v1423, %v1427
      %v1429 = vshrl.u32 %v1314, 16
      %v1431 = vor.u32 %v1429, %v1427
      %v1433 = vshll.u32 %v1416, 16
      %v1435 = vrot.slane %v1433, 1
      %v1436 = vsel %vm299, %v1431, %v1435
      %v1437 = vshrl.u32 %v1416, 16
      %v1439 = vor.u32 %v1437, %v1435
      %v1459 = vunpack.c.l.b16 %v1398
      %v1460 = vunpack.c.l.b16 %v1399
      %v1461 = vunpack.c.l.b16 %v1400
      %v1462 = vunpack.c.l.b16 %v1401
      %v1463 = vunpack.c.l.b16 %v1402
      %v1464 = vunpack.c.l.b16 %v1403
      %v1465 = vunpack.c.l.b16 %v1404
      %v1466 = vunpack.c.l.b16 %v1405
      %v1467 = vunpack.c.l.b16 %v1406
      %v1468 = vunpack.c.l.b16 %v1407
      %v1469 = vunpack.c.l.b16 %v1408
      %v1470 = vunpack.c.l.b16 %v1409
      %v1471 = vunpack.c.l.b16 %v1410
      %v1472 = vunpack.c.l.b16 %v1411
      %v1473 = vunpack.c.l.b16 %v1412
      %v1474 = vunpack.c.l.b16 %v1413
      %v1475 = vpack.c.b16 %v1460, %v1459
      %v1476 = vpack.c.b16 %v1462, %v1461
      %v1477 = vpack.c.b16 %v1464, %v1463
      %v1478 = vpack.c.b16 %v1466, %v1465
      %v1479 = vpack.c.b16 %v1468, %v1467
      %v1480 = vpack.c.b16 %v1470, %v1469
      %v1481 = vpack.c.b16 %v1472, %v1471
      %v1482 = vpack.c.b16 %v1474, %v1473
      %1491 = vmatpush.bf16.msra.mxu0 %v1482
      %1492 = vmatpush.bf16.msra.mxu0 %v1481
      %1493 = vmatpush.bf16.msra.mxu0 %v1480
      %1494 = vmatpush.bf16.msra.mxu0 %v1479
      %1495 = vmatpush.bf16.msra.mxu0 %v1478
      %1496 = vmatpush.bf16.msra.mxu0 %v1477
      %1497 = vmatpush.bf16.msra.mxu0 %v1476
      %1498 = vmatpush.bf16.msra.mxu0 %v1475
      %1499 = vmatmul.bf16.gmra.mxu0 %v1428
      %v1500 = vpop.f32.mrf.mxu0
      %v1501 = vadd.f32 0.0, %v1500
      %v1502 = vpop.f32.mrf.mxu0
      %v1503 = vadd.f32 0.0, %v1502
      %1504 = vmatmul.bf16.gmra.mxu0 %v1436
      %v1505 = vpop.f32.mrf.mxu0
      %v1506 = vadd.f32 0.0, %v1505
      %v1507 = vpop.f32.mrf.mxu0
      %v1508 = vadd.f32 0.0, %v1507
      %1509 = vmatmul.bf16.gmra.mxu0 %v1439
      %v1510 = vpop.f32.mrf.mxu0
      %v1511 = vadd.f32 0.0, %v1510
      %v1512 = vpop.f32.mrf.mxu0
      %v1513 = vadd.f32 0.0, %v1512
      %1514 = vdwg.mxu0
      %v1515 = vadd.f32 %v1391, %v1501
      %v1516 = vadd.f32 %v1392, %v1503
      %v1517 = vadd.f32 %v1393, %v1506
      %v1518 = vadd.f32 %v1394, %v1508
      %v1519 = vadd.f32 %v1395, %v1511
      %v1520 = vadd.f32 %v1396, %v1513
      %v1521 = vld [vmem:[%s239] sm:$0xe]
      %v1522 = vld [vmem:[%s3 + $0x80] sm:$0xf]
      %v1523 = vld [vmem:[%s3 + $0x84] sm:$0xf]
      %v1524 = vld [vmem:[%s3 + $0x88] sm:$0xf]
      %v1525 = vld [vmem:[%s3 + $0x8c] sm:$0xf]
      %v1526 = vld [vmem:[%s3 + $0x90] sm:$0xf]
      %v1527 = vld [vmem:[%s3 + $0x94] sm:$0xf]
      %v1528 = vld [vmem:[%s3 + $0x98] sm:$0xf]
      %v1529 = vld [vmem:[%s3 + $0x9c] sm:$0xf]
      %v1530 = vld [vmem:[%s3 + $0xa0] sm:$0xf]
      %v1531 = vld [vmem:[%s3 + $0xa4] sm:$0xf]
      %v1532 = vld [vmem:[%s3 + $0xa8] sm:$0xf]
      %v1533 = vld [vmem:[%s3 + $0xac] sm:$0xf]
      %v1534 = vld [vmem:[%s3 + $0xb0] sm:$0xf]
      %v1535 = vld [vmem:[%s3 + $0xb4] sm:$0xf]
      %v1536 = vld [vmem:[%s3 + $0xb8] sm:$0xf]
      %v1537 = vld [vmem:[%s3 + $0xbc] sm:$0xf]
      %v1539 = vunpack.c.l.b16 %v1521
      %v1540 = vpack.c.b16 %v1308, %v1539
      %v1541 = vrot.slane %v1540, 1
      %v1542 = vrot.slane %v1314, 1
      %v1543 = vsel %vm496, %v1541, %v1542
      %v1544 = vrot.slane %v1416, 1
      %v1545 = vsel %vm496, %v1542, %v1544
      %v1565 = vunpack.c.l.b16 %v1522
      %v1566 = vunpack.c.l.b16 %v1523
      %v1567 = vunpack.c.l.b16 %v1524
      %v1568 = vunpack.c.l.b16 %v1525
      %v1569 = vunpack.c.l.b16 %v1526
      %v1570 = vunpack.c.l.b16 %v1527
      %v1571 = vunpack.c.l.b16 %v1528
      %v1572 = vunpack.c.l.b16 %v1529
      %v1573 = vunpack.c.l.b16 %v1530
      %v1574 = vunpack.c.l.b16 %v1531
      %v1575 = vunpack.c.l.b16 %v1532
      %v1576 = vunpack.c.l.b16 %v1533
      %v1577 = vunpack.c.l.b16 %v1534
      %v1578 = vunpack.c.l.b16 %v1535
      %v1579 = vunpack.c.l.b16 %v1536
      %v1580 = vunpack.c.l.b16 %v1537
      %v1581 = vpack.c.b16 %v1566, %v1565
      %v1582 = vpack.c.b16 %v1568, %v1567
      %v1583 = vpack.c.b16 %v1570, %v1569
      %v1584 = vpack.c.b16 %v1572, %v1571
      %v1585 = vpack.c.b16 %v1574, %v1573
      %v1586 = vpack.c.b16 %v1576, %v1575
      %v1587 = vpack.c.b16 %v1578, %v1577
      %v1588 = vpack.c.b16 %v1580, %v1579
      %1597 = vmatpush.bf16.msra.mxu0 %v1588
      %1598 = vmatpush.bf16.msra.mxu0 %v1587
      %1599 = vmatpush.bf16.msra.mxu0 %v1586
      %1600 = vmatpush.bf16.msra.mxu0 %v1585
      %1601 = vmatpush.bf16.msra.mxu0 %v1584
      %1602 = vmatpush.bf16.msra.mxu0 %v1583
      %1603 = vmatpush.bf16.msra.mxu0 %v1582
      %1604 = vmatpush.bf16.msra.mxu0 %v1581
      %1605 = vmatmul.bf16.gmra.mxu0 %v1543
      %v1606 = vpop.f32.mrf.mxu0
      %v1607 = vadd.f32 0.0, %v1606
      %v1608 = vpop.f32.mrf.mxu0
      %v1609 = vadd.f32 0.0, %v1608
      %1610 = vmatmul.bf16.gmra.mxu0 %v1545
      %v1611 = vpop.f32.mrf.mxu0
      %v1612 = vadd.f32 0.0, %v1611
      %v1613 = vpop.f32.mrf.mxu0
      %v1614 = vadd.f32 0.0, %v1613
      %1615 = vmatmul.bf16.gmra.mxu0 %v1544
      %v1616 = vpop.f32.mrf.mxu0
      %v1617 = vadd.f32 0.0, %v1616
      %v1618 = vpop.f32.mrf.mxu0
      %v1619 = vadd.f32 0.0, %v1618
      %1620 = vdwg.mxu0
      %v1621 = vadd.f32 %v1515, %v1607
      %v1622 = vadd.f32 %v1516, %v1609
      %v1623 = vadd.f32 %v1517, %v1612
      %v1624 = vadd.f32 %v1518, %v1614
      %v1625 = vadd.f32 %v1519, %v1617
      %v1626 = vadd.f32 %v1520, %v1619
      %v1627 = vld [vmem:[%s239 + $0x4] sm:$0xf]
      %v1628 = vld [vmem:[%s239 + $0x8] sm:$0xf]
      %v1629 = vld [vmem:[%s239 + $0xc] sm:$0xf]
      %v1630 = vld [vmem:[%s239 + $0x10] sm:$0xf]
      %v1631 = vld [vmem:[%s239 + $0x14] sm:$0xf]
      %v1632 = vld [vmem:[%s239 + $0x18] sm:$0x7]
      %v1633 = vld [vmem:[%s3 + $0xc0] sm:$0xf]
      %v1634 = vld [vmem:[%s3 + $0xc4] sm:$0xf]
      %v1635 = vld [vmem:[%s3 + $0xc8] sm:$0xf]
      %v1636 = vld [vmem:[%s3 + $0xcc] sm:$0xf]
      %v1637 = vld [vmem:[%s3 + $0xd0] sm:$0xf]
      %v1638 = vld [vmem:[%s3 + $0xd4] sm:$0xf]
      %v1639 = vld [vmem:[%s3 + $0xd8] sm:$0xf]
      %v1640 = vld [vmem:[%s3 + $0xdc] sm:$0xf]
      %v1641 = vld [vmem:[%s3 + $0xe0] sm:$0xf]
      %v1642 = vld [vmem:[%s3 + $0xe4] sm:$0xf]
      %v1643 = vld [vmem:[%s3 + $0xe8] sm:$0xf]
      %v1644 = vld [vmem:[%s3 + $0xec] sm:$0xf]
      %v1645 = vld [vmem:[%s3 + $0xf0] sm:$0xf]
      %v1646 = vld [vmem:[%s3 + $0xf4] sm:$0xf]
      %v1647 = vld [vmem:[%s3 + $0xf8] sm:$0xf]
      %v1648 = vld [vmem:[%s3 + $0xfc] sm:$0xf]
      %v1655 = vunpack.c.l.b16 %v1627
      %v1656 = vunpack.c.l.b16 %v1628
      %v1657 = vunpack.c.l.b16 %v1629
      %v1658 = vunpack.c.l.b16 %v1630
      %v1659 = vunpack.c.l.b16 %v1631
      %v1660 = vunpack.c.l.b16 %v1632
      %v1661 = vpack.c.b16 %v1656, %v1655
      %v1662 = vpack.c.b16 %v1658, %v1657
      %v1663 = vpack.c.b16 %v1660, %v1659
      %v1683 = vunpack.c.l.b16 %v1633
      %v1684 = vunpack.c.l.b16 %v1634
      %v1685 = vunpack.c.l.b16 %v1635
      %v1686 = vunpack.c.l.b16 %v1636
      %v1687 = vunpack.c.l.b16 %v1637
      %v1688 = vunpack.c.l.b16 %v1638
      %v1689 = vunpack.c.l.b16 %v1639
      %v1690 = vunpack.c.l.b16 %v1640
      %v1691 = vunpack.c.l.b16 %v1641
      %v1692 = vunpack.c.l.b16 %v1642
      %v1693 = vunpack.c.l.b16 %v1643
      %v1694 = vunpack.c.l.b16 %v1644
      %v1695 = vunpack.c.l.b16 %v1645
      %v1696 = vunpack.c.l.b16 %v1646
      %v1697 = vunpack.c.l.b16 %v1647
      %v1698 = vunpack.c.l.b16 %v1648
      %v1699 = vpack.c.b16 %v1684, %v1683
      %v1700 = vpack.c.b16 %v1686, %v1685
      %v1701 = vpack.c.b16 %v1688, %v1687
      %v1702 = vpack.c.b16 %v1690, %v1689
      %v1703 = vpack.c.b16 %v1692, %v1691
      %v1704 = vpack.c.b16 %v1694, %v1693
      %v1705 = vpack.c.b16 %v1696, %v1695
      %v1706 = vpack.c.b16 %v1698, %v1697
      %1715 = vmatpush.bf16.msra.mxu0 %v1706
      %1716 = vmatpush.bf16.msra.mxu0 %v1705
      %1717 = vmatpush.bf16.msra.mxu0 %v1704
      %1718 = vmatpush.bf16.msra.mxu0 %v1703
      %1719 = vmatpush.bf16.msra.mxu0 %v1702
      %1720 = vmatpush.bf16.msra.mxu0 %v1701
      %1721 = vmatpush.bf16.msra.mxu0 %v1700
      %1722 = vmatpush.bf16.msra.mxu0 %v1699
      %1723 = vmatmul.bf16.gmra.mxu0 %v1661
      %v1724 = vpop.f32.mrf.mxu0
      %v1725 = vadd.f32 0.0, %v1724
      %v1726 = vpop.f32.mrf.mxu0
      %v1727 = vadd.f32 0.0, %v1726
      %1728 = vmatmul.bf16.gmra.mxu0 %v1662
      %v1729 = vpop.f32.mrf.mxu0
      %v1730 = vadd.f32 0.0, %v1729
      %v1731 = vpop.f32.mrf.mxu0
      %v1732 = vadd.f32 0.0, %v1731
      %1733 = vmatmul.bf16.gmra.mxu0 %v1663
      %v1734 = vpop.f32.mrf.mxu0
      %v1735 = vadd.f32 0.0, %v1734
      %v1736 = vpop.f32.mrf.mxu0
      %v1737 = vadd.f32 0.0, %v1736
      %1738 = vdwg.mxu0
      %v1739 = vadd.f32 %v1621, %v1725
      %v1740 = vadd.f32 %v1622, %v1727
      %v1741 = vadd.f32 %v1623, %v1730
      %v1742 = vadd.f32 %v1624, %v1732
      %v1743 = vadd.f32 %v1625, %v1735
      %v1744 = vadd.f32 %v1626, %v1737
      %v1745 = vld [vmem:[%s239 + $0x18] sm:$0xf]
      %v1746 = vld [vmem:[%s3 + $0x100] sm:$0xf]
      %v1747 = vld [vmem:[%s3 + $0x104] sm:$0xf]
      %v1748 = vld [vmem:[%s3 + $0x108] sm:$0xf]
      %v1749 = vld [vmem:[%s3 + $0x10c] sm:$0xf]
      %v1750 = vld [vmem:[%s3 + $0x110] sm:$0xf]
      %v1751 = vld [vmem:[%s3 + $0x114] sm:$0xf]
      %v1752 = vld [vmem:[%s3 + $0x118] sm:$0xf]
      %v1753 = vld [vmem:[%s3 + $0x11c] sm:$0xf]
      %v1754 = vld [vmem:[%s3 + $0x120] sm:$0xf]
      %v1755 = vld [vmem:[%s3 + $0x124] sm:$0xf]
      %v1756 = vld [vmem:[%s3 + $0x128] sm:$0xf]
      %v1757 = vld [vmem:[%s3 + $0x12c] sm:$0xf]
      %v1758 = vld [vmem:[%s3 + $0x130] sm:$0xf]
      %v1759 = vld [vmem:[%s3 + $0x134] sm:$0xf]
      %v1760 = vld [vmem:[%s3 + $0x138] sm:$0xf]
      %v1761 = vld [vmem:[%s3 + $0x13c] sm:$0xf]
      %v1763 = vunpack.c.l.b16 %v1745
      %v1764 = vpack.c.b16 %v1763, %v1659
      %v1766 = vshrl.u32 %v1661, 16
      %v1768 = vshll.u32 %v1661, 16
      %v1770 = vrot.slane %v1768, 1
      %v1771 = vor.u32 %v1766, %v1770
      %v1773 = vshll.u32 %v1662, 16
      %v1775 = vrot.slane %v1773, 1
      %v1776 = vsel %vm299, %v1771, %v1775
      %v1777 = vshrl.u32 %v1662, 16
      %v1779 = vor.u32 %v1777, %v1775
      %v1781 = vshll.u32 %v1764, 16
      %v1783 = vrot.slane %v1781, 1
      %v1784 = vsel %vm299, %v1779, %v1783
      %v1785 = vshrl.u32 %v1764, 16
      %v1787 = vor.u32 %v1785, %v1783
      %v1807 = vunpack.c.l.b16 %v1746
      %v1808 = vunpack.c.l.b16 %v1747
      %v1809 = vunpack.c.l.b16 %v1748
      %v1810 = vunpack.c.l.b16 %v1749
      %v1811 = vunpack.c.l.b16 %v1750
      %v1812 = vunpack.c.l.b16 %v1751
      %v1813 = vunpack.c.l.b16 %v1752
      %v1814 = vunpack.c.l.b16 %v1753
      %v1815 = vunpack.c.l.b16 %v1754
      %v1816 = vunpack.c.l.b16 %v1755
      %v1817 = vunpack.c.l.b16 %v1756
      %v1818 = vunpack.c.l.b16 %v1757
      %v1819 = vunpack.c.l.b16 %v1758
      %v1820 = vunpack.c.l.b16 %v1759
      %v1821 = vunpack.c.l.b16 %v1760
      %v1822 = vunpack.c.l.b16 %v1761
      %v1823 = vpack.c.b16 %v1808, %v1807
      %v1824 = vpack.c.b16 %v1810, %v1809
      %v1825 = vpack.c.b16 %v1812, %v1811
      %v1826 = vpack.c.b16 %v1814, %v1813
      %v1827 = vpack.c.b16 %v1816, %v1815
      %v1828 = vpack.c.b16 %v1818, %v1817
      %v1829 = vpack.c.b16 %v1820, %v1819
      %v1830 = vpack.c.b16 %v1822, %v1821
      %1839 = vmatpush.bf16.msra.mxu0 %v1830
      %1840 = vmatpush.bf16.msra.mxu0 %v1829
      %1841 = vmatpush.bf16.msra.mxu0 %v1828
      %1842 = vmatpush.bf16.msra.mxu0 %v1827
      %1843 = vmatpush.bf16.msra.mxu0 %v1826
      %1844 = vmatpush.bf16.msra.mxu0 %v1825
      %1845 = vmatpush.bf16.msra.mxu0 %v1824
      %1846 = vmatpush.bf16.msra.mxu0 %v1823
      %1847 = vmatmul.bf16.gmra.mxu0 %v1776
      %v1848 = vpop.f32.mrf.mxu0
      %v1849 = vadd.f32 0.0, %v1848
      %v1850 = vpop.f32.mrf.mxu0
      %v1851 = vadd.f32 0.0, %v1850
      %1852 = vmatmul.bf16.gmra.mxu0 %v1784
      %v1853 = vpop.f32.mrf.mxu0
      %v1854 = vadd.f32 0.0, %v1853
      %v1855 = vpop.f32.mrf.mxu0
      %v1856 = vadd.f32 0.0, %v1855
      %1857 = vmatmul.bf16.gmra.mxu0 %v1787
      %v1858 = vpop.f32.mrf.mxu0
      %v1859 = vadd.f32 0.0, %v1858
      %v1860 = vpop.f32.mrf.mxu0
      %v1861 = vadd.f32 0.0, %v1860
      %1862 = vdwg.mxu0
      %v1863 = vadd.f32 %v1739, %v1849
      %v1864 = vadd.f32 %v1740, %v1851
      %v1865 = vadd.f32 %v1741, %v1854
      %v1866 = vadd.f32 %v1742, %v1856
      %v1867 = vadd.f32 %v1743, %v1859
      %v1868 = vadd.f32 %v1744, %v1861
      %v1869 = vld [vmem:[%s239 + $0x4] sm:$0xe]
      %v1870 = vld [vmem:[%s3 + $0x140] sm:$0xf]
      %v1871 = vld [vmem:[%s3 + $0x144] sm:$0xf]
      %v1872 = vld [vmem:[%s3 + $0x148] sm:$0xf]
      %v1873 = vld [vmem:[%s3 + $0x14c] sm:$0xf]
      %v1874 = vld [vmem:[%s3 + $0x150] sm:$0xf]
      %v1875 = vld [vmem:[%s3 + $0x154] sm:$0xf]
      %v1876 = vld [vmem:[%s3 + $0x158] sm:$0xf]
      %v1877 = vld [vmem:[%s3 + $0x15c] sm:$0xf]
      %v1878 = vld [vmem:[%s3 + $0x160] sm:$0xf]
      %v1879 = vld [vmem:[%s3 + $0x164] sm:$0xf]
      %v1880 = vld [vmem:[%s3 + $0x168] sm:$0xf]
      %v1881 = vld [vmem:[%s3 + $0x16c] sm:$0xf]
      %v1882 = vld [vmem:[%s3 + $0x170] sm:$0xf]
      %v1883 = vld [vmem:[%s3 + $0x174] sm:$0xf]
      %v1884 = vld [vmem:[%s3 + $0x178] sm:$0xf]
      %v1885 = vld [vmem:[%s3 + $0x17c] sm:$0xf]
      %v1887 = vunpack.c.l.b16 %v1869
      %v1888 = vpack.c.b16 %v1656, %v1887
      %v1889 = vrot.slane %v1888, 1
      %v1890 = vrot.slane %v1662, 1
      %v1891 = vsel %vm496, %v1889, %v1890
      %v1892 = vrot.slane %v1764, 1
      %v1893 = vsel %vm496, %v1890, %v1892
      %v1913 = vunpack.c.l.b16 %v1870
      %v1914 = vunpack.c.l.b16 %v1871
      %v1915 = vunpack.c.l.b16 %v1872
      %v1916 = vunpack.c.l.b16 %v1873
      %v1917 = vunpack.c.l.b16 %v1874
      %v1918 = vunpack.c.l.b16 %v1875
      %v1919 = vunpack.c.l.b16 %v1876
      %v1920 = vunpack.c.l.b16 %v1877
      %v1921 = vunpack.c.l.b16 %v1878
      %v1922 = vunpack.c.l.b16 %v1879
      %v1923 = vunpack.c.l.b16 %v1880
      %v1924 = vunpack.c.l.b16 %v1881
      %v1925 = vunpack.c.l.b16 %v1882
      %v1926 = vunpack.c.l.b16 %v1883
      %v1927 = vunpack.c.l.b16 %v1884
      %v1928 = vunpack.c.l.b16 %v1885
      %v1929 = vpack.c.b16 %v1914, %v1913
      %v1930 = vpack.c.b16 %v1916, %v1915
      %v1931 = vpack.c.b16 %v1918, %v1917
      %v1932 = vpack.c.b16 %v1920, %v1919
      %v1933 = vpack.c.b16 %v1922, %v1921
      %v1934 = vpack.c.b16 %v1924, %v1923
      %v1935 = vpack.c.b16 %v1926, %v1925
      %v1936 = vpack.c.b16 %v1928, %v1927
      %1945 = vmatpush.bf16.msra.mxu0 %v1936
      %1946 = vmatpush.bf16.msra.mxu0 %v1935
      %1947 = vmatpush.bf16.msra.mxu0 %v1934
      %1948 = vmatpush.bf16.msra.mxu0 %v1933
      %1949 = vmatpush.bf16.msra.mxu0 %v1932
      %1950 = vmatpush.bf16.msra.mxu0 %v1931
      %1951 = vmatpush.bf16.msra.mxu0 %v1930
      %1952 = vmatpush.bf16.msra.mxu0 %v1929
      %1953 = vmatmul.bf16.gmra.mxu0 %v1891
      %v1954 = vpop.f32.mrf.mxu0
      %v1955 = vadd.f32 0.0, %v1954
      %v1956 = vpop.f32.mrf.mxu0
      %v1957 = vadd.f32 0.0, %v1956
      %1958 = vmatmul.bf16.gmra.mxu0 %v1893
      %v1959 = vpop.f32.mrf.mxu0
      %v1960 = vadd.f32 0.0, %v1959
      %v1961 = vpop.f32.mrf.mxu0
      %v1962 = vadd.f32 0.0, %v1961
      %1963 = vmatmul.bf16.gmra.mxu0 %v1892
      %v1964 = vpop.f32.mrf.mxu0
      %v1965 = vadd.f32 0.0, %v1964
      %v1966 = vpop.f32.mrf.mxu0
      %v1967 = vadd.f32 0.0, %v1966
      %1968 = vdwg.mxu0
      %v1969 = vadd.f32 %v1863, %v1955
      %v1970 = vadd.f32 %v1864, %v1957
      %v1971 = vadd.f32 %v1865, %v1960
      %v1972 = vadd.f32 %v1866, %v1962
      %v1973 = vadd.f32 %v1867, %v1965
      %v1974 = vadd.f32 %v1868, %v1967
      %v1975 = vld [vmem:[%s239 + $0x8] sm:$0xf]
      %v1976 = vld [vmem:[%s239 + $0xc] sm:$0xf]
      %v1977 = vld [vmem:[%s239 + $0x10] sm:$0xf]
      %v1978 = vld [vmem:[%s239 + $0x14] sm:$0xf]
      %v1979 = vld [vmem:[%s239 + $0x18] sm:$0xf]
      %v1980 = vld [vmem:[%s239 + $0x1c] sm:$0x7]
      %v1981 = vld [vmem:[%s3 + $0x180] sm:$0xf]
      %v1982 = vld [vmem:[%s3 + $0x184] sm:$0xf]
      %v1983 = vld [vmem:[%s3 + $0x188] sm:$0xf]
      %v1984 = vld [vmem:[%s3 + $0x18c] sm:$0xf]
      %v1985 = vld [vmem:[%s3 + $0x190] sm:$0xf]
      %v1986 = vld [vmem:[%s3 + $0x194] sm:$0xf]
      %v1987 = vld [vmem:[%s3 + $0x198] sm:$0xf]
      %v1988 = vld [vmem:[%s3 + $0x19c] sm:$0xf]
      %v1989 = vld [vmem:[%s3 + $0x1a0] sm:$0xf]
      %v1990 = vld [vmem:[%s3 + $0x1a4] sm:$0xf]
      %v1991 = vld [vmem:[%s3 + $0x1a8] sm:$0xf]
      %v1992 = vld [vmem:[%s3 + $0x1ac] sm:$0xf]
      %v1993 = vld [vmem:[%s3 + $0x1b0] sm:$0xf]
      %v1994 = vld [vmem:[%s3 + $0x1b4] sm:$0xf]
      %v1995 = vld [vmem:[%s3 + $0x1b8] sm:$0xf]
      %v1996 = vld [vmem:[%s3 + $0x1bc] sm:$0xf]
      %v2003 = vunpack.c.l.b16 %v1975
      %v2004 = vunpack.c.l.b16 %v1976
      %v2005 = vunpack.c.l.b16 %v1977
      %v2006 = vunpack.c.l.b16 %v1978
      %v2007 = vunpack.c.l.b16 %v1979
      %v2008 = vunpack.c.l.b16 %v1980
      %v2009 = vpack.c.b16 %v2004, %v2003
      %v2010 = vpack.c.b16 %v2006, %v2005
      %v2011 = vpack.c.b16 %v2008, %v2007
      %v2031 = vunpack.c.l.b16 %v1981
      %v2032 = vunpack.c.l.b16 %v1982
      %v2033 = vunpack.c.l.b16 %v1983
      %v2034 = vunpack.c.l.b16 %v1984
      %v2035 = vunpack.c.l.b16 %v1985
      %v2036 = vunpack.c.l.b16 %v1986
      %v2037 = vunpack.c.l.b16 %v1987
      %v2038 = vunpack.c.l.b16 %v1988
      %v2039 = vunpack.c.l.b16 %v1989
      %v2040 = vunpack.c.l.b16 %v1990
      %v2041 = vunpack.c.l.b16 %v1991
      %v2042 = vunpack.c.l.b16 %v1992
      %v2043 = vunpack.c.l.b16 %v1993
      %v2044 = vunpack.c.l.b16 %v1994
      %v2045 = vunpack.c.l.b16 %v1995
      %v2046 = vunpack.c.l.b16 %v1996
      %v2047 = vpack.c.b16 %v2032, %v2031
      %v2048 = vpack.c.b16 %v2034, %v2033
      %v2049 = vpack.c.b16 %v2036, %v2035
      %v2050 = vpack.c.b16 %v2038, %v2037
      %v2051 = vpack.c.b16 %v2040, %v2039
      %v2052 = vpack.c.b16 %v2042, %v2041
      %v2053 = vpack.c.b16 %v2044, %v2043
      %v2054 = vpack.c.b16 %v2046, %v2045
      %2063 = vmatpush.bf16.msra.mxu0 %v2054
      %2064 = vmatpush.bf16.msra.mxu0 %v2053
      %2065 = vmatpush.bf16.msra.mxu0 %v2052
      %2066 = vmatpush.bf16.msra.mxu0 %v2051
      %2067 = vmatpush.bf16.msra.mxu0 %v2050
      %2068 = vmatpush.bf16.msra.mxu0 %v2049
      %2069 = vmatpush.bf16.msra.mxu0 %v2048
      %2070 = vmatpush.bf16.msra.mxu0 %v2047
      %2071 = vmatmul.bf16.gmra.mxu0 %v2009
      %v2072 = vpop.f32.mrf.mxu0
      %v2073 = vadd.f32 0.0, %v2072
      %v2074 = vpop.f32.mrf.mxu0
      %v2075 = vadd.f32 0.0, %v2074
      %2076 = vmatmul.bf16.gmra.mxu0 %v2010
      %v2077 = vpop.f32.mrf.mxu0
      %v2078 = vadd.f32 0.0, %v2077
      %v2079 = vpop.f32.mrf.mxu0
      %v2080 = vadd.f32 0.0, %v2079
      %2081 = vmatmul.bf16.gmra.mxu0 %v2011
      %v2082 = vpop.f32.mrf.mxu0
      %v2083 = vadd.f32 0.0, %v2082
      %v2084 = vpop.f32.mrf.mxu0
      %v2085 = vadd.f32 0.0, %v2084
      %2086 = vdwg.mxu0
      %v2087 = vadd.f32 %v1969, %v2073
      %v2088 = vadd.f32 %v1970, %v2075
      %v2089 = vadd.f32 %v1971, %v2078
      %v2090 = vadd.f32 %v1972, %v2080
      %v2091 = vadd.f32 %v1973, %v2083
      %v2092 = vadd.f32 %v1974, %v2085
      %v2093 = vld [vmem:[%s239 + $0x1c] sm:$0xf]
      %v2094 = vld [vmem:[%s3 + $0x1c0] sm:$0xf]
      %v2095 = vld [vmem:[%s3 + $0x1c4] sm:$0xf]
      %v2096 = vld [vmem:[%s3 + $0x1c8] sm:$0xf]
      %v2097 = vld [vmem:[%s3 + $0x1cc] sm:$0xf]
      %v2098 = vld [vmem:[%s3 + $0x1d0] sm:$0xf]
      %v2099 = vld [vmem:[%s3 + $0x1d4] sm:$0xf]
      %v2100 = vld [vmem:[%s3 + $0x1d8] sm:$0xf]
      %v2101 = vld [vmem:[%s3 + $0x1dc] sm:$0xf]
      %v2102 = vld [vmem:[%s3 + $0x1e0] sm:$0xf]
      %v2103 = vld [vmem:[%s3 + $0x1e4] sm:$0xf]
      %v2104 = vld [vmem:[%s3 + $0x1e8] sm:$0xf]
      %v2105 = vld [vmem:[%s3 + $0x1ec] sm:$0xf]
      %v2106 = vld [vmem:[%s3 + $0x1f0] sm:$0xf]
      %v2107 = vld [vmem:[%s3 + $0x1f4] sm:$0xf]
      %v2108 = vld [vmem:[%s3 + $0x1f8] sm:$0xf]
      %v2109 = vld [vmem:[%s3 + $0x1fc] sm:$0xf]
      %v2111 = vunpack.c.l.b16 %v2093
      %v2112 = vpack.c.b16 %v2111, %v2007
      %v2114 = vshrl.u32 %v2009, 16
      %v2116 = vshll.u32 %v2009, 16
      %v2118 = vrot.slane %v2116, 1
      %v2119 = vor.u32 %v2114, %v2118
      %v2121 = vshll.u32 %v2010, 16
      %v2123 = vrot.slane %v2121, 1
      %v2124 = vsel %vm299, %v2119, %v2123
      %v2125 = vshrl.u32 %v2010, 16
      %v2127 = vor.u32 %v2125, %v2123
      %v2129 = vshll.u32 %v2112, 16
      %v2131 = vrot.slane %v2129, 1
      %v2132 = vsel %vm299, %v2127, %v2131
      %v2133 = vshrl.u32 %v2112, 16
      %v2135 = vor.u32 %v2133, %v2131
      %v2155 = vunpack.c.l.b16 %v2094
      %v2156 = vunpack.c.l.b16 %v2095
      %v2157 = vunpack.c.l.b16 %v2096
      %v2158 = vunpack.c.l.b16 %v2097
      %v2159 = vunpack.c.l.b16 %v2098
      %v2160 = vunpack.c.l.b16 %v2099
      %v2161 = vunpack.c.l.b16 %v2100
      %v2162 = vunpack.c.l.b16 %v2101
      %v2163 = vunpack.c.l.b16 %v2102
      %v2164 = vunpack.c.l.b16 %v2103
      %v2165 = vunpack.c.l.b16 %v2104
      %v2166 = vunpack.c.l.b16 %v2105
      %v2167 = vunpack.c.l.b16 %v2106
      %v2168 = vunpack.c.l.b16 %v2107
      %v2169 = vunpack.c.l.b16 %v2108
      %v2170 = vunpack.c.l.b16 %v2109
      %v2171 = vpack.c.b16 %v2156, %v2155
      %v2172 = vpack.c.b16 %v2158, %v2157
      %v2173 = vpack.c.b16 %v2160, %v2159
      %v2174 = vpack.c.b16 %v2162, %v2161
      %v2175 = vpack.c.b16 %v2164, %v2163
      %v2176 = vpack.c.b16 %v2166, %v2165
      %v2177 = vpack.c.b16 %v2168, %v2167
      %v2178 = vpack.c.b16 %v2170, %v2169
      %2187 = vmatpush.bf16.msra.mxu0 %v2178
      %2188 = vmatpush.bf16.msra.mxu0 %v2177
      %2189 = vmatpush.bf16.msra.mxu0 %v2176
      %2190 = vmatpush.bf16.msra.mxu0 %v2175
      %2191 = vmatpush.bf16.msra.mxu0 %v2174
      %2192 = vmatpush.bf16.msra.mxu0 %v2173
      %2193 = vmatpush.bf16.msra.mxu0 %v2172
      %2194 = vmatpush.bf16.msra.mxu0 %v2171
      %2195 = vmatmul.bf16.gmra.mxu0 %v2124
      %v2196 = vpop.f32.mrf.mxu0
      %v2197 = vadd.f32 0.0, %v2196
      %v2198 = vpop.f32.mrf.mxu0
      %v2199 = vadd.f32 0.0, %v2198
      %2200 = vmatmul.bf16.gmra.mxu0 %v2132
      %v2201 = vpop.f32.mrf.mxu0
      %v2202 = vadd.f32 0.0, %v2201
      %v2203 = vpop.f32.mrf.mxu0
      %v2204 = vadd.f32 0.0, %v2203
      %2205 = vmatmul.bf16.gmra.mxu0 %v2135
      %v2206 = vpop.f32.mrf.mxu0
      %v2207 = vadd.f32 0.0, %v2206
      %v2208 = vpop.f32.mrf.mxu0
      %v2209 = vadd.f32 0.0, %v2208
      %2210 = vdwg.mxu0
      %v2211 = vadd.f32 %v2087, %v2197
      %v2212 = vadd.f32 %v2088, %v2199
      %v2213 = vadd.f32 %v2089, %v2202
      %v2214 = vadd.f32 %v2090, %v2204
      %v2215 = vadd.f32 %v2091, %v2207
      %v2216 = vadd.f32 %v2092, %v2209
      %v2217 = vld [vmem:[%s239 + $0x8] sm:$0xe]
      %v2218 = vld [vmem:[%s3 + $0x200] sm:$0xf]
      %v2219 = vld [vmem:[%s3 + $0x204] sm:$0xf]
      %v2220 = vld [vmem:[%s3 + $0x208] sm:$0xf]
      %v2221 = vld [vmem:[%s3 + $0x20c] sm:$0xf]
      %v2222 = vld [vmem:[%s3 + $0x210] sm:$0xf]
      %v2223 = vld [vmem:[%s3 + $0x214] sm:$0xf]
      %v2224 = vld [vmem:[%s3 + $0x218] sm:$0xf]
      %v2225 = vld [vmem:[%s3 + $0x21c] sm:$0xf]
      %v2226 = vld [vmem:[%s3 + $0x220] sm:$0xf]
      %v2227 = vld [vmem:[%s3 + $0x224] sm:$0xf]
      %v2228 = vld [vmem:[%s3 + $0x228] sm:$0xf]
      %v2229 = vld [vmem:[%s3 + $0x22c] sm:$0xf]
      %v2230 = vld [vmem:[%s3 + $0x230] sm:$0xf]
      %v2231 = vld [vmem:[%s3 + $0x234] sm:$0xf]
      %v2232 = vld [vmem:[%s3 + $0x238] sm:$0xf]
      %v2233 = vld [vmem:[%s3 + $0x23c] sm:$0xf]
      %v2235 = vunpack.c.l.b16 %v2217
      %v2236 = vpack.c.b16 %v2004, %v2235
      %v2237 = vrot.slane %v2236, 1
      %v2238 = vrot.slane %v2010, 1
      %v2239 = vsel %vm496, %v2237, %v2238
      %v2240 = vrot.slane %v2112, 1
      %v2241 = vsel %vm496, %v2238, %v2240
      %v2261 = vunpack.c.l.b16 %v2218
      %v2262 = vunpack.c.l.b16 %v2219
      %v2263 = vunpack.c.l.b16 %v2220
      %v2264 = vunpack.c.l.b16 %v2221
      %v2265 = vunpack.c.l.b16 %v2222
      %v2266 = vunpack.c.l.b16 %v2223
      %v2267 = vunpack.c.l.b16 %v2224
      %v2268 = vunpack.c.l.b16 %v2225
      %v2269 = vunpack.c.l.b16 %v2226
      %v2270 = vunpack.c.l.b16 %v2227
      %v2271 = vunpack.c.l.b16 %v2228
      %v2272 = vunpack.c.l.b16 %v2229
      %v2273 = vunpack.c.l.b16 %v2230
      %v2274 = vunpack.c.l.b16 %v2231
      %v2275 = vunpack.c.l.b16 %v2232
      %v2276 = vunpack.c.l.b16 %v2233
      %v2277 = vpack.c.b16 %v2262, %v2261
      %v2278 = vpack.c.b16 %v2264, %v2263
      %v2279 = vpack.c.b16 %v2266, %v2265
      %v2280 = vpack.c.b16 %v2268, %v2267
      %v2281 = vpack.c.b16 %v2270, %v2269
      %v2282 = vpack.c.b16 %v2272, %v2271
      %v2283 = vpack.c.b16 %v2274, %v2273
      %v2284 = vpack.c.b16 %v2276, %v2275
      %2293 = vmatpush.bf16.msra.mxu0 %v2284
      %2294 = vmatpush.bf16.msra.mxu0 %v2283
      %2295 = vmatpush.bf16.msra.mxu0 %v2282
      %2296 = vmatpush.bf16.msra.mxu0 %v2281
      %2297 = vmatpush.bf16.msra.mxu0 %v2280
      %2298 = vmatpush.bf16.msra.mxu0 %v2279
      %2299 = vmatpush.bf16.msra.mxu0 %v2278
      %2300 = vmatpush.bf16.msra.mxu0 %v2277
      %2301 = vmatmul.bf16.gmra.mxu0 %v2239
      %v2302 = vpop.f32.mrf.mxu0
      %v2303 = vadd.f32 0.0, %v2302
      %v2304 = vpop.f32.mrf.mxu0
      %v2305 = vadd.f32 0.0, %v2304
      %2306 = vmatmul.bf16.gmra.mxu0 %v2241
      %v2307 = vpop.f32.mrf.mxu0
      %v2308 = vadd.f32 0.0, %v2307
      %v2309 = vpop.f32.mrf.mxu0
      %v2310 = vadd.f32 0.0, %v2309
      %2311 = vmatmul.bf16.gmra.mxu0 %v2240
      %v2312 = vpop.f32.mrf.mxu0
      %v2313 = vadd.f32 0.0, %v2312
      %v2314 = vpop.f32.mrf.mxu0
      %v2315 = vadd.f32 0.0, %v2314
      %2316 = vdwg.mxu0
      %v2317 = vadd.f32 %v2211, %v2303
      %v2318 = vadd.f32 %v2212, %v2305
      %v2319 = vadd.f32 %v2213, %v2308
      %v2320 = vadd.f32 %v2214, %v2310
      %v2321 = vadd.f32 %v2215, %v2313
      %v2322 = vadd.f32 %v2216, %v2315
      %v2323 = vld [vmem:[%s4] sm:$0x1]
      %v2325 = vperm.slane %v2323, 0
      %v2327 = vadd.f32 %v2317, %v2325
      %v2328 = vadd.f32 %v2318, %v2325
      %v2329 = vadd.f32 %v2319, %v2325
      %v2330 = vadd.f32 %v2320, %v2325
      %v2331 = vadd.f32 %v2321, %v2325
      %v2332 = vadd.f32 %v2322, %v2325
      %v2333 = vmax.f32 %v2327, 0.0
      %v2334 = vmax.f32 %v2328, 0.0
      %v2335 = vmax.f32 %v2329, 0.0
      %v2336 = vmax.f32 %v2330, 0.0
      %v2337 = vmax.f32 %v2331, 0.0
      %v2338 = vmax.f32 %v2332, 0.0
      %v2339 = vpack.c.bf16 %v2333, %v2333
      %v2340 = vpack.c.bf16 %v2334, %v2334
      %v2341 = vpack.c.bf16 %v2335, %v2335
      %v2342 = vpack.c.bf16 %v2336, %v2336
      %v2343 = vpack.c.bf16 %v2337, %v2337
      %v2344 = vpack.c.bf16 %v2338, %v2338
      %2345 = vst [vmem:[%s244] sm:$0xf] %v2339
      %2346 = vst [vmem:[%s244 + $0x4] sm:$0xf] %v2340
      %2347 = vst [vmem:[%s244 + $0x8] sm:$0xf] %v2341
      %2348 = vst [vmem:[%s244 + $0xc] sm:$0xf] %v2342
      %2349 = vst [vmem:[%s244 + $0x10] sm:$0xf] %v2343
      %2350 = vst [vmem:[%s244 + $0x14] sm:$0x7] %v2344
      %p2351 = scmp.lt.s32.totalorder %s16, 1
      %s2352 = scalar_select %p2351, %s16, 1
      %s2353 = smul.addr %s2352, 6
      %s2354 = smul.addr %s2353, 4
      %s2355 = scalar_lea.vmem %s5, %s2354
      // Predicated region
      $region41: #{expanding_path_forward.7} parent=39 // pred_check
        %p2356 = pneg %p149
      $region42: #{expanding_path_forward.7} parent=39 // pred_check_branch
        %2358 = sbr.rel (%p2356) target = $region44
      $region43: #{expanding_path_forward.7} parent=39 // pred_region
        _
      $region44: #{expanding_path_forward.7} parent=39 // pred_fallthru
        _
    $region40: #{expanding_path_forward.7} parent=5 // pred_fallthru
      _
    %p2359 = scmp.le.s32.totalorder 2, %s11
    // Predicated region
    $region45: #{expanding_path_forward.7} parent=5 // pred_check
      %p2360 = pneg %p2359
    $region46: #{expanding_path_forward.7} parent=5 // pred_check_branch
      %2362 = sbr.rel (%p2360) target = $region48
    $region47: #{expanding_path_forward.7} parent=5 // pred_region
      %s2363 = ssub.s32 %s11, 2
      // Predicated region
      $region49: #{expanding_path_forward.7} parent=47 // pred_check
        %p2364 = pneg %p155
      $region50: #{expanding_path_forward.7} parent=47 // pred_check_branch
        %2366 = sbr.rel (%p2364) target = $region52
      $region51: #{expanding_path_forward.7} parent=47 // pred_region
        %p2367 = scmp.lt.s32.totalorder %s17, 1
        %s2368 = scalar_select %p2367, %s17, 1
        %s2369 = smul.addr %s2368, 6
        %s2370 = smul.addr %s2369, 4
        %s2371 = scalar_lea.vmem %s5, %s2370
      $region52: #{expanding_path_forward.7} parent=47 // pred_fallthru
        _
    $region48: #{expanding_path_forward.7} parent=5 // pred_fallthru
      _
  $region6: #{expanding_path_forward.7} parent=0 // loop_footer
    %s15 = sadd.s32 1, %s11
  $region7: #{expanding_path_forward.7} parent=0 // loop_footer_branch
    %10 = sbr.rel target = $region3
  $region8: #{expanding_path_forward.7} parent=0 // loop_exit
    _

// kernel: expanding_path_forward.11
$region0: #{expanding_path_forward.11}
  #allocation0 [shape = 'u32[]', space=smem, size = 0x4, offset = 0x4, fixed_abs, tag = 'smem constant byte address 0x4 - core index']
  #allocation1 [shape = 'u32[72,128]{1,0:T(1,128)}', space=vmem, size = 0x9000, scoped, tag = 'internal scratch']
  %s0 = inlined_call_operand.vmem [shape: bf16[2,36,64], index: 0, kind: input, shape index: {}]
  %s1 = inlined_call_operand.vmem [shape: bf16[576,64], index: 1, kind: input, shape index: {}]
  %s2 = inlined_call_operand.vmem [shape: f32[1,64], index: 2, kind: input, shape index: {}]
  %s3 = inlined_call_operand.vmem [shape: bf16[2,24,64], index: 3, kind: output, shape index: {}]
  %s4 = sld [smem:[#allocation0]]
  $region45: #{expanding_path_forward.11} parent=0
    _
  %s6 = ssub.s32 1, %s4
  %s7 = scalar_select 0, %s6, %s4
  loop: start=0, step=1, limit=4
  $region2: #{expanding_path_forward.11} parent=0 // loop_pre_header
    _
  $region3: #{expanding_path_forward.11} parent=0 // loop_header
    %s9 = sphi 0, %s13
    %p10 = scmp.ge.s32.totalorder %s9, 4
    %s19 = sphi 0, %s21
    %s22 = sphi 0, %s19
    %s23 = sphi 0, %s22
    %s39 = sphi 0, %s23
    %s43 = sphi 0, %s43
    %s45 = sphi 0, %s43
    %s46 = sphi 0, %s45
    %s60 = sphi 0, %s46
    %s64 = sphi 0, %s64
    %s66 = sphi 0, %s64
    %s67 = sphi 0, %s66
    %s81 = sphi 0, %s67
    %s87 = sphi 0, %s89
    %s90 = sphi 0, %s87
    %s91 = sphi 0, %s90
    %s107 = sphi 0, %s91
  $region4: #{expanding_path_forward.11} parent=0 // loop_header_branch
    %12 = sbr.rel (%p10) target = $region8
  $region5: #{expanding_path_forward.11} parent=0 // loop_body
    %s14 = ssub.s32 %s9, 1
    %s15 = ssub.s32 %s9, 2
    %s16 = sadd.s32 %s9, 1
    %s17 = ssub.s32 %s9, %s16
    %p18 = scmp.eq.s32.totalorder %s17, 0
    %s20 = sadd.s32 %s19, 1
    %s21 = scalar_select %p18, %s19, %s20
    %p24 = pneg %p18
    %p25 = scmp.eq.s32.totalorder %s9, 1
    %p26 = por %p24, %p25
    %p27 = scmp.ne.s32.totalorder %s19, %s22
    %p28 = scmp.eq.s32.totalorder %s9, 0
    %p29 = por %p27, %p28
    %p30 = scmp.ne.s32.totalorder %s19, %s22
    %p31 = scmp.eq.s32.totalorder %s14, 1
    %p32 = por %p30, %p31
    %p33 = scmp.ne.s32.totalorder %s22, %s23
    %p34 = scmp.eq.s32.totalorder %s14, 0
    %p35 = por %p33, %p34
    %p36 = scmp.ne.s32.totalorder %s22, %s23
    %p37 = scmp.eq.s32.totalorder %s15, 1
    %p38 = por %p36, %p37
    %p40 = scmp.ne.s32.totalorder %s23, %s39
    %p41 = scmp.eq.s32.totalorder %s15, 0
    %p42 = por %p40, %p41
    %s44 = sadd.s32 %s43, 1
    %p47 = scmp.eq.s32.totalorder %s9, 1
    %p48 = scmp.ne.s32.totalorder %s43, %s45
    %p49 = scmp.eq.s32.totalorder %s9, 0
    %p50 = por %p48, %p49
    %p51 = scmp.ne.s32.totalorder %s43, %s45
    %p52 = scmp.eq.s32.totalorder %s14, 1
    %p53 = por %p51, %p52
    %p54 = scmp.ne.s32.totalorder %s45, %s46
    %p55 = scmp.eq.s32.totalorder %s14, 0
    %p56 = por %p54, %p55
    %p57 = scmp.ne.s32.totalorder %s45, %s46
    %p58 = scmp.eq.s32.totalorder %s15, 1
    %p59 = por %p57, %p58
    %p61 = scmp.ne.s32.totalorder %s46, %s60
    %p62 = scmp.eq.s32.totalorder %s15, 0
    %p63 = por %p61, %p62
    %s65 = sadd.s32 %s64, 1
    %p68 = scmp.eq.s32.totalorder %s9, 1
    %p69 = scmp.ne.s32.totalorder %s64, %s66
    %p70 = scmp.eq.s32.totalorder %s9, 0
    %p71 = por %p69, %p70
    %p72 = scmp.ne.s32.totalorder %s64, %s66
    %p73 = scmp.eq.s32.totalorder %s14, 1
    %p74 = por %p72, %p73
    %p75 = scmp.ne.s32.totalorder %s66, %s67
    %p76 = scmp.eq.s32.totalorder %s14, 0
    %p77 = por %p75, %p76
    %p78 = scmp.ne.s32.totalorder %s66, %s67
    %p79 = scmp.eq.s32.totalorder %s15, 1
    %p80 = por %p78, %p79
    %p82 = scmp.ne.s32.totalorder %s67, %s81
    %p83 = scmp.eq.s32.totalorder %s15, 0
    %p84 = por %p82, %p83
    %s85 = ssub.s32 %s9, %s16
    %p86 = scmp.eq.s32.totalorder %s85, 0
    %s88 = sadd.s32 %s87, 1
    %s89 = scalar_select %p86, %s87, %s88
    %p92 = pneg %p86
    %p93 = scmp.eq.s32.totalorder %s9, 1
    %p94 = por %p92, %p93
    %p95 = scmp.ne.s32.totalorder %s87, %s90
    %p96 = scmp.eq.s32.totalorder %s9, 0
    %p97 = por %p95, %p96
    %p98 = scmp.ne.s32.totalorder %s87, %s90
    %p99 = scmp.eq.s32.totalorder %s14, 1
    %p100 = por %p98, %p99
    %p101 = scmp.ne.s32.totalorder %s90, %s91
    %p102 = scmp.eq.s32.totalorder %s14, 0
    %p103 = por %p101, %p102
    %p104 = scmp.ne.s32.totalorder %s90, %s91
    %p105 = scmp.eq.s32.totalorder %s15, 1
    %p106 = por %p104, %p105
    %p108 = scmp.ne.s32.totalorder %s91, %s107
    %p109 = scmp.eq.s32.totalorder %s15, 0
    %p110 = por %p108, %p109
    %p111 = scmp.le.s32.totalorder 1, %s9
    %p112 = scmp.lt.s32.totalorder %s9, 3
    %p113 = pnand %p111, %p112
    %p114 = pneg %p113
    // Predicated region
    $region9: #{expanding_path_forward.11} parent=5 // pred_check
      _
    $region10: #{expanding_path_forward.11} parent=5 // pred_check_branch
      %116 = sbr.rel (%p113) target = $region12
    $region11: #{expanding_path_forward.11} parent=5 // pred_region
      %s117 = ssub.s32 %s9, 1
      // Predicated region
      $region13: #{expanding_path_forward.11} parent=11 // pred_check
        %p118 = pneg %p56
      $region14: #{expanding_path_forward.11} parent=11 // pred_check_branch
        %120 = sbr.rel (%p118) target = $region16
      $region15: #{expanding_path_forward.11} parent=11 // pred_region
        _
      $region16: #{expanding_path_forward.11} parent=11 // pred_fallthru
        _
      // Predicated region
      $region17: #{expanding_path_forward.11} parent=11 // pred_check
        %p121 = pneg %p77
      $region18: #{expanding_path_forward.11} parent=11 // pred_check_branch
        %123 = sbr.rel (%p121) target = $region20
      $region19: #{expanding_path_forward.11} parent=11 // pred_region
        _
      $region20: #{expanding_path_forward.11} parent=11 // pred_fallthru
        _
    $region12: #{expanding_path_forward.11} parent=5 // pred_fallthru
      _
    %p124 = scmp.lt.s32.totalorder %s9, 2
    // Predicated region
    $region21: #{expanding_path_forward.11} parent=5 // pred_check
      %p125 = pneg %p124
    $region22: #{expanding_path_forward.11} parent=5 // pred_check_branch
      %127 = sbr.rel (%p125) target = $region24
    $region23: #{expanding_path_forward.11} parent=5 // pred_region
      // Predicated region
      $region25: #{expanding_path_forward.11} parent=23 // pred_check
        %p128 = pneg %p29
      $region26: #{expanding_path_forward.11} parent=23 // pred_check_branch
        %130 = sbr.rel (%p128) target = $region28
      $region27: #{expanding_path_forward.11} parent=23 // pred_region
        %p131 = scmp.lt.s32.totalorder %s9, 1
        %s132 = scalar_select %p131, %s9, 1
        %s133 = smul.addr %s132, 5
        %s134 = smul.addr %s133, 4
        %s135 = scalar_lea.vmem %s0, %s134
      $region28: #{expanding_path_forward.11} parent=23 // pred_fallthru
        _
    $region24: #{expanding_path_forward.11} parent=5 // pred_fallthru
      _
    %p136 = scmp.le.s32.totalorder 1, %s9
    %p137 = scmp.lt.s32.totalorder %s9, 3
    %p138 = pnand %p136, %p137
    %p139 = pneg %p138
    // Predicated region
    $region29: #{expanding_path_forward.11} parent=5 // pred_check
      _
    $region30: #{expanding_path_forward.11} parent=5 // pred_check_branch
      %141 = sbr.rel (%p138) target = $region32
    $region31: #{expanding_path_forward.11} parent=5 // pred_region
      %s142 = ssub.s32 %s9, 1
      %p143 = scmp.lt.s32.totalorder %s14, 1
      %s144 = scalar_select %p143, %s14, 1
      %s145 = smul.addr %s144, 5
      %s146 = smul.addr %s145, 4
      %s147 = scalar_lea.vmem %s0, %s146
      %p148 = pneg %p35
      %p149 = pneg %p32
      %p150 = pneg %p56
      %p151 = pneg %p53
      %p152 = pneg %p77
      %p153 = pneg %p74
      %p154 = pneg %p103
      %p155 = pneg %p100
      %p156 = scmp.lt.s32.totalorder %s14, 1
      %s157 = scalar_select %p156, %s14, 1
      %s158 = smul.addr %s157, 3
      %s159 = smul.addr %s158, 4
      %s160 = scalar_lea.vmem %s3, %s159
      %p161 = scmp.lt.s32.totalorder %s14, 1
      %s162 = scalar_select %p161, %s14, 1
      %s163 = smul.addr %s162, 5
      %s164 = smul.addr %s163, 4
      %s165 = scalar_lea.vmem %s0, %s164
      %p166 = scmp.lt.s32.totalorder %s14, 1
      %s167 = scalar_select %p166, %s14, 1
      %s168 = smul.addr %s167, 3
      %s169 = smul.addr %s168, 4
      %s170 = scalar_lea.vmem %s3, %s169
      %v172 = vld [vmem:[%s165] sm:$0xf]
      %v173 = vld [vmem:[%s165 + $0x4] sm:$0xf]
      %v174 = vld [vmem:[%s165 + $0x8] sm:$0x7]
      %v175 = vld [vmem:[%s1] sm:$0xf]
      %v176 = vld [vmem:[%s1 + $0x4] sm:$0xf]
      %v177 = vld [vmem:[%s1 + $0x8] sm:$0xf]
      %v178 = vld [vmem:[%s1 + $0xc] sm:$0xf]
      %v179 = vld [vmem:[%s1 + $0x10] sm:$0xf]
      %v180 = vld [vmem:[%s1 + $0x14] sm:$0xf]
      %v181 = vld [vmem:[%s1 + $0x18] sm:$0xf]
      %v182 = vld [vmem:[%s1 + $0x1c] sm:$0xf]
      %v183 = vld [vmem:[%s165 + $0x8] sm:$0xf]
      %v184 = vld [vmem:[%s1 + $0x20] sm:$0xf]
      %v185 = vld [vmem:[%s1 + $0x24] sm:$0xf]
      %v186 = vld [vmem:[%s1 + $0x28] sm:$0xf]
      %v187 = vld [vmem:[%s1 + $0x2c] sm:$0xf]
      %v188 = vld [vmem:[%s1 + $0x30] sm:$0xf]
      %v189 = vld [vmem:[%s1 + $0x34] sm:$0xf]
      %v190 = vld [vmem:[%s1 + $0x38] sm:$0xf]
      %v191 = vld [vmem:[%s1 + $0x3c] sm:$0xf]
      %v195 = vunpack.c.l.b16 %v172
      %v196 = vunpack.c.l.b16 %v173
      %v197 = vunpack.c.l.b16 %v183
      %v198 = vpack.c.b16 %v196, %v195
      %v199 = vpack.c.b16 %v197, %v197
      %vm200 = vsmask.f32 7424
      %v202 = vshrl.u32 %v198, 16
      %v204 = vshll.u32 %v198, 16
      %v206 = vrot.slane %v204, 1
      %v207 = vor.u32 %v202, %v206
      %v209 = vshll.u32 %v199, 16
      %v211 = vrot.slane %v209, 1
      %v212 = vsel %vm200, %v207, %v211
      %v213 = vshrl.u32 %v199, 16
      %v215 = vor.u32 %v213, %v211
      %v224 = vunpack.c.l.b16 %v184
      %v225 = vunpack.c.l.b16 %v185
      %v226 = vunpack.c.l.b16 %v186
      %v227 = vunpack.c.l.b16 %v187
      %v228 = vunpack.c.l.b16 %v188
      %v229 = vunpack.c.l.b16 %v189
      %v230 = vunpack.c.l.b16 %v190
      %v231 = vunpack.c.l.b16 %v191
      %v232 = vpack.c.b16 %v225, %v224
      %v233 = vpack.c.b16 %v227, %v226
      %v234 = vpack.c.b16 %v229, %v228
      %v235 = vpack.c.b16 %v231, %v230
      %vm240 = vcmask 523264
      %v242 = vsel %vm240, %v212, 0
      %v245 = vsel %vm240, %v215, 0
      %247 = vmatpush.bf16.msra.mxu0 0
      %248 = vmatpush.bf16.msra.mxu0 0
      %249 = vmatpush.bf16.msra.mxu0 0
      %250 = vmatpush.bf16.msra.mxu0 0
      %251 = vmatpush.bf16.msra.mxu0 %v235
      %252 = vmatpush.bf16.msra.mxu0 %v234
      %253 = vmatpush.bf16.msra.mxu0 %v233
      %254 = vmatpush.bf16.msra.mxu0 %v232
      %255 = vmatmul.bf16.gmra.mxu0 %v242
      %v256 = vpop.f32.mrf.mxu0
      %v257 = vadd.f32 0.0, %v256
      %v258 = vpop.f32.mrf.mxu0
      %v259 = vadd.f32 0.0, %v258
      %260 = vmatmul.bf16.gmra.mxu0 %v245
      %v261 = vpop.f32.mrf.mxu0
      %v262 = vadd.f32 0.0, %v261
      %v263 = vpop.f32.mrf.mxu0
      %264 = vdwg.mxu0
      %v266 = vunpack.c.l.b16 %v174
      %v267 = vpack.c.b16 %v266, %v266
      %v276 = vunpack.c.l.b16 %v175
      %v277 = vunpack.c.l.b16 %v176
      %v278 = vunpack.c.l.b16 %v177
      %v279 = vunpack.c.l.b16 %v178
      %v280 = vunpack.c.l.b16 %v179
      %v281 = vunpack.c.l.b16 %v180
      %v282 = vunpack.c.l.b16 %v181
      %v283 = vunpack.c.l.b16 %v182
      %v284 = vpack.c.b16 %v277, %v276
      %v285 = vpack.c.b16 %v279, %v278
      %v286 = vpack.c.b16 %v281, %v280
      %v287 = vpack.c.b16 %v283, %v282
      %v292 = vsel %vm240, %v198, 0
      %v295 = vsel %vm240, %v267, 0
      %297 = vmatpush.bf16.msra.mxu0 0
      %298 = vmatpush.bf16.msra.mxu0 0
      %299 = vmatpush.bf16.msra.mxu0 0
      %300 = vmatpush.bf16.msra.mxu0 0
      %301 = vmatpush.bf16.msra.mxu0 %v287
      %302 = vmatpush.bf16.msra.mxu0 %v286
      %303 = vmatpush.bf16.msra.mxu0 %v285
      %304 = vmatpush.bf16.msra.mxu0 %v284
      %305 = vmatmul.bf16.gmra.mxu0 %v292
      %v306 = vpop.f32.mrf.mxu0
      %v307 = vadd.f32 %v257, %v306
      %v308 = vpop.f32.mrf.mxu0
      %v309 = vadd.f32 %v259, %v308
      %310 = vmatmul.bf16.gmra.mxu0 %v295
      %v311 = vpop.f32.mrf.mxu0
      %v312 = vadd.f32 %v262, %v311
      %v313 = vpop.f32.mrf.mxu0
      %314 = vdwg.mxu0
      %v315 = vld [vmem:[%s165] sm:$0xe]
      %v316 = vld [vmem:[%s1 + $0x40] sm:$0xf]
      %v317 = vld [vmem:[%s1 + $0x44] sm:$0xf]
      %v318 = vld [vmem:[%s1 + $0x48] sm:$0xf]
      %v319 = vld [vmem:[%s1 + $0x4c] sm:$0xf]
      %v320 = vld [vmem:[%s1 + $0x50] sm:$0xf]
      %v321 = vld [vmem:[%s1 + $0x54] sm:$0xf]
      %v322 = vld [vmem:[%s1 + $0x58] sm:$0xf]
      %v323 = vld [vmem:[%s1 + $0x5c] sm:$0xf]
      %v325 = vunpack.c.l.b16 %v315
      %v326 = vpack.c.b16 %v196, %v325
      %vm327 = vcmask 1046528
      %v328 = vrot.slane %v326, 1
      %v329 = vrot.slane %v199, 1
      %v330 = vsel %vm327, %v328, %v329
      %v339 = vunpack.c.l.b16 %v316
      %v340 = vunpack.c.l.b16 %v317
      %v341 = vunpack.c.l.b16 %v318
      %v342 = vunpack.c.l.b16 %v319
      %v343 = vunpack.c.l.b16 %v320
      %v344 = vunpack.c.l.b16 %v321
      %v345 = vunpack.c.l.b16 %v322
      %v346 = vunpack.c.l.b16 %v323
      %v347 = vpack.c.b16 %v340, %v339
      %v348 = vpack.c.b16 %v342, %v341
      %v349 = vpack.c.b16 %v344, %v343
      %v350 = vpack.c.b16 %v346, %v345
      %v356 = vsel %vm240, %v330, 0
      %v359 = vsel %vm240, %v329, 0
      %361 = vmatpush.bf16.msra.mxu0 0
      %362 = vmatpush.bf16.msra.mxu0 0
      %363 = vmatpush.bf16.msra.mxu0 0
      %364 = vmatpush.bf16.msra.mxu0 0
      %365 = vmatpush.bf16.msra.mxu0 %v350
      %366 = vmatpush.bf16.msra.mxu0 %v349
      %367 = vmatpush.bf16.msra.mxu0 %v348
      %368 = vmatpush.bf16.msra.mxu0 %v347
      %369 = vmatmul.bf16.gmra.mxu0 %v356
      %v370 = vpop.f32.mrf.mxu0
      %v371 = vadd.f32 0.0, %v370
      %v372 = vpop.f32.mrf.mxu0
      %v373 = vadd.f32 0.0, %v372
      %374 = vmatmul.bf16.gmra.mxu0 %v359
      %v375 = vpop.f32.mrf.mxu0
      %v376 = vadd.f32 0.0, %v375
      %v377 = vpop.f32.mrf.mxu0
      %378 = vdwg.mxu0
      %v379 = vadd.f32 %v307, %v371
      %v380 = vadd.f32 %v309, %v373
      %v381 = vadd.f32 %v312, %v376
      %v382 = vld [vmem:[%s165] sm:$0x8]
      %v383 = vld [vmem:[%s165 + $0x4] sm:$0xf]
      %v384 = vld [vmem:[%s165 + $0x8] sm:$0xf]
      %v385 = vld [vmem:[%s165 + $0xc] sm:$0x3]
      %v386 = vld [vmem:[%s1 + $0x60] sm:$0xf]
      %v387 = vld [vmem:[%s1 + $0x64] sm:$0xf]
      %v388 = vld [vmem:[%s1 + $0x68] sm:$0xf]
      %v389 = vld [vmem:[%s1 + $0x6c] sm:$0xf]
      %v390 = vld [vmem:[%s1 + $0x70] sm:$0xf]
      %v391 = vld [vmem:[%s1 + $0x74] sm:$0xf]
      %v392 = vld [vmem:[%s1 + $0x78] sm:$0xf]
      %v393 = vld [vmem:[%s1 + $0x7c] sm:$0xf]
      %v398 = vunpack.c.l.b16 %v382
      %v399 = vunpack.c.l.b16 %v383
      %v400 = vunpack.c.l.b16 %v384
      %v401 = vunpack.c.l.b16 %v385
      %v402 = vpack.c.b16 %v399, %v398
      %v403 = vpack.c.b16 %v401, %v400
      %vm404 = vcmask 1044480
      %v405 = vrot.slane %v402, 3
      %v406 = vrot.slane %v403, 3
      %v407 = vsel %vm404, %v405, %v406
      %v416 = vunpack.c.l.b16 %v386
      %v417 = vunpack.c.l.b16 %v387
      %v418 = vunpack.c.l.b16 %v388
      %v419 = vunpack.c.l.b16 %v389
      %v420 = vunpack.c.l.b16 %v390
      %v421 = vunpack.c.l.b16 %v391
      %v422 = vunpack.c.l.b16 %v392
      %v423 = vunpack.c.l.b16 %v393
      %v424 = vpack.c.b16 %v417, %v416
      %v425 = vpack.c.b16 %v419, %v418
      %v426 = vpack.c.b16 %v421, %v420
      %v427 = vpack.c.b16 %v423, %v422
      %v433 = vsel %vm240, %v407, 0
      %v436 = vsel %vm240, %v406, 0
      %438 = vmatpush.bf16.msra.mxu0 0
      %439 = vmatpush.bf16.msra.mxu0 0
      %440 = vmatpush.bf16.msra.mxu0 0
      %441 = vmatpush.bf16.msra.mxu0 0
      %442 = vmatpush.bf16.msra.mxu0 %v427
      %443 = vmatpush.bf16.msra.mxu0 %v426
      %444 = vmatpush.bf16.msra.mxu0 %v425
      %445 = vmatpush.bf16.msra.mxu0 %v424
      %446 = vmatmul.bf16.gmra.mxu0 %v433
      %v447 = vpop.f32.mrf.mxu0
      %v448 = vadd.f32 0.0, %v447
      %v449 = vpop.f32.mrf.mxu0
      %v450 = vadd.f32 0.0, %v449
      %451 = vmatmul.bf16.gmra.mxu0 %v436
      %v452 = vpop.f32.mrf.mxu0
      %v453 = vadd.f32 0.0, %v452
      %v454 = vpop.f32.mrf.mxu0
      %455 = vdwg.mxu0
      %v456 = vadd.f32 %v379, %v448
      %v457 = vadd.f32 %v380, %v450
      %v458 = vadd.f32 %v381, %v453
      %v459 = vld [vmem:[%s165 + $0xc] sm:$0x7]
      %v460 = vld [vmem:[%s1 + $0x80] sm:$0xf]
      %v461 = vld [vmem:[%s1 + $0x84] sm:$0xf]
      %v462 = vld [vmem:[%s1 + $0x88] sm:$0xf]
      %v463 = vld [vmem:[%s1 + $0x8c] sm:$0xf]
      %v464 = vld [vmem:[%s1 + $0x90] sm:$0xf]
      %v465 = vld [vmem:[%s1 + $0x94] sm:$0xf]
      %v466 = vld [vmem:[%s1 + $0x98] sm:$0xf]
      %v467 = vld [vmem:[%s1 + $0x9c] sm:$0xf]
      %v469 = vunpack.c.l.b16 %v459
      %v470 = vpack.c.b16 %v469, %v400
      %vm471 = vsmask.f32 4352
      %v473 = vshrl.u32 %v402, 16
      %v475 = vrot.slane %v473, 3
      %v476 = vshll.u32 %v402, 16
      %v478 = vrot.slane %v476, 4
      %v479 = vor.u32 %v475, %v478
      %v481 = vshrl.u32 %v470, 16
      %v483 = vrot.slane %v481, 3
      %v484 = vshll.u32 %v470, 16
      %v486 = vrot.slane %v484, 4
      %v487 = vor.u32 %v483, %v486
      %v488 = vsel %vm471, %v479, %v487
      %v497 = vunpack.c.l.b16 %v460
      %v498 = vunpack.c.l.b16 %v461
      %v499 = vunpack.c.l.b16 %v462
      %v500 = vunpack.c.l.b16 %v463
      %v501 = vunpack.c.l.b16 %v464
      %v502 = vunpack.c.l.b16 %v465
      %v503 = vunpack.c.l.b16 %v466
      %v504 = vunpack.c.l.b16 %v467
      %v505 = vpack.c.b16 %v498, %v497
      %v506 = vpack.c.b16 %v500, %v499
      %v507 = vpack.c.b16 %v502, %v501
      %v508 = vpack.c.b16 %v504, %v503
      %v514 = vsel %vm240, %v488, 0
      %v517 = vsel %vm240, %v487, 0
      %519 = vmatpush.bf16.msra.mxu0 0
      %520 = vmatpush.bf16.msra.mxu0 0
      %521 = vmatpush.bf16.msra.mxu0 0
      %522 = vmatpush.bf16.msra.mxu0 0
      %523 = vmatpush.bf16.msra.mxu0 %v508
      %524 = vmatpush.bf16.msra.mxu0 %v507
      %525 = vmatpush.bf16.msra.mxu0 %v506
      %526 = vmatpush.bf16.msra.mxu0 %v505
      %527 = vmatmul.bf16.gmra.mxu0 %v514
      %v528 = vpop.f32.mrf.mxu0
      %v529 = vadd.f32 0.0, %v528
      %v530 = vpop.f32.mrf.mxu0
      %v531 = vadd.f32 0.0, %v530
      %532 = vmatmul.bf16.gmra.mxu0 %v517
      %v533 = vpop.f32.mrf.mxu0
      %v534 = vadd.f32 0.0, %v533
      %v535 = vpop.f32.mrf.mxu0
      %536 = vdwg.mxu0
      %v537 = vadd.f32 %v456, %v529
      %v538 = vadd.f32 %v457, %v531
      %v539 = vadd.f32 %v458, %v534
      %v540 = vld [vmem:[%s1 + $0xa0] sm:$0xf]
      %v541 = vld [vmem:[%s1 + $0xa4] sm:$0xf]
      %v542 = vld [vmem:[%s1 + $0xa8] sm:$0xf]
      %v543 = vld [vmem:[%s1 + $0xac] sm:$0xf]
      %v544 = vld [vmem:[%s1 + $0xb0] sm:$0xf]
      %v545 = vld [vmem:[%s1 + $0xb4] sm:$0xf]
      %v546 = vld [vmem:[%s1 + $0xb8] sm:$0xf]
      %v547 = vld [vmem:[%s1 + $0xbc] sm:$0xf]
      %v548 = vpack.c.b16 %v400, %v399
      %v549 = vpack.c.b16 %v469, %v469
      %v558 = vunpack.c.l.b16 %v540
      %v559 = vunpack.c.l.b16 %v541
      %v560 = vunpack.c.l.b16 %v542
      %v561 = vunpack.c.l.b16 %v543
      %v562 = vunpack.c.l.b16 %v544
      %v563 = vunpack.c.l.b16 %v545
      %v564 = vunpack.c.l.b16 %v546
      %v565 = vunpack.c.l.b16 %v547
      %v566 = vpack.c.b16 %v559, %v558
      %v567 = vpack.c.b16 %v561, %v560
      %v568 = vpack.c.b16 %v563, %v562
      %v569 = vpack.c.b16 %v565, %v564
      %v575 = vsel %vm240, %v548, 0
      %v578 = vsel %vm240, %v549, 0
      %580 = vmatpush.bf16.msra.mxu0 0
      %581 = vmatpush.bf16.msra.mxu0 0
      %582 = vmatpush.bf16.msra.mxu0 0
      %583 = vmatpush.bf16.msra.mxu0 0
      %584 = vmatpush.bf16.msra.mxu0 %v569
      %585 = vmatpush.bf16.msra.mxu0 %v568
      %586 = vmatpush.bf16.msra.mxu0 %v567
      %587 = vmatpush.bf16.msra.mxu0 %v566
      %588 = vmatmul.bf16.gmra.mxu0 %v575
      %v589 = vpop.f32.mrf.mxu0
      %v590 = vadd.f32 0.0, %v589
      %v591 = vpop.f32.mrf.mxu0
      %v592 = vadd.f32 0.0, %v591
      %593 = vmatmul.bf16.gmra.mxu0 %v578
      %v594 = vpop.f32.mrf.mxu0
      %v595 = vadd.f32 0.0, %v594
      %v596 = vpop.f32.mrf.mxu0
      %597 = vdwg.mxu0
      %v598 = vadd.f32 %v537, %v590
      %v599 = vadd.f32 %v538, %v592
      %v600 = vadd.f32 %v539, %v595
      %v601 = vld [vmem:[%s165 + $0x4] sm:$0xc]
      %v602 = vld [vmem:[%s165 + $0x8] sm:$0xf]
      %v603 = vld [vmem:[%s165 + $0xc] sm:$0xf]
      %v604 = vld [vmem:[%s165 + $0x10] sm:$0x1]
      %v605 = vld [vmem:[%s1 + $0xc0] sm:$0xf]
      %v606 = vld [vmem:[%s1 + $0xc4] sm:$0xf]
      %v607 = vld [vmem:[%s1 + $0xc8] sm:$0xf]
      %v608 = vld [vmem:[%s1 + $0xcc] sm:$0xf]
      %v609 = vld [vmem:[%s1 + $0xd0] sm:$0xf]
      %v610 = vld [vmem:[%s1 + $0xd4] sm:$0xf]
      %v611 = vld [vmem:[%s1 + $0xd8] sm:$0xf]
      %v612 = vld [vmem:[%s1 + $0xdc] sm:$0xf]
      %v617 = vunpack.c.l.b16 %v601
      %v618 = vunpack.c.l.b16 %v602
      %v619 = vunpack.c.l.b16 %v603
      %v620 = vunpack.c.l.b16 %v604
      %v621 = vpack.c.b16 %v618, %v617
      %v622 = vpack.c.b16 %v620, %v619
      %vm623 = vcmask 1045504
      %v624 = vrot.slane %v621, 2
      %v625 = vrot.slane %v622, 2
      %v626 = vsel %vm623, %v624, %v625
      %v635 = vunpack.c.l.b16 %v605
      %v636 = vunpack.c.l.b16 %v606
      %v637 = vunpack.c.l.b16 %v607
      %v638 = vunpack.c.l.b16 %v608
      %v639 = vunpack.c.l.b16 %v609
      %v640 = vunpack.c.l.b16 %v610
      %v641 = vunpack.c.l.b16 %v611
      %v642 = vunpack.c.l.b16 %v612
      %v643 = vpack.c.b16 %v636, %v635
      %v644 = vpack.c.b16 %v638, %v637
      %v645 = vpack.c.b16 %v640, %v639
      %v646 = vpack.c.b16 %v642, %v641
      %v652 = vsel %vm240, %v626, 0
      %v655 = vsel %vm240, %v625, 0
      %657 = vmatpush.bf16.msra.mxu0 0
      %658 = vmatpush.bf16.msra.mxu0 0
      %659 = vmatpush.bf16.msra.mxu0 0
      %660 = vmatpush.bf16.msra.mxu0 0
      %661 = vmatpush.bf16.msra.mxu0 %v646
      %662 = vmatpush.bf16.msra.mxu0 %v645
      %663 = vmatpush.bf16.msra.mxu0 %v644
      %664 = vmatpush.bf16.msra.mxu0 %v643
      %665 = vmatmul.bf16.gmra.mxu0 %v652
      %v666 = vpop.f32.mrf.mxu0
      %v667 = vadd.f32 0.0, %v666
      %v668 = vpop.f32.mrf.mxu0
      %v669 = vadd.f32 0.0, %v668
      %670 = vmatmul.bf16.gmra.mxu0 %v655
      %v671 = vpop.f32.mrf.mxu0
      %v672 = vadd.f32 0.0, %v671
      %v673 = vpop.f32.mrf.mxu0
      %674 = vdwg.mxu0
      %v675 = vadd.f32 %v598, %v667
      %v676 = vadd.f32 %v599, %v669
      %v677 = vadd.f32 %v600, %v672
      %v678 = vld [vmem:[%s165 + $0x10] sm:$0x3]
      %v679 = vld [vmem:[%s1 + $0xe0] sm:$0xf]
      %v680 = vld [vmem:[%s1 + $0xe4] sm:$0xf]
      %v681 = vld [vmem:[%s1 + $0xe8] sm:$0xf]
      %v682 = vld [vmem:[%s1 + $0xec] sm:$0xf]
      %v683 = vld [vmem:[%s1 + $0xf0] sm:$0xf]
      %v684 = vld [vmem:[%s1 + $0xf4] sm:$0xf]
      %v685 = vld [vmem:[%s1 + $0xf8] sm:$0xf]
      %v686 = vld [vmem:[%s1 + $0xfc] sm:$0xf]
      %v688 = vunpack.c.l.b16 %v678
      %v689 = vpack.c.b16 %v688, %v619
      %vm690 = vsmask.f32 5376
      %v692 = vshrl.u32 %v621, 16
      %v694 = vrot.slane %v692, 2
      %v695 = vshll.u32 %v621, 16
      %v697 = vrot.slane %v695, 3
      %v698 = vor.u32 %v694, %v697
      %v700 = vshrl.u32 %v689, 16
      %v702 = vrot.slane %v700, 2
      %v703 = vshll.u32 %v689, 16
      %v705 = vrot.slane %v703, 3
      %v706 = vor.u32 %v702, %v705
      %v707 = vsel %vm690, %v698, %v706
      %v716 = vunpack.c.l.b16 %v679
      %v717 = vunpack.c.l.b16 %v680
      %v718 = vunpack.c.l.b16 %v681
      %v719 = vunpack.c.l.b16 %v682
      %v720 = vunpack.c.l.b16 %v683
      %v721 = vunpack.c.l.b16 %v684
      %v722 = vunpack.c.l.b16 %v685
      %v723 = vunpack.c.l.b16 %v686
      %v724 = vpack.c.b16 %v717, %v716
      %v725 = vpack.c.b16 %v719, %v718
      %v726 = vpack.c.b16 %v721, %v720
      %v727 = vpack.c.b16 %v723, %v722
      %v733 = vsel %vm240, %v707, 0
      %v736 = vsel %vm240, %v706, 0
      %738 = vmatpush.bf16.msra.mxu0 0
      %739 = vmatpush.bf16.msra.mxu0 0
      %740 = vmatpush.bf16.msra.mxu0 0
      %741 = vmatpush.bf16.msra.mxu0 0
      %742 = vmatpush.bf16.msra.mxu0 %v727
      %743 = vmatpush.bf16.msra.mxu0 %v726
      %744 = vmatpush.bf16.msra.mxu0 %v725
      %745 = vmatpush.bf16.msra.mxu0 %v724
      %746 = vmatmul.bf16.gmra.mxu0 %v733
      %v747 = vpop.f32.mrf.mxu0
      %v748 = vadd.f32 0.0, %v747
      %v749 = vpop.f32.mrf.mxu0
      %v750 = vadd.f32 0.0, %v749
      %751 = vmatmul.bf16.gmra.mxu0 %v736
      %v752 = vpop.f32.mrf.mxu0
      %v753 = vadd.f32 0.0, %v752
      %v754 = vpop.f32.mrf.mxu0
      %755 = vdwg.mxu0
      %v756 = vadd.f32 %v675, %v748
      %v757 = vadd.f32 %v676, %v750
      %v758 = vadd.f32 %v677, %v753
      %v759 = vld [vmem:[%s165 + $0x4] sm:$0x8]
      %v760 = vld [vmem:[%s1 + $0x100] sm:$0xf]
      %v761 = vld [vmem:[%s1 + $0x104] sm:$0xf]
      %v762 = vld [vmem:[%s1 + $0x108] sm:$0xf]
      %v763 = vld [vmem:[%s1 + $0x10c] sm:$0xf]
      %v764 = vld [vmem:[%s1 + $0x110] sm:$0xf]
      %v765 = vld [vmem:[%s1 + $0x114] sm:$0xf]
      %v766 = vld [vmem:[%s1 + $0x118] sm:$0xf]
      %v767 = vld [vmem:[%s1 + $0x11c] sm:$0xf]
      %v769 = vunpack.c.l.b16 %v759
      %v770 = vpack.c.b16 %v618, %v769
      %v771 = vrot.slane %v770, 3
      %v772 = vrot.slane %v689, 3
      %v773 = vsel %vm404, %v771, %v772
      %v782 = vunpack.c.l.b16 %v760
      %v783 = vunpack.c.l.b16 %v761
      %v784 = vunpack.c.l.b16 %v762
      %v785 = vunpack.c.l.b16 %v763
      %v786 = vunpack.c.l.b16 %v764
      %v787 = vunpack.c.l.b16 %v765
      %v788 = vunpack.c.l.b16 %v766
      %v789 = vunpack.c.l.b16 %v767
      %v790 = vpack.c.b16 %v783, %v782
      %v791 = vpack.c.b16 %v785, %v784
      %v792 = vpack.c.b16 %v787, %v786
      %v793 = vpack.c.b16 %v789, %v788
      %v799 = vsel %vm240, %v773, 0
      %v802 = vsel %vm240, %v772, 0
      %804 = vmatpush.bf16.msra.mxu0 0
      %805 = vmatpush.bf16.msra.mxu0 0
      %806 = vmatpush.bf16.msra.mxu0 0
      %807 = vmatpush.bf16.msra.mxu0 0
      %808 = vmatpush.bf16.msra.mxu0 %v793
      %809 = vmatpush.bf16.msra.mxu0 %v792
      %810 = vmatpush.bf16.msra.mxu0 %v791
      %811 = vmatpush.bf16.msra.mxu0 %v790
      %812 = vmatmul.bf16.gmra.mxu0 %v799
      %v813 = vpop.f32.mrf.mxu0
      %v814 = vadd.f32 0.0, %v813
      %v815 = vpop.f32.mrf.mxu0
      %v816 = vadd.f32 0.0, %v815
      %817 = vmatmul.bf16.gmra.mxu0 %v802
      %v818 = vpop.f32.mrf.mxu0
      %v819 = vadd.f32 0.0, %v818
      %v820 = vpop.f32.mrf.mxu0
      %821 = vdwg.mxu0
      %v822 = vadd.f32 %v756, %v814
      %v823 = vadd.f32 %v757, %v816
      %v824 = vadd.f32 %v758, %v819
      %v825 = vld [vmem:[%s2] sm:$0x1]
      %v827 = vperm.slane %v825, 0
      %v829 = vadd.f32 %v822, %v827
      %v830 = vadd.f32 %v823, %v827
      %v831 = vadd.f32 %v824, %v827
      %v832 = vmax.f32 %v829, 0.0
      %v833 = vmax.f32 %v830, 0.0
      %v834 = vmax.f32 %v831, 0.0
      %v835 = vpack.c.bf16 %v832, %v832
      %v836 = vpack.c.bf16 %v833, %v833
      %v837 = vpack.c.bf16 %v834, %v834
      %vm838 = vcmask 519168
      %839 = vst.msk [vmem:[%s170] sm:$0xf] %vm838, %v835
      %840 = vst.msk [vmem:[%s170 + $0x4] sm:$0xf] %vm838, %v836
      %vm841 = vcmask 518144
      %842 = vst.msk [vmem:[%s170 + $0x8] sm:$0x7] %vm841, %v837
      %p843 = scmp.lt.s32.totalorder %s14, 1
      %s844 = scalar_select %p843, %s14, 1
      %s845 = smul.addr %s844, 3
      %s846 = smul.addr %s845, 4
      %s847 = scalar_lea.vmem %s3, %s846
      // Predicated region
      $region33: #{expanding_path_forward.11} parent=31 // pred_check
        %p848 = pneg %p100
      $region34: #{expanding_path_forward.11} parent=31 // pred_check_branch
        %850 = sbr.rel (%p848) target = $region36
      $region35: #{expanding_path_forward.11} parent=31 // pred_region
        _
      $region36: #{expanding_path_forward.11} parent=31 // pred_fallthru
        _
    $region32: #{expanding_path_forward.11} parent=5 // pred_fallthru
      _
    %p851 = scmp.le.s32.totalorder 2, %s9
    // Predicated region
    $region37: #{expanding_path_forward.11} parent=5 // pred_check
      %p852 = pneg %p851
    $region38: #{expanding_path_forward.11} parent=5 // pred_check_branch
      %854 = sbr.rel (%p852) target = $region40
    $region39: #{expanding_path_forward.11} parent=5 // pred_region
      %s855 = ssub.s32 %s9, 2
      // Predicated region
      $region41: #{expanding_path_forward.11} parent=39 // pred_check
        %p856 = pneg %p106
      $region42: #{expanding_path_forward.11} parent=39 // pred_check_branch
        %858 = sbr.rel (%p856) target = $region44
      $region43: #{expanding_path_forward.11} parent=39 // pred_region
        %p859 = scmp.lt.s32.totalorder %s15, 1
        %s860 = scalar_select %p859, %s15, 1
        %s861 = smul.addr %s860, 3
        %s862 = smul.addr %s861, 4
        %s863 = scalar_lea.vmem %s3, %s862
      $region44: #{expanding_path_forward.11} parent=39 // pred_fallthru
        _
    $region40: #{expanding_path_forward.11} parent=5 // pred_fallthru
      _
  $region6: #{expanding_path_forward.11} parent=0 // loop_footer
    %s13 = sadd.s32 1, %s9
  $region7: #{expanding_path_forward.11} parent=0 // loop_footer_branch
    %8 = sbr.rel target = $region3
  $region8: #{expanding_path_forward.11} parent=0 // loop_exit
    _

// kernel: expanding_path_forward.10
$region0: #{expanding_path_forward.10}
  #allocation0 [shape = 'u32[]', space=smem, size = 0x4, offset = 0x4, fixed_abs, tag = 'smem constant byte address 0x4 - core index']
  #allocation1 [shape = 'u32[72,128]{1,0:T(1,128)}', space=vmem, size = 0x9000, scoped, tag = 'internal scratch']
  %s0 = inlined_call_operand.vmem [shape: bf16[2,64,64], index: 0, kind: input, shape index: {}]
  %s1 = inlined_call_operand.vmem [shape: bf16[2,64,64], index: 1, kind: input, shape index: {}]
  %s2 = inlined_call_operand.vmem [shape: bf16[576,64], index: 2, kind: input, shape index: {}]
  %s3 = inlined_call_operand.vmem [shape: bf16[576,64], index: 3, kind: input, shape index: {}]
  %s4 = inlined_call_operand.vmem [shape: f32[1,64], index: 4, kind: input, shape index: {}]
  %s5 = inlined_call_operand.vmem [shape: bf16[2,48,64], index: 5, kind: output, shape index: {}]
  %s6 = sld [smem:[#allocation0]]
  $region53: #{expanding_path_forward.10} parent=0
    _
  %s8 = ssub.s32 1, %s6
  %s9 = scalar_select 0, %s8, %s6
  loop: start=0, step=1, limit=4
  $region2: #{expanding_path_forward.10} parent=0 // loop_pre_header
    _
  $region3: #{expanding_path_forward.10} parent=0 // loop_header
    %s11 = sphi 0, %s15
    %p12 = scmp.ge.s32.totalorder %s11, 4
    %s21 = sphi 0, %s23
    %s24 = sphi 0, %s21
    %s25 = sphi 0, %s24
    %s41 = sphi 0, %s25
    %s47 = sphi 0, %s49
    %s50 = sphi 0, %s47
    %s51 = sphi 0, %s50
    %s67 = sphi 0, %s51
    %s71 = sphi 0, %s71
    %s73 = sphi 0, %s71
    %s74 = sphi 0, %s73
    %s88 = sphi 0, %s74
    %s92 = sphi 0, %s92
    %s94 = sphi 0, %s92
    %s95 = sphi 0, %s94
    %s109 = sphi 0, %s95
    %s113 = sphi 0, %s113
    %s115 = sphi 0, %s113
    %s116 = sphi 0, %s115
    %s130 = sphi 0, %s116
    %s136 = sphi 0, %s138
    %s139 = sphi 0, %s136
    %s140 = sphi 0, %s139
    %s156 = sphi 0, %s140
  $region4: #{expanding_path_forward.10} parent=0 // loop_header_branch
    %14 = sbr.rel (%p12) target = $region8
  $region5: #{expanding_path_forward.10} parent=0 // loop_body
    %s16 = ssub.s32 %s11, 1
    %s17 = ssub.s32 %s11, 2
    %s18 = sadd.s32 %s11, 1
    %s19 = ssub.s32 %s11, %s18
    %p20 = scmp.eq.s32.totalorder %s19, 0
    %s22 = sadd.s32 %s21, 1
    %s23 = scalar_select %p20, %s21, %s22
    %p26 = pneg %p20
    %p27 = scmp.eq.s32.totalorder %s11, 1
    %p28 = por %p26, %p27
    %p29 = scmp.ne.s32.totalorder %s21, %s24
    %p30 = scmp.eq.s32.totalorder %s11, 0
    %p31 = por %p29, %p30
    %p32 = scmp.ne.s32.totalorder %s21, %s24
    %p33 = scmp.eq.s32.totalorder %s16, 1
    %p34 = por %p32, %p33
    %p35 = scmp.ne.s32.totalorder %s24, %s25
    %p36 = scmp.eq.s32.totalorder %s16, 0
    %p37 = por %p35, %p36
    %p38 = scmp.ne.s32.totalorder %s24, %s25
    %p39 = scmp.eq.s32.totalorder %s17, 1
    %p40 = por %p38, %p39
    %p42 = scmp.ne.s32.totalorder %s25, %s41
    %p43 = scmp.eq.s32.totalorder %s17, 0
    %p44 = por %p42, %p43
    %s45 = ssub.s32 %s11, %s18
    %p46 = scmp.eq.s32.totalorder %s45, 0
    %s48 = sadd.s32 %s47, 1
    %s49 = scalar_select %p46, %s47, %s48
    %p52 = pneg %p46
    %p53 = scmp.eq.s32.totalorder %s11, 1
    %p54 = por %p52, %p53
    %p55 = scmp.ne.s32.totalorder %s47, %s50
    %p56 = scmp.eq.s32.totalorder %s11, 0
    %p57 = por %p55, %p56
    %p58 = scmp.ne.s32.totalorder %s47, %s50
    %p59 = scmp.eq.s32.totalorder %s16, 1
    %p60 = por %p58, %p59
    %p61 = scmp.ne.s32.totalorder %s50, %s51
    %p62 = scmp.eq.s32.totalorder %s16, 0
    %p63 = por %p61, %p62
    %p64 = scmp.ne.s32.totalorder %s50, %s51
    %p65 = scmp.eq.s32.totalorder %s17, 1
    %p66 = por %p64, %p65
    %p68 = scmp.ne.s32.totalorder %s51, %s67
    %p69 = scmp.eq.s32.totalorder %s17, 0
    %p70 = por %p68, %p69
    %s72 = sadd.s32 %s71, 1
    %p75 = scmp.eq.s32.totalorder %s11, 1
    %p76 = scmp.ne.s32.totalorder %s71, %s73
    %p77 = scmp.eq.s32.totalorder %s11, 0
    %p78 = por %p76, %p77
    %p79 = scmp.ne.s32.totalorder %s71, %s73
    %p80 = scmp.eq.s32.totalorder %s16, 1
    %p81 = por %p79, %p80
    %p82 = scmp.ne.s32.totalorder %s73, %s74
    %p83 = scmp.eq.s32.totalorder %s16, 0
    %p84 = por %p82, %p83
    %p85 = scmp.ne.s32.totalorder %s73, %s74
    %p86 = scmp.eq.s32.totalorder %s17, 1
    %p87 = por %p85, %p86
    %p89 = scmp.ne.s32.totalorder %s74, %s88
    %p90 = scmp.eq.s32.totalorder %s17, 0
    %p91 = por %p89, %p90
    %s93 = sadd.s32 %s92, 1
    %p96 = scmp.eq.s32.totalorder %s11, 1
    %p97 = scmp.ne.s32.totalorder %s92, %s94
    %p98 = scmp.eq.s32.totalorder %s11, 0
    %p99 = por %p97, %p98
    %p100 = scmp.ne.s32.totalorder %s92, %s94
    %p101 = scmp.eq.s32.totalorder %s16, 1
    %p102 = por %p100, %p101
    %p103 = scmp.ne.s32.totalorder %s94, %s95
    %p104 = scmp.eq.s32.totalorder %s16, 0
    %p105 = por %p103, %p104
    %p106 = scmp.ne.s32.totalorder %s94, %s95
    %p107 = scmp.eq.s32.totalorder %s17, 1
    %p108 = por %p106, %p107
    %p110 = scmp.ne.s32.totalorder %s95, %s109
    %p111 = scmp.eq.s32.totalorder %s17, 0
    %p112 = por %p110, %p111
    %s114 = sadd.s32 %s113, 1
    %p117 = scmp.eq.s32.totalorder %s11, 1
    %p118 = scmp.ne.s32.totalorder %s113, %s115
    %p119 = scmp.eq.s32.totalorder %s11, 0
    %p120 = por %p118, %p119
    %p121 = scmp.ne.s32.totalorder %s113, %s115
    %p122 = scmp.eq.s32.totalorder %s16, 1
    %p123 = por %p121, %p122
    %p124 = scmp.ne.s32.totalorder %s115, %s116
    %p125 = scmp.eq.s32.totalorder %s16, 0
    %p126 = por %p124, %p125
    %p127 = scmp.ne.s32.totalorder %s115, %s116
    %p128 = scmp.eq.s32.totalorder %s17, 1
    %p129 = por %p127, %p128
    %p131 = scmp.ne.s32.totalorder %s116, %s130
    %p132 = scmp.eq.s32.totalorder %s17, 0
    %p133 = por %p131, %p132
    %s134 = ssub.s32 %s11, %s18
    %p135 = scmp.eq.s32.totalorder %s134, 0
    %s137 = sadd.s32 %s136, 1
    %s138 = scalar_select %p135, %s136, %s137
    %p141 = pneg %p135
    %p142 = scmp.eq.s32.totalorder %s11, 1
    %p143 = por %p141, %p142
    %p144 = scmp.ne.s32.totalorder %s136, %s139
    %p145 = scmp.eq.s32.totalorder %s11, 0
    %p146 = por %p144, %p145
    %p147 = scmp.ne.s32.totalorder %s136, %s139
    %p148 = scmp.eq.s32.totalorder %s16, 1
    %p149 = por %p147, %p148
    %p150 = scmp.ne.s32.totalorder %s139, %s140
    %p151 = scmp.eq.s32.totalorder %s16, 0
    %p152 = por %p150, %p151
    %p153 = scmp.ne.s32.totalorder %s139, %s140
    %p154 = scmp.eq.s32.totalorder %s17, 1
    %p155 = por %p153, %p154
    %p157 = scmp.ne.s32.totalorder %s140, %s156
    %p158 = scmp.eq.s32.totalorder %s17, 0
    %p159 = por %p157, %p158
    %p160 = scmp.le.s32.totalorder 1, %s11
    %p161 = scmp.lt.s32.totalorder %s11, 3
    %p162 = pnand %p160, %p161
    %p163 = pneg %p162
    // Predicated region
    $region9: #{expanding_path_forward.10} parent=5 // pred_check
      _
    $region10: #{expanding_path_forward.10} parent=5 // pred_check_branch
      %165 = sbr.rel (%p162) target = $region12
    $region11: #{expanding_path_forward.10} parent=5 // pred_region
      %s166 = ssub.s32 %s11, 1
      // Predicated region
      $region13: #{expanding_path_forward.10} parent=11 // pred_check
        %p167 = pneg %p84
      $region14: #{expanding_path_forward.10} parent=11 // pred_check_branch
        %169 = sbr.rel (%p167) target = $region16
      $region15: #{expanding_path_forward.10} parent=11 // pred_region
        _
      $region16: #{expanding_path_forward.10} parent=11 // pred_fallthru
        _
      // Predicated region
      $region17: #{expanding_path_forward.10} parent=11 // pred_check
        %p170 = pneg %p105
      $region18: #{expanding_path_forward.10} parent=11 // pred_check_branch
        %172 = sbr.rel (%p170) target = $region20
      $region19: #{expanding_path_forward.10} parent=11 // pred_region
        _
      $region20: #{expanding_path_forward.10} parent=11 // pred_fallthru
        _
      // Predicated region
      $region21: #{expanding_path_forward.10} parent=11 // pred_check
        %p173 = pneg %p126
      $region22: #{expanding_path_forward.10} parent=11 // pred_check_branch
        %175 = sbr.rel (%p173) target = $region24
      $region23: #{expanding_path_forward.10} parent=11 // pred_region
        _
      $region24: #{expanding_path_forward.10} parent=11 // pred_fallthru
        _
    $region12: #{expanding_path_forward.10} parent=5 // pred_fallthru
      _
    %p176 = scmp.lt.s32.totalorder %s11, 2
    // Predicated region
    $region25: #{expanding_path_forward.10} parent=5 // pred_check
      %p177 = pneg %p176
    $region26: #{expanding_path_forward.10} parent=5 // pred_check_branch
      %179 = sbr.rel (%p177) target = $region28
    $region27: #{expanding_path_forward.10} parent=5 // pred_region
      // Predicated region
      $region29: #{expanding_path_forward.10} parent=27 // pred_check
        %p180 = pneg %p31
      $region30: #{expanding_path_forward.10} parent=27 // pred_check_branch
        %182 = sbr.rel (%p180) target = $region32
      $region31: #{expanding_path_forward.10} parent=27 // pred_region
        %p183 = scmp.lt.s32.totalorder %s11, 1
        %s184 = scalar_select %p183, %s11, 1
        %s185 = smul.addr %s184, 8
        %s186 = smul.addr %s185, 4
        %s187 = scalar_lea.vmem %s0, %s186
      $region32: #{expanding_path_forward.10} parent=27 // pred_fallthru
        _
      // Predicated region
      $region33: #{expanding_path_forward.10} parent=27 // pred_check
        %p188 = pneg %p57
      $region34: #{expanding_path_forward.10} parent=27 // pred_check_branch
        %190 = sbr.rel (%p188) target = $region36
      $region35: #{expanding_path_forward.10} parent=27 // pred_region
        %p191 = scmp.lt.s32.totalorder %s11, 1
        %s192 = scalar_select %p191, %s11, 1
        %s193 = smul.addr %s192, 8
        %s194 = smul.addr %s193, 4
        %s195 = scalar_lea.vmem %s1, %s194
      $region36: #{expanding_path_forward.10} parent=27 // pred_fallthru
        _
    $region28: #{expanding_path_forward.10} parent=5 // pred_fallthru
      _
    %p196 = scmp.le.s32.totalorder 1, %s11
    %p197 = scmp.lt.s32.totalorder %s11, 3
    %p198 = pnand %p196, %p197
    %p199 = pneg %p198
    // Predicated region
    $region37: #{expanding_path_forward.10} parent=5 // pred_check
      _
    $region38: #{expanding_path_forward.10} parent=5 // pred_check_branch
      %201 = sbr.rel (%p198) target = $region40
    $region39: #{expanding_path_forward.10} parent=5 // pred_region
      %s202 = ssub.s32 %s11, 1
      %p203 = scmp.lt.s32.totalorder %s16, 1
      %s204 = scalar_select %p203, %s16, 1
      %s205 = smul.addr %s204, 8
      %s206 = smul.addr %s205, 4
      %s207 = scalar_lea.vmem %s0, %s206
      %p208 = pneg %p37
      %p209 = pneg %p34
      %p210 = scmp.lt.s32.totalorder %s16, 1
      %s211 = scalar_select %p210, %s16, 1
      %s212 = smul.addr %s211, 8
      %s213 = smul.addr %s212, 4
      %s214 = scalar_lea.vmem %s1, %s213
      %p215 = pneg %p63
      %p216 = pneg %p60
      %p217 = pneg %p84
      %p218 = pneg %p81
      %p219 = pneg %p105
      %p220 = pneg %p102
      %p221 = pneg %p126
      %p222 = pneg %p123
      %p223 = pneg %p152
      %p224 = pneg %p149
      %p225 = scmp.lt.s32.totalorder %s16, 1
      %s226 = scalar_select %p225, %s16, 1
      %s227 = smul.addr %s226, 6
      %s228 = smul.addr %s227, 4
      %s229 = scalar_lea.vmem %s5, %s228
      %p230 = scmp.lt.s32.totalorder %s16, 1
      %s231 = scalar_select %p230, %s16, 1
      %s232 = smul.addr %s231, 8
      %s233 = smul.addr %s232, 4
      %s234 = scalar_lea.vmem %s0, %s233
      %p235 = scmp.lt.s32.totalorder %s16, 1
      %s236 = scalar_select %p235, %s16, 1
      %s237 = smul.addr %s236, 8
      %s238 = smul.addr %s237, 4
      %s239 = scalar_lea.vmem %s1, %s238
      %p240 = scmp.lt.s32.totalorder %s16, 1
      %s241 = scalar_select %p240, %s16, 1
      %s242 = smul.addr %s241, 6
      %s243 = smul.addr %s242, 4
      %s244 = scalar_lea.vmem %s5, %s243
      %v246 = vld [vmem:[%s234] sm:$0xf]
      %v247 = vld [vmem:[%s234 + $0x4] sm:$0xf]
      %v248 = vld [vmem:[%s234 + $0x8] sm:$0xf]
      %v249 = vld [vmem:[%s234 + $0xc] sm:$0xf]
      %v250 = vld [vmem:[%s234 + $0x10] sm:$0xf]
      %v251 = vld [vmem:[%s234 + $0x14] sm:$0x7]
      %v252 = vld [vmem:[%s2] sm:$0xf]
      %v253 = vld [vmem:[%s2 + $0x4] sm:$0xf]
      %v254 = vld [vmem:[%s2 + $0x8] sm:$0xf]
      %v255 = vld [vmem:[%s2 + $0xc] sm:$0xf]
      %v256 = vld [vmem:[%s2 + $0x10] sm:$0xf]
      %v257 = vld [vmem:[%s2 + $0x14] sm:$0xf]
      %v258 = vld [vmem:[%s2 + $0x18] sm:$0xf]
      %v259 = vld [vmem:[%s2 + $0x1c] sm:$0xf]
      %v260 = vld [vmem:[%s234 + $0x14] sm:$0xf]
      %v261 = vld [vmem:[%s2 + $0x20] sm:$0xf]
      %v262 = vld [vmem:[%s2 + $0x24] sm:$0xf]
      %v263 = vld [vmem:[%s2 + $0x28] sm:$0xf]
      %v264 = vld [vmem:[%s2 + $0x2c] sm:$0xf]
      %v265 = vld [vmem:[%s2 + $0x30] sm:$0xf]
      %v266 = vld [vmem:[%s2 + $0x34] sm:$0xf]
      %v267 = vld [vmem:[%s2 + $0x38] sm:$0xf]
      %v268 = vld [vmem:[%s2 + $0x3c] sm:$0xf]
      %v275 = vunpack.c.l.b16 %v246
      %v276 = vunpack.c.l.b16 %v247
      %v277 = vunpack.c.l.b16 %v248
      %v278 = vunpack.c.l.b16 %v249
      %v279 = vunpack.c.l.b16 %v250
      %v280 = vunpack.c.l.b16 %v260
      %v281 = vpack.c.b16 %v276, %v275
      %v282 = vpack.c.b16 %v278, %v277
      %v283 = vpack.c.b16 %v280, %v279
      %vm284 = vsmask.f32 7424
      %v286 = vshrl.u32 %v281, 16
      %v288 = vshll.u32 %v281, 16
      %v290 = vrot.slane %v288, 1
      %v291 = vor.u32 %v286, %v290
      %v293 = vshll.u32 %v282, 16
      %v295 = vrot.slane %v293, 1
      %v296 = vsel %vm284, %v291, %v295
      %v297 = vshrl.u32 %v282, 16
      %v299 = vor.u32 %v297, %v295
      %v301 = vshll.u32 %v283, 16
      %v303 = vrot.slane %v301, 1
      %v304 = vsel %vm284, %v299, %v303
      %v305 = vshrl.u32 %v283, 16
      %v307 = vor.u32 %v305, %v303
      %v316 = vunpack.c.l.b16 %v261
      %v317 = vunpack.c.l.b16 %v262
      %v318 = vunpack.c.l.b16 %v263
      %v319 = vunpack.c.l.b16 %v264
      %v320 = vunpack.c.l.b16 %v265
      %v321 = vunpack.c.l.b16 %v266
      %v322 = vunpack.c.l.b16 %v267
      %v323 = vunpack.c.l.b16 %v268
      %v324 = vpack.c.b16 %v317, %v316
      %v325 = vpack.c.b16 %v319, %v318
      %v326 = vpack.c.b16 %v321, %v320
      %v327 = vpack.c.b16 %v323, %v322
      %vm332 = vcmask 523264
      %v334 = vsel %vm332, %v296, 0
      %v337 = vsel %vm332, %v304, 0
      %v340 = vsel %vm332, %v307, 0
      %342 = vmatpush.bf16.msra.mxu0 0
      %343 = vmatpush.bf16.msra.mxu0 0
      %344 = vmatpush.bf16.msra.mxu0 0
      %345 = vmatpush.bf16.msra.mxu0 0
      %346 = vmatpush.bf16.msra.mxu0 %v327
      %347 = vmatpush.bf16.msra.mxu0 %v326
      %348 = vmatpush.bf16.msra.mxu0 %v325
      %349 = vmatpush.bf16.msra.mxu0 %v324
      %350 = vmatmul.bf16.gmra.mxu0 %v334
      %v351 = vpop.f32.mrf.mxu0
      %v352 = vadd.f32 0.0, %v351
      %v353 = vpop.f32.mrf.mxu0
      %v354 = vadd.f32 0.0, %v353
      %355 = vmatmul.bf16.gmra.mxu0 %v337
      %v356 = vpop.f32.mrf.mxu0
      %v357 = vadd.f32 0.0, %v356
      %v358 = vpop.f32.mrf.mxu0
      %v359 = vadd.f32 0.0, %v358
      %360 = vmatmul.bf16.gmra.mxu0 %v340
      %v361 = vpop.f32.mrf.mxu0
      %v362 = vadd.f32 0.0, %v361
      %v363 = vpop.f32.mrf.mxu0
      %v364 = vadd.f32 0.0, %v363
      %365 = vdwg.mxu0
      %v367 = vunpack.c.l.b16 %v251
      %v368 = vpack.c.b16 %v367, %v279
      %v377 = vunpack.c.l.b16 %v252
      %v378 = vunpack.c.l.b16 %v253
      %v379 = vunpack.c.l.b16 %v254
      %v380 = vunpack.c.l.b16 %v255
      %v381 = vunpack.c.l.b16 %v256
      %v382 = vunpack.c.l.b16 %v257
      %v383 = vunpack.c.l.b16 %v258
      %v384 = vunpack.c.l.b16 %v259
      %v385 = vpack.c.b16 %v378, %v377
      %v386 = vpack.c.b16 %v380, %v379
      %v387 = vpack.c.b16 %v382, %v381
      %v388 = vpack.c.b16 %v384, %v383
      %v393 = vsel %vm332, %v281, 0
      %v395 = vsel %vm332, %v282, 0
      %v398 = vsel %vm332, %v368, 0
      %400 = vmatpush.bf16.msra.mxu0 0
      %401 = vmatpush.bf16.msra.mxu0 0
      %402 = vmatpush.bf16.msra.mxu0 0
      %403 = vmatpush.bf16.msra.mxu0 0
      %404 = vmatpush.bf16.msra.mxu0 %v388
      %405 = vmatpush.bf16.msra.mxu0 %v387
      %406 = vmatpush.bf16.msra.mxu0 %v386
      %407 = vmatpush.bf16.msra.mxu0 %v385
      %408 = vmatmul.bf16.gmra.mxu0 %v393
      %v409 = vpop.f32.mrf.mxu0
      %v410 = vadd.f32 %v352, %v409
      %v411 = vpop.f32.mrf.mxu0
      %v412 = vadd.f32 %v354, %v411
      %413 = vmatmul.bf16.gmra.mxu0 %v395
      %v414 = vpop.f32.mrf.mxu0
      %v415 = vadd.f32 %v357, %v414
      %v416 = vpop.f32.mrf.mxu0
      %v417 = vadd.f32 %v359, %v416
      %418 = vmatmul.bf16.gmra.mxu0 %v398
      %v419 = vpop.f32.mrf.mxu0
      %v420 = vadd.f32 %v362, %v419
      %v421 = vpop.f32.mrf.mxu0
      %v422 = vadd.f32 %v364, %v421
      %423 = vdwg.mxu0
      %v424 = vld [vmem:[%s234] sm:$0xe]
      %v425 = vld [vmem:[%s2 + $0x40] sm:$0xf]
      %v426 = vld [vmem:[%s2 + $0x44] sm:$0xf]
      %v427 = vld [vmem:[%s2 + $0x48] sm:$0xf]
      %v428 = vld [vmem:[%s2 + $0x4c] sm:$0xf]
      %v429 = vld [vmem:[%s2 + $0x50] sm:$0xf]
      %v430 = vld [vmem:[%s2 + $0x54] sm:$0xf]
      %v431 = vld [vmem:[%s2 + $0x58] sm:$0xf]
      %v432 = vld [vmem:[%s2 + $0x5c] sm:$0xf]
      %v434 = vunpack.c.l.b16 %v424
      %v435 = vpack.c.b16 %v276, %v434
      %vm436 = vcmask 1046528
      %v437 = vrot.slane %v435, 1
      %v438 = vrot.slane %v282, 1
      %v439 = vsel %vm436, %v437, %v438
      %v440 = vrot.slane %v283, 1
      %v441 = vsel %vm436, %v438, %v440
      %v450 = vunpack.c.l.b16 %v425
      %v451 = vunpack.c.l.b16 %v426
      %v452 = vunpack.c.l.b16 %v427
      %v453 = vunpack.c.l.b16 %v428
      %v454 = vunpack.c.l.b16 %v429
      %v455 = vunpack.c.l.b16 %v430
      %v456 = vunpack.c.l.b16 %v431
      %v457 = vunpack.c.l.b16 %v432
      %v458 = vpack.c.b16 %v451, %v450
      %v459 = vpack.c.b16 %v453, %v452
      %v460 = vpack.c.b16 %v455, %v454
      %v461 = vpack.c.b16 %v457, %v456
      %v467 = vsel %vm332, %v439, 0
      %v470 = vsel %vm332, %v441, 0
      %v473 = vsel %vm332, %v440, 0
      %475 = vmatpush.bf16.msra.mxu0 0
      %476 = vmatpush.bf16.msra.mxu0 0
      %477 = vmatpush.bf16.msra.mxu0 0
      %478 = vmatpush.bf16.msra.mxu0 0
      %479 = vmatpush.bf16.msra.mxu0 %v461
      %480 = vmatpush.bf16.msra.mxu0 %v460
      %481 = vmatpush.bf16.msra.mxu0 %v459
      %482 = vmatpush.bf16.msra.mxu0 %v458
      %483 = vmatmul.bf16.gmra.mxu0 %v467
      %v484 = vpop.f32.mrf.mxu0
      %v485 = vadd.f32 0.0, %v484
      %v486 = vpop.f32.mrf.mxu0
      %v487 = vadd.f32 0.0, %v486
      %488 = vmatmul.bf16.gmra.mxu0 %v470
      %v489 = vpop.f32.mrf.mxu0
      %v490 = vadd.f32 0.0, %v489
      %v491 = vpop.f32.mrf.mxu0
      %v492 = vadd.f32 0.0, %v491
      %493 = vmatmul.bf16.gmra.mxu0 %v473
      %v494 = vpop.f32.mrf.mxu0
      %v495 = vadd.f32 0.0, %v494
      %v496 = vpop.f32.mrf.mxu0
      %v497 = vadd.f32 0.0, %v496
      %498 = vdwg.mxu0
      %v499 = vadd.f32 %v410, %v485
      %v500 = vadd.f32 %v412, %v487
      %v501 = vadd.f32 %v415, %v490
      %v502 = vadd.f32 %v417, %v492
      %v503 = vadd.f32 %v420, %v495
      %v504 = vadd.f32 %v422, %v497
      %v505 = vld [vmem:[%s234 + $0x4] sm:$0xf]
      %v506 = vld [vmem:[%s234 + $0x8] sm:$0xf]
      %v507 = vld [vmem:[%s234 + $0xc] sm:$0xf]
      %v508 = vld [vmem:[%s234 + $0x10] sm:$0xf]
      %v509 = vld [vmem:[%s234 + $0x14] sm:$0xf]
      %v510 = vld [vmem:[%s234 + $0x18] sm:$0x7]
      %v511 = vld [vmem:[%s2 + $0x60] sm:$0xf]
      %v512 = vld [vmem:[%s2 + $0x64] sm:$0xf]
      %v513 = vld [vmem:[%s2 + $0x68] sm:$0xf]
      %v514 = vld [vmem:[%s2 + $0x6c] sm:$0xf]
      %v515 = vld [vmem:[%s2 + $0x70] sm:$0xf]
      %v516 = vld [vmem:[%s2 + $0x74] sm:$0xf]
      %v517 = vld [vmem:[%s2 + $0x78] sm:$0xf]
      %v518 = vld [vmem:[%s2 + $0x7c] sm:$0xf]
      %v525 = vunpack.c.l.b16 %v505
      %v526 = vunpack.c.l.b16 %v506
      %v527 = vunpack.c.l.b16 %v507
      %v528 = vunpack.c.l.b16 %v508
      %v529 = vunpack.c.l.b16 %v509
      %v530 = vunpack.c.l.b16 %v510
      %v531 = vpack.c.b16 %v526, %v525
      %v532 = vpack.c.b16 %v528, %v527
      %v533 = vpack.c.b16 %v530, %v529
      %v542 = vunpack.c.l.b16 %v511
      %v543 = vunpack.c.l.b16 %v512
      %v544 = vunpack.c.l.b16 %v513
      %v545 = vunpack.c.l.b16 %v514
      %v546 = vunpack.c.l.b16 %v515
      %v547 = vunpack.c.l.b16 %v516
      %v548 = vunpack.c.l.b16 %v517
      %v549 = vunpack.c.l.b16 %v518
      %v550 = vpack.c.b16 %v543, %v542
      %v551 = vpack.c.b16 %v545, %v544
      %v552 = vpack.c.b16 %v547, %v546
      %v553 = vpack.c.b16 %v549, %v548
      %v559 = vsel %vm332, %v531, 0
      %v562 = vsel %vm332, %v532, 0
      %v565 = vsel %vm332, %v533, 0
      %567 = vmatpush.bf16.msra.mxu0 0
      %568 = vmatpush.bf16.msra.mxu0 0
      %569 = vmatpush.bf16.msra.mxu0 0
      %570 = vmatpush.bf16.msra.mxu0 0
      %571 = vmatpush.bf16.msra.mxu0 %v553
      %572 = vmatpush.bf16.msra.mxu0 %v552
      %573 = vmatpush.bf16.msra.mxu0 %v551
      %574 = vmatpush.bf16.msra.mxu0 %v550
      %575 = vmatmul.bf16.gmra.mxu0 %v559
      %v576 = vpop.f32.mrf.mxu0
      %v577 = vadd.f32 0.0, %v576
      %v578 = vpop.f32.mrf.mxu0
      %v579 = vadd.f32 0.0, %v578
      %580 = vmatmul.bf16.gmra.mxu0 %v562
      %v581 = vpop.f32.mrf.mxu0
      %v582 = vadd.f32 0.0, %v581
      %v583 = vpop.f32.mrf.mxu0
      %v584 = vadd.f32 0.0, %v583
      %585 = vmatmul.bf16.gmra.mxu0 %v565
      %v586 = vpop.f32.mrf.mxu0
      %v587 = vadd.f32 0.0, %v586
      %v588 = vpop.f32.mrf.mxu0
      %v589 = vadd.f32 0.0, %v588
      %590 = vdwg.mxu0
      %v591 = vadd.f32 %v499, %v577
      %v592 = vadd.f32 %v500, %v579
      %v593 = vadd.f32 %v501, %v582
      %v594 = vadd.f32 %v502, %v584
      %v595 = vadd.f32 %v503, %v587
      %v596 = vadd.f32 %v504, %v589
      %v597 = vld [vmem:[%s234 + $0x18] sm:$0xf]
      %v598 = vld [vmem:[%s2 + $0x80] sm:$0xf]
      %v599 = vld [vmem:[%s2 + $0x84] sm:$0xf]
      %v600 = vld [vmem:[%s2 + $0x88] sm:$0xf]
      %v601 = vld [vmem:[%s2 + $0x8c] sm:$0xf]
      %v602 = vld [vmem:[%s2 + $0x90] sm:$0xf]
      %v603 = vld [vmem:[%s2 + $0x94] sm:$0xf]
      %v604 = vld [vmem:[%s2 + $0x98] sm:$0xf]
      %v605 = vld [vmem:[%s2 + $0x9c] sm:$0xf]
      %v607 = vunpack.c.l.b16 %v597
      %v608 = vpack.c.b16 %v607, %v529
      %v609 = vshrl.u32 %v531, 16
      %v611 = vshll.u32 %v531, 16
      %v613 = vrot.slane %v611, 1
      %v614 = vor.u32 %v609, %v613
      %v615 = vshll.u32 %v532, 16
      %v617 = vrot.slane %v615, 1
      %v618 = vsel %vm284, %v614, %v617
      %v619 = vshrl.u32 %v532, 16
      %v621 = vor.u32 %v619, %v617
      %v623 = vshll.u32 %v608, 16
      %v625 = vrot.slane %v623, 1
      %v626 = vsel %vm284, %v621, %v625
      %v627 = vshrl.u32 %v608, 16
      %v629 = vor.u32 %v627, %v625
      %v638 = vunpack.c.l.b16 %v598
      %v639 = vunpack.c.l.b16 %v599
      %v640 = vunpack.c.l.b16 %v600
      %v641 = vunpack.c.l.b16 %v601
      %v642 = vunpack.c.l.b16 %v602
      %v643 = vunpack.c.l.b16 %v603
      %v644 = vunpack.c.l.b16 %v604
      %v645 = vunpack.c.l.b16 %v605
      %v646 = vpack.c.b16 %v639, %v638
      %v647 = vpack.c.b16 %v641, %v640
      %v648 = vpack.c.b16 %v643, %v642
      %v649 = vpack.c.b16 %v645, %v644
      %v655 = vsel %vm332, %v618, 0
      %v658 = vsel %vm332, %v626, 0
      %v661 = vsel %vm332, %v629, 0
      %663 = vmatpush.bf16.msra.mxu0 0
      %664 = vmatpush.bf16.msra.mxu0 0
      %665 = vmatpush.bf16.msra.mxu0 0
      %666 = vmatpush.bf16.msra.mxu0 0
      %667 = vmatpush.bf16.msra.mxu0 %v649
      %668 = vmatpush.bf16.msra.mxu0 %v648
      %669 = vmatpush.bf16.msra.mxu0 %v647
      %670 = vmatpush.bf16.msra.mxu0 %v646
      %671 = vmatmul.bf16.gmra.mxu0 %v655
      %v672 = vpop.f32.mrf.mxu0
      %v673 = vadd.f32 0.0, %v672
      %v674 = vpop.f32.mrf.mxu0
      %v675 = vadd.f32 0.0, %v674
      %676 = vmatmul.bf16.gmra.mxu0 %v658
      %v677 = vpop.f32.mrf.mxu0
      %v678 = vadd.f32 0.0, %v677
      %v679 = vpop.f32.mrf.mxu0
      %v680 = vadd.f32 0.0, %v679
      %681 = vmatmul.bf16.gmra.mxu0 %v661
      %v682 = vpop.f32.mrf.mxu0
      %v683 = vadd.f32 0.0, %v682
      %v684 = vpop.f32.mrf.mxu0
      %v685 = vadd.f32 0.0, %v684
      %686 = vdwg.mxu0
      %v687 = vadd.f32 %v591, %v673
      %v688 = vadd.f32 %v592, %v675
      %v689 = vadd.f32 %v593, %v678
      %v690 = vadd.f32 %v594, %v680
      %v691 = vadd.f32 %v595, %v683
      %v692 = vadd.f32 %v596, %v685
      %v693 = vld [vmem:[%s234 + $0x4] sm:$0xe]
      %v694 = vld [vmem:[%s2 + $0xa0] sm:$0xf]
      %v695 = vld [vmem:[%s2 + $0xa4] sm:$0xf]
      %v696 = vld [vmem:[%s2 + $0xa8] sm:$0xf]
      %v697 = vld [vmem:[%s2 + $0xac] sm:$0xf]
      %v698 = vld [vmem:[%s2 + $0xb0] sm:$0xf]
      %v699 = vld [vmem:[%s2 + $0xb4] sm:$0xf]
      %v700 = vld [vmem:[%s2 + $0xb8] sm:$0xf]
      %v701 = vld [vmem:[%s2 + $0xbc] sm:$0xf]
      %v703 = vunpack.c.l.b16 %v693
      %v704 = vpack.c.b16 %v526, %v703
      %v705 = vrot.slane %v704, 1
      %v706 = vrot.slane %v532, 1
      %v707 = vsel %vm436, %v705, %v706
      %v708 = vrot.slane %v608, 1
      %v709 = vsel %vm436, %v706, %v708
      %v718 = vunpack.c.l.b16 %v694
      %v719 = vunpack.c.l.b16 %v695
      %v720 = vunpack.c.l.b16 %v696
      %v721 = vunpack.c.l.b16 %v697
      %v722 = vunpack.c.l.b16 %v698
      %v723 = vunpack.c.l.b16 %v699
      %v724 = vunpack.c.l.b16 %v700
      %v725 = vunpack.c.l.b16 %v701
      %v726 = vpack.c.b16 %v719, %v718
      %v727 = vpack.c.b16 %v721, %v720
      %v728 = vpack.c.b16 %v723, %v722
      %v729 = vpack.c.b16 %v725, %v724
      %v735 = vsel %vm332, %v707, 0
      %v738 = vsel %vm332, %v709, 0
      %v741 = vsel %vm332, %v708, 0
      %743 = vmatpush.bf16.msra.mxu0 0
      %744 = vmatpush.bf16.msra.mxu0 0
      %745 = vmatpush.bf16.msra.mxu0 0
      %746 = vmatpush.bf16.msra.mxu0 0
      %747 = vmatpush.bf16.msra.mxu0 %v729
      %748 = vmatpush.bf16.msra.mxu0 %v728
      %749 = vmatpush.bf16.msra.mxu0 %v727
      %750 = vmatpush.bf16.msra.mxu0 %v726
      %751 = vmatmul.bf16.gmra.mxu0 %v735
      %v752 = vpop.f32.mrf.mxu0
      %v753 = vadd.f32 0.0, %v752
      %v754 = vpop.f32.mrf.mxu0
      %v755 = vadd.f32 0.0, %v754
      %756 = vmatmul.bf16.gmra.mxu0 %v738
      %v757 = vpop.f32.mrf.mxu0
      %v758 = vadd.f32 0.0, %v757
      %v759 = vpop.f32.mrf.mxu0
      %v760 = vadd.f32 0.0, %v759
      %761 = vmatmul.bf16.gmra.mxu0 %v741
      %v762 = vpop.f32.mrf.mxu0
      %v763 = vadd.f32 0.0, %v762
      %v764 = vpop.f32.mrf.mxu0
      %v765 = vadd.f32 0.0, %v764
      %766 = vdwg.mxu0
      %v767 = vadd.f32 %v687, %v753
      %v768 = vadd.f32 %v688, %v755
      %v769 = vadd.f32 %v689, %v758
      %v770 = vadd.f32 %v690, %v760
      %v771 = vadd.f32 %v691, %v763
      %v772 = vadd.f32 %v692, %v765
      %v773 = vld [vmem:[%s234 + $0x8] sm:$0xf]
      %v774 = vld [vmem:[%s234 + $0xc] sm:$0xf]
      %v775 = vld [vmem:[%s234 + $0x10] sm:$0xf]
      %v776 = vld [vmem:[%s234 + $0x14] sm:$0xf]
      %v777 = vld [vmem:[%s234 + $0x18] sm:$0xf]
      %v778 = vld [vmem:[%s234 + $0x1c] sm:$0x7]
      %v779 = vld [vmem:[%s2 + $0xc0] sm:$0xf]
      %v780 = vld [vmem:[%s2 + $0xc4] sm:$0xf]
      %v781 = vld [vmem:[%s2 + $0xc8] sm:$0xf]
      %v782 = vld [vmem:[%s2 + $0xcc] sm:$0xf]
      %v783 = vld [vmem:[%s2 + $0xd0] sm:$0xf]
      %v784 = vld [vmem:[%s2 + $0xd4] sm:$0xf]
      %v785 = vld [vmem:[%s2 + $0xd8] sm:$0xf]
      %v786 = vld [vmem:[%s2 + $0xdc] sm:$0xf]
      %v793 = vunpack.c.l.b16 %v773
      %v794 = vunpack.c.l.b16 %v774
      %v795 = vunpack.c.l.b16 %v775
      %v796 = vunpack.c.l.b16 %v776
      %v797 = vunpack.c.l.b16 %v777
      %v798 = vunpack.c.l.b16 %v778
      %v799 = vpack.c.b16 %v794, %v793
      %v800 = vpack.c.b16 %v796, %v795
      %v801 = vpack.c.b16 %v798, %v797
      %v810 = vunpack.c.l.b16 %v779
      %v811 = vunpack.c.l.b16 %v780
      %v812 = vunpack.c.l.b16 %v781
      %v813 = vunpack.c.l.b16 %v782
      %v814 = vunpack.c.l.b16 %v783
      %v815 = vunpack.c.l.b16 %v784
      %v816 = vunpack.c.l.b16 %v785
      %v817 = vunpack.c.l.b16 %v786
      %v818 = vpack.c.b16 %v811, %v810
      %v819 = vpack.c.b16 %v813, %v812
      %v820 = vpack.c.b16 %v815, %v814
      %v821 = vpack.c.b16 %v817, %v816
      %v827 = vsel %vm332, %v799, 0
      %v830 = vsel %vm332, %v800, 0
      %v833 = vsel %vm332, %v801, 0
      %835 = vmatpush.bf16.msra.mxu0 0
      %836 = vmatpush.bf16.msra.mxu0 0
      %837 = vmatpush.bf16.msra.mxu0 0
      %838 = vmatpush.bf16.msra.mxu0 0
      %839 = vmatpush.bf16.msra.mxu0 %v821
      %840 = vmatpush.bf16.msra.mxu0 %v820
      %841 = vmatpush.bf16.msra.mxu0 %v819
      %842 = vmatpush.bf16.msra.mxu0 %v818
      %843 = vmatmul.bf16.gmra.mxu0 %v827
      %v844 = vpop.f32.mrf.mxu0
      %v845 = vadd.f32 0.0, %v844
      %v846 = vpop.f32.mrf.mxu0
      %v847 = vadd.f32 0.0, %v846
      %848 = vmatmul.bf16.gmra.mxu0 %v830
      %v849 = vpop.f32.mrf.mxu0
      %v850 = vadd.f32 0.0, %v849
      %v851 = vpop.f32.mrf.mxu0
      %v852 = vadd.f32 0.0, %v851
      %853 = vmatmul.bf16.gmra.mxu0 %v833
      %v854 = vpop.f32.mrf.mxu0
      %v855 = vadd.f32 0.0, %v854
      %v856 = vpop.f32.mrf.mxu0
      %v857 = vadd.f32 0.0, %v856
      %858 = vdwg.mxu0
      %v859 = vadd.f32 %v767, %v845
      %v860 = vadd.f32 %v768, %v847
      %v861 = vadd.f32 %v769, %v850
      %v862 = vadd.f32 %v770, %v852
      %v863 = vadd.f32 %v771, %v855
      %v864 = vadd.f32 %v772, %v857
      %v865 = vld [vmem:[%s234 + $0x1c] sm:$0xf]
      %v866 = vld [vmem:[%s2 + $0xe0] sm:$0xf]
      %v867 = vld [vmem:[%s2 + $0xe4] sm:$0xf]
      %v868 = vld [vmem:[%s2 + $0xe8] sm:$0xf]
      %v869 = vld [vmem:[%s2 + $0xec] sm:$0xf]
      %v870 = vld [vmem:[%s2 + $0xf0] sm:$0xf]
      %v871 = vld [vmem:[%s2 + $0xf4] sm:$0xf]
      %v872 = vld [vmem:[%s2 + $0xf8] sm:$0xf]
      %v873 = vld [vmem:[%s2 + $0xfc] sm:$0xf]
      %v875 = vunpack.c.l.b16 %v865
      %v876 = vpack.c.b16 %v875, %v797
      %v877 = vshrl.u32 %v799, 16
      %v879 = vshll.u32 %v799, 16
      %v881 = vrot.slane %v879, 1
      %v882 = vor.u32 %v877, %v881
      %v883 = vshll.u32 %v800, 16
      %v885 = vrot.slane %v883, 1
      %v886 = vsel %vm284, %v882, %v885
      %v887 = vshrl.u32 %v800, 16
      %v889 = vor.u32 %v887, %v885
      %v891 = vshll.u32 %v876, 16
      %v893 = vrot.slane %v891, 1
      %v894 = vsel %vm284, %v889, %v893
      %v895 = vshrl.u32 %v876, 16
      %v897 = vor.u32 %v895, %v893
      %v906 = vunpack.c.l.b16 %v866
      %v907 = vunpack.c.l.b16 %v867
      %v908 = vunpack.c.l.b16 %v868
      %v909 = vunpack.c.l.b16 %v869
      %v910 = vunpack.c.l.b16 %v870
      %v911 = vunpack.c.l.b16 %v871
      %v912 = vunpack.c.l.b16 %v872
      %v913 = vunpack.c.l.b16 %v873
      %v914 = vpack.c.b16 %v907, %v906
      %v915 = vpack.c.b16 %v909, %v908
      %v916 = vpack.c.b16 %v911, %v910
      %v917 = vpack.c.b16 %v913, %v912
      %v923 = vsel %vm332, %v886, 0
      %v926 = vsel %vm332, %v894, 0
      %v929 = vsel %vm332, %v897, 0
      %931 = vmatpush.bf16.msra.mxu0 0
      %932 = vmatpush.bf16.msra.mxu0 0
      %933 = vmatpush.bf16.msra.mxu0 0
      %934 = vmatpush.bf16.msra.mxu0 0
      %935 = vmatpush.bf16.msra.mxu0 %v917
      %936 = vmatpush.bf16.msra.mxu0 %v916
      %937 = vmatpush.bf16.msra.mxu0 %v915
      %938 = vmatpush.bf16.msra.mxu0 %v914
      %939 = vmatmul.bf16.gmra.mxu0 %v923
      %v940 = vpop.f32.mrf.mxu0
      %v941 = vadd.f32 0.0, %v940
      %v942 = vpop.f32.mrf.mxu0
      %v943 = vadd.f32 0.0, %v942
      %944 = vmatmul.bf16.gmra.mxu0 %v926
      %v945 = vpop.f32.mrf.mxu0
      %v946 = vadd.f32 0.0, %v945
      %v947 = vpop.f32.mrf.mxu0
      %v948 = vadd.f32 0.0, %v947
      %949 = vmatmul.bf16.gmra.mxu0 %v929
      %v950 = vpop.f32.mrf.mxu0
      %v951 = vadd.f32 0.0, %v950
      %v952 = vpop.f32.mrf.mxu0
      %v953 = vadd.f32 0.0, %v952
      %954 = vdwg.mxu0
      %v955 = vadd.f32 %v859, %v941
      %v956 = vadd.f32 %v860, %v943
      %v957 = vadd.f32 %v861, %v946
      %v958 = vadd.f32 %v862, %v948
      %v959 = vadd.f32 %v863, %v951
      %v960 = vadd.f32 %v864, %v953
      %v961 = vld [vmem:[%s234 + $0x8] sm:$0xe]
      %v962 = vld [vmem:[%s2 + $0x100] sm:$0xf]
      %v963 = vld [vmem:[%s2 + $0x104] sm:$0xf]
      %v964 = vld [vmem:[%s2 + $0x108] sm:$0xf]
      %v965 = vld [vmem:[%s2 + $0x10c] sm:$0xf]
      %v966 = vld [vmem:[%s2 + $0x110] sm:$0xf]
      %v967 = vld [vmem:[%s2 + $0x114] sm:$0xf]
      %v968 = vld [vmem:[%s2 + $0x118] sm:$0xf]
      %v969 = vld [vmem:[%s2 + $0x11c] sm:$0xf]
      %v971 = vunpack.c.l.b16 %v961
      %v972 = vpack.c.b16 %v794, %v971
      %v973 = vrot.slane %v972, 1
      %v974 = vrot.slane %v800, 1
      %v975 = vsel %vm436, %v973, %v974
      %v976 = vrot.slane %v876, 1
      %v977 = vsel %vm436, %v974, %v976
      %v986 = vunpack.c.l.b16 %v962
      %v987 = vunpack.c.l.b16 %v963
      %v988 = vunpack.c.l.b16 %v964
      %v989 = vunpack.c.l.b16 %v965
      %v990 = vunpack.c.l.b16 %v966
      %v991 = vunpack.c.l.b16 %v967
      %v992 = vunpack.c.l.b16 %v968
      %v993 = vunpack.c.l.b16 %v969
      %v994 = vpack.c.b16 %v987, %v986
      %v995 = vpack.c.b16 %v989, %v988
      %v996 = vpack.c.b16 %v991, %v990
      %v997 = vpack.c.b16 %v993, %v992
      %v1003 = vsel %vm332, %v975, 0
      %v1006 = vsel %vm332, %v977, 0
      %v1009 = vsel %vm332, %v976, 0
      %1011 = vmatpush.bf16.msra.mxu0 0
      %1012 = vmatpush.bf16.msra.mxu0 0
      %1013 = vmatpush.bf16.msra.mxu0 0
      %1014 = vmatpush.bf16.msra.mxu0 0
      %1015 = vmatpush.bf16.msra.mxu0 %v997
      %1016 = vmatpush.bf16.msra.mxu0 %v996
      %1017 = vmatpush.bf16.msra.mxu0 %v995
      %1018 = vmatpush.bf16.msra.mxu0 %v994
      %1019 = vmatmul.bf16.gmra.mxu0 %v1003
      %v1020 = vpop.f32.mrf.mxu0
      %v1021 = vadd.f32 0.0, %v1020
      %v1022 = vpop.f32.mrf.mxu0
      %v1023 = vadd.f32 0.0, %v1022
      %1024 = vmatmul.bf16.gmra.mxu0 %v1006
      %v1025 = vpop.f32.mrf.mxu0
      %v1026 = vadd.f32 0.0, %v1025
      %v1027 = vpop.f32.mrf.mxu0
      %v1028 = vadd.f32 0.0, %v1027
      %1029 = vmatmul.bf16.gmra.mxu0 %v1009
      %v1030 = vpop.f32.mrf.mxu0
      %v1031 = vadd.f32 0.0, %v1030
      %v1032 = vpop.f32.mrf.mxu0
      %v1033 = vadd.f32 0.0, %v1032
      %1034 = vdwg.mxu0
      %v1035 = vadd.f32 %v955, %v1021
      %v1036 = vadd.f32 %v956, %v1023
      %v1037 = vadd.f32 %v957, %v1026
      %v1038 = vadd.f32 %v958, %v1028
      %v1039 = vadd.f32 %v959, %v1031
      %v1040 = vadd.f32 %v960, %v1033
      %v1041 = vld [vmem:[%s239] sm:$0xf]
      %v1042 = vld [vmem:[%s239 + $0x4] sm:$0xf]
      %v1043 = vld [vmem:[%s239 + $0x8] sm:$0xf]
      %v1044 = vld [vmem:[%s239 + $0xc] sm:$0xf]
      %v1045 = vld [vmem:[%s239 + $0x10] sm:$0xf]
      %v1046 = vld [vmem:[%s239 + $0x14] sm:$0x7]
      %v1047 = vld [vmem:[%s3] sm:$0xf]
      %v1048 = vld [vmem:[%s3 + $0x4] sm:$0xf]
      %v1049 = vld [vmem:[%s3 + $0x8] sm:$0xf]
      %v1050 = vld [vmem:[%s3 + $0xc] sm:$0xf]
      %v1051 = vld [vmem:[%s3 + $0x10] sm:$0xf]
      %v1052 = vld [vmem:[%s3 + $0x14] sm:$0xf]
      %v1053 = vld [vmem:[%s3 + $0x18] sm:$0xf]
      %v1054 = vld [vmem:[%s3 + $0x1c] sm:$0xf]
      %v1061 = vunpack.c.l.b16 %v1041
      %v1062 = vunpack.c.l.b16 %v1042
      %v1063 = vunpack.c.l.b16 %v1043
      %v1064 = vunpack.c.l.b16 %v1044
      %v1065 = vunpack.c.l.b16 %v1045
      %v1066 = vunpack.c.l.b16 %v1046
      %v1067 = vpack.c.b16 %v1062, %v1061
      %v1068 = vpack.c.b16 %v1064, %v1063
      %v1069 = vpack.c.b16 %v1066, %v1065
      %v1078 = vunpack.c.l.b16 %v1047
      %v1079 = vunpack.c.l.b16 %v1048
      %v1080 = vunpack.c.l.b16 %v1049
      %v1081 = vunpack.c.l.b16 %v1050
      %v1082 = vunpack.c.l.b16 %v1051
      %v1083 = vunpack.c.l.b16 %v1052
      %v1084 = vunpack.c.l.b16 %v1053
      %v1085 = vunpack.c.l.b16 %v1054
      %v1086 = vpack.c.b16 %v1079, %v1078
      %v1087 = vpack.c.b16 %v1081, %v1080
      %v1088 = vpack.c.b16 %v1083, %v1082
      %v1089 = vpack.c.b16 %v1085, %v1084
      %v1095 = vsel %vm332, %v1067, 0
      %v1098 = vsel %vm332, %v1068, 0
      %v1101 = vsel %vm332, %v1069, 0
      %1103 = vmatpush.bf16.msra.mxu0 0
      %1104 = vmatpush.bf16.msra.mxu0 0
      %1105 = vmatpush.bf16.msra.mxu0 0
      %1106 = vmatpush.bf16.msra.mxu0 0
      %1107 = vmatpush.bf16.msra.mxu0 %v1089
      %1108 = vmatpush.bf16.msra.mxu0 %v1088
      %1109 = vmatpush.bf16.msra.mxu0 %v1087
      %1110 = vmatpush.bf16.msra.mxu0 %v1086
      %1111 = vmatmul.bf16.gmra.mxu0 %v1095
      %v1112 = vpop.f32.mrf.mxu0
      %v1113 = vadd.f32 0.0, %v1112
      %v1114 = vpop.f32.mrf.mxu0
      %v1115 = vadd.f32 0.0, %v1114
      %1116 = vmatmul.bf16.gmra.mxu0 %v1098
      %v1117 = vpop.f32.mrf.mxu0
      %v1118 = vadd.f32 0.0, %v1117
      %v1119 = vpop.f32.mrf.mxu0
      %v1120 = vadd.f32 0.0, %v1119
      %1121 = vmatmul.bf16.gmra.mxu0 %v1101
      %v1122 = vpop.f32.mrf.mxu0
      %v1123 = vadd.f32 0.0, %v1122
      %v1124 = vpop.f32.mrf.mxu0
      %v1125 = vadd.f32 0.0, %v1124
      %1126 = vdwg.mxu0
      %v1127 = vadd.f32 %v1035, %v1113
      %v1128 = vadd.f32 %v1036, %v1115
      %v1129 = vadd.f32 %v1037, %v1118
      %v1130 = vadd.f32 %v1038, %v1120
      %v1131 = vadd.f32 %v1039, %v1123
      %v1132 = vadd.f32 %v1040, %v1125
      %v1133 = vld [vmem:[%s239 + $0x14] sm:$0xf]
      %v1134 = vld [vmem:[%s3 + $0x20] sm:$0xf]
      %v1135 = vld [vmem:[%s3 + $0x24] sm:$0xf]
      %v1136 = vld [vmem:[%s3 + $0x28] sm:$0xf]
      %v1137 = vld [vmem:[%s3 + $0x2c] sm:$0xf]
      %v1138 = vld [vmem:[%s3 + $0x30] sm:$0xf]
      %v1139 = vld [vmem:[%s3 + $0x34] sm:$0xf]
      %v1140 = vld [vmem:[%s3 + $0x38] sm:$0xf]
      %v1141 = vld [vmem:[%s3 + $0x3c] sm:$0xf]
      %v1143 = vunpack.c.l.b16 %v1133
      %v1144 = vpack.c.b16 %v1143, %v1065
      %v1145 = vshrl.u32 %v1067, 16
      %v1147 = vshll.u32 %v1067, 16
      %v1149 = vrot.slane %v1147, 1
      %v1150 = vor.u32 %v1145, %v1149
      %v1151 = vshll.u32 %v1068, 16
      %v1153 = vrot.slane %v1151, 1
      %v1154 = vsel %vm284, %v1150, %v1153
      %v1155 = vshrl.u32 %v1068, 16
      %v1157 = vor.u32 %v1155, %v1153
      %v1159 = vshll.u32 %v1144, 16
      %v1161 = vrot.slane %v1159, 1
      %v1162 = vsel %vm284, %v1157, %v1161
      %v1163 = vshrl.u32 %v1144, 16
      %v1165 = vor.u32 %v1163, %v1161
      %v1174 = vunpack.c.l.b16 %v1134
      %v1175 = vunpack.c.l.b16 %v1135
      %v1176 = vunpack.c.l.b16 %v1136
      %v1177 = vunpack.c.l.b16 %v1137
      %v1178 = vunpack.c.l.b16 %v1138
      %v1179 = vunpack.c.l.b16 %v1139
      %v1180 = vunpack.c.l.b16 %v1140
      %v1181 = vunpack.c.l.b16 %v1141
      %v1182 = vpack.c.b16 %v1175, %v1174
      %v1183 = vpack.c.b16 %v1177, %v1176
      %v1184 = vpack.c.b16 %v1179, %v1178
      %v1185 = vpack.c.b16 %v1181, %v1180
      %v1191 = vsel %vm332, %v1154, 0
      %v1194 = vsel %vm332, %v1162, 0
      %v1197 = vsel %vm332, %v1165, 0
      %1199 = vmatpush.bf16.msra.mxu0 0
      %1200 = vmatpush.bf16.msra.mxu0 0
      %1201 = vmatpush.bf16.msra.mxu0 0
      %1202 = vmatpush.bf16.msra.mxu0 0
      %1203 = vmatpush.bf16.msra.mxu0 %v1185
      %1204 = vmatpush.bf16.msra.mxu0 %v1184
      %1205 = vmatpush.bf16.msra.mxu0 %v1183
      %1206 = vmatpush.bf16.msra.mxu0 %v1182
      %1207 = vmatmul.bf16.gmra.mxu0 %v1191
      %v1208 = vpop.f32.mrf.mxu0
      %v1209 = vadd.f32 0.0, %v1208
      %v1210 = vpop.f32.mrf.mxu0
      %v1211 = vadd.f32 0.0, %v1210
      %1212 = vmatmul.bf16.gmra.mxu0 %v1194
      %v1213 = vpop.f32.mrf.mxu0
      %v1214 = vadd.f32 0.0, %v1213
      %v1215 = vpop.f32.mrf.mxu0
      %v1216 = vadd.f32 0.0, %v1215
      %1217 = vmatmul.bf16.gmra.mxu0 %v1197
      %v1218 = vpop.f32.mrf.mxu0
      %v1219 = vadd.f32 0.0, %v1218
      %v1220 = vpop.f32.mrf.mxu0
      %v1221 = vadd.f32 0.0, %v1220
      %1222 = vdwg.mxu0
      %v1223 = vadd.f32 %v1127, %v1209
      %v1224 = vadd.f32 %v1128, %v1211
      %v1225 = vadd.f32 %v1129, %v1214
      %v1226 = vadd.f32 %v1130, %v1216
      %v1227 = vadd.f32 %v1131, %v1219
      %v1228 = vadd.f32 %v1132, %v1221
      %v1229 = vld [vmem:[%s239] sm:$0xe]
      %v1230 = vld [vmem:[%s3 + $0x40] sm:$0xf]
      %v1231 = vld [vmem:[%s3 + $0x44] sm:$0xf]
      %v1232 = vld [vmem:[%s3 + $0x48] sm:$0xf]
      %v1233 = vld [vmem:[%s3 + $0x4c] sm:$0xf]
      %v1234 = vld [vmem:[%s3 + $0x50] sm:$0xf]
      %v1235 = vld [vmem:[%s3 + $0x54] sm:$0xf]
      %v1236 = vld [vmem:[%s3 + $0x58] sm:$0xf]
      %v1237 = vld [vmem:[%s3 + $0x5c] sm:$0xf]
      %v1239 = vunpack.c.l.b16 %v1229
      %v1240 = vpack.c.b16 %v1062, %v1239
      %v1241 = vrot.slane %v1240, 1
      %v1242 = vrot.slane %v1068, 1
      %v1243 = vsel %vm436, %v1241, %v1242
      %v1244 = vrot.slane %v1144, 1
      %v1245 = vsel %vm436, %v1242, %v1244
      %v1254 = vunpack.c.l.b16 %v1230
      %v1255 = vunpack.c.l.b16 %v1231
      %v1256 = vunpack.c.l.b16 %v1232
      %v1257 = vunpack.c.l.b16 %v1233
      %v1258 = vunpack.c.l.b16 %v1234
      %v1259 = vunpack.c.l.b16 %v1235
      %v1260 = vunpack.c.l.b16 %v1236
      %v1261 = vunpack.c.l.b16 %v1237
      %v1262 = vpack.c.b16 %v1255, %v1254
      %v1263 = vpack.c.b16 %v1257, %v1256
      %v1264 = vpack.c.b16 %v1259, %v1258
      %v1265 = vpack.c.b16 %v1261, %v1260
      %v1271 = vsel %vm332, %v1243, 0
      %v1274 = vsel %vm332, %v1245, 0
      %v1277 = vsel %vm332, %v1244, 0
      %1279 = vmatpush.bf16.msra.mxu0 0
      %1280 = vmatpush.bf16.msra.mxu0 0
      %1281 = vmatpush.bf16.msra.mxu0 0
      %1282 = vmatpush.bf16.msra.mxu0 0
      %1283 = vmatpush.bf16.msra.mxu0 %v1265
      %1284 = vmatpush.bf16.msra.mxu0 %v1264
      %1285 = vmatpush.bf16.msra.mxu0 %v1263
      %1286 = vmatpush.bf16.msra.mxu0 %v1262
      %1287 = vmatmul.bf16.gmra.mxu0 %v1271
      %v1288 = vpop.f32.mrf.mxu0
      %v1289 = vadd.f32 0.0, %v1288
      %v1290 = vpop.f32.mrf.mxu0
      %v1291 = vadd.f32 0.0, %v1290
      %1292 = vmatmul.bf16.gmra.mxu0 %v1274
      %v1293 = vpop.f32.mrf.mxu0
      %v1294 = vadd.f32 0.0, %v1293
      %v1295 = vpop.f32.mrf.mxu0
      %v1296 = vadd.f32 0.0, %v1295
      %1297 = vmatmul.bf16.gmra.mxu0 %v1277
      %v1298 = vpop.f32.mrf.mxu0
      %v1299 = vadd.f32 0.0, %v1298
      %v1300 = vpop.f32.mrf.mxu0
      %v1301 = vadd.f32 0.0, %v1300
      %1302 = vdwg.mxu0
      %v1303 = vadd.f32 %v1223, %v1289
      %v1304 = vadd.f32 %v1224, %v1291
      %v1305 = vadd.f32 %v1225, %v1294
      %v1306 = vadd.f32 %v1226, %v1296
      %v1307 = vadd.f32 %v1227, %v1299
      %v1308 = vadd.f32 %v1228, %v1301
      %v1309 = vld [vmem:[%s239 + $0x4] sm:$0xf]
      %v1310 = vld [vmem:[%s239 + $0x8] sm:$0xf]
      %v1311 = vld [vmem:[%s239 + $0xc] sm:$0xf]
      %v1312 = vld [vmem:[%s239 + $0x10] sm:$0xf]
      %v1313 = vld [vmem:[%s239 + $0x14] sm:$0xf]
      %v1314 = vld [vmem:[%s239 + $0x18] sm:$0x7]
      %v1315 = vld [vmem:[%s3 + $0x60] sm:$0xf]
      %v1316 = vld [vmem:[%s3 + $0x64] sm:$0xf]
      %v1317 = vld [vmem:[%s3 + $0x68] sm:$0xf]
      %v1318 = vld [vmem:[%s3 + $0x6c] sm:$0xf]
      %v1319 = vld [vmem:[%s3 + $0x70] sm:$0xf]
      %v1320 = vld [vmem:[%s3 + $0x74] sm:$0xf]
      %v1321 = vld [vmem:[%s3 + $0x78] sm:$0xf]
      %v1322 = vld [vmem:[%s3 + $0x7c] sm:$0xf]
      %v1329 = vunpack.c.l.b16 %v1309
      %v1330 = vunpack.c.l.b16 %v1310
      %v1331 = vunpack.c.l.b16 %v1311
      %v1332 = vunpack.c.l.b16 %v1312
      %v1333 = vunpack.c.l.b16 %v1313
      %v1334 = vunpack.c.l.b16 %v1314
      %v1335 = vpack.c.b16 %v1330, %v1329
      %v1336 = vpack.c.b16 %v1332, %v1331
      %v1337 = vpack.c.b16 %v1334, %v1333
      %v1346 = vunpack.c.l.b16 %v1315
      %v1347 = vunpack.c.l.b16 %v1316
      %v1348 = vunpack.c.l.b16 %v1317
      %v1349 = vunpack.c.l.b16 %v1318
      %v1350 = vunpack.c.l.b16 %v1319
      %v1351 = vunpack.c.l.b16 %v1320
      %v1352 = vunpack.c.l.b16 %v1321
      %v1353 = vunpack.c.l.b16 %v1322
      %v1354 = vpack.c.b16 %v1347, %v1346
      %v1355 = vpack.c.b16 %v1349, %v1348
      %v1356 = vpack.c.b16 %v1351, %v1350
      %v1357 = vpack.c.b16 %v1353, %v1352
      %v1363 = vsel %vm332, %v1335, 0
      %v1366 = vsel %vm332, %v1336, 0
      %v1369 = vsel %vm332, %v1337, 0
      %1371 = vmatpush.bf16.msra.mxu0 0
      %1372 = vmatpush.bf16.msra.mxu0 0
      %1373 = vmatpush.bf16.msra.mxu0 0
      %1374 = vmatpush.bf16.msra.mxu0 0
      %1375 = vmatpush.bf16.msra.mxu0 %v1357
      %1376 = vmatpush.bf16.msra.mxu0 %v1356
      %1377 = vmatpush.bf16.msra.mxu0 %v1355
      %1378 = vmatpush.bf16.msra.mxu0 %v1354
      %1379 = vmatmul.bf16.gmra.mxu0 %v1363
      %v1380 = vpop.f32.mrf.mxu0
      %v1381 = vadd.f32 0.0, %v1380
      %v1382 = vpop.f32.mrf.mxu0
      %v1383 = vadd.f32 0.0, %v1382
      %1384 = vmatmul.bf16.gmra.mxu0 %v1366
      %v1385 = vpop.f32.mrf.mxu0
      %v1386 = vadd.f32 0.0, %v1385
      %v1387 = vpop.f32.mrf.mxu0
      %v1388 = vadd.f32 0.0, %v1387
      %1389 = vmatmul.bf16.gmra.mxu0 %v1369
      %v1390 = vpop.f32.mrf.mxu0
      %v1391 = vadd.f32 0.0, %v1390
      %v1392 = vpop.f32.mrf.mxu0
      %v1393 = vadd.f32 0.0, %v1392
      %1394 = vdwg.mxu0
      %v1395 = vadd.f32 %v1303, %v1381
      %v1396 = vadd.f32 %v1304, %v1383
      %v1397 = vadd.f32 %v1305, %v1386
      %v1398 = vadd.f32 %v1306, %v1388
      %v1399 = vadd.f32 %v1307, %v1391
      %v1400 = vadd.f32 %v1308, %v1393
      %v1401 = vld [vmem:[%s239 + $0x18] sm:$0xf]
      %v1402 = vld [vmem:[%s3 + $0x80] sm:$0xf]
      %v1403 = vld [vmem:[%s3 + $0x84] sm:$0xf]
      %v1404 = vld [vmem:[%s3 + $0x88] sm:$0xf]
      %v1405 = vld [vmem:[%s3 + $0x8c] sm:$0xf]
      %v1406 = vld [vmem:[%s3 + $0x90] sm:$0xf]
      %v1407 = vld [vmem:[%s3 + $0x94] sm:$0xf]
      %v1408 = vld [vmem:[%s3 + $0x98] sm:$0xf]
      %v1409 = vld [vmem:[%s3 + $0x9c] sm:$0xf]
      %v1411 = vunpack.c.l.b16 %v1401
      %v1412 = vpack.c.b16 %v1411, %v1333
      %v1413 = vshrl.u32 %v1335, 16
      %v1415 = vshll.u32 %v1335, 16
      %v1417 = vrot.slane %v1415, 1
      %v1418 = vor.u32 %v1413, %v1417
      %v1419 = vshll.u32 %v1336, 16
      %v1421 = vrot.slane %v1419, 1
      %v1422 = vsel %vm284, %v1418, %v1421
      %v1423 = vshrl.u32 %v1336, 16
      %v1425 = vor.u32 %v1423, %v1421
      %v1427 = vshll.u32 %v1412, 16
      %v1429 = vrot.slane %v1427, 1
      %v1430 = vsel %vm284, %v1425, %v1429
      %v1431 = vshrl.u32 %v1412, 16
      %v1433 = vor.u32 %v1431, %v1429
      %v1442 = vunpack.c.l.b16 %v1402
      %v1443 = vunpack.c.l.b16 %v1403
      %v1444 = vunpack.c.l.b16 %v1404
      %v1445 = vunpack.c.l.b16 %v1405
      %v1446 = vunpack.c.l.b16 %v1406
      %v1447 = vunpack.c.l.b16 %v1407
      %v1448 = vunpack.c.l.b16 %v1408
      %v1449 = vunpack.c.l.b16 %v1409
      %v1450 = vpack.c.b16 %v1443, %v1442
      %v1451 = vpack.c.b16 %v1445, %v1444
      %v1452 = vpack.c.b16 %v1447, %v1446
      %v1453 = vpack.c.b16 %v1449, %v1448
      %v1459 = vsel %vm332, %v1422, 0
      %v1462 = vsel %vm332, %v1430, 0
      %v1465 = vsel %vm332, %v1433, 0
      %1467 = vmatpush.bf16.msra.mxu0 0
      %1468 = vmatpush.bf16.msra.mxu0 0
      %1469 = vmatpush.bf16.msra.mxu0 0
      %1470 = vmatpush.bf16.msra.mxu0 0
      %1471 = vmatpush.bf16.msra.mxu0 %v1453
      %1472 = vmatpush.bf16.msra.mxu0 %v1452
      %1473 = vmatpush.bf16.msra.mxu0 %v1451
      %1474 = vmatpush.bf16.msra.mxu0 %v1450
      %1475 = vmatmul.bf16.gmra.mxu0 %v1459
      %v1476 = vpop.f32.mrf.mxu0
      %v1477 = vadd.f32 0.0, %v1476
      %v1478 = vpop.f32.mrf.mxu0
      %v1479 = vadd.f32 0.0, %v1478
      %1480 = vmatmul.bf16.gmra.mxu0 %v1462
      %v1481 = vpop.f32.mrf.mxu0
      %v1482 = vadd.f32 0.0, %v1481
      %v1483 = vpop.f32.mrf.mxu0
      %v1484 = vadd.f32 0.0, %v1483
      %1485 = vmatmul.bf16.gmra.mxu0 %v1465
      %v1486 = vpop.f32.mrf.mxu0
      %v1487 = vadd.f32 0.0, %v1486
      %v1488 = vpop.f32.mrf.mxu0
      %v1489 = vadd.f32 0.0, %v1488
      %1490 = vdwg.mxu0
      %v1491 = vadd.f32 %v1395, %v1477
      %v1492 = vadd.f32 %v1396, %v1479
      %v1493 = vadd.f32 %v1397, %v1482
      %v1494 = vadd.f32 %v1398, %v1484
      %v1495 = vadd.f32 %v1399, %v1487
      %v1496 = vadd.f32 %v1400, %v1489
      %v1497 = vld [vmem:[%s239 + $0x4] sm:$0xe]
      %v1498 = vld [vmem:[%s3 + $0xa0] sm:$0xf]
      %v1499 = vld [vmem:[%s3 + $0xa4] sm:$0xf]
      %v1500 = vld [vmem:[%s3 + $0xa8] sm:$0xf]
      %v1501 = vld [vmem:[%s3 + $0xac] sm:$0xf]
      %v1502 = vld [vmem:[%s3 + $0xb0] sm:$0xf]
      %v1503 = vld [vmem:[%s3 + $0xb4] sm:$0xf]
      %v1504 = vld [vmem:[%s3 + $0xb8] sm:$0xf]
      %v1505 = vld [vmem:[%s3 + $0xbc] sm:$0xf]
      %v1507 = vunpack.c.l.b16 %v1497
      %v1508 = vpack.c.b16 %v1330, %v1507
      %v1509 = vrot.slane %v1508, 1
      %v1510 = vrot.slane %v1336, 1
      %v1511 = vsel %vm436, %v1509, %v1510
      %v1512 = vrot.slane %v1412, 1
      %v1513 = vsel %vm436, %v1510, %v1512
      %v1522 = vunpack.c.l.b16 %v1498
      %v1523 = vunpack.c.l.b16 %v1499
      %v1524 = vunpack.c.l.b16 %v1500
      %v1525 = vunpack.c.l.b16 %v1501
      %v1526 = vunpack.c.l.b16 %v1502
      %v1527 = vunpack.c.l.b16 %v1503
      %v1528 = vunpack.c.l.b16 %v1504
      %v1529 = vunpack.c.l.b16 %v1505
      %v1530 = vpack.c.b16 %v1523, %v1522
      %v1531 = vpack.c.b16 %v1525, %v1524
      %v1532 = vpack.c.b16 %v1527, %v1526
      %v1533 = vpack.c.b16 %v1529, %v1528
      %v1539 = vsel %vm332, %v1511, 0
      %v1542 = vsel %vm332, %v1513, 0
      %v1545 = vsel %vm332, %v1512, 0
      %1547 = vmatpush.bf16.msra.mxu0 0
      %1548 = vmatpush.bf16.msra.mxu0 0
      %1549 = vmatpush.bf16.msra.mxu0 0
      %1550 = vmatpush.bf16.msra.mxu0 0
      %1551 = vmatpush.bf16.msra.mxu0 %v1533
      %1552 = vmatpush.bf16.msra.mxu0 %v1532
      %1553 = vmatpush.bf16.msra.mxu0 %v1531
      %1554 = vmatpush.bf16.msra.mxu0 %v1530
      %1555 = vmatmul.bf16.gmra.mxu0 %v1539
      %v1556 = vpop.f32.mrf.mxu0
      %v1557 = vadd.f32 0.0, %v1556
      %v1558 = vpop.f32.mrf.mxu0
      %v1559 = vadd.f32 0.0, %v1558
      %1560 = vmatmul.bf16.gmra.mxu0 %v1542
      %v1561 = vpop.f32.mrf.mxu0
      %v1562 = vadd.f32 0.0, %v1561
      %v1563 = vpop.f32.mrf.mxu0
      %v1564 = vadd.f32 0.0, %v1563
      %1565 = vmatmul.bf16.gmra.mxu0 %v1545
      %v1566 = vpop.f32.mrf.mxu0
      %v1567 = vadd.f32 0.0, %v1566
      %v1568 = vpop.f32.mrf.mxu0
      %v1569 = vadd.f32 0.0, %v1568
      %1570 = vdwg.mxu0
      %v1571 = vadd.f32 %v1491, %v1557
      %v1572 = vadd.f32 %v1492, %v1559
      %v1573 = vadd.f32 %v1493, %v1562
      %v1574 = vadd.f32 %v1494, %v1564
      %v1575 = vadd.f32 %v1495, %v1567
      %v1576 = vadd.f32 %v1496, %v1569
      %v1577 = vld [vmem:[%s239 + $0x8] sm:$0xf]
      %v1578 = vld [vmem:[%s239 + $0xc] sm:$0xf]
      %v1579 = vld [vmem:[%s239 + $0x10] sm:$0xf]
      %v1580 = vld [vmem:[%s239 + $0x14] sm:$0xf]
      %v1581 = vld [vmem:[%s239 + $0x18] sm:$0xf]
      %v1582 = vld [vmem:[%s239 + $0x1c] sm:$0x7]
      %v1583 = vld [vmem:[%s3 + $0xc0] sm:$0xf]
      %v1584 = vld [vmem:[%s3 + $0xc4] sm:$0xf]
      %v1585 = vld [vmem:[%s3 + $0xc8] sm:$0xf]
      %v1586 = vld [vmem:[%s3 + $0xcc] sm:$0xf]
      %v1587 = vld [vmem:[%s3 + $0xd0] sm:$0xf]
      %v1588 = vld [vmem:[%s3 + $0xd4] sm:$0xf]
      %v1589 = vld [vmem:[%s3 + $0xd8] sm:$0xf]
      %v1590 = vld [vmem:[%s3 + $0xdc] sm:$0xf]
      %v1597 = vunpack.c.l.b16 %v1577
      %v1598 = vunpack.c.l.b16 %v1578
      %v1599 = vunpack.c.l.b16 %v1579
      %v1600 = vunpack.c.l.b16 %v1580
      %v1601 = vunpack.c.l.b16 %v1581
      %v1602 = vunpack.c.l.b16 %v1582
      %v1603 = vpack.c.b16 %v1598, %v1597
      %v1604 = vpack.c.b16 %v1600, %v1599
      %v1605 = vpack.c.b16 %v1602, %v1601
      %v1614 = vunpack.c.l.b16 %v1583
      %v1615 = vunpack.c.l.b16 %v1584
      %v1616 = vunpack.c.l.b16 %v1585
      %v1617 = vunpack.c.l.b16 %v1586
      %v1618 = vunpack.c.l.b16 %v1587
      %v1619 = vunpack.c.l.b16 %v1588
      %v1620 = vunpack.c.l.b16 %v1589
      %v1621 = vunpack.c.l.b16 %v1590
      %v1622 = vpack.c.b16 %v1615, %v1614
      %v1623 = vpack.c.b16 %v1617, %v1616
      %v1624 = vpack.c.b16 %v1619, %v1618
      %v1625 = vpack.c.b16 %v1621, %v1620
      %v1631 = vsel %vm332, %v1603, 0
      %v1634 = vsel %vm332, %v1604, 0
      %v1637 = vsel %vm332, %v1605, 0
      %1639 = vmatpush.bf16.msra.mxu0 0
      %1640 = vmatpush.bf16.msra.mxu0 0
      %1641 = vmatpush.bf16.msra.mxu0 0
      %1642 = vmatpush.bf16.msra.mxu0 0
      %1643 = vmatpush.bf16.msra.mxu0 %v1625
      %1644 = vmatpush.bf16.msra.mxu0 %v1624
      %1645 = vmatpush.bf16.msra.mxu0 %v1623
      %1646 = vmatpush.bf16.msra.mxu0 %v1622
      %1647 = vmatmul.bf16.gmra.mxu0 %v1631
      %v1648 = vpop.f32.mrf.mxu0
      %v1649 = vadd.f32 0.0, %v1648
      %v1650 = vpop.f32.mrf.mxu0
      %v1651 = vadd.f32 0.0, %v1650
      %1652 = vmatmul.bf16.gmra.mxu0 %v1634
      %v1653 = vpop.f32.mrf.mxu0
      %v1654 = vadd.f32 0.0, %v1653
      %v1655 = vpop.f32.mrf.mxu0
      %v1656 = vadd.f32 0.0, %v1655
      %1657 = vmatmul.bf16.gmra.mxu0 %v1637
      %v1658 = vpop.f32.mrf.mxu0
      %v1659 = vadd.f32 0.0, %v1658
      %v1660 = vpop.f32.mrf.mxu0
      %v1661 = vadd.f32 0.0, %v1660
      %1662 = vdwg.mxu0
      %v1663 = vadd.f32 %v1571, %v1649
      %v1664 = vadd.f32 %v1572, %v1651
      %v1665 = vadd.f32 %v1573, %v1654
      %v1666 = vadd.f32 %v1574, %v1656
      %v1667 = vadd.f32 %v1575, %v1659
      %v1668 = vadd.f32 %v1576, %v1661
      %v1669 = vld [vmem:[%s239 + $0x1c] sm:$0xf]
      %v1670 = vld [vmem:[%s3 + $0xe0] sm:$0xf]
      %v1671 = vld [vmem:[%s3 + $0xe4] sm:$0xf]
      %v1672 = vld [vmem:[%s3 + $0xe8] sm:$0xf]
      %v1673 = vld [vmem:[%s3 + $0xec] sm:$0xf]
      %v1674 = vld [vmem:[%s3 + $0xf0] sm:$0xf]
      %v1675 = vld [vmem:[%s3 + $0xf4] sm:$0xf]
      %v1676 = vld [vmem:[%s3 + $0xf8] sm:$0xf]
      %v1677 = vld [vmem:[%s3 + $0xfc] sm:$0xf]
      %v1679 = vunpack.c.l.b16 %v1669
      %v1680 = vpack.c.b16 %v1679, %v1601
      %v1681 = vshrl.u32 %v1603, 16
      %v1683 = vshll.u32 %v1603, 16
      %v1685 = vrot.slane %v1683, 1
      %v1686 = vor.u32 %v1681, %v1685
      %v1687 = vshll.u32 %v1604, 16
      %v1689 = vrot.slane %v1687, 1
      %v1690 = vsel %vm284, %v1686, %v1689
      %v1691 = vshrl.u32 %v1604, 16
      %v1693 = vor.u32 %v1691, %v1689
      %v1695 = vshll.u32 %v1680, 16
      %v1697 = vrot.slane %v1695, 1
      %v1698 = vsel %vm284, %v1693, %v1697
      %v1699 = vshrl.u32 %v1680, 16
      %v1701 = vor.u32 %v1699, %v1697
      %v1710 = vunpack.c.l.b16 %v1670
      %v1711 = vunpack.c.l.b16 %v1671
      %v1712 = vunpack.c.l.b16 %v1672
      %v1713 = vunpack.c.l.b16 %v1673
      %v1714 = vunpack.c.l.b16 %v1674
      %v1715 = vunpack.c.l.b16 %v1675
      %v1716 = vunpack.c.l.b16 %v1676
      %v1717 = vunpack.c.l.b16 %v1677
      %v1718 = vpack.c.b16 %v1711, %v1710
      %v1719 = vpack.c.b16 %v1713, %v1712
      %v1720 = vpack.c.b16 %v1715, %v1714
      %v1721 = vpack.c.b16 %v1717, %v1716
      %v1727 = vsel %vm332, %v1690, 0
      %v1730 = vsel %vm332, %v1698, 0
      %v1733 = vsel %vm332, %v1701, 0
      %1735 = vmatpush.bf16.msra.mxu0 0
      %1736 = vmatpush.bf16.msra.mxu0 0
      %1737 = vmatpush.bf16.msra.mxu0 0
      %1738 = vmatpush.bf16.msra.mxu0 0
      %1739 = vmatpush.bf16.msra.mxu0 %v1721
      %1740 = vmatpush.bf16.msra.mxu0 %v1720
      %1741 = vmatpush.bf16.msra.mxu0 %v1719
      %1742 = vmatpush.bf16.msra.mxu0 %v1718
      %1743 = vmatmul.bf16.gmra.mxu0 %v1727
      %v1744 = vpop.f32.mrf.mxu0
      %v1745 = vadd.f32 0.0, %v1744
      %v1746 = vpop.f32.mrf.mxu0
      %v1747 = vadd.f32 0.0, %v1746
      %1748 = vmatmul.bf16.gmra.mxu0 %v1730
      %v1749 = vpop.f32.mrf.mxu0
      %v1750 = vadd.f32 0.0, %v1749
      %v1751 = vpop.f32.mrf.mxu0
      %v1752 = vadd.f32 0.0, %v1751
      %1753 = vmatmul.bf16.gmra.mxu0 %v1733
      %v1754 = vpop.f32.mrf.mxu0
      %v1755 = vadd.f32 0.0, %v1754
      %v1756 = vpop.f32.mrf.mxu0
      %v1757 = vadd.f32 0.0, %v1756
      %1758 = vdwg.mxu0
      %v1759 = vadd.f32 %v1663, %v1745
      %v1760 = vadd.f32 %v1664, %v1747
      %v1761 = vadd.f32 %v1665, %v1750
      %v1762 = vadd.f32 %v1666, %v1752
      %v1763 = vadd.f32 %v1667, %v1755
      %v1764 = vadd.f32 %v1668, %v1757
      %v1765 = vld [vmem:[%s239 + $0x8] sm:$0xe]
      %v1766 = vld [vmem:[%s3 + $0x100] sm:$0xf]
      %v1767 = vld [vmem:[%s3 + $0x104] sm:$0xf]
      %v1768 = vld [vmem:[%s3 + $0x108] sm:$0xf]
      %v1769 = vld [vmem:[%s3 + $0x10c] sm:$0xf]
      %v1770 = vld [vmem:[%s3 + $0x110] sm:$0xf]
      %v1771 = vld [vmem:[%s3 + $0x114] sm:$0xf]
      %v1772 = vld [vmem:[%s3 + $0x118] sm:$0xf]
      %v1773 = vld [vmem:[%s3 + $0x11c] sm:$0xf]
      %v1775 = vunpack.c.l.b16 %v1765
      %v1776 = vpack.c.b16 %v1598, %v1775
      %v1777 = vrot.slane %v1776, 1
      %v1778 = vrot.slane %v1604, 1
      %v1779 = vsel %vm436, %v1777, %v1778
      %v1780 = vrot.slane %v1680, 1
      %v1781 = vsel %vm436, %v1778, %v1780
      %v1790 = vunpack.c.l.b16 %v1766
      %v1791 = vunpack.c.l.b16 %v1767
      %v1792 = vunpack.c.l.b16 %v1768
      %v1793 = vunpack.c.l.b16 %v1769
      %v1794 = vunpack.c.l.b16 %v1770
      %v1795 = vunpack.c.l.b16 %v1771
      %v1796 = vunpack.c.l.b16 %v1772
      %v1797 = vunpack.c.l.b16 %v1773
      %v1798 = vpack.c.b16 %v1791, %v1790
      %v1799 = vpack.c.b16 %v1793, %v1792
      %v1800 = vpack.c.b16 %v1795, %v1794
      %v1801 = vpack.c.b16 %v1797, %v1796
      %v1807 = vsel %vm332, %v1779, 0
      %v1810 = vsel %vm332, %v1781, 0
      %v1813 = vsel %vm332, %v1780, 0
      %1815 = vmatpush.bf16.msra.mxu0 0
      %1816 = vmatpush.bf16.msra.mxu0 0
      %1817 = vmatpush.bf16.msra.mxu0 0
      %1818 = vmatpush.bf16.msra.mxu0 0
      %1819 = vmatpush.bf16.msra.mxu0 %v1801
      %1820 = vmatpush.bf16.msra.mxu0 %v1800
      %1821 = vmatpush.bf16.msra.mxu0 %v1799
      %1822 = vmatpush.bf16.msra.mxu0 %v1798
      %1823 = vmatmul.bf16.gmra.mxu0 %v1807
      %v1824 = vpop.f32.mrf.mxu0
      %v1825 = vadd.f32 0.0, %v1824
      %v1826 = vpop.f32.mrf.mxu0
      %v1827 = vadd.f32 0.0, %v1826
      %1828 = vmatmul.bf16.gmra.mxu0 %v1810
      %v1829 = vpop.f32.mrf.mxu0
      %v1830 = vadd.f32 0.0, %v1829
      %v1831 = vpop.f32.mrf.mxu0
      %v1832 = vadd.f32 0.0, %v1831
      %1833 = vmatmul.bf16.gmra.mxu0 %v1813
      %v1834 = vpop.f32.mrf.mxu0
      %v1835 = vadd.f32 0.0, %v1834
      %v1836 = vpop.f32.mrf.mxu0
      %v1837 = vadd.f32 0.0, %v1836
      %1838 = vdwg.mxu0
      %v1839 = vadd.f32 %v1759, %v1825
      %v1840 = vadd.f32 %v1760, %v1827
      %v1841 = vadd.f32 %v1761, %v1830
      %v1842 = vadd.f32 %v1762, %v1832
      %v1843 = vadd.f32 %v1763, %v1835
      %v1844 = vadd.f32 %v1764, %v1837
      %v1845 = vld [vmem:[%s4] sm:$0x1]
      %v1847 = vperm.slane %v1845, 0
      %v1849 = vadd.f32 %v1839, %v1847
      %v1850 = vadd.f32 %v1840, %v1847
      %v1851 = vadd.f32 %v1841, %v1847
      %v1852 = vadd.f32 %v1842, %v1847
      %v1853 = vadd.f32 %v1843, %v1847
      %v1854 = vadd.f32 %v1844, %v1847
      %v1855 = vmax.f32 %v1849, 0.0
      %v1856 = vmax.f32 %v1850, 0.0
      %v1857 = vmax.f32 %v1851, 0.0
      %v1858 = vmax.f32 %v1852, 0.0
      %v1859 = vmax.f32 %v1853, 0.0
      %v1860 = vmax.f32 %v1854, 0.0
      %v1861 = vpack.c.bf16 %v1855, %v1855
      %v1862 = vpack.c.bf16 %v1856, %v1856
      %v1863 = vpack.c.bf16 %v1857, %v1857
      %v1864 = vpack.c.bf16 %v1858, %v1858
      %v1865 = vpack.c.bf16 %v1859, %v1859
      %v1866 = vpack.c.bf16 %v1860, %v1860
      %vm1867 = vcmask 519168
      %1868 = vst.msk [vmem:[%s244] sm:$0xf] %vm1867, %v1861
      %1869 = vst.msk [vmem:[%s244 + $0x4] sm:$0xf] %vm1867, %v1862
      %1870 = vst.msk [vmem:[%s244 + $0x8] sm:$0xf] %vm1867, %v1863
      %1871 = vst.msk [vmem:[%s244 + $0xc] sm:$0xf] %vm1867, %v1864
      %1872 = vst.msk [vmem:[%s244 + $0x10] sm:$0xf] %vm1867, %v1865
      %vm1873 = vcmask 518144
      %1874 = vst.msk [vmem:[%s244 + $0x14] sm:$0x7] %vm1873, %v1866
      %p1875 = scmp.lt.s32.totalorder %s16, 1
      %s1876 = scalar_select %p1875, %s16, 1
      %s1877 = smul.addr %s1876, 6
      %s1878 = smul.addr %s1877, 4
      %s1879 = scalar_lea.vmem %s5, %s1878
      // Predicated region
      $region41: #{expanding_path_forward.10} parent=39 // pred_check
        %p1880 = pneg %p149
      $region42: #{expanding_path_forward.10} parent=39 // pred_check_branch
        %1882 = sbr.rel (%p1880) target = $region44
      $region43: #{expanding_path_forward.10} parent=39 // pred_region
        _
      $region44: #{expanding_path_forward.10} parent=39 // pred_fallthru
        _
    $region40: #{expanding_path_forward.10} parent=5 // pred_fallthru
      _
    %p1883 = scmp.le.s32.totalorder 2, %s11
    // Predicated region
    $region45: #{expanding_path_forward.10} parent=5 // pred_check
      %p1884 = pneg %p1883
    $region46: #{expanding_path_forward.10} parent=5 // pred_check_branch
      %1886 = sbr.rel (%p1884) target = $region48
    $region47: #{expanding_path_forward.10} parent=5 // pred_region
      %s1887 = ssub.s32 %s11, 2
      // Predicated region
      $region49: #{expanding_path_forward.10} parent=47 // pred_check
        %p1888 = pneg %p155
      $region50: #{expanding_path_forward.10} parent=47 // pred_check_branch
        %1890 = sbr.rel (%p1888) target = $region52
      $region51: #{expanding_path_forward.10} parent=47 // pred_region
        %p1891 = scmp.lt.s32.totalorder %s17, 1
        %s1892 = scalar_select %p1891, %s17, 1
        %s1893 = smul.addr %s1892, 6
        %s1894 = smul.addr %s1893, 4
        %s1895 = scalar_lea.vmem %s5, %s1894
      $region52: #{expanding_path_forward.10} parent=47 // pred_fallthru
        _
    $region48: #{expanding_path_forward.10} parent=5 // pred_fallthru
      _
  $region6: #{expanding_path_forward.10} parent=0 // loop_footer
    %s15 = sadd.s32 1, %s11
  $region7: #{expanding_path_forward.10} parent=0 // loop_footer_branch
    %10 = sbr.rel target = $region3
  $region8: #{expanding_path_forward.10} parent=0 // loop_exit
    _

</llo_original>
